<compile_context>
chip_gen: v7x
topology: tpu7x:2x2x1
jax: 0.10.0
libtpu: 0.0.40
codegen_flags: <defaults>
</compile_context>

<pallas_src>
import functools

import numpy as np
import jax
import jax.numpy as jnp
from jax import lax
from jax.experimental import pallas as pl
from jax.experimental.pallas import tpu as pltpu


OUT_T = 298            # fixed by nn.functional.interpolate(size=(298, 1))
C_IN = 512             # model input channels
C_HID = 256            # every layer's output channels
K1, K_REST = 7, 5      # temporal kernel sizes
DILS_REST = (1, 2, 4, 8, 16)   # dilations of conv2..conv6


def _video_model_kernel(x_ref, w1_ref, wr_ref, b_ref, g_ref, beta_ref,
                        o_ref, pad1_ref, pad_ref, *, B, T, maxpad):
    """Fused 6x(dilated 1-D conv + BatchNorm(train) + ReLU) + nearest upsample.

    x_ref    : (B, T, 512)            bf16  channel-last input
    w1_ref   : (7*512, 256)           bf16  layer-1 weight, im2col layout
    wr_ref   : (5, 5*256, 256)        bf16  layer 2..6 weights, im2col layout
    b_ref    : (6, 256)               f32   conv biases
    g_ref    : (6, 256)               f32   BN gammas
    beta_ref : (6, 256)               f32   BN betas
    o_ref    : (B, 298, 256)          f32   lane-dense output (time, channel)
    pad1_ref : (B, T + 6, 512)        bf16  scratch: padded layer-1 input
    pad_ref  : (B, T + 2*maxpad, 256) bf16  scratch: padded layer 2..6 input
    """
    p1 = (K1 - 1) // 2                       # layer-1 "same" padding (=3)

    # ---- in-VMEM zero padding: zero both halo buffers once ----
    pad1_ref[...] = jnp.zeros_like(pad1_ref)
    pad_ref[...] = jnp.zeros_like(pad_ref)
    pad1_ref[:, p1:p1 + T, :] = x_ref[...]

    def conv_im2col(buf_ref, w2d, K, d, p, off, cin):
        # K shifted (B*T, cin) slabs -> single (B*T, K*cin) @ (K*cin, 256)
        # MXU matmul (bf16 operands, f32 accumulation).
        cols = [
            buf_ref[:, off - p + k * d: off - p + k * d + T, :].reshape(B * T, cin)
            for k in range(K)
        ]
        xk = jnp.concatenate(cols, axis=-1)                  # (B*T, K*cin) bf16
        return jnp.dot(xk, w2d, preferred_element_type=jnp.float32)

    def bias_bn_relu(y, li):
        # conv bias + training-mode BatchNorm (batch stats over B*T samples,
        # biased variance) + ReLU, all in f32.
        y = y + b_ref[li:li + 1, :]
        mean = jnp.mean(y, axis=0, keepdims=True)
        var = jnp.mean(jnp.square(y - mean), axis=0, keepdims=True)
        yn = (y - mean) * lax.rsqrt(var + 1e-5)
        return jnp.maximum(yn * g_ref[li:li + 1, :] + beta_ref[li:li + 1, :], 0.0)

    # ---- layer 1: Cin=512, K=7, dilation 1 ----
    h = bias_bn_relu(conv_im2col(pad1_ref, w1_ref[...], K1, 1, p1, p1, C_IN), 0)

    # ---- layers 2..6: Cin=256, K=5, dilations 1,2,4,8,16 ----
    for i, d in enumerate(DILS_REST):
        pad_ref[:, maxpad:maxpad + T, :] = (
            h.reshape(B, T, C_HID).astype(pad_ref.dtype))
        p = d * (K_REST - 1) // 2
        h = bias_bn_relu(
            conv_im2col(pad_ref, wr_ref[i], K_REST, d, p, maxpad, C_HID), i + 1)

    # ---- nearest upsample T -> 298 along time (torch 'nearest':
    #      src = floor(dst * T / 298)). Indices are static, so this is just
    #      T run-length broadcast stores into a lane-dense (B, 298, 256) out. ----
    h3 = h.reshape(B, T, C_HID)
    src = np.floor(np.arange(OUT_T) * T / OUT_T).astype(np.int32)
    for r in range(T):
        rows = np.nonzero(src == r)[0]
        if rows.size == 0:
            continue
        s0, cnt = int(rows[0]), int(rows.size)
        o_ref[:, s0:s0 + cnt, :] = jnp.broadcast_to(
            h3[:, r:r + 1, :], (B, cnt, C_HID))


def init_params(key):
    # (K, Cin, Cout, dilation) per layer, matching Video_Model.__init__.
    layer_defs = [
        (7, 512, 256, 1),
        (5, 256, 256, 1),
        (5, 256, 256, 2),
        (5, 256, 256, 4),
        (5, 256, 256, 8),
        (5, 256, 256, 16),
    ]
    params = []
    for (K, Cin, Cout, d) in layer_defs:
        key, k1, k2, k3, k4 = jax.random.split(key, 5)
        # Conv weights are stored/shipped in bf16 (mixed-precision inference,
        # halves the dominant HBM bytes); bias / BN affine stay f32.
        w = (jax.random.normal(k1, (K, Cin, Cout), jnp.float32) * 0.05
             ).astype(jnp.bfloat16)
        b = jax.random.normal(k2, (Cout,), jnp.float32) * 0.05
        gamma = 1.0 + 0.1 * jax.random.normal(k3, (Cout,), jnp.float32)
        beta = 0.1 * jax.random.normal(k4, (Cout,), jnp.float32)
        params.append((w, b, gamma, beta, d))
    return params


def video_model_forward(x, params):
    """x: (B, T, 512) f32 (the 3-D input path of the torch forward).

    Returns (B, 256, 298, 1), matching torch's NCHW output."""
    B, T, cin = x.shape
    assert cin == C_IN
    assert T % 16 == 0, "in-kernel (B,T,C)<->(B*T,C) reshapes assume T % 16 == 0"
    # TODO(synk): for long sequences (T >> 128) add a T-tiled grid with
    # dilation*(K-1) halo rows instead of this single whole-array block.
    # TODO(synk): for repeated inference, keep the packed bf16 weights
    # resident / cross-call prefetched instead of re-shipping per call.

    maxpad = max(d * (K_REST - 1) // 2 for d in DILS_REST)    # 32

    # One-time packing into im2col / stacked layouts (offline in deployment).
    w1 = params[0][0].reshape(K1 * C_IN, C_HID)                          # bf16
    wr = jnp.stack([p[0].reshape(K_REST * C_HID, C_HID) for p in params[1:]])
    b_all = jnp.stack([p[1] for p in params]).astype(jnp.float32)        # (6,256)
    g_all = jnp.stack([p[2] for p in params]).astype(jnp.float32)
    be_all = jnp.stack([p[3] for p in params]).astype(jnp.float32)
    xb = x.astype(jnp.bfloat16)

    kernel = functools.partial(_video_model_kernel, B=B, T=T, maxpad=maxpad)
    out = pl.pallas_call(
        kernel,
        out_shape=jax.ShapeDtypeStruct((B, OUT_T, C_HID), jnp.float32),
        in_specs=[
            pl.BlockSpec(xb.shape, lambda: (0, 0, 0)),
            pl.BlockSpec(w1.shape, lambda: (0, 0)),
            pl.BlockSpec(wr.shape, lambda: (0, 0, 0)),
            pl.BlockSpec(b_all.shape, lambda: (0, 0)),
            pl.BlockSpec(g_all.shape, lambda: (0, 0)),
            pl.BlockSpec(be_all.shape, lambda: (0, 0)),
        ],
        out_specs=pl.BlockSpec((B, OUT_T, C_HID), lambda: (0, 0, 0)),
        scratch_shapes=[
            pltpu.VMEM((B, T + 2 * ((K1 - 1) // 2), C_IN), jnp.bfloat16),
            pltpu.VMEM((B, T + 2 * maxpad, C_HID), jnp.bfloat16),
        ],
    )(xb, w1, wr, b_all, g_all, be_all)

    # Required NCHW layout to match torch: cheap XLA transpose on ~0.6 MB.
    return jnp.transpose(out, (0, 2, 1))[..., None]            # (B, 256, 298, 1)


def ref_forward(x, params):
    """Pure-JAX (lax.conv) reference mirroring the PyTorch module, with the
    same mixed-precision policy as the kernel (bf16 conv operands, f32
    accumulation, f32 BatchNorm/ReLU)."""
    h = jnp.transpose(x, (0, 2, 1))[:, :, :, None]             # (B, 512, T, 1)
    for (w, b, gamma, beta, d) in params:
        K = w.shape[0]
        wt = jnp.transpose(w, (2, 1, 0))[:, :, :, None]        # OIHW, bf16
        pad = d * (K - 1) // 2
        h = lax.conv_general_dilated(
            h.astype(jnp.bfloat16), wt,
            window_strides=(1, 1), padding=((pad, pad), (0, 0)),
            rhs_dilation=(d, 1),
            dimension_numbers=("NCHW", "OIHW", "NCHW"),
            preferred_element_type=jnp.float32)
        h = h + b.reshape(1, -1, 1, 1)
        mean = jnp.mean(h, axis=(0, 2, 3), keepdims=True)
        var = jnp.mean(jnp.square(h - mean), axis=(0, 2, 3), keepdims=True)
        h = (h - mean) * lax.rsqrt(var + 1e-5)
        h = h * gamma.reshape(1, -1, 1, 1) + beta.reshape(1, -1, 1, 1)
        h = jnp.maximum(h, 0.0)
    T = h.shape[2]
    idx = np.floor(np.arange(OUT_T) * T / OUT_T).astype(np.int32)
    return h[:, :, idx, :]                                     # (B, 256, 298, 1)


if __name__ == "__main__":
    key = jax.random.PRNGKey(0)
    pkey, xkey = jax.random.split(key)
    params = init_params(pkey)

    B, T = 2, 16                     # small time axis; channels fixed at 512
    x = jax.random.normal(xkey, (B, T, C_IN), jnp.float32)

    out = jax.block_until_ready(video_model_forward(x, params))
    ref = jax.block_until_ready(ref_forward(x, params))

    assert out.shape == (B, 256, OUT_T, 1), out.shape
    # Tolerance sized for bf16 conv operands (1280-3584-deep contractions with
    # f32 accumulation) compounded over 6 BN-normalized layers; observed
    # deviations are far smaller since kernel and reference share the same
    # bf16 quantization points.
    np.testing.assert_allclose(np.asarray(out), np.asarray(ref),
                               rtol=1e-2, atol=1e-2)
    print("KERNEL_OK")
</pallas_src>

<mosaic_0001>
module attributes {stable_mosaic.version = 11 : i64} {
  func.func @_video_model_kernel(%arg0: memref<2x16x512xbf16, #tpu.memory_space<vmem>>, %arg1: memref<3584x256xbf16, #tpu.memory_space<vmem>>, %arg2: memref<5x1280x256xbf16, #tpu.memory_space<vmem>>, %arg3: memref<6x256xf32, #tpu.memory_space<vmem>>, %arg4: memref<6x256xf32, #tpu.memory_space<vmem>>, %arg5: memref<6x256xf32, #tpu.memory_space<vmem>>, %arg6: memref<2x298x256xf32, #tpu.memory_space<vmem>>, %arg7: memref<2x22x512xbf16, #tpu.memory_space<vmem>>, %arg8: memref<2x80x256xbf16, #tpu.memory_space<vmem>>) attributes {dimension_semantics = [], scalar_prefetch = 0 : i64, scratch_operands = 2 : i64, tpu.core_type = #tpu.core_type<tc>} {
    %cst = arith.constant 0.000000e+00 : bf16
    %0 = vector.broadcast %cst : bf16 to vector<2x22x512xbf16>
    %c0 = arith.constant 0 : index
    %c0_0 = arith.constant 0 : index
    %c0_1 = arith.constant 0 : index
    %1 = vector.load %arg7[%c0, %c0_0, %c0_1] : memref<2x22x512xbf16, #tpu.memory_space<vmem>>, vector<2x22x512xbf16>
    tpu.vector_store %arg7[%c0, %c0_0, %c0_1], %0 {strides = array<i32>} : memref<2x22x512xbf16, #tpu.memory_space<vmem>>, vector<2x22x512xbf16>,
    %cst_2 = arith.constant 0.000000e+00 : bf16
    %2 = vector.broadcast %cst_2 : bf16 to vector<2x80x256xbf16>
    %c0_3 = arith.constant 0 : index
    %c0_4 = arith.constant 0 : index
    %c0_5 = arith.constant 0 : index
    %3 = vector.load %arg8[%c0_3, %c0_4, %c0_5] : memref<2x80x256xbf16, #tpu.memory_space<vmem>>, vector<2x80x256xbf16>
    tpu.vector_store %arg8[%c0_3, %c0_4, %c0_5], %2 {strides = array<i32>} : memref<2x80x256xbf16, #tpu.memory_space<vmem>>, vector<2x80x256xbf16>,
    %c0_6 = arith.constant 0 : index
    %c0_7 = arith.constant 0 : index
    %c0_8 = arith.constant 0 : index
    %4 = vector.load %arg0[%c0_6, %c0_7, %c0_8] : memref<2x16x512xbf16, #tpu.memory_space<vmem>>, vector<2x16x512xbf16>
    %c0_9 = arith.constant 0 : index
    %c3 = arith.constant 3 : index
    %c0_10 = arith.constant 0 : index
    %5 = vector.load %arg7[%c0_9, %c3, %c0_10] : memref<2x22x512xbf16, #tpu.memory_space<vmem>>, vector<2x16x512xbf16>
    tpu.vector_store %arg7[%c0_9, %c3, %c0_10], %4 {strides = array<i32>} : memref<2x22x512xbf16, #tpu.memory_space<vmem>>, vector<2x16x512xbf16>,
    %c0_11 = arith.constant 0 : index
    %c0_12 = arith.constant 0 : index
    %6 = vector.load %arg1[%c0_11, %c0_12] : memref<3584x256xbf16, #tpu.memory_space<vmem>>, vector<3584x256xbf16>
    %c0_13 = arith.constant 0 : index
    %c0_14 = arith.constant 0 : index
    %c0_15 = arith.constant 0 : index
    %7 = vector.load %arg7[%c0_13, %c0_14, %c0_15] : memref<2x22x512xbf16, #tpu.memory_space<vmem>>, vector<2x16x512xbf16>
    %8 = vector.shape_cast %7 : vector<2x16x512xbf16> to vector<32x512xbf16>
    %c0_16 = arith.constant 0 : index
    %c1 = arith.constant 1 : index
    %c0_17 = arith.constant 0 : index
    %9 = vector.load %arg7[%c0_16, %c1, %c0_17] : memref<2x22x512xbf16, #tpu.memory_space<vmem>>, vector<2x16x512xbf16>
    %10 = vector.shape_cast %9 : vector<2x16x512xbf16> to vector<32x512xbf16>
    %c0_18 = arith.constant 0 : index
    %c2 = arith.constant 2 : index
    %c0_19 = arith.constant 0 : index
    %11 = vector.load %arg7[%c0_18, %c2, %c0_19] : memref<2x22x512xbf16, #tpu.memory_space<vmem>>, vector<2x16x512xbf16>
    %12 = vector.shape_cast %11 : vector<2x16x512xbf16> to vector<32x512xbf16>
    %c0_20 = arith.constant 0 : index
    %c3_21 = arith.constant 3 : index
    %c0_22 = arith.constant 0 : index
    %13 = vector.load %arg7[%c0_20, %c3_21, %c0_22] : memref<2x22x512xbf16, #tpu.memory_space<vmem>>, vector<2x16x512xbf16>
    %14 = vector.shape_cast %13 : vector<2x16x512xbf16> to vector<32x512xbf16>
    %c0_23 = arith.constant 0 : index
    %c4 = arith.constant 4 : index
    %c0_24 = arith.constant 0 : index
    %15 = vector.load %arg7[%c0_23, %c4, %c0_24] : memref<2x22x512xbf16, #tpu.memory_space<vmem>>, vector<2x16x512xbf16>
    %16 = vector.shape_cast %15 : vector<2x16x512xbf16> to vector<32x512xbf16>
    %c0_25 = arith.constant 0 : index
    %c5 = arith.constant 5 : index
    %c0_26 = arith.constant 0 : index
    %17 = vector.load %arg7[%c0_25, %c5, %c0_26] : memref<2x22x512xbf16, #tpu.memory_space<vmem>>, vector<2x16x512xbf16>
    %18 = vector.shape_cast %17 : vector<2x16x512xbf16> to vector<32x512xbf16>
    %c0_27 = arith.constant 0 : index
    %c6 = arith.constant 6 : index
    %c0_28 = arith.constant 0 : index
    %19 = vector.load %arg7[%c0_27, %c6, %c0_28] : memref<2x22x512xbf16, #tpu.memory_space<vmem>>, vector<2x16x512xbf16>
    %20 = vector.shape_cast %19 : vector<2x16x512xbf16> to vector<32x512xbf16>
    %21 = tpu.concatenate %8, %10, %12, %14, %16, %18, %20 in 1 : vector<32x512xbf16>, vector<32x512xbf16>, vector<32x512xbf16>, vector<32x512xbf16>, vector<32x512xbf16>, vector<32x512xbf16>, vector<32x512xbf16> -> vector<32x3584xbf16>
    %cst_29 = arith.constant dense<0.000000e+00> : vector<32x256xf32>
    %22 = tpu.matmul %21, %6, %cst_29 {dimension_numbers = #tpu.dot_dimension_numbers<[1], [0], [0], [1], [0, 0, 1, 1], [], []>} : vector<32x3584xbf16>, vector<3584x256xbf16>, vector<32x256xf32> -> vector<32x256xf32>
    %c0_30 = arith.constant 0 : index
    %c0_31 = arith.constant 0 : index
    %23 = vector.load %arg3[%c0_30, %c0_31] : memref<6x256xf32, #tpu.memory_space<vmem>>, vector<1x256xf32>
    %24 = vector.broadcast %23 : vector<1x256xf32> to vector<32x256xf32>
    %25 = arith.addf %22, %24 : vector<32x256xf32>
    %cst_32 = arith.constant dense<0.000000e+00> : vector<256xf32>
    %26 = vector.multi_reduction <add>, %25, %cst_32 [0] : vector<32x256xf32> to vector<256xf32>
    %27 = vector.shape_cast %26 : vector<256xf32> to vector<1x256xf32>
    %cst_33 = arith.constant 3.200000e+01 : f32
    %28 = vector.broadcast %cst_33 : f32 to vector<1x256xf32>
    %29 = arith.divf %27, %28 : vector<1x256xf32>
    %30 = vector.broadcast %29 : vector<1x256xf32> to vector<32x256xf32>
    %31 = arith.subf %25, %30 : vector<32x256xf32>
    %32 = arith.mulf %31, %31 : vector<32x256xf32>
    %cst_34 = arith.constant dense<0.000000e+00> : vector<256xf32>
    %33 = vector.multi_reduction <add>, %32, %cst_34 [0] : vector<32x256xf32> to vector<256xf32>
    %34 = vector.shape_cast %33 : vector<256xf32> to vector<1x256xf32>
    %cst_35 = arith.constant 3.200000e+01 : f32
    %35 = vector.broadcast %cst_35 : f32 to vector<1x256xf32>
    %36 = arith.divf %34, %35 : vector<1x256xf32>
    %37 = vector.broadcast %29 : vector<1x256xf32> to vector<32x256xf32>
    %38 = arith.subf %25, %37 : vector<32x256xf32>
    %cst_36 = arith.constant 9.99999974E-6 : f32
    %39 = vector.broadcast %cst_36 : f32 to vector<1x256xf32>
    %40 = arith.addf %36, %39 : vector<1x256xf32>
    %41 = math.rsqrt %40 : vector<1x256xf32>
    %42 = vector.broadcast %41 : vector<1x256xf32> to vector<32x256xf32>
    %43 = arith.mulf %38, %42 : vector<32x256xf32>
    %c0_37 = arith.constant 0 : index
    %c0_38 = arith.constant 0 : index
    %44 = vector.load %arg4[%c0_37, %c0_38] : memref<6x256xf32, #tpu.memory_space<vmem>>, vector<1x256xf32>
    %45 = vector.broadcast %44 : vector<1x256xf32> to vector<32x256xf32>
    %46 = arith.mulf %43, %45 : vector<32x256xf32>
    %c0_39 = arith.constant 0 : index
    %c0_40 = arith.constant 0 : index
    %47 = vector.load %arg5[%c0_39, %c0_40] : memref<6x256xf32, #tpu.memory_space<vmem>>, vector<1x256xf32>
    %48 = vector.broadcast %47 : vector<1x256xf32> to vector<32x256xf32>
    %49 = arith.addf %46, %48 : vector<32x256xf32>
    %cst_41 = arith.constant 0.000000e+00 : f32
    %50 = vector.broadcast %cst_41 : f32 to vector<32x256xf32>
    %51 = arith.maximumf %49, %50 : vector<32x256xf32>
    %52 = vector.shape_cast %51 : vector<32x256xf32> to vector<2x16x256xf32>
    %53 = arith.truncf %52 : vector<2x16x256xf32> to vector<2x16x256xbf16>
    %c0_42 = arith.constant 0 : index
    %c32 = arith.constant 32 : index
    %c0_43 = arith.constant 0 : index
    %54 = vector.load %arg8[%c0_42, %c32, %c0_43] : memref<2x80x256xbf16, #tpu.memory_space<vmem>>, vector<2x16x256xbf16>
    tpu.vector_store %arg8[%c0_42, %c32, %c0_43], %53 {strides = array<i32>} : memref<2x80x256xbf16, #tpu.memory_space<vmem>>, vector<2x16x256xbf16>,
    %c0_44 = arith.constant 0 : index
    %c0_45 = arith.constant 0 : index
    %c0_46 = arith.constant 0 : index
    %55 = vector.load %arg2[%c0_44, %c0_45, %c0_46] : memref<5x1280x256xbf16, #tpu.memory_space<vmem>>, vector<1x1280x256xbf16>
    %56 = vector.shape_cast %55 : vector<1x1280x256xbf16> to vector<1280x256xbf16>
    %c0_47 = arith.constant 0 : index
    %c30 = arith.constant 30 : index
    %c0_48 = arith.constant 0 : index
    %57 = vector.load %arg8[%c0_47, %c30, %c0_48] : memref<2x80x256xbf16, #tpu.memory_space<vmem>>, vector<2x16x256xbf16>
    %58 = vector.shape_cast %57 : vector<2x16x256xbf16> to vector<32x256xbf16>
    %c0_49 = arith.constant 0 : index
    %c31 = arith.constant 31 : index
    %c0_50 = arith.constant 0 : index
    %59 = vector.load %arg8[%c0_49, %c31, %c0_50] : memref<2x80x256xbf16, #tpu.memory_space<vmem>>, vector<2x16x256xbf16>
    %60 = vector.shape_cast %59 : vector<2x16x256xbf16> to vector<32x256xbf16>
    %c0_51 = arith.constant 0 : index
    %c32_52 = arith.constant 32 : index
    %c0_53 = arith.constant 0 : index
    %61 = vector.load %arg8[%c0_51, %c32_52, %c0_53] : memref<2x80x256xbf16, #tpu.memory_space<vmem>>, vector<2x16x256xbf16>
    %62 = vector.shape_cast %61 : vector<2x16x256xbf16> to vector<32x256xbf16>
    %c0_54 = arith.constant 0 : index
    %c33 = arith.constant 33 : index
    %c0_55 = arith.constant 0 : index
    %63 = vector.load %arg8[%c0_54, %c33, %c0_55] : memref<2x80x256xbf16, #tpu.memory_space<vmem>>, vector<2x16x256xbf16>
    %64 = vector.shape_cast %63 : vector<2x16x256xbf16> to vector<32x256xbf16>
    %c0_56 = arith.constant 0 : index
    %c34 = arith.constant 34 : index
    %c0_57 = arith.constant 0 : index
    %65 = vector.load %arg8[%c0_56, %c34, %c0_57] : memref<2x80x256xbf16, #tpu.memory_space<vmem>>, vector<2x16x256xbf16>
    %66 = vector.shape_cast %65 : vector<2x16x256xbf16> to vector<32x256xbf16>
    %67 = tpu.concatenate %58, %60, %62, %64, %66 in 1 : vector<32x256xbf16>, vector<32x256xbf16>, vector<32x256xbf16>, vector<32x256xbf16>, vector<32x256xbf16> -> vector<32x1280xbf16>
    %cst_58 = arith.constant dense<0.000000e+00> : vector<32x256xf32>
    %68 = tpu.matmul %67, %56, %cst_58 {dimension_numbers = #tpu.dot_dimension_numbers<[1], [0], [0], [1], [0, 0, 1, 1], [], []>} : vector<32x1280xbf16>, vector<1280x256xbf16>, vector<32x256xf32> -> vector<32x256xf32>
    %c1_59 = arith.constant 1 : index
    %c0_60 = arith.constant 0 : index
    %69 = vector.load %arg3[%c1_59, %c0_60] : memref<6x256xf32, #tpu.memory_space<vmem>>, vector<1x256xf32>
    %70 = vector.broadcast %69 : vector<1x256xf32> to vector<32x256xf32>
    %71 = arith.addf %68, %70 : vector<32x256xf32>
    %cst_61 = arith.constant dense<0.000000e+00> : vector<256xf32>
    %72 = vector.multi_reduction <add>, %71, %cst_61 [0] : vector<32x256xf32> to vector<256xf32>
    %73 = vector.shape_cast %72 : vector<256xf32> to vector<1x256xf32>
    %cst_62 = arith.constant 3.200000e+01 : f32
    %74 = vector.broadcast %cst_62 : f32 to vector<1x256xf32>
    %75 = arith.divf %73, %74 : vector<1x256xf32>
    %76 = vector.broadcast %75 : vector<1x256xf32> to vector<32x256xf32>
    %77 = arith.subf %71, %76 : vector<32x256xf32>
    %78 = arith.mulf %77, %77 : vector<32x256xf32>
    %cst_63 = arith.constant dense<0.000000e+00> : vector<256xf32>
    %79 = vector.multi_reduction <add>, %78, %cst_63 [0] : vector<32x256xf32> to vector<256xf32>
    %80 = vector.shape_cast %79 : vector<256xf32> to vector<1x256xf32>
    %cst_64 = arith.constant 3.200000e+01 : f32
    %81 = vector.broadcast %cst_64 : f32 to vector<1x256xf32>
    %82 = arith.divf %80, %81 : vector<1x256xf32>
    %83 = vector.broadcast %75 : vector<1x256xf32> to vector<32x256xf32>
    %84 = arith.subf %71, %83 : vector<32x256xf32>
    %cst_65 = arith.constant 9.99999974E-6 : f32
    %85 = vector.broadcast %cst_65 : f32 to vector<1x256xf32>
    %86 = arith.addf %82, %85 : vector<1x256xf32>
    %87 = math.rsqrt %86 : vector<1x256xf32>
    %88 = vector.broadcast %87 : vector<1x256xf32> to vector<32x256xf32>
    %89 = arith.mulf %84, %88 : vector<32x256xf32>
    %c1_66 = arith.constant 1 : index
    %c0_67 = arith.constant 0 : index
    %90 = vector.load %arg4[%c1_66, %c0_67] : memref<6x256xf32, #tpu.memory_space<vmem>>, vector<1x256xf32>
    %91 = vector.broadcast %90 : vector<1x256xf32> to vector<32x256xf32>
    %92 = arith.mulf %89, %91 : vector<32x256xf32>
    %c1_68 = arith.constant 1 : index
    %c0_69 = arith.constant 0 : index
    %93 = vector.load %arg5[%c1_68, %c0_69] : memref<6x256xf32, #tpu.memory_space<vmem>>, vector<1x256xf32>
    %94 = vector.broadcast %93 : vector<1x256xf32> to vector<32x256xf32>
    %95 = arith.addf %92, %94 : vector<32x256xf32>
    %cst_70 = arith.constant 0.000000e+00 : f32
    %96 = vector.broadcast %cst_70 : f32 to vector<32x256xf32>
    %97 = arith.maximumf %95, %96 : vector<32x256xf32>
    %98 = vector.shape_cast %97 : vector<32x256xf32> to vector<2x16x256xf32>
    %99 = arith.truncf %98 : vector<2x16x256xf32> to vector<2x16x256xbf16>
    %c0_71 = arith.constant 0 : index
    %c32_72 = arith.constant 32 : index
    %c0_73 = arith.constant 0 : index
    %100 = vector.load %arg8[%c0_71, %c32_72, %c0_73] : memref<2x80x256xbf16, #tpu.memory_space<vmem>>, vector<2x16x256xbf16>
    tpu.vector_store %arg8[%c0_71, %c32_72, %c0_73], %99 {strides = array<i32>} : memref<2x80x256xbf16, #tpu.memory_space<vmem>>, vector<2x16x256xbf16>,
    %c1_74 = arith.constant 1 : index
    %c0_75 = arith.constant 0 : index
    %c0_76 = arith.constant 0 : index
    %101 = vector.load %arg2[%c1_74, %c0_75, %c0_76] : memref<5x1280x256xbf16, #tpu.memory_space<vmem>>, vector<1x1280x256xbf16>
    %102 = vector.shape_cast %101 : vector<1x1280x256xbf16> to vector<1280x256xbf16>
    %c0_77 = arith.constant 0 : index
    %c28 = arith.constant 28 : index
    %c0_78 = arith.constant 0 : index
    %103 = vector.load %arg8[%c0_77, %c28, %c0_78] : memref<2x80x256xbf16, #tpu.memory_space<vmem>>, vector<2x16x256xbf16>
    %104 = vector.shape_cast %103 : vector<2x16x256xbf16> to vector<32x256xbf16>
    %c0_79 = arith.constant 0 : index
    %c30_80 = arith.constant 30 : index
    %c0_81 = arith.constant 0 : index
    %105 = vector.load %arg8[%c0_79, %c30_80, %c0_81] : memref<2x80x256xbf16, #tpu.memory_space<vmem>>, vector<2x16x256xbf16>
    %106 = vector.shape_cast %105 : vector<2x16x256xbf16> to vector<32x256xbf16>
    %c0_82 = arith.constant 0 : index
    %c32_83 = arith.constant 32 : index
    %c0_84 = arith.constant 0 : index
    %107 = vector.load %arg8[%c0_82, %c32_83, %c0_84] : memref<2x80x256xbf16, #tpu.memory_space<vmem>>, vector<2x16x256xbf16>
    %108 = vector.shape_cast %107 : vector<2x16x256xbf16> to vector<32x256xbf16>
    %c0_85 = arith.constant 0 : index
    %c34_86 = arith.constant 34 : index
    %c0_87 = arith.constant 0 : index
    %109 = vector.load %arg8[%c0_85, %c34_86, %c0_87] : memref<2x80x256xbf16, #tpu.memory_space<vmem>>, vector<2x16x256xbf16>
    %110 = vector.shape_cast %109 : vector<2x16x256xbf16> to vector<32x256xbf16>
    %c0_88 = arith.constant 0 : index
    %c36 = arith.constant 36 : index
    %c0_89 = arith.constant 0 : index
    %111 = vector.load %arg8[%c0_88, %c36, %c0_89] : memref<2x80x256xbf16, #tpu.memory_space<vmem>>, vector<2x16x256xbf16>
    %112 = vector.shape_cast %111 : vector<2x16x256xbf16> to vector<32x256xbf16>
    %113 = tpu.concatenate %104, %106, %108, %110, %112 in 1 : vector<32x256xbf16>, vector<32x256xbf16>, vector<32x256xbf16>, vector<32x256xbf16>, vector<32x256xbf16> -> vector<32x1280xbf16>
    %cst_90 = arith.constant dense<0.000000e+00> : vector<32x256xf32>
    %114 = tpu.matmul %113, %102, %cst_90 {dimension_numbers = #tpu.dot_dimension_numbers<[1], [0], [0], [1], [0, 0, 1, 1], [], []>} : vector<32x1280xbf16>, vector<1280x256xbf16>, vector<32x256xf32> -> vector<32x256xf32>
    %c2_91 = arith.constant 2 : index
    %c0_92 = arith.constant 0 : index
    %115 = vector.load %arg3[%c2_91, %c0_92] : memref<6x256xf32, #tpu.memory_space<vmem>>, vector<1x256xf32>
    %116 = vector.broadcast %115 : vector<1x256xf32> to vector<32x256xf32>
    %117 = arith.addf %114, %116 : vector<32x256xf32>
    %cst_93 = arith.constant dense<0.000000e+00> : vector<256xf32>
    %118 = vector.multi_reduction <add>, %117, %cst_93 [0] : vector<32x256xf32> to vector<256xf32>
    %119 = vector.shape_cast %118 : vector<256xf32> to vector<1x256xf32>
    %cst_94 = arith.constant 3.200000e+01 : f32
    %120 = vector.broadcast %cst_94 : f32 to vector<1x256xf32>
    %121 = arith.divf %119, %120 : vector<1x256xf32>
    %122 = vector.broadcast %121 : vector<1x256xf32> to vector<32x256xf32>
    %123 = arith.subf %117, %122 : vector<32x256xf32>
    %124 = arith.mulf %123, %123 : vector<32x256xf32>
    %cst_95 = arith.constant dense<0.000000e+00> : vector<256xf32>
    %125 = vector.multi_reduction <add>, %124, %cst_95 [0] : vector<32x256xf32> to vector<256xf32>
    %126 = vector.shape_cast %125 : vector<256xf32> to vector<1x256xf32>
    %cst_96 = arith.constant 3.200000e+01 : f32
    %127 = vector.broadcast %cst_96 : f32 to vector<1x256xf32>
    %128 = arith.divf %126, %127 : vector<1x256xf32>
    %129 = vector.broadcast %121 : vector<1x256xf32> to vector<32x256xf32>
    %130 = arith.subf %117, %129 : vector<32x256xf32>
    %cst_97 = arith.constant 9.99999974E-6 : f32
    %131 = vector.broadcast %cst_97 : f32 to vector<1x256xf32>
    %132 = arith.addf %128, %131 : vector<1x256xf32>
    %133 = math.rsqrt %132 : vector<1x256xf32>
    %134 = vector.broadcast %133 : vector<1x256xf32> to vector<32x256xf32>
    %135 = arith.mulf %130, %134 : vector<32x256xf32>
    %c2_98 = arith.constant 2 : index
    %c0_99 = arith.constant 0 : index
    %136 = vector.load %arg4[%c2_98, %c0_99] : memref<6x256xf32, #tpu.memory_space<vmem>>, vector<1x256xf32>
    %137 = vector.broadcast %136 : vector<1x256xf32> to vector<32x256xf32>
    %138 = arith.mulf %135, %137 : vector<32x256xf32>
    %c2_100 = arith.constant 2 : index
    %c0_101 = arith.constant 0 : index
    %139 = vector.load %arg5[%c2_100, %c0_101] : memref<6x256xf32, #tpu.memory_space<vmem>>, vector<1x256xf32>
    %140 = vector.broadcast %139 : vector<1x256xf32> to vector<32x256xf32>
    %141 = arith.addf %138, %140 : vector<32x256xf32>
    %cst_102 = arith.constant 0.000000e+00 : f32
    %142 = vector.broadcast %cst_102 : f32 to vector<32x256xf32>
    %143 = arith.maximumf %141, %142 : vector<32x256xf32>
    %144 = vector.shape_cast %143 : vector<32x256xf32> to vector<2x16x256xf32>
    %145 = arith.truncf %144 : vector<2x16x256xf32> to vector<2x16x256xbf16>
    %c0_103 = arith.constant 0 : index
    %c32_104 = arith.constant 32 : index
    %c0_105 = arith.constant 0 : index
    %146 = vector.load %arg8[%c0_103, %c32_104, %c0_105] : memref<2x80x256xbf16, #tpu.memory_space<vmem>>, vector<2x16x256xbf16>
    tpu.vector_store %arg8[%c0_103, %c32_104, %c0_105], %145 {strides = array<i32>} : memref<2x80x256xbf16, #tpu.memory_space<vmem>>, vector<2x16x256xbf16>,
    %c2_106 = arith.constant 2 : index
    %c0_107 = arith.constant 0 : index
    %c0_108 = arith.constant 0 : index
    %147 = vector.load %arg2[%c2_106, %c0_107, %c0_108] : memref<5x1280x256xbf16, #tpu.memory_space<vmem>>, vector<1x1280x256xbf16>
    %148 = vector.shape_cast %147 : vector<1x1280x256xbf16> to vector<1280x256xbf16>
    %c0_109 = arith.constant 0 : index
    %c24 = arith.constant 24 : index
    %c0_110 = arith.constant 0 : index
    %149 = vector.load %arg8[%c0_109, %c24, %c0_110] : memref<2x80x256xbf16, #tpu.memory_space<vmem>>, vector<2x16x256xbf16>
    %150 = vector.shape_cast %149 : vector<2x16x256xbf16> to vector<32x256xbf16>
    %c0_111 = arith.constant 0 : index
    %c28_112 = arith.constant 28 : index
    %c0_113 = arith.constant 0 : index
    %151 = vector.load %arg8[%c0_111, %c28_112, %c0_113] : memref<2x80x256xbf16, #tpu.memory_space<vmem>>, vector<2x16x256xbf16>
    %152 = vector.shape_cast %151 : vector<2x16x256xbf16> to vector<32x256xbf16>
    %c0_114 = arith.constant 0 : index
    %c32_115 = arith.constant 32 : index
    %c0_116 = arith.constant 0 : index
    %153 = vector.load %arg8[%c0_114, %c32_115, %c0_116] : memref<2x80x256xbf16, #tpu.memory_space<vmem>>, vector<2x16x256xbf16>
    %154 = vector.shape_cast %153 : vector<2x16x256xbf16> to vector<32x256xbf16>
    %c0_117 = arith.constant 0 : index
    %c36_118 = arith.constant 36 : index
    %c0_119 = arith.constant 0 : index
    %155 = vector.load %arg8[%c0_117, %c36_118, %c0_119] : memref<2x80x256xbf16, #tpu.memory_space<vmem>>, vector<2x16x256xbf16>
    %156 = vector.shape_cast %155 : vector<2x16x256xbf16> to vector<32x256xbf16>
    %c0_120 = arith.constant 0 : index
    %c40 = arith.constant 40 : index
    %c0_121 = arith.constant 0 : index
    %157 = vector.load %arg8[%c0_120, %c40, %c0_121] : memref<2x80x256xbf16, #tpu.memory_space<vmem>>, vector<2x16x256xbf16>
    %158 = vector.shape_cast %157 : vector<2x16x256xbf16> to vector<32x256xbf16>
    %159 = tpu.concatenate %150, %152, %154, %156, %158 in 1 : vector<32x256xbf16>, vector<32x256xbf16>, vector<32x256xbf16>, vector<32x256xbf16>, vector<32x256xbf16> -> vector<32x1280xbf16>
    %cst_122 = arith.constant dense<0.000000e+00> : vector<32x256xf32>
    %160 = tpu.matmul %159, %148, %cst_122 {dimension_numbers = #tpu.dot_dimension_numbers<[1], [0], [0], [1], [0, 0, 1, 1], [], []>} : vector<32x1280xbf16>, vector<1280x256xbf16>, vector<32x256xf32> -> vector<32x256xf32>
    %c3_123 = arith.constant 3 : index
    %c0_124 = arith.constant 0 : index
    %161 = vector.load %arg3[%c3_123, %c0_124] : memref<6x256xf32, #tpu.memory_space<vmem>>, vector<1x256xf32>
    %162 = vector.broadcast %161 : vector<1x256xf32> to vector<32x256xf32>
    %163 = arith.addf %160, %162 : vector<32x256xf32>
    %cst_125 = arith.constant dense<0.000000e+00> : vector<256xf32>
    %164 = vector.multi_reduction <add>, %163, %cst_125 [0] : vector<32x256xf32> to vector<256xf32>
    %165 = vector.shape_cast %164 : vector<256xf32> to vector<1x256xf32>
    %cst_126 = arith.constant 3.200000e+01 : f32
    %166 = vector.broadcast %cst_126 : f32 to vector<1x256xf32>
    %167 = arith.divf %165, %166 : vector<1x256xf32>
    %168 = vector.broadcast %167 : vector<1x256xf32> to vector<32x256xf32>
    %169 = arith.subf %163, %168 : vector<32x256xf32>
    %170 = arith.mulf %169, %169 : vector<32x256xf32>
    %cst_127 = arith.constant dense<0.000000e+00> : vector<256xf32>
    %171 = vector.multi_reduction <add>, %170, %cst_127 [0] : vector<32x256xf32> to vector<256xf32>
    %172 = vector.shape_cast %171 : vector<256xf32> to vector<1x256xf32>
    %cst_128 = arith.constant 3.200000e+01 : f32
    %173 = vector.broadcast %cst_128 : f32 to vector<1x256xf32>
    %174 = arith.divf %172, %173 : vector<1x256xf32>
    %175 = vector.broadcast %167 : vector<1x256xf32> to vector<32x256xf32>
    %176 = arith.subf %163, %175 : vector<32x256xf32>
    %cst_129 = arith.constant 9.99999974E-6 : f32
    %177 = vector.broadcast %cst_129 : f32 to vector<1x256xf32>
    %178 = arith.addf %174, %177 : vector<1x256xf32>
    %179 = math.rsqrt %178 : vector<1x256xf32>
    %180 = vector.broadcast %179 : vector<1x256xf32> to vector<32x256xf32>
    %181 = arith.mulf %176, %180 : vector<32x256xf32>
    %c3_130 = arith.constant 3 : index
    %c0_131 = arith.constant 0 : index
    %182 = vector.load %arg4[%c3_130, %c0_131] : memref<6x256xf32, #tpu.memory_space<vmem>>, vector<1x256xf32>
    %183 = vector.broadcast %182 : vector<1x256xf32> to vector<32x256xf32>
    %184 = arith.mulf %181, %183 : vector<32x256xf32>
    %c3_132 = arith.constant 3 : index
    %c0_133 = arith.constant 0 : index
    %185 = vector.load %arg5[%c3_132, %c0_133] : memref<6x256xf32, #tpu.memory_space<vmem>>, vector<1x256xf32>
    %186 = vector.broadcast %185 : vector<1x256xf32> to vector<32x256xf32>
    %187 = arith.addf %184, %186 : vector<32x256xf32>
    %cst_134 = arith.constant 0.000000e+00 : f32
    %188 = vector.broadcast %cst_134 : f32 to vector<32x256xf32>
    %189 = arith.maximumf %187, %188 : vector<32x256xf32>
    %190 = vector.shape_cast %189 : vector<32x256xf32> to vector<2x16x256xf32>
    %191 = arith.truncf %190 : vector<2x16x256xf32> to vector<2x16x256xbf16>
    %c0_135 = arith.constant 0 : index
    %c32_136 = arith.constant 32 : index
    %c0_137 = arith.constant 0 : index
    %192 = vector.load %arg8[%c0_135, %c32_136, %c0_137] : memref<2x80x256xbf16, #tpu.memory_space<vmem>>, vector<2x16x256xbf16>
    tpu.vector_store %arg8[%c0_135, %c32_136, %c0_137], %191 {strides = array<i32>} : memref<2x80x256xbf16, #tpu.memory_space<vmem>>, vector<2x16x256xbf16>,
    %c3_138 = arith.constant 3 : index
    %c0_139 = arith.constant 0 : index
    %c0_140 = arith.constant 0 : index
    %193 = vector.load %arg2[%c3_138, %c0_139, %c0_140] : memref<5x1280x256xbf16, #tpu.memory_space<vmem>>, vector<1x1280x256xbf16>
    %194 = vector.shape_cast %193 : vector<1x1280x256xbf16> to vector<1280x256xbf16>
    %c0_141 = arith.constant 0 : index
    %c16 = arith.constant 16 : index
    %c0_142 = arith.constant 0 : index
    %195 = vector.load %arg8[%c0_141, %c16, %c0_142] : memref<2x80x256xbf16, #tpu.memory_space<vmem>>, vector<2x16x256xbf16>
    %196 = vector.shape_cast %195 : vector<2x16x256xbf16> to vector<32x256xbf16>
    %c0_143 = arith.constant 0 : index
    %c24_144 = arith.constant 24 : index
    %c0_145 = arith.constant 0 : index
    %197 = vector.load %arg8[%c0_143, %c24_144, %c0_145] : memref<2x80x256xbf16, #tpu.memory_space<vmem>>, vector<2x16x256xbf16>
    %198 = vector.shape_cast %197 : vector<2x16x256xbf16> to vector<32x256xbf16>
    %c0_146 = arith.constant 0 : index
    %c32_147 = arith.constant 32 : index
    %c0_148 = arith.constant 0 : index
    %199 = vector.load %arg8[%c0_146, %c32_147, %c0_148] : memref<2x80x256xbf16, #tpu.memory_space<vmem>>, vector<2x16x256xbf16>
    %200 = vector.shape_cast %199 : vector<2x16x256xbf16> to vector<32x256xbf16>
    %c0_149 = arith.constant 0 : index
    %c40_150 = arith.constant 40 : index
    %c0_151 = arith.constant 0 : index
    %201 = vector.load %arg8[%c0_149, %c40_150, %c0_151] : memref<2x80x256xbf16, #tpu.memory_space<vmem>>, vector<2x16x256xbf16>
    %202 = vector.shape_cast %201 : vector<2x16x256xbf16> to vector<32x256xbf16>
    %c0_152 = arith.constant 0 : index
    %c48 = arith.constant 48 : index
    %c0_153 = arith.constant 0 : index
    %203 = vector.load %arg8[%c0_152, %c48, %c0_153] : memref<2x80x256xbf16, #tpu.memory_space<vmem>>, vector<2x16x256xbf16>
    %204 = vector.shape_cast %203 : vector<2x16x256xbf16> to vector<32x256xbf16>
    %205 = tpu.concatenate %196, %198, %200, %202, %204 in 1 : vector<32x256xbf16>, vector<32x256xbf16>, vector<32x256xbf16>, vector<32x256xbf16>, vector<32x256xbf16> -> vector<32x1280xbf16>
    %cst_154 = arith.constant dense<0.000000e+00> : vector<32x256xf32>
    %206 = tpu.matmul %205, %194, %cst_154 {dimension_numbers = #tpu.dot_dimension_numbers<[1], [0], [0], [1], [0, 0, 1, 1], [], []>} : vector<32x1280xbf16>, vector<1280x256xbf16>, vector<32x256xf32> -> vector<32x256xf32>
    %c4_155 = arith.constant 4 : index
    %c0_156 = arith.constant 0 : index
    %207 = vector.load %arg3[%c4_155, %c0_156] : memref<6x256xf32, #tpu.memory_space<vmem>>, vector<1x256xf32>
    %208 = vector.broadcast %207 : vector<1x256xf32> to vector<32x256xf32>
    %209 = arith.addf %206, %208 : vector<32x256xf32>
    %cst_157 = arith.constant dense<0.000000e+00> : vector<256xf32>
    %210 = vector.multi_reduction <add>, %209, %cst_157 [0] : vector<32x256xf32> to vector<256xf32>
    %211 = vector.shape_cast %210 : vector<256xf32> to vector<1x256xf32>
    %cst_158 = arith.constant 3.200000e+01 : f32
    %212 = vector.broadcast %cst_158 : f32 to vector<1x256xf32>
    %213 = arith.divf %211, %212 : vector<1x256xf32>
    %214 = vector.broadcast %213 : vector<1x256xf32> to vector<32x256xf32>
    %215 = arith.subf %209, %214 : vector<32x256xf32>
    %216 = arith.mulf %215, %215 : vector<32x256xf32>
    %cst_159 = arith.constant dense<0.000000e+00> : vector<256xf32>
    %217 = vector.multi_reduction <add>, %216, %cst_159 [0] : vector<32x256xf32> to vector<256xf32>
    %218 = vector.shape_cast %217 : vector<256xf32> to vector<1x256xf32>
    %cst_160 = arith.constant 3.200000e+01 : f32
    %219 = vector.broadcast %cst_160 : f32 to vector<1x256xf32>
    %220 = arith.divf %218, %219 : vector<1x256xf32>
    %221 = vector.broadcast %213 : vector<1x256xf32> to vector<32x256xf32>
    %222 = arith.subf %209, %221 : vector<32x256xf32>
    %cst_161 = arith.constant 9.99999974E-6 : f32
    %223 = vector.broadcast %cst_161 : f32 to vector<1x256xf32>
    %224 = arith.addf %220, %223 : vector<1x256xf32>
    %225 = math.rsqrt %224 : vector<1x256xf32>
    %226 = vector.broadcast %225 : vector<1x256xf32> to vector<32x256xf32>
    %227 = arith.mulf %222, %226 : vector<32x256xf32>
    %c4_162 = arith.constant 4 : index
    %c0_163 = arith.constant 0 : index
    %228 = vector.load %arg4[%c4_162, %c0_163] : memref<6x256xf32, #tpu.memory_space<vmem>>, vector<1x256xf32>
    %229 = vector.broadcast %228 : vector<1x256xf32> to vector<32x256xf32>
    %230 = arith.mulf %227, %229 : vector<32x256xf32>
    %c4_164 = arith.constant 4 : index
    %c0_165 = arith.constant 0 : index
    %231 = vector.load %arg5[%c4_164, %c0_165] : memref<6x256xf32, #tpu.memory_space<vmem>>, vector<1x256xf32>
    %232 = vector.broadcast %231 : vector<1x256xf32> to vector<32x256xf32>
    %233 = arith.addf %230, %232 : vector<32x256xf32>
    %cst_166 = arith.constant 0.000000e+00 : f32
    %234 = vector.broadcast %cst_166 : f32 to vector<32x256xf32>
    %235 = arith.maximumf %233, %234 : vector<32x256xf32>
    %236 = vector.shape_cast %235 : vector<32x256xf32> to vector<2x16x256xf32>
    %237 = arith.truncf %236 : vector<2x16x256xf32> to vector<2x16x256xbf16>
    %c0_167 = arith.constant 0 : index
    %c32_168 = arith.constant 32 : index
    %c0_169 = arith.constant 0 : index
    %238 = vector.load %arg8[%c0_167, %c32_168, %c0_169] : memref<2x80x256xbf16, #tpu.memory_space<vmem>>, vector<2x16x256xbf16>
    tpu.vector_store %arg8[%c0_167, %c32_168, %c0_169], %237 {strides = array<i32>} : memref<2x80x256xbf16, #tpu.memory_space<vmem>>, vector<2x16x256xbf16>,
    %c4_170 = arith.constant 4 : index
    %c0_171 = arith.constant 0 : index
    %c0_172 = arith.constant 0 : index
    %239 = vector.load %arg2[%c4_170, %c0_171, %c0_172] : memref<5x1280x256xbf16, #tpu.memory_space<vmem>>, vector<1x1280x256xbf16>
    %240 = vector.shape_cast %239 : vector<1x1280x256xbf16> to vector<1280x256xbf16>
    %c0_173 = arith.constant 0 : index
    %c0_174 = arith.constant 0 : index
    %c0_175 = arith.constant 0 : index
    %241 = vector.load %arg8[%c0_173, %c0_174, %c0_175] : memref<2x80x256xbf16, #tpu.memory_space<vmem>>, vector<2x16x256xbf16>
    %242 = vector.shape_cast %241 : vector<2x16x256xbf16> to vector<32x256xbf16>
    %c0_176 = arith.constant 0 : index
    %c16_177 = arith.constant 16 : index
    %c0_178 = arith.constant 0 : index
    %243 = vector.load %arg8[%c0_176, %c16_177, %c0_178] : memref<2x80x256xbf16, #tpu.memory_space<vmem>>, vector<2x16x256xbf16>
    %244 = vector.shape_cast %243 : vector<2x16x256xbf16> to vector<32x256xbf16>
    %c0_179 = arith.constant 0 : index
    %c32_180 = arith.constant 32 : index
    %c0_181 = arith.constant 0 : index
    %245 = vector.load %arg8[%c0_179, %c32_180, %c0_181] : memref<2x80x256xbf16, #tpu.memory_space<vmem>>, vector<2x16x256xbf16>
    %246 = vector.shape_cast %245 : vector<2x16x256xbf16> to vector<32x256xbf16>
    %c0_182 = arith.constant 0 : index
    %c48_183 = arith.constant 48 : index
    %c0_184 = arith.constant 0 : index
    %247 = vector.load %arg8[%c0_182, %c48_183, %c0_184] : memref<2x80x256xbf16, #tpu.memory_space<vmem>>, vector<2x16x256xbf16>
    %248 = vector.shape_cast %247 : vector<2x16x256xbf16> to vector<32x256xbf16>
    %c0_185 = arith.constant 0 : index
    %c64 = arith.constant 64 : index
    %c0_186 = arith.constant 0 : index
    %249 = vector.load %arg8[%c0_185, %c64, %c0_186] : memref<2x80x256xbf16, #tpu.memory_space<vmem>>, vector<2x16x256xbf16>
    %250 = vector.shape_cast %249 : vector<2x16x256xbf16> to vector<32x256xbf16>
    %251 = tpu.concatenate %242, %244, %246, %248, %250 in 1 : vector<32x256xbf16>, vector<32x256xbf16>, vector<32x256xbf16>, vector<32x256xbf16>, vector<32x256xbf16> -> vector<32x1280xbf16>
    %cst_187 = arith.constant dense<0.000000e+00> : vector<32x256xf32>
    %252 = tpu.matmul %251, %240, %cst_187 {dimension_numbers = #tpu.dot_dimension_numbers<[1], [0], [0], [1], [0, 0, 1, 1], [], []>} : vector<32x1280xbf16>, vector<1280x256xbf16>, vector<32x256xf32> -> vector<32x256xf32>
    %c5_188 = arith.constant 5 : index
    %c0_189 = arith.constant 0 : index
    %253 = vector.load %arg3[%c5_188, %c0_189] : memref<6x256xf32, #tpu.memory_space<vmem>>, vector<1x256xf32>
    %254 = vector.broadcast %253 : vector<1x256xf32> to vector<32x256xf32>
    %255 = arith.addf %252, %254 : vector<32x256xf32>
    %cst_190 = arith.constant dense<0.000000e+00> : vector<256xf32>
    %256 = vector.multi_reduction <add>, %255, %cst_190 [0] : vector<32x256xf32> to vector<256xf32>
    %257 = vector.shape_cast %256 : vector<256xf32> to vector<1x256xf32>
    %cst_191 = arith.constant 3.200000e+01 : f32
    %258 = vector.broadcast %cst_191 : f32 to vector<1x256xf32>
    %259 = arith.divf %257, %258 : vector<1x256xf32>
    %260 = vector.broadcast %259 : vector<1x256xf32> to vector<32x256xf32>
    %261 = arith.subf %255, %260 : vector<32x256xf32>
    %262 = arith.mulf %261, %261 : vector<32x256xf32>
    %cst_192 = arith.constant dense<0.000000e+00> : vector<256xf32>
    %263 = vector.multi_reduction <add>, %262, %cst_192 [0] : vector<32x256xf32> to vector<256xf32>
    %264 = vector.shape_cast %263 : vector<256xf32> to vector<1x256xf32>
    %cst_193 = arith.constant 3.200000e+01 : f32
    %265 = vector.broadcast %cst_193 : f32 to vector<1x256xf32>
    %266 = arith.divf %264, %265 : vector<1x256xf32>
    %267 = vector.broadcast %259 : vector<1x256xf32> to vector<32x256xf32>
    %268 = arith.subf %255, %267 : vector<32x256xf32>
    %cst_194 = arith.constant 9.99999974E-6 : f32
    %269 = vector.broadcast %cst_194 : f32 to vector<1x256xf32>
    %270 = arith.addf %266, %269 : vector<1x256xf32>
    %271 = math.rsqrt %270 : vector<1x256xf32>
    %272 = vector.broadcast %271 : vector<1x256xf32> to vector<32x256xf32>
    %273 = arith.mulf %268, %272 : vector<32x256xf32>
    %c5_195 = arith.constant 5 : index
    %c0_196 = arith.constant 0 : index
    %274 = vector.load %arg4[%c5_195, %c0_196] : memref<6x256xf32, #tpu.memory_space<vmem>>, vector<1x256xf32>
    %275 = vector.broadcast %274 : vector<1x256xf32> to vector<32x256xf32>
    %276 = arith.mulf %273, %275 : vector<32x256xf32>
    %c5_197 = arith.constant 5 : index
    %c0_198 = arith.constant 0 : index
    %277 = vector.load %arg5[%c5_197, %c0_198] : memref<6x256xf32, #tpu.memory_space<vmem>>, vector<1x256xf32>
    %278 = vector.broadcast %277 : vector<1x256xf32> to vector<32x256xf32>
    %279 = arith.addf %276, %278 : vector<32x256xf32>
    %cst_199 = arith.constant 0.000000e+00 : f32
    %280 = vector.broadcast %cst_199 : f32 to vector<32x256xf32>
    %281 = arith.maximumf %279, %280 : vector<32x256xf32>
    %282 = vector.shape_cast %281 : vector<32x256xf32> to vector<2x16x256xf32>
    %283 = vector.extract_strided_slice %282 {offsets = [0, 0, 0], sizes = [2, 1, 256], strides = [1, 1, 1]} : vector<2x16x256xf32> to vector<2x1x256xf32>
    %284 = vector.shape_cast %283 : vector<2x1x256xf32> to vector<2x1x256xf32>
    %285 = vector.broadcast %284 : vector<2x1x256xf32> to vector<2x19x256xf32>
    %c0_200 = arith.constant 0 : index
    %c0_201 = arith.constant 0 : index
    %c0_202 = arith.constant 0 : index
    %286 = vector.load %arg6[%c0_200, %c0_201, %c0_202] : memref<2x298x256xf32, #tpu.memory_space<vmem>>, vector<2x19x256xf32>
    tpu.vector_store %arg6[%c0_200, %c0_201, %c0_202], %285 {strides = array<i32>} : memref<2x298x256xf32, #tpu.memory_space<vmem>>, vector<2x19x256xf32>,
    %287 = vector.extract_strided_slice %282 {offsets = [0, 1, 0], sizes = [2, 1, 256], strides = [1, 1, 1]} : vector<2x16x256xf32> to vector<2x1x256xf32>
    %288 = vector.shape_cast %287 : vector<2x1x256xf32> to vector<2x1x256xf32>
    %289 = vector.broadcast %288 : vector<2x1x256xf32> to vector<2x19x256xf32>
    %c0_203 = arith.constant 0 : index
    %c19 = arith.constant 19 : index
    %c0_204 = arith.constant 0 : index
    %290 = vector.load %arg6[%c0_203, %c19, %c0_204] : memref<2x298x256xf32, #tpu.memory_space<vmem>>, vector<2x19x256xf32>
    tpu.vector_store %arg6[%c0_203, %c19, %c0_204], %289 {strides = array<i32>} : memref<2x298x256xf32, #tpu.memory_space<vmem>>, vector<2x19x256xf32>,
    %291 = vector.extract_strided_slice %282 {offsets = [0, 2, 0], sizes = [2, 1, 256], strides = [1, 1, 1]} : vector<2x16x256xf32> to vector<2x1x256xf32>
    %292 = vector.shape_cast %291 : vector<2x1x256xf32> to vector<2x1x256xf32>
    %293 = vector.broadcast %292 : vector<2x1x256xf32> to vector<2x18x256xf32>
    %c0_205 = arith.constant 0 : index
    %c38 = arith.constant 38 : index
    %c0_206 = arith.constant 0 : index
    %294 = vector.load %arg6[%c0_205, %c38, %c0_206] : memref<2x298x256xf32, #tpu.memory_space<vmem>>, vector<2x18x256xf32>
    tpu.vector_store %arg6[%c0_205, %c38, %c0_206], %293 {strides = array<i32>} : memref<2x298x256xf32, #tpu.memory_space<vmem>>, vector<2x18x256xf32>,
    %295 = vector.extract_strided_slice %282 {offsets = [0, 3, 0], sizes = [2, 1, 256], strides = [1, 1, 1]} : vector<2x16x256xf32> to vector<2x1x256xf32>
    %296 = vector.shape_cast %295 : vector<2x1x256xf32> to vector<2x1x256xf32>
    %297 = vector.broadcast %296 : vector<2x1x256xf32> to vector<2x19x256xf32>
    %c0_207 = arith.constant 0 : index
    %c56 = arith.constant 56 : index
    %c0_208 = arith.constant 0 : index
    %298 = vector.load %arg6[%c0_207, %c56, %c0_208] : memref<2x298x256xf32, #tpu.memory_space<vmem>>, vector<2x19x256xf32>
    tpu.vector_store %arg6[%c0_207, %c56, %c0_208], %297 {strides = array<i32>} : memref<2x298x256xf32, #tpu.memory_space<vmem>>, vector<2x19x256xf32>,
    %299 = vector.extract_strided_slice %282 {offsets = [0, 4, 0], sizes = [2, 1, 256], strides = [1, 1, 1]} : vector<2x16x256xf32> to vector<2x1x256xf32>
    %300 = vector.shape_cast %299 : vector<2x1x256xf32> to vector<2x1x256xf32>
    %301 = vector.broadcast %300 : vector<2x1x256xf32> to vector<2x19x256xf32>
    %c0_209 = arith.constant 0 : index
    %c75 = arith.constant 75 : index
    %c0_210 = arith.constant 0 : index
    %302 = vector.load %arg6[%c0_209, %c75, %c0_210] : memref<2x298x256xf32, #tpu.memory_space<vmem>>, vector<2x19x256xf32>
    tpu.vector_store %arg6[%c0_209, %c75, %c0_210], %301 {strides = array<i32>} : memref<2x298x256xf32, #tpu.memory_space<vmem>>, vector<2x19x256xf32>,
    %303 = vector.extract_strided_slice %282 {offsets = [0, 5, 0], sizes = [2, 1, 256], strides = [1, 1, 1]} : vector<2x16x256xf32> to vector<2x1x256xf32>
    %304 = vector.shape_cast %303 : vector<2x1x256xf32> to vector<2x1x256xf32>
    %305 = vector.broadcast %304 : vector<2x1x256xf32> to vector<2x18x256xf32>
    %c0_211 = arith.constant 0 : index
    %c94 = arith.constant 94 : index
    %c0_212 = arith.constant 0 : index
    %306 = vector.load %arg6[%c0_211, %c94, %c0_212] : memref<2x298x256xf32, #tpu.memory_space<vmem>>, vector<2x18x256xf32>
    tpu.vector_store %arg6[%c0_211, %c94, %c0_212], %305 {strides = array<i32>} : memref<2x298x256xf32, #tpu.memory_space<vmem>>, vector<2x18x256xf32>,
    %307 = vector.extract_strided_slice %282 {offsets = [0, 6, 0], sizes = [2, 1, 256], strides = [1, 1, 1]} : vector<2x16x256xf32> to vector<2x1x256xf32>
    %308 = vector.shape_cast %307 : vector<2x1x256xf32> to vector<2x1x256xf32>
    %309 = vector.broadcast %308 : vector<2x1x256xf32> to vector<2x19x256xf32>
    %c0_213 = arith.constant 0 : index
    %c112 = arith.constant 112 : index
    %c0_214 = arith.constant 0 : index
    %310 = vector.load %arg6[%c0_213, %c112, %c0_214] : memref<2x298x256xf32, #tpu.memory_space<vmem>>, vector<2x19x256xf32>
    tpu.vector_store %arg6[%c0_213, %c112, %c0_214], %309 {strides = array<i32>} : memref<2x298x256xf32, #tpu.memory_space<vmem>>, vector<2x19x256xf32>,
    %311 = vector.extract_strided_slice %282 {offsets = [0, 7, 0], sizes = [2, 1, 256], strides = [1, 1, 1]} : vector<2x16x256xf32> to vector<2x1x256xf32>
    %312 = vector.shape_cast %311 : vector<2x1x256xf32> to vector<2x1x256xf32>
    %313 = vector.broadcast %312 : vector<2x1x256xf32> to vector<2x18x256xf32>
    %c0_215 = arith.constant 0 : index
    %c131 = arith.constant 131 : index
    %c0_216 = arith.constant 0 : index
    %314 = vector.load %arg6[%c0_215, %c131, %c0_216] : memref<2x298x256xf32, #tpu.memory_space<vmem>>, vector<2x18x256xf32>
    tpu.vector_store %arg6[%c0_215, %c131, %c0_216], %313 {strides = array<i32>} : memref<2x298x256xf32, #tpu.memory_space<vmem>>, vector<2x18x256xf32>,
    %315 = vector.extract_strided_slice %282 {offsets = [0, 8, 0], sizes = [2, 1, 256], strides = [1, 1, 1]} : vector<2x16x256xf32> to vector<2x1x256xf32>
    %316 = vector.shape_cast %315 : vector<2x1x256xf32> to vector<2x1x256xf32>
    %317 = vector.broadcast %316 : vector<2x1x256xf32> to vector<2x19x256xf32>
    %c0_217 = arith.constant 0 : index
    %c149 = arith.constant 149 : index
    %c0_218 = arith.constant 0 : index
    %318 = vector.load %arg6[%c0_217, %c149, %c0_218] : memref<2x298x256xf32, #tpu.memory_space<vmem>>, vector<2x19x256xf32>
    tpu.vector_store %arg6[%c0_217, %c149, %c0_218], %317 {strides = array<i32>} : memref<2x298x256xf32, #tpu.memory_space<vmem>>, vector<2x19x256xf32>,
    %319 = vector.extract_strided_slice %282 {offsets = [0, 9, 0], sizes = [2, 1, 256], strides = [1, 1, 1]} : vector<2x16x256xf32> to vector<2x1x256xf32>
    %320 = vector.shape_cast %319 : vector<2x1x256xf32> to vector<2x1x256xf32>
    %321 = vector.broadcast %320 : vector<2x1x256xf32> to vector<2x19x256xf32>
    %c0_219 = arith.constant 0 : index
    %c168 = arith.constant 168 : index
    %c0_220 = arith.constant 0 : index
    %322 = vector.load %arg6[%c0_219, %c168, %c0_220] : memref<2x298x256xf32, #tpu.memory_space<vmem>>, vector<2x19x256xf32>
    tpu.vector_store %arg6[%c0_219, %c168, %c0_220], %321 {strides = array<i32>} : memref<2x298x256xf32, #tpu.memory_space<vmem>>, vector<2x19x256xf32>,
    %323 = vector.extract_strided_slice %282 {offsets = [0, 10, 0], sizes = [2, 1, 256], strides = [1, 1, 1]} : vector<2x16x256xf32> to vector<2x1x256xf32>
    %324 = vector.shape_cast %323 : vector<2x1x256xf32> to vector<2x1x256xf32>
    %325 = vector.broadcast %324 : vector<2x1x256xf32> to vector<2x18x256xf32>
    %c0_221 = arith.constant 0 : index
    %c187 = arith.constant 187 : index
    %c0_222 = arith.constant 0 : index
    %326 = vector.load %arg6[%c0_221, %c187, %c0_222] : memref<2x298x256xf32, #tpu.memory_space<vmem>>, vector<2x18x256xf32>
    tpu.vector_store %arg6[%c0_221, %c187, %c0_222], %325 {strides = array<i32>} : memref<2x298x256xf32, #tpu.memory_space<vmem>>, vector<2x18x256xf32>,
    %327 = vector.extract_strided_slice %282 {offsets = [0, 11, 0], sizes = [2, 1, 256], strides = [1, 1, 1]} : vector<2x16x256xf32> to vector<2x1x256xf32>
    %328 = vector.shape_cast %327 : vector<2x1x256xf32> to vector<2x1x256xf32>
    %329 = vector.broadcast %328 : vector<2x1x256xf32> to vector<2x19x256xf32>
    %c0_223 = arith.constant 0 : index
    %c205 = arith.constant 205 : index
    %c0_224 = arith.constant 0 : index
    %330 = vector.load %arg6[%c0_223, %c205, %c0_224] : memref<2x298x256xf32, #tpu.memory_space<vmem>>, vector<2x19x256xf32>
    tpu.vector_store %arg6[%c0_223, %c205, %c0_224], %329 {strides = array<i32>} : memref<2x298x256xf32, #tpu.memory_space<vmem>>, vector<2x19x256xf32>,
    %331 = vector.extract_strided_slice %282 {offsets = [0, 12, 0], sizes = [2, 1, 256], strides = [1, 1, 1]} : vector<2x16x256xf32> to vector<2x1x256xf32>
    %332 = vector.shape_cast %331 : vector<2x1x256xf32> to vector<2x1x256xf32>
    %333 = vector.broadcast %332 : vector<2x1x256xf32> to vector<2x19x256xf32>
    %c0_225 = arith.constant 0 : index
    %c224 = arith.constant 224 : index
    %c0_226 = arith.constant 0 : index
    %334 = vector.load %arg6[%c0_225, %c224, %c0_226] : memref<2x298x256xf32, #tpu.memory_space<vmem>>, vector<2x19x256xf32>
    tpu.vector_store %arg6[%c0_225, %c224, %c0_226], %333 {strides = array<i32>} : memref<2x298x256xf32, #tpu.memory_space<vmem>>, vector<2x19x256xf32>,
    %335 = vector.extract_strided_slice %282 {offsets = [0, 13, 0], sizes = [2, 1, 256], strides = [1, 1, 1]} : vector<2x16x256xf32> to vector<2x1x256xf32>
    %336 = vector.shape_cast %335 : vector<2x1x256xf32> to vector<2x1x256xf32>
    %337 = vector.broadcast %336 : vector<2x1x256xf32> to vector<2x18x256xf32>
    %c0_227 = arith.constant 0 : index
    %c243 = arith.constant 243 : index
    %c0_228 = arith.constant 0 : index
    %338 = vector.load %arg6[%c0_227, %c243, %c0_228] : memref<2x298x256xf32, #tpu.memory_space<vmem>>, vector<2x18x256xf32>
    tpu.vector_store %arg6[%c0_227, %c243, %c0_228], %337 {strides = array<i32>} : memref<2x298x256xf32, #tpu.memory_space<vmem>>, vector<2x18x256xf32>,
    %339 = vector.extract_strided_slice %282 {offsets = [0, 14, 0], sizes = [2, 1, 256], strides = [1, 1, 1]} : vector<2x16x256xf32> to vector<2x1x256xf32>
    %340 = vector.shape_cast %339 : vector<2x1x256xf32> to vector<2x1x256xf32>
    %341 = vector.broadcast %340 : vector<2x1x256xf32> to vector<2x19x256xf32>
    %c0_229 = arith.constant 0 : index
    %c261 = arith.constant 261 : index
    %c0_230 = arith.constant 0 : index
    %342 = vector.load %arg6[%c0_229, %c261, %c0_230] : memref<2x298x256xf32, #tpu.memory_space<vmem>>, vector<2x19x256xf32>
    tpu.vector_store %arg6[%c0_229, %c261, %c0_230], %341 {strides = array<i32>} : memref<2x298x256xf32, #tpu.memory_space<vmem>>, vector<2x19x256xf32>,
    %343 = vector.extract_strided_slice %282 {offsets = [0, 15, 0], sizes = [2, 1, 256], strides = [1, 1, 1]} : vector<2x16x256xf32> to vector<2x1x256xf32>
    %344 = vector.shape_cast %343 : vector<2x1x256xf32> to vector<2x1x256xf32>
    %345 = vector.broadcast %344 : vector<2x1x256xf32> to vector<2x18x256xf32>
    %c0_231 = arith.constant 0 : index
    %c280 = arith.constant 280 : index
    %c0_232 = arith.constant 0 : index
    %346 = vector.load %arg6[%c0_231, %c280, %c0_232] : memref<2x298x256xf32, #tpu.memory_space<vmem>>, vector<2x18x256xf32>
    tpu.vector_store %arg6[%c0_231, %c280, %c0_232], %345 {strides = array<i32>} : memref<2x298x256xf32, #tpu.memory_space<vmem>>, vector<2x18x256xf32>,
    return
  }
}

</mosaic_0001>

<llo_original>
// kernel: tpu_custom_call.1
$region0: #{tpu_custom_call.1}
  #allocation0 [shape = 'u32[]', space=smem, size = 0x4, offset = 0x4, fixed_abs, tag = 'smem constant byte address 0x4 - core index']
  #allocation1 [shape = 'u32[144,128]{1,0:T(1,128)}', space=vmem, size = 0x12000, scoped, tag = 'internal scratch']
  #allocation2 [shape = 'bf16[2,22,512]{2,1,0:T(8,128)(2,1)}', space=vmem, size = 0xc000, scoped, tag = 'scratch operand']
  #allocation3 [shape = 'bf16[2,80,256]{2,1,0:T(16,128)(2,1)}', space=vmem, size = 0x14000, scoped, tag = 'scratch operand']
  %s0 = inlined_call_operand.hbm [shape: bf16[2,16,512], index: 0, kind: input, shape index: {}]
  %s1 = inlined_call_operand.hbm [shape: bf16[3584,256], index: 1, kind: input, shape index: {}]
  %s2 = inlined_call_operand.hbm [shape: bf16[5,1280,256], index: 2, kind: input, shape index: {}]
  %s3 = inlined_call_operand.hbm [shape: f32[6,256], index: 3, kind: input, shape index: {}]
  %s4 = inlined_call_operand.hbm [shape: f32[6,256], index: 4, kind: input, shape index: {}]
  %s5 = inlined_call_operand.hbm [shape: f32[6,256], index: 5, kind: input, shape index: {}]
  %s6 = inlined_call_operand.vmem [shape: f32[2,298,256], index: 6, kind: output, shape index: {}]
  %s7 = sld [smem:[#allocation0]]
  $region58: #{tpu_custom_call.1} parent=0
    _
  %s9 = ssub.s32 1, %s7
  %s10 = scalar_select 0, %s9, %s7
  $region1: #{tpu_custom_call.1} parent=0
    #allocation4 [shape = 'u8[32768]{0}', space=vmem, size = 0x8000, scoped, tag = 'input window, operand 0, single buffered']
    #allocation5 [shape = 's32[1]{0}', space=sflag, size = 0x4, scoped, tag = 'scoped memory for tpu_custom_call.1']
    #allocation6 [shape = 'u8[1835008]{0}', space=vmem, size = 0x1c0000, scoped, tag = 'input window, operand 1, single buffered']
    #allocation7 [shape = 's32[1]{0}', space=sflag, size = 0x4, scoped, tag = 'scoped memory for tpu_custom_call.1']
    #allocation8 [shape = 'u8[3276800]{0}', space=vmem, size = 0x320000, scoped, tag = 'input window, operand 2, single buffered']
    #allocation9 [shape = 'u8[8192]{0}', space=vmem, size = 0x2000, scoped, tag = 'input window, operand 3, single buffered']
    #allocation10 [shape = 's32[1]{0}', space=sflag, size = 0x4, scoped, tag = 'scoped memory for tpu_custom_call.1']
    #allocation11 [shape = 'u8[8192]{0}', space=vmem, size = 0x2000, scoped, tag = 'input window, operand 4, single buffered']
    #allocation12 [shape = 'u8[8192]{0}', space=vmem, size = 0x2000, scoped, tag = 'input window, operand 5, single buffered']
    #allocation13 [shape = 's32[1]{0}', space=sflag, size = 0x4, scoped, tag = 'scoped memory for tpu_custom_call.1']
    %11 = vsyncpa [#allocation5], 0
    %12 = vsyncpa [#allocation7], 0
    %13 = vsyncpa [#allocation10], 0
    %14 = vsyncpa [#allocation13], 0
    // Predicated region
    $region2: #{tpu_custom_call.1} parent=1 // pred_check
      _
    $region3: #{tpu_custom_call.1} parent=1 // pred_check_branch
      %16 = sbr.rel (0) target = $region5
    $region4: #{tpu_custom_call.1} parent=1 // pred_region
      %s18 = ssub.s32 1024, 1024
      %19 = vsyncadd [#allocation5], %s18
      %s20 = sshll.u32 [#allocation4], 4
      %s21 = int_to_ptr.vmem [resolvable:$true] %s20
      %26 = dma.hbm_to_vmem [thread:$0]  %s0, 1024, %s21, [#allocation5], 256, 256, 16
    $region5: #{tpu_custom_call.1} parent=1 // pred_fallthru
      _
    // Predicated region
    $region6: #{tpu_custom_call.1} parent=1 // pred_check
      _
    $region7: #{tpu_custom_call.1} parent=1 // pred_check_branch
      %28 = sbr.rel (0) target = $region9
    $region8: #{tpu_custom_call.1} parent=1 // pred_region
      %s30 = ssub.s32 57344, 57344
      %31 = vsyncadd [#allocation7], %s30
      %s32 = sshll.u32 [#allocation6], 4
      %s33 = int_to_ptr.vmem [resolvable:$true] %s32
      %38 = dma.hbm_to_vmem [thread:$0]  %s1, 57344, %s33, [#allocation7], 128, 128, 8
    $region9: #{tpu_custom_call.1} parent=1 // pred_fallthru
      _
    // Predicated region
    $region10: #{tpu_custom_call.1} parent=1 // pred_check
      _
    $region11: #{tpu_custom_call.1} parent=1 // pred_check_branch
      %40 = sbr.rel (0) target = $region13
    $region12: #{tpu_custom_call.1} parent=1 // pred_region
      %s42 = ssub.s32 102400, 102400
      %43 = vsyncadd [#allocation7], %s42
      %s44 = sshll.u32 [#allocation8], 4
      %s45 = int_to_ptr.vmem [resolvable:$true] %s44
      %50 = dma.hbm_to_vmem [thread:$0]  %s2, 102400, %s45, [#allocation7], 128, 128, 8
    $region13: #{tpu_custom_call.1} parent=1 // pred_fallthru
      _
    // Predicated region
    $region14: #{tpu_custom_call.1} parent=1 // pred_check
      _
    $region15: #{tpu_custom_call.1} parent=1 // pred_check_branch
      %52 = sbr.rel (0) target = $region17
    $region16: #{tpu_custom_call.1} parent=1 // pred_region
      %s54 = ssub.s32 256, 256
      %55 = vsyncadd [#allocation10], %s54
      %s57 = sshll.u32 [#allocation9], 4
      %s58 = int_to_ptr.vmem [resolvable:$true] %s57
      %60 = dma.hbm_to_vmem [thread:$0]  %s3, 256, %s58, [#allocation10]
    $region17: #{tpu_custom_call.1} parent=1 // pred_fallthru
      _
    // Predicated region
    $region18: #{tpu_custom_call.1} parent=1 // pred_check
      _
    $region19: #{tpu_custom_call.1} parent=1 // pred_check_branch
      %62 = sbr.rel (0) target = $region21
    $region20: #{tpu_custom_call.1} parent=1 // pred_region
      %s64 = ssub.s32 256, 256
      %65 = vsyncadd [#allocation10], %s64
      %s67 = sshll.u32 [#allocation11], 4
      %s68 = int_to_ptr.vmem [resolvable:$true] %s67
      %70 = dma.hbm_to_vmem [thread:$0]  %s4, 256, %s68, [#allocation10]
    $region21: #{tpu_custom_call.1} parent=1 // pred_fallthru
      _
    // Predicated region
    $region22: #{tpu_custom_call.1} parent=1 // pred_check
      _
    $region23: #{tpu_custom_call.1} parent=1 // pred_check_branch
      %72 = sbr.rel (0) target = $region25
    $region24: #{tpu_custom_call.1} parent=1 // pred_region
      %s74 = ssub.s32 256, 256
      %75 = vsyncadd [#allocation13], %s74
      %s77 = sshll.u32 [#allocation12], 4
      %s78 = int_to_ptr.vmem [resolvable:$true] %s77
      %80 = dma.hbm_to_vmem [thread:$0]  %s5, 256, %s78, [#allocation13]
    $region25: #{tpu_custom_call.1} parent=1 // pred_fallthru
      _
    // Predicated region
    $region26: #{tpu_custom_call.1} parent=1 // pred_check
      _
    $region27: #{tpu_custom_call.1} parent=1 // pred_check_branch
      %82 = sbr.rel (0) target = $region29
    $region28: #{tpu_custom_call.1} parent=1 // pred_region
      %83 = dma.done [#allocation5], 1024
    $region29: #{tpu_custom_call.1} parent=1 // pred_fallthru
      _
    // Predicated region
    $region30: #{tpu_custom_call.1} parent=1 // pred_check
      _
    $region31: #{tpu_custom_call.1} parent=1 // pred_check_branch
      %85 = sbr.rel (0) target = $region33
    $region32: #{tpu_custom_call.1} parent=1 // pred_region
      %86 = dma.done [#allocation7], 57344
    $region33: #{tpu_custom_call.1} parent=1 // pred_fallthru
      _
    // Predicated region
    $region34: #{tpu_custom_call.1} parent=1 // pred_check
      _
    $region35: #{tpu_custom_call.1} parent=1 // pred_check_branch
      %88 = sbr.rel (0) target = $region37
    $region36: #{tpu_custom_call.1} parent=1 // pred_region
      %89 = dma.done [#allocation7], 102400
    $region37: #{tpu_custom_call.1} parent=1 // pred_fallthru
      _
    // Predicated region
    $region38: #{tpu_custom_call.1} parent=1 // pred_check
      _
    $region39: #{tpu_custom_call.1} parent=1 // pred_check_branch
      %91 = sbr.rel (0) target = $region41
    $region40: #{tpu_custom_call.1} parent=1 // pred_region
      %92 = dma.done [#allocation10], 256
    $region41: #{tpu_custom_call.1} parent=1 // pred_fallthru
      _
    // Predicated region
    $region42: #{tpu_custom_call.1} parent=1 // pred_check
      _
    $region43: #{tpu_custom_call.1} parent=1 // pred_check_branch
      %94 = sbr.rel (0) target = $region45
    $region44: #{tpu_custom_call.1} parent=1 // pred_region
      %95 = dma.done [#allocation10], 256
    $region45: #{tpu_custom_call.1} parent=1 // pred_fallthru
      _
    // Predicated region
    $region46: #{tpu_custom_call.1} parent=1 // pred_check
      _
    $region47: #{tpu_custom_call.1} parent=1 // pred_check_branch
      %97 = sbr.rel (0) target = $region49
    $region48: #{tpu_custom_call.1} parent=1 // pred_region
      %98 = dma.done [#allocation13], 256
    $region49: #{tpu_custom_call.1} parent=1 // pred_fallthru
      _
    %100 = vst [vmem:[#allocation2] sm:$0xff] 0
    %101 = vst [vmem:[#allocation2 + $0x8] sm:$0xff] 0
    %102 = vst [vmem:[#allocation2 + $0x10] sm:$0xff] 0
    %103 = vst [vmem:[#allocation2 + $0x18] sm:$0xff] 0
    %104 = vst [vmem:[#allocation2 + $0x20] sm:$0x77] 0
    %105 = vst [vmem:[#allocation2 + $0x28] sm:$0x77] 0
    %106 = vst [vmem:[#allocation2 + $0x30] sm:$0xff] 0
    %107 = vst [vmem:[#allocation2 + $0x38] sm:$0xff] 0
    %108 = vst [vmem:[#allocation2 + $0x40] sm:$0xff] 0
    %109 = vst [vmem:[#allocation2 + $0x48] sm:$0xff] 0
    %110 = vst [vmem:[#allocation2 + $0x50] sm:$0x77] 0
    %111 = vst [vmem:[#allocation2 + $0x58] sm:$0x77] 0
    %112 = vst [vmem:[#allocation3] sm:$0xff] 0
    %113 = vst [vmem:[#allocation3 + $0x8] sm:$0xff] 0
    %114 = vst [vmem:[#allocation3 + $0x10] sm:$0xff] 0
    %115 = vst [vmem:[#allocation3 + $0x18] sm:$0xff] 0
    %116 = vst [vmem:[#allocation3 + $0x20] sm:$0xff] 0
    %117 = vst [vmem:[#allocation3 + $0x28] sm:$0xff] 0
    %118 = vst [vmem:[#allocation3 + $0x30] sm:$0xff] 0
    %119 = vst [vmem:[#allocation3 + $0x38] sm:$0xff] 0
    %120 = vst [vmem:[#allocation3 + $0x40] sm:$0xff] 0
    %121 = vst [vmem:[#allocation3 + $0x48] sm:$0xff] 0
    %122 = vst [vmem:[#allocation3 + $0x50] sm:$0xff] 0
    %123 = vst [vmem:[#allocation3 + $0x58] sm:$0xff] 0
    %124 = vst [vmem:[#allocation3 + $0x60] sm:$0xff] 0
    %125 = vst [vmem:[#allocation3 + $0x68] sm:$0xff] 0
    %126 = vst [vmem:[#allocation3 + $0x70] sm:$0xff] 0
    %127 = vst [vmem:[#allocation3 + $0x78] sm:$0xff] 0
    %128 = vst [vmem:[#allocation3 + $0x80] sm:$0xff] 0
    %129 = vst [vmem:[#allocation3 + $0x88] sm:$0xff] 0
    %130 = vst [vmem:[#allocation3 + $0x90] sm:$0xff] 0
    %131 = vst [vmem:[#allocation3 + $0x98] sm:$0xff] 0
    %v132 = vld [vmem:[#allocation4] sm:$0xff]
    %v133 = vld [vmem:[#allocation4 + $0x8] sm:$0xff]
    %v134 = vld [vmem:[#allocation4 + $0x10] sm:$0xff]
    %v135 = vld [vmem:[#allocation4 + $0x18] sm:$0xff]
    %v136 = vld [vmem:[#allocation4 + $0x20] sm:$0xff]
    %v137 = vld [vmem:[#allocation4 + $0x28] sm:$0xff]
    %v138 = vld [vmem:[#allocation4 + $0x30] sm:$0xff]
    %v139 = vld [vmem:[#allocation4 + $0x38] sm:$0xff]
    %vm140 = vsmask.f32 1280
    %vm141 = vsmask.f32 5392
    %vm142 = vmor %vm140, %vm141
    %v144 = vshrl.u32 %v132, 16
    %v146 = vrot.slane %v144, 6
    %v147 = vshll.u32 %v132, 16
    %v149 = vrot.slane %v147, 7
    %v150 = vor.u32 %v146, %v149
    %v152 = vshrl.u32 %v133, 16
    %v154 = vrot.slane %v152, 6
    %v155 = vshll.u32 %v133, 16
    %v157 = vrot.slane %v155, 7
    %v158 = vor.u32 %v154, %v157
    %v159 = vrot.slane %v150, 4
    %v161 = vshrl.u32 %v134, 16
    %v163 = vrot.slane %v161, 6
    %v164 = vshll.u32 %v134, 16
    %v166 = vrot.slane %v164, 7
    %v167 = vor.u32 %v163, %v166
    %v168 = vsel %vm142, %v159, %v167
    %v169 = vrot.slane %v158, 4
    %v171 = vshrl.u32 %v135, 16
    %v173 = vrot.slane %v171, 6
    %v174 = vshll.u32 %v135, 16
    %v176 = vrot.slane %v174, 7
    %v177 = vor.u32 %v173, %v176
    %v178 = vsel %vm142, %v169, %v177
    %v179 = vrot.slane %v167, 4
    %v180 = vrot.slane %v177, 4
    %v182 = vshrl.u32 %v136, 16
    %v184 = vrot.slane %v182, 6
    %v185 = vshll.u32 %v136, 16
    %v187 = vrot.slane %v185, 7
    %v188 = vor.u32 %v184, %v187
    %v190 = vshrl.u32 %v137, 16
    %v192 = vrot.slane %v190, 6
    %v193 = vshll.u32 %v137, 16
    %v195 = vrot.slane %v193, 7
    %v196 = vor.u32 %v192, %v195
    %v197 = vrot.slane %v188, 4
    %v199 = vshrl.u32 %v138, 16
    %v201 = vrot.slane %v199, 6
    %v202 = vshll.u32 %v138, 16
    %v204 = vrot.slane %v202, 7
    %v205 = vor.u32 %v201, %v204
    %v206 = vsel %vm142, %v197, %v205
    %v207 = vrot.slane %v196, 4
    %v209 = vshrl.u32 %v139, 16
    %v211 = vrot.slane %v209, 6
    %v212 = vshll.u32 %v139, 16
    %v214 = vrot.slane %v212, 7
    %v215 = vor.u32 %v211, %v214
    %v216 = vsel %vm142, %v207, %v215
    %v217 = vrot.slane %v205, 4
    %v218 = vrot.slane %v215, 4
    %vm231 = vcmask 1043457
    %vm232 = vsmask.f32 7942
    %vm233 = vmand %vm231, %vm232
    %vm234 = vcmask 1047557
    %vm235 = vsmask.f32 7958
    %vm236 = vmand %vm234, %vm235
    %vm237 = vmor %vm236, %vm233
    %v238 = vld [vmem:[#allocation2] sm:$0xee]
    %v239 = vsel %vm237, %v150, %v238
    %240 = vst [vmem:[#allocation2] sm:$0xee] %v239
    %v241 = vld [vmem:[#allocation2 + $0x8] sm:$0xee]
    %v242 = vsel %vm237, %v158, %v241
    %243 = vst [vmem:[#allocation2 + $0x8] sm:$0xee] %v242
    %244 = vst [vmem:[#allocation2 + $0x10] sm:$0xff] %v168
    %245 = vst [vmem:[#allocation2 + $0x18] sm:$0xff] %v178
    %vm246 = vcmask 1041408
    %vm247 = vmand %vm246, %vm140
    %vm248 = vcmask 1045508
    %vm249 = vsmask.f32 5376
    %vm250 = vmand %vm248, %vm249
    %vm251 = vmor %vm250, %vm247
    %v252 = vld [vmem:[#allocation2 + $0x20] sm:$0x33]
    %v253 = vsel %vm251, %v179, %v252
    %254 = vst [vmem:[#allocation2 + $0x20] sm:$0x33] %v253
    %v255 = vld [vmem:[#allocation2 + $0x28] sm:$0x33]
    %v256 = vsel %vm251, %v180, %v255
    %257 = vst [vmem:[#allocation2 + $0x28] sm:$0x33] %v256
    %v258 = vld [vmem:[#allocation2 + $0x30] sm:$0xee]
    %v259 = vsel %vm237, %v188, %v258
    %260 = vst [vmem:[#allocation2 + $0x30] sm:$0xee] %v259
    %v261 = vld [vmem:[#allocation2 + $0x38] sm:$0xee]
    %v262 = vsel %vm237, %v196, %v261
    %263 = vst [vmem:[#allocation2 + $0x38] sm:$0xee] %v262
    %264 = vst [vmem:[#allocation2 + $0x40] sm:$0xff] %v206
    %265 = vst [vmem:[#allocation2 + $0x48] sm:$0xff] %v216
    %v266 = vld [vmem:[#allocation2 + $0x50] sm:$0x33]
    %v267 = vsel %vm251, %v217, %v266
    %268 = vst [vmem:[#allocation2 + $0x50] sm:$0x33] %v267
    %v269 = vld [vmem:[#allocation2 + $0x58] sm:$0x33]
    %v270 = vsel %vm251, %v218, %v269
    %271 = vst [vmem:[#allocation2 + $0x58] sm:$0x33] %v270
    %v272 = vld [vmem:[#allocation6] sm:$0xff]
    %v273 = vld [vmem:[#allocation6 + $0x8] sm:$0xff]
    %v274 = vld [vmem:[#allocation6 + $0x10] sm:$0xff]
    %v275 = vld [vmem:[#allocation6 + $0x18] sm:$0xff]
    %v276 = vld [vmem:[#allocation6 + $0x20] sm:$0xff]
    %v277 = vld [vmem:[#allocation6 + $0x28] sm:$0xff]
    %v278 = vld [vmem:[#allocation6 + $0x30] sm:$0xff]
    %v279 = vld [vmem:[#allocation6 + $0x38] sm:$0xff]
    %v280 = vld [vmem:[#allocation6 + $0x40] sm:$0xff]
    %v281 = vld [vmem:[#allocation6 + $0x48] sm:$0xff]
    %v282 = vld [vmem:[#allocation6 + $0x50] sm:$0xff]
    %v283 = vld [vmem:[#allocation6 + $0x58] sm:$0xff]
    %v284 = vld [vmem:[#allocation6 + $0x60] sm:$0xff]
    %v285 = vld [vmem:[#allocation6 + $0x68] sm:$0xff]
    %v286 = vld [vmem:[#allocation6 + $0x70] sm:$0xff]
    %v287 = vld [vmem:[#allocation6 + $0x78] sm:$0xff]
    %v288 = vld [vmem:[#allocation6 + $0x80] sm:$0xff]
    %v289 = vld [vmem:[#allocation6 + $0x88] sm:$0xff]
    %v290 = vld [vmem:[#allocation6 + $0x90] sm:$0xff]
    %v291 = vld [vmem:[#allocation6 + $0x98] sm:$0xff]
    %v292 = vld [vmem:[#allocation6 + $0xa0] sm:$0xff]
    %v293 = vld [vmem:[#allocation6 + $0xa8] sm:$0xff]
    %v294 = vld [vmem:[#allocation6 + $0xb0] sm:$0xff]
    %v295 = vld [vmem:[#allocation6 + $0xb8] sm:$0xff]
    %v296 = vld [vmem:[#allocation6 + $0xc0] sm:$0xff]
    %v297 = vld [vmem:[#allocation6 + $0xc8] sm:$0xff]
    %v298 = vld [vmem:[#allocation6 + $0xd0] sm:$0xff]
    %v299 = vld [vmem:[#allocation6 + $0xd8] sm:$0xff]
    %v300 = vld [vmem:[#allocation6 + $0xe0] sm:$0xff]
    %v301 = vld [vmem:[#allocation6 + $0xe8] sm:$0xff]
    %v302 = vld [vmem:[#allocation6 + $0xf0] sm:$0xff]
    %v303 = vld [vmem:[#allocation6 + $0xf8] sm:$0xff]
    %v304 = vld [vmem:[#allocation6 + $0x100] sm:$0xff]
    %v305 = vld [vmem:[#allocation6 + $0x108] sm:$0xff]
    %v306 = vld [vmem:[#allocation6 + $0x110] sm:$0xff]
    %v307 = vld [vmem:[#allocation6 + $0x118] sm:$0xff]
    %v308 = vld [vmem:[#allocation6 + $0x120] sm:$0xff]
    %v309 = vld [vmem:[#allocation6 + $0x128] sm:$0xff]
    %v310 = vld [vmem:[#allocation6 + $0x130] sm:$0xff]
    %v311 = vld [vmem:[#allocation6 + $0x138] sm:$0xff]
    %v312 = vld [vmem:[#allocation6 + $0x140] sm:$0xff]
    %v313 = vld [vmem:[#allocation6 + $0x148] sm:$0xff]
    %v314 = vld [vmem:[#allocation6 + $0x150] sm:$0xff]
    %v315 = vld [vmem:[#allocation6 + $0x158] sm:$0xff]
    %v316 = vld [vmem:[#allocation6 + $0x160] sm:$0xff]
    %v317 = vld [vmem:[#allocation6 + $0x168] sm:$0xff]
    %v318 = vld [vmem:[#allocation6 + $0x170] sm:$0xff]
    %v319 = vld [vmem:[#allocation6 + $0x178] sm:$0xff]
    %v320 = vld [vmem:[#allocation6 + $0x180] sm:$0xff]
    %v321 = vld [vmem:[#allocation6 + $0x188] sm:$0xff]
    %v322 = vld [vmem:[#allocation6 + $0x190] sm:$0xff]
    %v323 = vld [vmem:[#allocation6 + $0x198] sm:$0xff]
    %v324 = vld [vmem:[#allocation6 + $0x1a0] sm:$0xff]
    %v325 = vld [vmem:[#allocation6 + $0x1a8] sm:$0xff]
    %v326 = vld [vmem:[#allocation6 + $0x1b0] sm:$0xff]
    %v327 = vld [vmem:[#allocation6 + $0x1b8] sm:$0xff]
    %v328 = vld [vmem:[#allocation6 + $0x1c0] sm:$0xff]
    %v329 = vld [vmem:[#allocation6 + $0x1c8] sm:$0xff]
    %v330 = vld [vmem:[#allocation6 + $0x1d0] sm:$0xff]
    %v331 = vld [vmem:[#allocation6 + $0x1d8] sm:$0xff]
    %v332 = vld [vmem:[#allocation6 + $0x1e0] sm:$0xff]
    %v333 = vld [vmem:[#allocation6 + $0x1e8] sm:$0xff]
    %v334 = vld [vmem:[#allocation6 + $0x1f0] sm:$0xff]
    %v335 = vld [vmem:[#allocation6 + $0x1f8] sm:$0xff]
    %v336 = vld [vmem:[#allocation6 + $0x200] sm:$0xff]
    %v337 = vld [vmem:[#allocation6 + $0x208] sm:$0xff]
    %v338 = vld [vmem:[#allocation6 + $0x210] sm:$0xff]
    %v339 = vld [vmem:[#allocation6 + $0x218] sm:$0xff]
    %v340 = vld [vmem:[#allocation6 + $0x220] sm:$0xff]
    %v341 = vld [vmem:[#allocation6 + $0x228] sm:$0xff]
    %v342 = vld [vmem:[#allocation6 + $0x230] sm:$0xff]
    %v343 = vld [vmem:[#allocation6 + $0x238] sm:$0xff]
    %v344 = vld [vmem:[#allocation6 + $0x240] sm:$0xff]
    %v345 = vld [vmem:[#allocation6 + $0x248] sm:$0xff]
    %v346 = vld [vmem:[#allocation6 + $0x250] sm:$0xff]
    %v347 = vld [vmem:[#allocation6 + $0x258] sm:$0xff]
    %v348 = vld [vmem:[#allocation6 + $0x260] sm:$0xff]
    %v349 = vld [vmem:[#allocation6 + $0x268] sm:$0xff]
    %v350 = vld [vmem:[#allocation6 + $0x270] sm:$0xff]
    %v351 = vld [vmem:[#allocation6 + $0x278] sm:$0xff]
    %v352 = vld [vmem:[#allocation6 + $0x280] sm:$0xff]
    %v353 = vld [vmem:[#allocation6 + $0x288] sm:$0xff]
    %v354 = vld [vmem:[#allocation6 + $0x290] sm:$0xff]
    %v355 = vld [vmem:[#allocation6 + $0x298] sm:$0xff]
    %v356 = vld [vmem:[#allocation6 + $0x2a0] sm:$0xff]
    %v357 = vld [vmem:[#allocation6 + $0x2a8] sm:$0xff]
    %v358 = vld [vmem:[#allocation6 + $0x2b0] sm:$0xff]
    %v359 = vld [vmem:[#allocation6 + $0x2b8] sm:$0xff]
    %v360 = vld [vmem:[#allocation6 + $0x2c0] sm:$0xff]
    %v361 = vld [vmem:[#allocation6 + $0x2c8] sm:$0xff]
    %v362 = vld [vmem:[#allocation6 + $0x2d0] sm:$0xff]
    %v363 = vld [vmem:[#allocation6 + $0x2d8] sm:$0xff]
    %v364 = vld [vmem:[#allocation6 + $0x2e0] sm:$0xff]
    %v365 = vld [vmem:[#allocation6 + $0x2e8] sm:$0xff]
    %v366 = vld [vmem:[#allocation6 + $0x2f0] sm:$0xff]
    %v367 = vld [vmem:[#allocation6 + $0x2f8] sm:$0xff]
    %v368 = vld [vmem:[#allocation6 + $0x300] sm:$0xff]
    %v369 = vld [vmem:[#allocation6 + $0x308] sm:$0xff]
    %v370 = vld [vmem:[#allocation6 + $0x310] sm:$0xff]
    %v371 = vld [vmem:[#allocation6 + $0x318] sm:$0xff]
    %v372 = vld [vmem:[#allocation6 + $0x320] sm:$0xff]
    %v373 = vld [vmem:[#allocation6 + $0x328] sm:$0xff]
    %v374 = vld [vmem:[#allocation6 + $0x330] sm:$0xff]
    %v375 = vld [vmem:[#allocation6 + $0x338] sm:$0xff]
    %v376 = vld [vmem:[#allocation6 + $0x340] sm:$0xff]
    %v377 = vld [vmem:[#allocation6 + $0x348] sm:$0xff]
    %v378 = vld [vmem:[#allocation6 + $0x350] sm:$0xff]
    %v379 = vld [vmem:[#allocation6 + $0x358] sm:$0xff]
    %v380 = vld [vmem:[#allocation6 + $0x360] sm:$0xff]
    %v381 = vld [vmem:[#allocation6 + $0x368] sm:$0xff]
    %v382 = vld [vmem:[#allocation6 + $0x370] sm:$0xff]
    %v383 = vld [vmem:[#allocation6 + $0x378] sm:$0xff]
    %v384 = vld [vmem:[#allocation6 + $0x380] sm:$0xff]
    %v385 = vld [vmem:[#allocation6 + $0x388] sm:$0xff]
    %v386 = vld [vmem:[#allocation6 + $0x390] sm:$0xff]
    %v387 = vld [vmem:[#allocation6 + $0x398] sm:$0xff]
    %v388 = vld [vmem:[#allocation6 + $0x3a0] sm:$0xff]
    %v389 = vld [vmem:[#allocation6 + $0x3a8] sm:$0xff]
    %v390 = vld [vmem:[#allocation6 + $0x3b0] sm:$0xff]
    %v391 = vld [vmem:[#allocation6 + $0x3b8] sm:$0xff]
    %v392 = vld [vmem:[#allocation6 + $0x3c0] sm:$0xff]
    %v393 = vld [vmem:[#allocation6 + $0x3c8] sm:$0xff]
    %v394 = vld [vmem:[#allocation6 + $0x3d0] sm:$0xff]
    %v395 = vld [vmem:[#allocation6 + $0x3d8] sm:$0xff]
    %v396 = vld [vmem:[#allocation6 + $0x3e0] sm:$0xff]
    %v397 = vld [vmem:[#allocation6 + $0x3e8] sm:$0xff]
    %v398 = vld [vmem:[#allocation6 + $0x3f0] sm:$0xff]
    %v399 = vld [vmem:[#allocation6 + $0x3f8] sm:$0xff]
    %v400 = vld [vmem:[#allocation6 + $0x400] sm:$0xff]
    %v401 = vld [vmem:[#allocation6 + $0x408] sm:$0xff]
    %v402 = vld [vmem:[#allocation6 + $0x410] sm:$0xff]
    %v403 = vld [vmem:[#allocation6 + $0x418] sm:$0xff]
    %v404 = vld [vmem:[#allocation6 + $0x420] sm:$0xff]
    %v405 = vld [vmem:[#allocation6 + $0x428] sm:$0xff]
    %v406 = vld [vmem:[#allocation6 + $0x430] sm:$0xff]
    %v407 = vld [vmem:[#allocation6 + $0x438] sm:$0xff]
    %v408 = vld [vmem:[#allocation6 + $0x440] sm:$0xff]
    %v409 = vld [vmem:[#allocation6 + $0x448] sm:$0xff]
    %v410 = vld [vmem:[#allocation6 + $0x450] sm:$0xff]
    %v411 = vld [vmem:[#allocation6 + $0x458] sm:$0xff]
    %v412 = vld [vmem:[#allocation6 + $0x460] sm:$0xff]
    %v413 = vld [vmem:[#allocation6 + $0x468] sm:$0xff]
    %v414 = vld [vmem:[#allocation6 + $0x470] sm:$0xff]
    %v415 = vld [vmem:[#allocation6 + $0x478] sm:$0xff]
    %v416 = vld [vmem:[#allocation6 + $0x480] sm:$0xff]
    %v417 = vld [vmem:[#allocation6 + $0x488] sm:$0xff]
    %v418 = vld [vmem:[#allocation6 + $0x490] sm:$0xff]
    %v419 = vld [vmem:[#allocation6 + $0x498] sm:$0xff]
    %v420 = vld [vmem:[#allocation6 + $0x4a0] sm:$0xff]
    %v421 = vld [vmem:[#allocation6 + $0x4a8] sm:$0xff]
    %v422 = vld [vmem:[#allocation6 + $0x4b0] sm:$0xff]
    %v423 = vld [vmem:[#allocation6 + $0x4b8] sm:$0xff]
    %v424 = vld [vmem:[#allocation6 + $0x4c0] sm:$0xff]
    %v425 = vld [vmem:[#allocation6 + $0x4c8] sm:$0xff]
    %v426 = vld [vmem:[#allocation6 + $0x4d0] sm:$0xff]
    %v427 = vld [vmem:[#allocation6 + $0x4d8] sm:$0xff]
    %v428 = vld [vmem:[#allocation6 + $0x4e0] sm:$0xff]
    %v429 = vld [vmem:[#allocation6 + $0x4e8] sm:$0xff]
    %v430 = vld [vmem:[#allocation6 + $0x4f0] sm:$0xff]
    %v431 = vld [vmem:[#allocation6 + $0x4f8] sm:$0xff]
    %v432 = vld [vmem:[#allocation6 + $0x500] sm:$0xff]
    %v433 = vld [vmem:[#allocation6 + $0x508] sm:$0xff]
    %v434 = vld [vmem:[#allocation6 + $0x510] sm:$0xff]
    %v435 = vld [vmem:[#allocation6 + $0x518] sm:$0xff]
    %v436 = vld [vmem:[#allocation6 + $0x520] sm:$0xff]
    %v437 = vld [vmem:[#allocation6 + $0x528] sm:$0xff]
    %v438 = vld [vmem:[#allocation6 + $0x530] sm:$0xff]
    %v439 = vld [vmem:[#allocation6 + $0x538] sm:$0xff]
    %v440 = vld [vmem:[#allocation6 + $0x540] sm:$0xff]
    %v441 = vld [vmem:[#allocation6 + $0x548] sm:$0xff]
    %v442 = vld [vmem:[#allocation6 + $0x550] sm:$0xff]
    %v443 = vld [vmem:[#allocation6 + $0x558] sm:$0xff]
    %v444 = vld [vmem:[#allocation6 + $0x560] sm:$0xff]
    %v445 = vld [vmem:[#allocation6 + $0x568] sm:$0xff]
    %v446 = vld [vmem:[#allocation6 + $0x570] sm:$0xff]
    %v447 = vld [vmem:[#allocation6 + $0x578] sm:$0xff]
    %v448 = vld [vmem:[#allocation6 + $0x580] sm:$0xff]
    %v449 = vld [vmem:[#allocation6 + $0x588] sm:$0xff]
    %v450 = vld [vmem:[#allocation6 + $0x590] sm:$0xff]
    %v451 = vld [vmem:[#allocation6 + $0x598] sm:$0xff]
    %v452 = vld [vmem:[#allocation6 + $0x5a0] sm:$0xff]
    %v453 = vld [vmem:[#allocation6 + $0x5a8] sm:$0xff]
    %v454 = vld [vmem:[#allocation6 + $0x5b0] sm:$0xff]
    %v455 = vld [vmem:[#allocation6 + $0x5b8] sm:$0xff]
    %v456 = vld [vmem:[#allocation6 + $0x5c0] sm:$0xff]
    %v457 = vld [vmem:[#allocation6 + $0x5c8] sm:$0xff]
    %v458 = vld [vmem:[#allocation6 + $0x5d0] sm:$0xff]
    %v459 = vld [vmem:[#allocation6 + $0x5d8] sm:$0xff]
    %v460 = vld [vmem:[#allocation6 + $0x5e0] sm:$0xff]
    %v461 = vld [vmem:[#allocation6 + $0x5e8] sm:$0xff]
    %v462 = vld [vmem:[#allocation6 + $0x5f0] sm:$0xff]
    %v463 = vld [vmem:[#allocation6 + $0x5f8] sm:$0xff]
    %v464 = vld [vmem:[#allocation6 + $0x600] sm:$0xff]
    %v465 = vld [vmem:[#allocation6 + $0x608] sm:$0xff]
    %v466 = vld [vmem:[#allocation6 + $0x610] sm:$0xff]
    %v467 = vld [vmem:[#allocation6 + $0x618] sm:$0xff]
    %v468 = vld [vmem:[#allocation6 + $0x620] sm:$0xff]
    %v469 = vld [vmem:[#allocation6 + $0x628] sm:$0xff]
    %v470 = vld [vmem:[#allocation6 + $0x630] sm:$0xff]
    %v471 = vld [vmem:[#allocation6 + $0x638] sm:$0xff]
    %v472 = vld [vmem:[#allocation6 + $0x640] sm:$0xff]
    %v473 = vld [vmem:[#allocation6 + $0x648] sm:$0xff]
    %v474 = vld [vmem:[#allocation6 + $0x650] sm:$0xff]
    %v475 = vld [vmem:[#allocation6 + $0x658] sm:$0xff]
    %v476 = vld [vmem:[#allocation6 + $0x660] sm:$0xff]
    %v477 = vld [vmem:[#allocation6 + $0x668] sm:$0xff]
    %v478 = vld [vmem:[#allocation6 + $0x670] sm:$0xff]
    %v479 = vld [vmem:[#allocation6 + $0x678] sm:$0xff]
    %v480 = vld [vmem:[#allocation6 + $0x680] sm:$0xff]
    %v481 = vld [vmem:[#allocation6 + $0x688] sm:$0xff]
    %v482 = vld [vmem:[#allocation6 + $0x690] sm:$0xff]
    %v483 = vld [vmem:[#allocation6 + $0x698] sm:$0xff]
    %v484 = vld [vmem:[#allocation6 + $0x6a0] sm:$0xff]
    %v485 = vld [vmem:[#allocation6 + $0x6a8] sm:$0xff]
    %v486 = vld [vmem:[#allocation6 + $0x6b0] sm:$0xff]
    %v487 = vld [vmem:[#allocation6 + $0x6b8] sm:$0xff]
    %v488 = vld [vmem:[#allocation6 + $0x6c0] sm:$0xff]
    %v489 = vld [vmem:[#allocation6 + $0x6c8] sm:$0xff]
    %v490 = vld [vmem:[#allocation6 + $0x6d0] sm:$0xff]
    %v491 = vld [vmem:[#allocation6 + $0x6d8] sm:$0xff]
    %v492 = vld [vmem:[#allocation6 + $0x6e0] sm:$0xff]
    %v493 = vld [vmem:[#allocation6 + $0x6e8] sm:$0xff]
    %v494 = vld [vmem:[#allocation6 + $0x6f0] sm:$0xff]
    %v495 = vld [vmem:[#allocation6 + $0x6f8] sm:$0xff]
    %v496 = vld [vmem:[#allocation6 + $0x700] sm:$0xff]
    %v497 = vld [vmem:[#allocation6 + $0x708] sm:$0xff]
    %v498 = vld [vmem:[#allocation6 + $0x710] sm:$0xff]
    %v499 = vld [vmem:[#allocation6 + $0x718] sm:$0xff]
    %v500 = vld [vmem:[#allocation6 + $0x720] sm:$0xff]
    %v501 = vld [vmem:[#allocation6 + $0x728] sm:$0xff]
    %v502 = vld [vmem:[#allocation6 + $0x730] sm:$0xff]
    %v503 = vld [vmem:[#allocation6 + $0x738] sm:$0xff]
    %v504 = vld [vmem:[#allocation6 + $0x740] sm:$0xff]
    %v505 = vld [vmem:[#allocation6 + $0x748] sm:$0xff]
    %v506 = vld [vmem:[#allocation6 + $0x750] sm:$0xff]
    %v507 = vld [vmem:[#allocation6 + $0x758] sm:$0xff]
    %v508 = vld [vmem:[#allocation6 + $0x760] sm:$0xff]
    %v509 = vld [vmem:[#allocation6 + $0x768] sm:$0xff]
    %v510 = vld [vmem:[#allocation6 + $0x770] sm:$0xff]
    %v511 = vld [vmem:[#allocation6 + $0x778] sm:$0xff]
    %v512 = vld [vmem:[#allocation6 + $0x780] sm:$0xff]
    %v513 = vld [vmem:[#allocation6 + $0x788] sm:$0xff]
    %v514 = vld [vmem:[#allocation6 + $0x790] sm:$0xff]
    %v515 = vld [vmem:[#allocation6 + $0x798] sm:$0xff]
    %v516 = vld [vmem:[#allocation6 + $0x7a0] sm:$0xff]
    %v517 = vld [vmem:[#allocation6 + $0x7a8] sm:$0xff]
    %v518 = vld [vmem:[#allocation6 + $0x7b0] sm:$0xff]
    %v519 = vld [vmem:[#allocation6 + $0x7b8] sm:$0xff]
    %v520 = vld [vmem:[#allocation6 + $0x7c0] sm:$0xff]
    %v521 = vld [vmem:[#allocation6 + $0x7c8] sm:$0xff]
    %v522 = vld [vmem:[#allocation6 + $0x7d0] sm:$0xff]
    %v523 = vld [vmem:[#allocation6 + $0x7d8] sm:$0xff]
    %v524 = vld [vmem:[#allocation6 + $0x7e0] sm:$0xff]
    %v525 = vld [vmem:[#allocation6 + $0x7e8] sm:$0xff]
    %v526 = vld [vmem:[#allocation6 + $0x7f0] sm:$0xff]
    %v527 = vld [vmem:[#allocation6 + $0x7f8] sm:$0xff]
    %v528 = vld [vmem:[#allocation6 + $0x800] sm:$0xff]
    %v529 = vld [vmem:[#allocation6 + $0x808] sm:$0xff]
    %v530 = vld [vmem:[#allocation6 + $0x810] sm:$0xff]
    %v531 = vld [vmem:[#allocation6 + $0x818] sm:$0xff]
    %v532 = vld [vmem:[#allocation6 + $0x820] sm:$0xff]
    %v533 = vld [vmem:[#allocation6 + $0x828] sm:$0xff]
    %v534 = vld [vmem:[#allocation6 + $0x830] sm:$0xff]
    %v535 = vld [vmem:[#allocation6 + $0x838] sm:$0xff]
    %v536 = vld [vmem:[#allocation6 + $0x840] sm:$0xff]
    %v537 = vld [vmem:[#allocation6 + $0x848] sm:$0xff]
    %v538 = vld [vmem:[#allocation6 + $0x850] sm:$0xff]
    %v539 = vld [vmem:[#allocation6 + $0x858] sm:$0xff]
    %v540 = vld [vmem:[#allocation6 + $0x860] sm:$0xff]
    %v541 = vld [vmem:[#allocation6 + $0x868] sm:$0xff]
    %v542 = vld [vmem:[#allocation6 + $0x870] sm:$0xff]
    %v543 = vld [vmem:[#allocation6 + $0x878] sm:$0xff]
    %v544 = vld [vmem:[#allocation6 + $0x880] sm:$0xff]
    %v545 = vld [vmem:[#allocation6 + $0x888] sm:$0xff]
    %v546 = vld [vmem:[#allocation6 + $0x890] sm:$0xff]
    %v547 = vld [vmem:[#allocation6 + $0x898] sm:$0xff]
    %v548 = vld [vmem:[#allocation6 + $0x8a0] sm:$0xff]
    %v549 = vld [vmem:[#allocation6 + $0x8a8] sm:$0xff]
    %v550 = vld [vmem:[#allocation6 + $0x8b0] sm:$0xff]
    %v551 = vld [vmem:[#allocation6 + $0x8b8] sm:$0xff]
    %v552 = vld [vmem:[#allocation6 + $0x8c0] sm:$0xff]
    %v553 = vld [vmem:[#allocation6 + $0x8c8] sm:$0xff]
    %v554 = vld [vmem:[#allocation6 + $0x8d0] sm:$0xff]
    %v555 = vld [vmem:[#allocation6 + $0x8d8] sm:$0xff]
    %v556 = vld [vmem:[#allocation6 + $0x8e0] sm:$0xff]
    %v557 = vld [vmem:[#allocation6 + $0x8e8] sm:$0xff]
    %v558 = vld [vmem:[#allocation6 + $0x8f0] sm:$0xff]
    %v559 = vld [vmem:[#allocation6 + $0x8f8] sm:$0xff]
    %v560 = vld [vmem:[#allocation6 + $0x900] sm:$0xff]
    %v561 = vld [vmem:[#allocation6 + $0x908] sm:$0xff]
    %v562 = vld [vmem:[#allocation6 + $0x910] sm:$0xff]
    %v563 = vld [vmem:[#allocation6 + $0x918] sm:$0xff]
    %v564 = vld [vmem:[#allocation6 + $0x920] sm:$0xff]
    %v565 = vld [vmem:[#allocation6 + $0x928] sm:$0xff]
    %v566 = vld [vmem:[#allocation6 + $0x930] sm:$0xff]
    %v567 = vld [vmem:[#allocation6 + $0x938] sm:$0xff]
    %v568 = vld [vmem:[#allocation6 + $0x940] sm:$0xff]
    %v569 = vld [vmem:[#allocation6 + $0x948] sm:$0xff]
    %v570 = vld [vmem:[#allocation6 + $0x950] sm:$0xff]
    %v571 = vld [vmem:[#allocation6 + $0x958] sm:$0xff]
    %v572 = vld [vmem:[#allocation6 + $0x960] sm:$0xff]
    %v573 = vld [vmem:[#allocation6 + $0x968] sm:$0xff]
    %v574 = vld [vmem:[#allocation6 + $0x970] sm:$0xff]
    %v575 = vld [vmem:[#allocation6 + $0x978] sm:$0xff]
    %v576 = vld [vmem:[#allocation6 + $0x980] sm:$0xff]
    %v577 = vld [vmem:[#allocation6 + $0x988] sm:$0xff]
    %v578 = vld [vmem:[#allocation6 + $0x990] sm:$0xff]
    %v579 = vld [vmem:[#allocation6 + $0x998] sm:$0xff]
    %v580 = vld [vmem:[#allocation6 + $0x9a0] sm:$0xff]
    %v581 = vld [vmem:[#allocation6 + $0x9a8] sm:$0xff]
    %v582 = vld [vmem:[#allocation6 + $0x9b0] sm:$0xff]
    %v583 = vld [vmem:[#allocation6 + $0x9b8] sm:$0xff]
    %v584 = vld [vmem:[#allocation6 + $0x9c0] sm:$0xff]
    %v585 = vld [vmem:[#allocation6 + $0x9c8] sm:$0xff]
    %v586 = vld [vmem:[#allocation6 + $0x9d0] sm:$0xff]
    %v587 = vld [vmem:[#allocation6 + $0x9d8] sm:$0xff]
    %v588 = vld [vmem:[#allocation6 + $0x9e0] sm:$0xff]
    %v589 = vld [vmem:[#allocation6 + $0x9e8] sm:$0xff]
    %v590 = vld [vmem:[#allocation6 + $0x9f0] sm:$0xff]
    %v591 = vld [vmem:[#allocation6 + $0x9f8] sm:$0xff]
    %v592 = vld [vmem:[#allocation6 + $0xa00] sm:$0xff]
    %v593 = vld [vmem:[#allocation6 + $0xa08] sm:$0xff]
    %v594 = vld [vmem:[#allocation6 + $0xa10] sm:$0xff]
    %v595 = vld [vmem:[#allocation6 + $0xa18] sm:$0xff]
    %v596 = vld [vmem:[#allocation6 + $0xa20] sm:$0xff]
    %v597 = vld [vmem:[#allocation6 + $0xa28] sm:$0xff]
    %v598 = vld [vmem:[#allocation6 + $0xa30] sm:$0xff]
    %v599 = vld [vmem:[#allocation6 + $0xa38] sm:$0xff]
    %v600 = vld [vmem:[#allocation6 + $0xa40] sm:$0xff]
    %v601 = vld [vmem:[#allocation6 + $0xa48] sm:$0xff]
    %v602 = vld [vmem:[#allocation6 + $0xa50] sm:$0xff]
    %v603 = vld [vmem:[#allocation6 + $0xa58] sm:$0xff]
    %v604 = vld [vmem:[#allocation6 + $0xa60] sm:$0xff]
    %v605 = vld [vmem:[#allocation6 + $0xa68] sm:$0xff]
    %v606 = vld [vmem:[#allocation6 + $0xa70] sm:$0xff]
    %v607 = vld [vmem:[#allocation6 + $0xa78] sm:$0xff]
    %v608 = vld [vmem:[#allocation6 + $0xa80] sm:$0xff]
    %v609 = vld [vmem:[#allocation6 + $0xa88] sm:$0xff]
    %v610 = vld [vmem:[#allocation6 + $0xa90] sm:$0xff]
    %v611 = vld [vmem:[#allocation6 + $0xa98] sm:$0xff]
    %v612 = vld [vmem:[#allocation6 + $0xaa0] sm:$0xff]
    %v613 = vld [vmem:[#allocation6 + $0xaa8] sm:$0xff]
    %v614 = vld [vmem:[#allocation6 + $0xab0] sm:$0xff]
    %v615 = vld [vmem:[#allocation6 + $0xab8] sm:$0xff]
    %v616 = vld [vmem:[#allocation6 + $0xac0] sm:$0xff]
    %v617 = vld [vmem:[#allocation6 + $0xac8] sm:$0xff]
    %v618 = vld [vmem:[#allocation6 + $0xad0] sm:$0xff]
    %v619 = vld [vmem:[#allocation6 + $0xad8] sm:$0xff]
    %v620 = vld [vmem:[#allocation6 + $0xae0] sm:$0xff]
    %v621 = vld [vmem:[#allocation6 + $0xae8] sm:$0xff]
    %v622 = vld [vmem:[#allocation6 + $0xaf0] sm:$0xff]
    %v623 = vld [vmem:[#allocation6 + $0xaf8] sm:$0xff]
    %v624 = vld [vmem:[#allocation6 + $0xb00] sm:$0xff]
    %v625 = vld [vmem:[#allocation6 + $0xb08] sm:$0xff]
    %v626 = vld [vmem:[#allocation6 + $0xb10] sm:$0xff]
    %v627 = vld [vmem:[#allocation6 + $0xb18] sm:$0xff]
    %v628 = vld [vmem:[#allocation6 + $0xb20] sm:$0xff]
    %v629 = vld [vmem:[#allocation6 + $0xb28] sm:$0xff]
    %v630 = vld [vmem:[#allocation6 + $0xb30] sm:$0xff]
    %v631 = vld [vmem:[#allocation6 + $0xb38] sm:$0xff]
    %v632 = vld [vmem:[#allocation6 + $0xb40] sm:$0xff]
    %v633 = vld [vmem:[#allocation6 + $0xb48] sm:$0xff]
    %v634 = vld [vmem:[#allocation6 + $0xb50] sm:$0xff]
    %v635 = vld [vmem:[#allocation6 + $0xb58] sm:$0xff]
    %v636 = vld [vmem:[#allocation6 + $0xb60] sm:$0xff]
    %v637 = vld [vmem:[#allocation6 + $0xb68] sm:$0xff]
    %v638 = vld [vmem:[#allocation6 + $0xb70] sm:$0xff]
    %v639 = vld [vmem:[#allocation6 + $0xb78] sm:$0xff]
    %v640 = vld [vmem:[#allocation6 + $0xb80] sm:$0xff]
    %v641 = vld [vmem:[#allocation6 + $0xb88] sm:$0xff]
    %v642 = vld [vmem:[#allocation6 + $0xb90] sm:$0xff]
    %v643 = vld [vmem:[#allocation6 + $0xb98] sm:$0xff]
    %v644 = vld [vmem:[#allocation6 + $0xba0] sm:$0xff]
    %v645 = vld [vmem:[#allocation6 + $0xba8] sm:$0xff]
    %v646 = vld [vmem:[#allocation6 + $0xbb0] sm:$0xff]
    %v647 = vld [vmem:[#allocation6 + $0xbb8] sm:$0xff]
    %v648 = vld [vmem:[#allocation6 + $0xbc0] sm:$0xff]
    %v649 = vld [vmem:[#allocation6 + $0xbc8] sm:$0xff]
    %v650 = vld [vmem:[#allocation6 + $0xbd0] sm:$0xff]
    %v651 = vld [vmem:[#allocation6 + $0xbd8] sm:$0xff]
    %v652 = vld [vmem:[#allocation6 + $0xbe0] sm:$0xff]
    %v653 = vld [vmem:[#allocation6 + $0xbe8] sm:$0xff]
    %v654 = vld [vmem:[#allocation6 + $0xbf0] sm:$0xff]
    %v655 = vld [vmem:[#allocation6 + $0xbf8] sm:$0xff]
    %v656 = vld [vmem:[#allocation6 + $0xc00] sm:$0xff]
    %v657 = vld [vmem:[#allocation6 + $0xc08] sm:$0xff]
    %v658 = vld [vmem:[#allocation6 + $0xc10] sm:$0xff]
    %v659 = vld [vmem:[#allocation6 + $0xc18] sm:$0xff]
    %v660 = vld [vmem:[#allocation6 + $0xc20] sm:$0xff]
    %v661 = vld [vmem:[#allocation6 + $0xc28] sm:$0xff]
    %v662 = vld [vmem:[#allocation6 + $0xc30] sm:$0xff]
    %v663 = vld [vmem:[#allocation6 + $0xc38] sm:$0xff]
    %v664 = vld [vmem:[#allocation6 + $0xc40] sm:$0xff]
    %v665 = vld [vmem:[#allocation6 + $0xc48] sm:$0xff]
    %v666 = vld [vmem:[#allocation6 + $0xc50] sm:$0xff]
    %v667 = vld [vmem:[#allocation6 + $0xc58] sm:$0xff]
    %v668 = vld [vmem:[#allocation6 + $0xc60] sm:$0xff]
    %v669 = vld [vmem:[#allocation6 + $0xc68] sm:$0xff]
    %v670 = vld [vmem:[#allocation6 + $0xc70] sm:$0xff]
    %v671 = vld [vmem:[#allocation6 + $0xc78] sm:$0xff]
    %v672 = vld [vmem:[#allocation6 + $0xc80] sm:$0xff]
    %v673 = vld [vmem:[#allocation6 + $0xc88] sm:$0xff]
    %v674 = vld [vmem:[#allocation6 + $0xc90] sm:$0xff]
    %v675 = vld [vmem:[#allocation6 + $0xc98] sm:$0xff]
    %v676 = vld [vmem:[#allocation6 + $0xca0] sm:$0xff]
    %v677 = vld [vmem:[#allocation6 + $0xca8] sm:$0xff]
    %v678 = vld [vmem:[#allocation6 + $0xcb0] sm:$0xff]
    %v679 = vld [vmem:[#allocation6 + $0xcb8] sm:$0xff]
    %v680 = vld [vmem:[#allocation6 + $0xcc0] sm:$0xff]
    %v681 = vld [vmem:[#allocation6 + $0xcc8] sm:$0xff]
    %v682 = vld [vmem:[#allocation6 + $0xcd0] sm:$0xff]
    %v683 = vld [vmem:[#allocation6 + $0xcd8] sm:$0xff]
    %v684 = vld [vmem:[#allocation6 + $0xce0] sm:$0xff]
    %v685 = vld [vmem:[#allocation6 + $0xce8] sm:$0xff]
    %v686 = vld [vmem:[#allocation6 + $0xcf0] sm:$0xff]
    %v687 = vld [vmem:[#allocation6 + $0xcf8] sm:$0xff]
    %v688 = vld [vmem:[#allocation6 + $0xd00] sm:$0xff]
    %v689 = vld [vmem:[#allocation6 + $0xd08] sm:$0xff]
    %v690 = vld [vmem:[#allocation6 + $0xd10] sm:$0xff]
    %v691 = vld [vmem:[#allocation6 + $0xd18] sm:$0xff]
    %v692 = vld [vmem:[#allocation6 + $0xd20] sm:$0xff]
    %v693 = vld [vmem:[#allocation6 + $0xd28] sm:$0xff]
    %v694 = vld [vmem:[#allocation6 + $0xd30] sm:$0xff]
    %v695 = vld [vmem:[#allocation6 + $0xd38] sm:$0xff]
    %v696 = vld [vmem:[#allocation6 + $0xd40] sm:$0xff]
    %v697 = vld [vmem:[#allocation6 + $0xd48] sm:$0xff]
    %v698 = vld [vmem:[#allocation6 + $0xd50] sm:$0xff]
    %v699 = vld [vmem:[#allocation6 + $0xd58] sm:$0xff]
    %v700 = vld [vmem:[#allocation6 + $0xd60] sm:$0xff]
    %v701 = vld [vmem:[#allocation6 + $0xd68] sm:$0xff]
    %v702 = vld [vmem:[#allocation6 + $0xd70] sm:$0xff]
    %v703 = vld [vmem:[#allocation6 + $0xd78] sm:$0xff]
    %v704 = vld [vmem:[#allocation6 + $0xd80] sm:$0xff]
    %v705 = vld [vmem:[#allocation6 + $0xd88] sm:$0xff]
    %v706 = vld [vmem:[#allocation6 + $0xd90] sm:$0xff]
    %v707 = vld [vmem:[#allocation6 + $0xd98] sm:$0xff]
    %v708 = vld [vmem:[#allocation6 + $0xda0] sm:$0xff]
    %v709 = vld [vmem:[#allocation6 + $0xda8] sm:$0xff]
    %v710 = vld [vmem:[#allocation6 + $0xdb0] sm:$0xff]
    %v711 = vld [vmem:[#allocation6 + $0xdb8] sm:$0xff]
    %v712 = vld [vmem:[#allocation6 + $0xdc0] sm:$0xff]
    %v713 = vld [vmem:[#allocation6 + $0xdc8] sm:$0xff]
    %v714 = vld [vmem:[#allocation6 + $0xdd0] sm:$0xff]
    %v715 = vld [vmem:[#allocation6 + $0xdd8] sm:$0xff]
    %v716 = vld [vmem:[#allocation6 + $0xde0] sm:$0xff]
    %v717 = vld [vmem:[#allocation6 + $0xde8] sm:$0xff]
    %v718 = vld [vmem:[#allocation6 + $0xdf0] sm:$0xff]
    %v719 = vld [vmem:[#allocation6 + $0xdf8] sm:$0xff]
    %v720 = vld [vmem:[#allocation2] sm:$0xff]
    %v721 = vld [vmem:[#allocation2 + $0x8] sm:$0xff]
    %v722 = vld [vmem:[#allocation2 + $0x10] sm:$0xff]
    %v723 = vld [vmem:[#allocation2 + $0x18] sm:$0xff]
    %v724 = vld [vmem:[#allocation2 + $0x30] sm:$0xff]
    %v725 = vld [vmem:[#allocation2 + $0x38] sm:$0xff]
    %v726 = vld [vmem:[#allocation2 + $0x40] sm:$0xff]
    %v727 = vld [vmem:[#allocation2 + $0x48] sm:$0xff]
    %v728 = vld [vmem:[#allocation2 + $0x20] sm:$0x11]
    %v729 = vld [vmem:[#allocation2 + $0x28] sm:$0x11]
    %v730 = vld [vmem:[#allocation2 + $0x50] sm:$0x11]
    %v731 = vld [vmem:[#allocation2 + $0x58] sm:$0x11]
    %vm732 = vsmask.f32 3328
    %vm733 = vsmask.f32 7440
    %vm734 = vmor %vm732, %vm733
    %v736 = vshrl.u32 %v720, 16
    %v738 = vrot.slane %v736, 4
    %v739 = vshll.u32 %v720, 16
    %v741 = vrot.slane %v739, 5
    %v742 = vor.u32 %v738, %v741
    %v743 = vrot.slane %v742, 4
    %v745 = vshll.u32 %v722, 16
    %v747 = vrot.slane %v745, 5
    %v748 = vsel %vm734, %v743, %v747
    %v750 = vshrl.u32 %v721, 16
    %v752 = vrot.slane %v750, 4
    %v753 = vshll.u32 %v721, 16
    %v755 = vrot.slane %v753, 5
    %v756 = vor.u32 %v752, %v755
    %v757 = vrot.slane %v756, 4
    %v759 = vshll.u32 %v723, 16
    %v761 = vrot.slane %v759, 5
    %v762 = vsel %vm734, %v757, %v761
    %v763 = vshrl.u32 %v722, 16
    %v765 = vrot.slane %v763, 4
    %v766 = vor.u32 %v765, %v747
    %v767 = vrot.slane %v766, 4
    %v769 = vshll.u32 %v728, 16
    %v771 = vrot.slane %v769, 5
    %v772 = vsel %vm734, %v767, %v771
    %v773 = vshrl.u32 %v723, 16
    %v775 = vrot.slane %v773, 4
    %v776 = vor.u32 %v775, %v761
    %v777 = vrot.slane %v776, 4
    %v779 = vshll.u32 %v729, 16
    %v781 = vrot.slane %v779, 5
    %v782 = vsel %vm734, %v777, %v781
    %v784 = vshrl.u32 %v724, 16
    %v786 = vrot.slane %v784, 4
    %v787 = vshll.u32 %v724, 16
    %v789 = vrot.slane %v787, 5
    %v790 = vor.u32 %v786, %v789
    %v791 = vrot.slane %v790, 4
    %v793 = vshll.u32 %v726, 16
    %v795 = vrot.slane %v793, 5
    %v796 = vsel %vm734, %v791, %v795
    %v798 = vshrl.u32 %v725, 16
    %v800 = vrot.slane %v798, 4
    %v801 = vshll.u32 %v725, 16
    %v803 = vrot.slane %v801, 5
    %v804 = vor.u32 %v800, %v803
    %v805 = vrot.slane %v804, 4
    %v807 = vshll.u32 %v727, 16
    %v809 = vrot.slane %v807, 5
    %v810 = vsel %vm734, %v805, %v809
    %v811 = vshrl.u32 %v726, 16
    %v813 = vrot.slane %v811, 4
    %v814 = vor.u32 %v813, %v795
    %v815 = vrot.slane %v814, 4
    %v817 = vshll.u32 %v730, 16
    %v819 = vrot.slane %v817, 5
    %v820 = vsel %vm734, %v815, %v819
    %v821 = vshrl.u32 %v727, 16
    %v823 = vrot.slane %v821, 4
    %v824 = vor.u32 %v823, %v809
    %v825 = vrot.slane %v824, 4
    %v827 = vshll.u32 %v731, 16
    %v829 = vrot.slane %v827, 5
    %v830 = vsel %vm734, %v825, %v829
    %v831 = vld [vmem:[#allocation2] sm:$0xee]
    %v832 = vld [vmem:[#allocation2 + $0x8] sm:$0xee]
    %v833 = vld [vmem:[#allocation2 + $0x30] sm:$0xee]
    %v834 = vld [vmem:[#allocation2 + $0x38] sm:$0xee]
    %vm847 = vcmask 1042432
    %vm848 = vcmask 1046532
    %vm849 = vmor %vm847, %vm848
    %v850 = vrot.slane %v831, 5
    %v851 = vrot.slane %v850, 4
    %v852 = vrot.slane %v722, 5
    %v853 = vsel %vm849, %v851, %v852
    %v854 = vrot.slane %v832, 5
    %v855 = vrot.slane %v854, 4
    %v856 = vrot.slane %v723, 5
    %v857 = vsel %vm849, %v855, %v856
    %v858 = vrot.slane %v852, 4
    %v859 = vrot.slane %v728, 5
    %v860 = vsel %vm849, %v858, %v859
    %v861 = vrot.slane %v856, 4
    %v862 = vrot.slane %v729, 5
    %v863 = vsel %vm849, %v861, %v862
    %v864 = vrot.slane %v833, 5
    %v865 = vrot.slane %v864, 4
    %v866 = vrot.slane %v726, 5
    %v867 = vsel %vm849, %v865, %v866
    %v868 = vrot.slane %v834, 5
    %v869 = vrot.slane %v868, 4
    %v870 = vrot.slane %v727, 5
    %v871 = vsel %vm849, %v869, %v870
    %v872 = vrot.slane %v866, 4
    %v873 = vrot.slane %v730, 5
    %v874 = vsel %vm849, %v872, %v873
    %v875 = vrot.slane %v870, 4
    %v876 = vrot.slane %v731, 5
    %v877 = vsel %vm849, %v875, %v876
    %v878 = vld [vmem:[#allocation2 + $0x20] sm:$0x33]
    %v879 = vld [vmem:[#allocation2 + $0x28] sm:$0x33]
    %v880 = vld [vmem:[#allocation2 + $0x50] sm:$0x33]
    %v881 = vld [vmem:[#allocation2 + $0x58] sm:$0x33]
    %vm882 = vsmask.f32 2304
    %vm883 = vsmask.f32 6416
    %vm884 = vmor %vm882, %vm883
    %v886 = vshrl.u32 %v831, 16
    %v888 = vrot.slane %v886, 5
    %v889 = vshll.u32 %v831, 16
    %v891 = vrot.slane %v889, 6
    %v892 = vor.u32 %v888, %v891
    %v893 = vrot.slane %v892, 4
    %v894 = vrot.slane %v763, 5
    %v895 = vrot.slane %v745, 6
    %v896 = vor.u32 %v894, %v895
    %v897 = vsel %vm884, %v893, %v896
    %v899 = vshrl.u32 %v832, 16
    %v901 = vrot.slane %v899, 5
    %v902 = vshll.u32 %v832, 16
    %v904 = vrot.slane %v902, 6
    %v905 = vor.u32 %v901, %v904
    %v906 = vrot.slane %v905, 4
    %v907 = vrot.slane %v773, 5
    %v908 = vrot.slane %v759, 6
    %v909 = vor.u32 %v907, %v908
    %v910 = vsel %vm884, %v906, %v909
    %v911 = vrot.slane %v896, 4
    %v913 = vshrl.u32 %v878, 16
    %v915 = vrot.slane %v913, 5
    %v916 = vshll.u32 %v878, 16
    %v918 = vrot.slane %v916, 6
    %v919 = vor.u32 %v915, %v918
    %v920 = vsel %vm884, %v911, %v919
    %v921 = vrot.slane %v909, 4
    %v923 = vshrl.u32 %v879, 16
    %v925 = vrot.slane %v923, 5
    %v926 = vshll.u32 %v879, 16
    %v928 = vrot.slane %v926, 6
    %v929 = vor.u32 %v925, %v928
    %v930 = vsel %vm884, %v921, %v929
    %v932 = vshrl.u32 %v833, 16
    %v934 = vrot.slane %v932, 5
    %v935 = vshll.u32 %v833, 16
    %v937 = vrot.slane %v935, 6
    %v938 = vor.u32 %v934, %v937
    %v939 = vrot.slane %v938, 4
    %v940 = vrot.slane %v811, 5
    %v941 = vrot.slane %v793, 6
    %v942 = vor.u32 %v940, %v941
    %v943 = vsel %vm884, %v939, %v942
    %v945 = vshrl.u32 %v834, 16
    %v947 = vrot.slane %v945, 5
    %v948 = vshll.u32 %v834, 16
    %v950 = vrot.slane %v948, 6
    %v951 = vor.u32 %v947, %v950
    %v952 = vrot.slane %v951, 4
    %v953 = vrot.slane %v821, 5
    %v954 = vrot.slane %v807, 6
    %v955 = vor.u32 %v953, %v954
    %v956 = vsel %vm884, %v952, %v955
    %v957 = vrot.slane %v942, 4
    %v959 = vshrl.u32 %v880, 16
    %v961 = vrot.slane %v959, 5
    %v962 = vshll.u32 %v880, 16
    %v964 = vrot.slane %v962, 6
    %v965 = vor.u32 %v961, %v964
    %v966 = vsel %vm884, %v957, %v965
    %v967 = vrot.slane %v955, 4
    %v969 = vshrl.u32 %v881, 16
    %v971 = vrot.slane %v969, 5
    %v972 = vshll.u32 %v881, 16
    %v974 = vrot.slane %v972, 6
    %v975 = vor.u32 %v971, %v974
    %v976 = vsel %vm884, %v967, %v975
    %v977 = vld [vmem:[#allocation2] sm:$0xcc]
    %v978 = vld [vmem:[#allocation2 + $0x8] sm:$0xcc]
    %v979 = vld [vmem:[#allocation2 + $0x30] sm:$0xcc]
    %v980 = vld [vmem:[#allocation2 + $0x38] sm:$0xcc]
    %vm989 = vmor %vm246, %vm248
    %v990 = vrot.slane %v977, 6
    %v991 = vrot.slane %v990, 4
    %v992 = vrot.slane %v722, 6
    %v993 = vsel %vm989, %v991, %v992
    %v994 = vrot.slane %v978, 6
    %v995 = vrot.slane %v994, 4
    %v996 = vrot.slane %v723, 6
    %v997 = vsel %vm989, %v995, %v996
    %v998 = vrot.slane %v992, 4
    %v999 = vrot.slane %v878, 6
    %v1000 = vsel %vm989, %v998, %v999
    %v1001 = vrot.slane %v996, 4
    %v1002 = vrot.slane %v879, 6
    %v1003 = vsel %vm989, %v1001, %v1002
    %v1004 = vrot.slane %v979, 6
    %v1005 = vrot.slane %v1004, 4
    %v1006 = vrot.slane %v726, 6
    %v1007 = vsel %vm989, %v1005, %v1006
    %v1008 = vrot.slane %v980, 6
    %v1009 = vrot.slane %v1008, 4
    %v1010 = vrot.slane %v727, 6
    %v1011 = vsel %vm989, %v1009, %v1010
    %v1012 = vrot.slane %v1006, 4
    %v1013 = vrot.slane %v880, 6
    %v1014 = vsel %vm989, %v1012, %v1013
    %v1015 = vrot.slane %v1010, 4
    %v1016 = vrot.slane %v881, 6
    %v1017 = vsel %vm989, %v1015, %v1016
    %v1018 = vld [vmem:[#allocation2 + $0x20] sm:$0x77]
    %v1019 = vld [vmem:[#allocation2 + $0x28] sm:$0x77]
    %v1020 = vld [vmem:[#allocation2 + $0x50] sm:$0x77]
    %v1021 = vld [vmem:[#allocation2 + $0x58] sm:$0x77]
    %v1023 = vshrl.u32 %v977, 16
    %v1025 = vrot.slane %v1023, 6
    %v1026 = vshll.u32 %v977, 16
    %v1028 = vrot.slane %v1026, 7
    %v1029 = vor.u32 %v1025, %v1028
    %v1030 = vrot.slane %v1029, 4
    %v1031 = vrot.slane %v763, 6
    %v1032 = vrot.slane %v745, 7
    %v1033 = vor.u32 %v1031, %v1032
    %v1034 = vsel %vm142, %v1030, %v1033
    %v1036 = vshrl.u32 %v978, 16
    %v1038 = vrot.slane %v1036, 6
    %v1039 = vshll.u32 %v978, 16
    %v1041 = vrot.slane %v1039, 7
    %v1042 = vor.u32 %v1038, %v1041
    %v1043 = vrot.slane %v1042, 4
    %v1044 = vrot.slane %v773, 6
    %v1045 = vrot.slane %v759, 7
    %v1046 = vor.u32 %v1044, %v1045
    %v1047 = vsel %vm142, %v1043, %v1046
    %v1048 = vrot.slane %v1033, 4
    %v1050 = vshrl.u32 %v1018, 16
    %v1052 = vrot.slane %v1050, 6
    %v1053 = vshll.u32 %v1018, 16
    %v1055 = vrot.slane %v1053, 7
    %v1056 = vor.u32 %v1052, %v1055
    %v1057 = vsel %vm142, %v1048, %v1056
    %v1058 = vrot.slane %v1046, 4
    %v1060 = vshrl.u32 %v1019, 16
    %v1062 = vrot.slane %v1060, 6
    %v1063 = vshll.u32 %v1019, 16
    %v1065 = vrot.slane %v1063, 7
    %v1066 = vor.u32 %v1062, %v1065
    %v1067 = vsel %vm142, %v1058, %v1066
    %v1069 = vshrl.u32 %v979, 16
    %v1071 = vrot.slane %v1069, 6
    %v1072 = vshll.u32 %v979, 16
    %v1074 = vrot.slane %v1072, 7
    %v1075 = vor.u32 %v1071, %v1074
    %v1076 = vrot.slane %v1075, 4
    %v1077 = vrot.slane %v811, 6
    %v1078 = vrot.slane %v793, 7
    %v1079 = vor.u32 %v1077, %v1078
    %v1080 = vsel %vm142, %v1076, %v1079
    %v1082 = vshrl.u32 %v980, 16
    %v1084 = vrot.slane %v1082, 6
    %v1085 = vshll.u32 %v980, 16
    %v1087 = vrot.slane %v1085, 7
    %v1088 = vor.u32 %v1084, %v1087
    %v1089 = vrot.slane %v1088, 4
    %v1090 = vrot.slane %v821, 6
    %v1091 = vrot.slane %v807, 7
    %v1092 = vor.u32 %v1090, %v1091
    %v1093 = vsel %vm142, %v1089, %v1092
    %v1094 = vrot.slane %v1079, 4
    %v1096 = vshrl.u32 %v1020, 16
    %v1098 = vrot.slane %v1096, 6
    %v1099 = vshll.u32 %v1020, 16
    %v1101 = vrot.slane %v1099, 7
    %v1102 = vor.u32 %v1098, %v1101
    %v1103 = vsel %vm142, %v1094, %v1102
    %v1104 = vrot.slane %v1092, 4
    %v1106 = vshrl.u32 %v1021, 16
    %v1108 = vrot.slane %v1106, 6
    %v1109 = vshll.u32 %v1021, 16
    %v1111 = vrot.slane %v1109, 7
    %v1112 = vor.u32 %v1108, %v1111
    %v1113 = vsel %vm142, %v1104, %v1112
    %v1114 = vld [vmem:[#allocation2] sm:$0x88]
    %v1115 = vld [vmem:[#allocation2 + $0x8] sm:$0x88]
    %v1116 = vld [vmem:[#allocation2 + $0x30] sm:$0x88]
    %v1117 = vld [vmem:[#allocation2 + $0x38] sm:$0x88]
    %vm1126 = vcmask 1040384
    %vm1127 = vcmask 1044484
    %vm1128 = vmor %vm1126, %vm1127
    %v1129 = vrot.slane %v1114, 7
    %v1130 = vrot.slane %v1129, 4
    %v1131 = vrot.slane %v722, 7
    %v1132 = vsel %vm1128, %v1130, %v1131
    %v1133 = vrot.slane %v1115, 7
    %v1134 = vrot.slane %v1133, 4
    %v1135 = vrot.slane %v723, 7
    %v1136 = vsel %vm1128, %v1134, %v1135
    %v1137 = vrot.slane %v1131, 4
    %v1138 = vrot.slane %v1018, 7
    %v1139 = vsel %vm1128, %v1137, %v1138
    %v1140 = vrot.slane %v1135, 4
    %v1141 = vrot.slane %v1019, 7
    %v1142 = vsel %vm1128, %v1140, %v1141
    %v1143 = vrot.slane %v1116, 7
    %v1144 = vrot.slane %v1143, 4
    %v1145 = vrot.slane %v726, 7
    %v1146 = vsel %vm1128, %v1144, %v1145
    %v1147 = vrot.slane %v1117, 7
    %v1148 = vrot.slane %v1147, 4
    %v1149 = vrot.slane %v727, 7
    %v1150 = vsel %vm1128, %v1148, %v1149
    %v1151 = vrot.slane %v1145, 4
    %v1152 = vrot.slane %v1020, 7
    %v1153 = vsel %vm1128, %v1151, %v1152
    %v1154 = vrot.slane %v1149, 4
    %v1155 = vrot.slane %v1021, 7
    %v1156 = vsel %vm1128, %v1154, %v1155
    %v1161 = vunpack.c.l.b16 %v720
    %v1162 = vunpack.c.h.b16 %v720
    %v1163 = vunpack.c.l.b16 %v721
    %v1164 = vunpack.c.h.b16 %v721
    %v1165 = vunpack.c.l.b16 %v722
    %v1166 = vunpack.c.h.b16 %v722
    %v1167 = vunpack.c.l.b16 %v723
    %v1168 = vunpack.c.h.b16 %v723
    %v1169 = vunpack.c.l.b16 %v724
    %v1170 = vunpack.c.h.b16 %v724
    %v1171 = vunpack.c.l.b16 %v725
    %v1172 = vunpack.c.h.b16 %v725
    %v1173 = vunpack.c.l.b16 %v726
    %v1174 = vunpack.c.h.b16 %v726
    %v1175 = vunpack.c.l.b16 %v727
    %v1176 = vunpack.c.h.b16 %v727
    %v1177 = vpack.c.b16 %v1165, %v1161
    %v1178 = vpack.c.b16 %v1166, %v1162
    %v1179 = vpack.c.b16 %v1167, %v1163
    %v1180 = vpack.c.b16 %v1168, %v1164
    %v1181 = vpack.c.b16 %v1173, %v1169
    %v1182 = vpack.c.b16 %v1174, %v1170
    %v1183 = vpack.c.b16 %v1175, %v1171
    %v1184 = vpack.c.b16 %v1176, %v1172
    %v1193 = vunpack.c.l.b16 %v748
    %v1194 = vunpack.c.h.b16 %v748
    %v1195 = vunpack.c.l.b16 %v762
    %v1196 = vunpack.c.h.b16 %v762
    %v1197 = vunpack.c.l.b16 %v772
    %v1198 = vunpack.c.h.b16 %v772
    %v1199 = vunpack.c.l.b16 %v782
    %v1200 = vunpack.c.h.b16 %v782
    %v1201 = vunpack.c.l.b16 %v796
    %v1202 = vunpack.c.h.b16 %v796
    %v1203 = vunpack.c.l.b16 %v810
    %v1204 = vunpack.c.h.b16 %v810
    %v1205 = vunpack.c.l.b16 %v820
    %v1206 = vunpack.c.h.b16 %v820
    %v1207 = vunpack.c.l.b16 %v830
    %v1208 = vunpack.c.h.b16 %v830
    %v1209 = vpack.c.b16 %v1197, %v1193
    %v1210 = vpack.c.b16 %v1198, %v1194
    %v1211 = vpack.c.b16 %v1199, %v1195
    %v1212 = vpack.c.b16 %v1200, %v1196
    %v1213 = vpack.c.b16 %v1205, %v1201
    %v1214 = vpack.c.b16 %v1206, %v1202
    %v1215 = vpack.c.b16 %v1207, %v1203
    %v1216 = vpack.c.b16 %v1208, %v1204
    %v1225 = vunpack.c.l.b16 %v853
    %v1226 = vunpack.c.h.b16 %v853
    %v1227 = vunpack.c.l.b16 %v857
    %v1228 = vunpack.c.h.b16 %v857
    %v1229 = vunpack.c.l.b16 %v860
    %v1230 = vunpack.c.h.b16 %v860
    %v1231 = vunpack.c.l.b16 %v863
    %v1232 = vunpack.c.h.b16 %v863
    %v1233 = vunpack.c.l.b16 %v867
    %v1234 = vunpack.c.h.b16 %v867
    %v1235 = vunpack.c.l.b16 %v871
    %v1236 = vunpack.c.h.b16 %v871
    %v1237 = vunpack.c.l.b16 %v874
    %v1238 = vunpack.c.h.b16 %v874
    %v1239 = vunpack.c.l.b16 %v877
    %v1240 = vunpack.c.h.b16 %v877
    %v1241 = vpack.c.b16 %v1229, %v1225
    %v1242 = vpack.c.b16 %v1230, %v1226
    %v1243 = vpack.c.b16 %v1231, %v1227
    %v1244 = vpack.c.b16 %v1232, %v1228
    %v1245 = vpack.c.b16 %v1237, %v1233
    %v1246 = vpack.c.b16 %v1238, %v1234
    %v1247 = vpack.c.b16 %v1239, %v1235
    %v1248 = vpack.c.b16 %v1240, %v1236
    %v1257 = vunpack.c.l.b16 %v897
    %v1258 = vunpack.c.h.b16 %v897
    %v1259 = vunpack.c.l.b16 %v910
    %v1260 = vunpack.c.h.b16 %v910
    %v1261 = vunpack.c.l.b16 %v920
    %v1262 = vunpack.c.h.b16 %v920
    %v1263 = vunpack.c.l.b16 %v930
    %v1264 = vunpack.c.h.b16 %v930
    %v1265 = vunpack.c.l.b16 %v943
    %v1266 = vunpack.c.h.b16 %v943
    %v1267 = vunpack.c.l.b16 %v956
    %v1268 = vunpack.c.h.b16 %v956
    %v1269 = vunpack.c.l.b16 %v966
    %v1270 = vunpack.c.h.b16 %v966
    %v1271 = vunpack.c.l.b16 %v976
    %v1272 = vunpack.c.h.b16 %v976
    %v1273 = vpack.c.b16 %v1261, %v1257
    %v1274 = vpack.c.b16 %v1262, %v1258
    %v1275 = vpack.c.b16 %v1263, %v1259
    %v1276 = vpack.c.b16 %v1264, %v1260
    %v1277 = vpack.c.b16 %v1269, %v1265
    %v1278 = vpack.c.b16 %v1270, %v1266
    %v1279 = vpack.c.b16 %v1271, %v1267
    %v1280 = vpack.c.b16 %v1272, %v1268
    %v1289 = vunpack.c.l.b16 %v993
    %v1290 = vunpack.c.h.b16 %v993
    %v1291 = vunpack.c.l.b16 %v997
    %v1292 = vunpack.c.h.b16 %v997
    %v1293 = vunpack.c.l.b16 %v1000
    %v1294 = vunpack.c.h.b16 %v1000
    %v1295 = vunpack.c.l.b16 %v1003
    %v1296 = vunpack.c.h.b16 %v1003
    %v1297 = vunpack.c.l.b16 %v1007
    %v1298 = vunpack.c.h.b16 %v1007
    %v1299 = vunpack.c.l.b16 %v1011
    %v1300 = vunpack.c.h.b16 %v1011
    %v1301 = vunpack.c.l.b16 %v1014
    %v1302 = vunpack.c.h.b16 %v1014
    %v1303 = vunpack.c.l.b16 %v1017
    %v1304 = vunpack.c.h.b16 %v1017
    %v1305 = vpack.c.b16 %v1293, %v1289
    %v1306 = vpack.c.b16 %v1294, %v1290
    %v1307 = vpack.c.b16 %v1295, %v1291
    %v1308 = vpack.c.b16 %v1296, %v1292
    %v1309 = vpack.c.b16 %v1301, %v1297
    %v1310 = vpack.c.b16 %v1302, %v1298
    %v1311 = vpack.c.b16 %v1303, %v1299
    %v1312 = vpack.c.b16 %v1304, %v1300
    %v1321 = vunpack.c.l.b16 %v1034
    %v1322 = vunpack.c.h.b16 %v1034
    %v1323 = vunpack.c.l.b16 %v1047
    %v1324 = vunpack.c.h.b16 %v1047
    %v1325 = vunpack.c.l.b16 %v1057
    %v1326 = vunpack.c.h.b16 %v1057
    %v1327 = vunpack.c.l.b16 %v1067
    %v1328 = vunpack.c.h.b16 %v1067
    %v1329 = vunpack.c.l.b16 %v1080
    %v1330 = vunpack.c.h.b16 %v1080
    %v1331 = vunpack.c.l.b16 %v1093
    %v1332 = vunpack.c.h.b16 %v1093
    %v1333 = vunpack.c.l.b16 %v1103
    %v1334 = vunpack.c.h.b16 %v1103
    %v1335 = vunpack.c.l.b16 %v1113
    %v1336 = vunpack.c.h.b16 %v1113
    %v1337 = vpack.c.b16 %v1325, %v1321
    %v1338 = vpack.c.b16 %v1326, %v1322
    %v1339 = vpack.c.b16 %v1327, %v1323
    %v1340 = vpack.c.b16 %v1328, %v1324
    %v1341 = vpack.c.b16 %v1333, %v1329
    %v1342 = vpack.c.b16 %v1334, %v1330
    %v1343 = vpack.c.b16 %v1335, %v1331
    %v1344 = vpack.c.b16 %v1336, %v1332
    %v1353 = vunpack.c.l.b16 %v1132
    %v1354 = vunpack.c.h.b16 %v1132
    %v1355 = vunpack.c.l.b16 %v1136
    %v1356 = vunpack.c.h.b16 %v1136
    %v1357 = vunpack.c.l.b16 %v1139
    %v1358 = vunpack.c.h.b16 %v1139
    %v1359 = vunpack.c.l.b16 %v1142
    %v1360 = vunpack.c.h.b16 %v1142
    %v1361 = vunpack.c.l.b16 %v1146
    %v1362 = vunpack.c.h.b16 %v1146
    %v1363 = vunpack.c.l.b16 %v1150
    %v1364 = vunpack.c.h.b16 %v1150
    %v1365 = vunpack.c.l.b16 %v1153
    %v1366 = vunpack.c.h.b16 %v1153
    %v1367 = vunpack.c.l.b16 %v1156
    %v1368 = vunpack.c.h.b16 %v1156
    %v1369 = vpack.c.b16 %v1357, %v1353
    %v1370 = vpack.c.b16 %v1358, %v1354
    %v1371 = vpack.c.b16 %v1359, %v1355
    %v1372 = vpack.c.b16 %v1360, %v1356
    %v1373 = vpack.c.b16 %v1365, %v1361
    %v1374 = vpack.c.b16 %v1366, %v1362
    %v1375 = vpack.c.b16 %v1367, %v1363
    %v1376 = vpack.c.b16 %v1368, %v1364
    %v1385 = vld [vmem:[#allocation9] ss:$8 sm:$0x3]
    %v1387 = vlaneseq
    %v1388 = vshrl.u32 %v1387, 7
    %v1389 = vsub.s32 0, %v1388
    %v1390 = vrot.slane %v1385, %v1389
    %v1391 = vlaneseq
    %v1392 = vshrl.u32 %v1391, 7
    %v1393 = vsub.s32 1, %v1392
    %v1394 = vrot.slane %v1385, %v1393
    %v1845 = vunpack.c.l.b16 %v272
    %v1846 = vunpack.c.h.b16 %v272
    %v1847 = vunpack.c.l.b16 %v273
    %v1848 = vunpack.c.h.b16 %v273
    %v1849 = vunpack.c.l.b16 %v274
    %v1850 = vunpack.c.h.b16 %v274
    %v1851 = vunpack.c.l.b16 %v275
    %v1852 = vunpack.c.h.b16 %v275
    %v1853 = vunpack.c.l.b16 %v276
    %v1854 = vunpack.c.h.b16 %v276
    %v1855 = vunpack.c.l.b16 %v277
    %v1856 = vunpack.c.h.b16 %v277
    %v1857 = vunpack.c.l.b16 %v278
    %v1858 = vunpack.c.h.b16 %v278
    %v1859 = vunpack.c.l.b16 %v279
    %v1860 = vunpack.c.h.b16 %v279
    %v1861 = vunpack.c.l.b16 %v280
    %v1862 = vunpack.c.h.b16 %v280
    %v1863 = vunpack.c.l.b16 %v281
    %v1864 = vunpack.c.h.b16 %v281
    %v1865 = vunpack.c.l.b16 %v282
    %v1866 = vunpack.c.h.b16 %v282
    %v1867 = vunpack.c.l.b16 %v283
    %v1868 = vunpack.c.h.b16 %v283
    %v1869 = vunpack.c.l.b16 %v284
    %v1870 = vunpack.c.h.b16 %v284
    %v1871 = vunpack.c.l.b16 %v285
    %v1872 = vunpack.c.h.b16 %v285
    %v1873 = vunpack.c.l.b16 %v286
    %v1874 = vunpack.c.h.b16 %v286
    %v1875 = vunpack.c.l.b16 %v287
    %v1876 = vunpack.c.h.b16 %v287
    %v1877 = vunpack.c.l.b16 %v288
    %v1878 = vunpack.c.h.b16 %v288
    %v1879 = vunpack.c.l.b16 %v289
    %v1880 = vunpack.c.h.b16 %v289
    %v1881 = vunpack.c.l.b16 %v290
    %v1882 = vunpack.c.h.b16 %v290
    %v1883 = vunpack.c.l.b16 %v291
    %v1884 = vunpack.c.h.b16 %v291
    %v1885 = vunpack.c.l.b16 %v292
    %v1886 = vunpack.c.h.b16 %v292
    %v1887 = vunpack.c.l.b16 %v293
    %v1888 = vunpack.c.h.b16 %v293
    %v1889 = vunpack.c.l.b16 %v294
    %v1890 = vunpack.c.h.b16 %v294
    %v1891 = vunpack.c.l.b16 %v295
    %v1892 = vunpack.c.h.b16 %v295
    %v1893 = vunpack.c.l.b16 %v296
    %v1894 = vunpack.c.h.b16 %v296
    %v1895 = vunpack.c.l.b16 %v297
    %v1896 = vunpack.c.h.b16 %v297
    %v1897 = vunpack.c.l.b16 %v298
    %v1898 = vunpack.c.h.b16 %v298
    %v1899 = vunpack.c.l.b16 %v299
    %v1900 = vunpack.c.h.b16 %v299
    %v1901 = vunpack.c.l.b16 %v300
    %v1902 = vunpack.c.h.b16 %v300
    %v1903 = vunpack.c.l.b16 %v301
    %v1904 = vunpack.c.h.b16 %v301
    %v1905 = vunpack.c.l.b16 %v302
    %v1906 = vunpack.c.h.b16 %v302
    %v1907 = vunpack.c.l.b16 %v303
    %v1908 = vunpack.c.h.b16 %v303
    %v1909 = vunpack.c.l.b16 %v304
    %v1910 = vunpack.c.h.b16 %v304
    %v1911 = vunpack.c.l.b16 %v305
    %v1912 = vunpack.c.h.b16 %v305
    %v1913 = vunpack.c.l.b16 %v306
    %v1914 = vunpack.c.h.b16 %v306
    %v1915 = vunpack.c.l.b16 %v307
    %v1916 = vunpack.c.h.b16 %v307
    %v1917 = vunpack.c.l.b16 %v308
    %v1918 = vunpack.c.h.b16 %v308
    %v1919 = vunpack.c.l.b16 %v309
    %v1920 = vunpack.c.h.b16 %v309
    %v1921 = vunpack.c.l.b16 %v310
    %v1922 = vunpack.c.h.b16 %v310
    %v1923 = vunpack.c.l.b16 %v311
    %v1924 = vunpack.c.h.b16 %v311
    %v1925 = vunpack.c.l.b16 %v312
    %v1926 = vunpack.c.h.b16 %v312
    %v1927 = vunpack.c.l.b16 %v313
    %v1928 = vunpack.c.h.b16 %v313
    %v1929 = vunpack.c.l.b16 %v314
    %v1930 = vunpack.c.h.b16 %v314
    %v1931 = vunpack.c.l.b16 %v315
    %v1932 = vunpack.c.h.b16 %v315
    %v1933 = vunpack.c.l.b16 %v316
    %v1934 = vunpack.c.h.b16 %v316
    %v1935 = vunpack.c.l.b16 %v317
    %v1936 = vunpack.c.h.b16 %v317
    %v1937 = vunpack.c.l.b16 %v318
    %v1938 = vunpack.c.h.b16 %v318
    %v1939 = vunpack.c.l.b16 %v319
    %v1940 = vunpack.c.h.b16 %v319
    %v1941 = vunpack.c.l.b16 %v320
    %v1942 = vunpack.c.h.b16 %v320
    %v1943 = vunpack.c.l.b16 %v321
    %v1944 = vunpack.c.h.b16 %v321
    %v1945 = vunpack.c.l.b16 %v322
    %v1946 = vunpack.c.h.b16 %v322
    %v1947 = vunpack.c.l.b16 %v323
    %v1948 = vunpack.c.h.b16 %v323
    %v1949 = vunpack.c.l.b16 %v324
    %v1950 = vunpack.c.h.b16 %v324
    %v1951 = vunpack.c.l.b16 %v325
    %v1952 = vunpack.c.h.b16 %v325
    %v1953 = vunpack.c.l.b16 %v326
    %v1954 = vunpack.c.h.b16 %v326
    %v1955 = vunpack.c.l.b16 %v327
    %v1956 = vunpack.c.h.b16 %v327
    %v1957 = vunpack.c.l.b16 %v328
    %v1958 = vunpack.c.h.b16 %v328
    %v1959 = vunpack.c.l.b16 %v329
    %v1960 = vunpack.c.h.b16 %v329
    %v1961 = vunpack.c.l.b16 %v330
    %v1962 = vunpack.c.h.b16 %v330
    %v1963 = vunpack.c.l.b16 %v331
    %v1964 = vunpack.c.h.b16 %v331
    %v1965 = vunpack.c.l.b16 %v332
    %v1966 = vunpack.c.h.b16 %v332
    %v1967 = vunpack.c.l.b16 %v333
    %v1968 = vunpack.c.h.b16 %v333
    %v1969 = vunpack.c.l.b16 %v334
    %v1970 = vunpack.c.h.b16 %v334
    %v1971 = vunpack.c.l.b16 %v335
    %v1972 = vunpack.c.h.b16 %v335
    %v1973 = vunpack.c.l.b16 %v336
    %v1974 = vunpack.c.h.b16 %v336
    %v1975 = vunpack.c.l.b16 %v337
    %v1976 = vunpack.c.h.b16 %v337
    %v1977 = vunpack.c.l.b16 %v338
    %v1978 = vunpack.c.h.b16 %v338
    %v1979 = vunpack.c.l.b16 %v339
    %v1980 = vunpack.c.h.b16 %v339
    %v1981 = vunpack.c.l.b16 %v340
    %v1982 = vunpack.c.h.b16 %v340
    %v1983 = vunpack.c.l.b16 %v341
    %v1984 = vunpack.c.h.b16 %v341
    %v1985 = vunpack.c.l.b16 %v342
    %v1986 = vunpack.c.h.b16 %v342
    %v1987 = vunpack.c.l.b16 %v343
    %v1988 = vunpack.c.h.b16 %v343
    %v1989 = vunpack.c.l.b16 %v344
    %v1990 = vunpack.c.h.b16 %v344
    %v1991 = vunpack.c.l.b16 %v345
    %v1992 = vunpack.c.h.b16 %v345
    %v1993 = vunpack.c.l.b16 %v346
    %v1994 = vunpack.c.h.b16 %v346
    %v1995 = vunpack.c.l.b16 %v347
    %v1996 = vunpack.c.h.b16 %v347
    %v1997 = vunpack.c.l.b16 %v348
    %v1998 = vunpack.c.h.b16 %v348
    %v1999 = vunpack.c.l.b16 %v349
    %v2000 = vunpack.c.h.b16 %v349
    %v2001 = vunpack.c.l.b16 %v350
    %v2002 = vunpack.c.h.b16 %v350
    %v2003 = vunpack.c.l.b16 %v351
    %v2004 = vunpack.c.h.b16 %v351
    %v2005 = vunpack.c.l.b16 %v352
    %v2006 = vunpack.c.h.b16 %v352
    %v2007 = vunpack.c.l.b16 %v353
    %v2008 = vunpack.c.h.b16 %v353
    %v2009 = vunpack.c.l.b16 %v354
    %v2010 = vunpack.c.h.b16 %v354
    %v2011 = vunpack.c.l.b16 %v355
    %v2012 = vunpack.c.h.b16 %v355
    %v2013 = vunpack.c.l.b16 %v356
    %v2014 = vunpack.c.h.b16 %v356
    %v2015 = vunpack.c.l.b16 %v357
    %v2016 = vunpack.c.h.b16 %v357
    %v2017 = vunpack.c.l.b16 %v358
    %v2018 = vunpack.c.h.b16 %v358
    %v2019 = vunpack.c.l.b16 %v359
    %v2020 = vunpack.c.h.b16 %v359
    %v2021 = vunpack.c.l.b16 %v360
    %v2022 = vunpack.c.h.b16 %v360
    %v2023 = vunpack.c.l.b16 %v361
    %v2024 = vunpack.c.h.b16 %v361
    %v2025 = vunpack.c.l.b16 %v362
    %v2026 = vunpack.c.h.b16 %v362
    %v2027 = vunpack.c.l.b16 %v363
    %v2028 = vunpack.c.h.b16 %v363
    %v2029 = vunpack.c.l.b16 %v364
    %v2030 = vunpack.c.h.b16 %v364
    %v2031 = vunpack.c.l.b16 %v365
    %v2032 = vunpack.c.h.b16 %v365
    %v2033 = vunpack.c.l.b16 %v366
    %v2034 = vunpack.c.h.b16 %v366
    %v2035 = vunpack.c.l.b16 %v367
    %v2036 = vunpack.c.h.b16 %v367
    %v2037 = vunpack.c.l.b16 %v368
    %v2038 = vunpack.c.h.b16 %v368
    %v2039 = vunpack.c.l.b16 %v369
    %v2040 = vunpack.c.h.b16 %v369
    %v2041 = vunpack.c.l.b16 %v370
    %v2042 = vunpack.c.h.b16 %v370
    %v2043 = vunpack.c.l.b16 %v371
    %v2044 = vunpack.c.h.b16 %v371
    %v2045 = vunpack.c.l.b16 %v372
    %v2046 = vunpack.c.h.b16 %v372
    %v2047 = vunpack.c.l.b16 %v373
    %v2048 = vunpack.c.h.b16 %v373
    %v2049 = vunpack.c.l.b16 %v374
    %v2050 = vunpack.c.h.b16 %v374
    %v2051 = vunpack.c.l.b16 %v375
    %v2052 = vunpack.c.h.b16 %v375
    %v2053 = vunpack.c.l.b16 %v376
    %v2054 = vunpack.c.h.b16 %v376
    %v2055 = vunpack.c.l.b16 %v377
    %v2056 = vunpack.c.h.b16 %v377
    %v2057 = vunpack.c.l.b16 %v378
    %v2058 = vunpack.c.h.b16 %v378
    %v2059 = vunpack.c.l.b16 %v379
    %v2060 = vunpack.c.h.b16 %v379
    %v2061 = vunpack.c.l.b16 %v380
    %v2062 = vunpack.c.h.b16 %v380
    %v2063 = vunpack.c.l.b16 %v381
    %v2064 = vunpack.c.h.b16 %v381
    %v2065 = vunpack.c.l.b16 %v382
    %v2066 = vunpack.c.h.b16 %v382
    %v2067 = vunpack.c.l.b16 %v383
    %v2068 = vunpack.c.h.b16 %v383
    %v2069 = vunpack.c.l.b16 %v384
    %v2070 = vunpack.c.h.b16 %v384
    %v2071 = vunpack.c.l.b16 %v385
    %v2072 = vunpack.c.h.b16 %v385
    %v2073 = vunpack.c.l.b16 %v386
    %v2074 = vunpack.c.h.b16 %v386
    %v2075 = vunpack.c.l.b16 %v387
    %v2076 = vunpack.c.h.b16 %v387
    %v2077 = vunpack.c.l.b16 %v388
    %v2078 = vunpack.c.h.b16 %v388
    %v2079 = vunpack.c.l.b16 %v389
    %v2080 = vunpack.c.h.b16 %v389
    %v2081 = vunpack.c.l.b16 %v390
    %v2082 = vunpack.c.h.b16 %v390
    %v2083 = vunpack.c.l.b16 %v391
    %v2084 = vunpack.c.h.b16 %v391
    %v2085 = vunpack.c.l.b16 %v392
    %v2086 = vunpack.c.h.b16 %v392
    %v2087 = vunpack.c.l.b16 %v393
    %v2088 = vunpack.c.h.b16 %v393
    %v2089 = vunpack.c.l.b16 %v394
    %v2090 = vunpack.c.h.b16 %v394
    %v2091 = vunpack.c.l.b16 %v395
    %v2092 = vunpack.c.h.b16 %v395
    %v2093 = vunpack.c.l.b16 %v396
    %v2094 = vunpack.c.h.b16 %v396
    %v2095 = vunpack.c.l.b16 %v397
    %v2096 = vunpack.c.h.b16 %v397
    %v2097 = vunpack.c.l.b16 %v398
    %v2098 = vunpack.c.h.b16 %v398
    %v2099 = vunpack.c.l.b16 %v399
    %v2100 = vunpack.c.h.b16 %v399
    %v2101 = vunpack.c.l.b16 %v400
    %v2102 = vunpack.c.h.b16 %v400
    %v2103 = vunpack.c.l.b16 %v401
    %v2104 = vunpack.c.h.b16 %v401
    %v2105 = vunpack.c.l.b16 %v402
    %v2106 = vunpack.c.h.b16 %v402
    %v2107 = vunpack.c.l.b16 %v403
    %v2108 = vunpack.c.h.b16 %v403
    %v2109 = vunpack.c.l.b16 %v404
    %v2110 = vunpack.c.h.b16 %v404
    %v2111 = vunpack.c.l.b16 %v405
    %v2112 = vunpack.c.h.b16 %v405
    %v2113 = vunpack.c.l.b16 %v406
    %v2114 = vunpack.c.h.b16 %v406
    %v2115 = vunpack.c.l.b16 %v407
    %v2116 = vunpack.c.h.b16 %v407
    %v2117 = vunpack.c.l.b16 %v408
    %v2118 = vunpack.c.h.b16 %v408
    %v2119 = vunpack.c.l.b16 %v409
    %v2120 = vunpack.c.h.b16 %v409
    %v2121 = vunpack.c.l.b16 %v410
    %v2122 = vunpack.c.h.b16 %v410
    %v2123 = vunpack.c.l.b16 %v411
    %v2124 = vunpack.c.h.b16 %v411
    %v2125 = vunpack.c.l.b16 %v412
    %v2126 = vunpack.c.h.b16 %v412
    %v2127 = vunpack.c.l.b16 %v413
    %v2128 = vunpack.c.h.b16 %v413
    %v2129 = vunpack.c.l.b16 %v414
    %v2130 = vunpack.c.h.b16 %v414
    %v2131 = vunpack.c.l.b16 %v415
    %v2132 = vunpack.c.h.b16 %v415
    %v2133 = vunpack.c.l.b16 %v416
    %v2134 = vunpack.c.h.b16 %v416
    %v2135 = vunpack.c.l.b16 %v417
    %v2136 = vunpack.c.h.b16 %v417
    %v2137 = vunpack.c.l.b16 %v418
    %v2138 = vunpack.c.h.b16 %v418
    %v2139 = vunpack.c.l.b16 %v419
    %v2140 = vunpack.c.h.b16 %v419
    %v2141 = vunpack.c.l.b16 %v420
    %v2142 = vunpack.c.h.b16 %v420
    %v2143 = vunpack.c.l.b16 %v421
    %v2144 = vunpack.c.h.b16 %v421
    %v2145 = vunpack.c.l.b16 %v422
    %v2146 = vunpack.c.h.b16 %v422
    %v2147 = vunpack.c.l.b16 %v423
    %v2148 = vunpack.c.h.b16 %v423
    %v2149 = vunpack.c.l.b16 %v424
    %v2150 = vunpack.c.h.b16 %v424
    %v2151 = vunpack.c.l.b16 %v425
    %v2152 = vunpack.c.h.b16 %v425
    %v2153 = vunpack.c.l.b16 %v426
    %v2154 = vunpack.c.h.b16 %v426
    %v2155 = vunpack.c.l.b16 %v427
    %v2156 = vunpack.c.h.b16 %v427
    %v2157 = vunpack.c.l.b16 %v428
    %v2158 = vunpack.c.h.b16 %v428
    %v2159 = vunpack.c.l.b16 %v429
    %v2160 = vunpack.c.h.b16 %v429
    %v2161 = vunpack.c.l.b16 %v430
    %v2162 = vunpack.c.h.b16 %v430
    %v2163 = vunpack.c.l.b16 %v431
    %v2164 = vunpack.c.h.b16 %v431
    %v2165 = vunpack.c.l.b16 %v432
    %v2166 = vunpack.c.h.b16 %v432
    %v2167 = vunpack.c.l.b16 %v433
    %v2168 = vunpack.c.h.b16 %v433
    %v2169 = vunpack.c.l.b16 %v434
    %v2170 = vunpack.c.h.b16 %v434
    %v2171 = vunpack.c.l.b16 %v435
    %v2172 = vunpack.c.h.b16 %v435
    %v2173 = vunpack.c.l.b16 %v436
    %v2174 = vunpack.c.h.b16 %v436
    %v2175 = vunpack.c.l.b16 %v437
    %v2176 = vunpack.c.h.b16 %v437
    %v2177 = vunpack.c.l.b16 %v438
    %v2178 = vunpack.c.h.b16 %v438
    %v2179 = vunpack.c.l.b16 %v439
    %v2180 = vunpack.c.h.b16 %v439
    %v2181 = vunpack.c.l.b16 %v440
    %v2182 = vunpack.c.h.b16 %v440
    %v2183 = vunpack.c.l.b16 %v441
    %v2184 = vunpack.c.h.b16 %v441
    %v2185 = vunpack.c.l.b16 %v442
    %v2186 = vunpack.c.h.b16 %v442
    %v2187 = vunpack.c.l.b16 %v443
    %v2188 = vunpack.c.h.b16 %v443
    %v2189 = vunpack.c.l.b16 %v444
    %v2190 = vunpack.c.h.b16 %v444
    %v2191 = vunpack.c.l.b16 %v445
    %v2192 = vunpack.c.h.b16 %v445
    %v2193 = vunpack.c.l.b16 %v446
    %v2194 = vunpack.c.h.b16 %v446
    %v2195 = vunpack.c.l.b16 %v447
    %v2196 = vunpack.c.h.b16 %v447
    %v2197 = vunpack.c.l.b16 %v448
    %v2198 = vunpack.c.h.b16 %v448
    %v2199 = vunpack.c.l.b16 %v449
    %v2200 = vunpack.c.h.b16 %v449
    %v2201 = vunpack.c.l.b16 %v450
    %v2202 = vunpack.c.h.b16 %v450
    %v2203 = vunpack.c.l.b16 %v451
    %v2204 = vunpack.c.h.b16 %v451
    %v2205 = vunpack.c.l.b16 %v452
    %v2206 = vunpack.c.h.b16 %v452
    %v2207 = vunpack.c.l.b16 %v453
    %v2208 = vunpack.c.h.b16 %v453
    %v2209 = vunpack.c.l.b16 %v454
    %v2210 = vunpack.c.h.b16 %v454
    %v2211 = vunpack.c.l.b16 %v455
    %v2212 = vunpack.c.h.b16 %v455
    %v2213 = vunpack.c.l.b16 %v456
    %v2214 = vunpack.c.h.b16 %v456
    %v2215 = vunpack.c.l.b16 %v457
    %v2216 = vunpack.c.h.b16 %v457
    %v2217 = vunpack.c.l.b16 %v458
    %v2218 = vunpack.c.h.b16 %v458
    %v2219 = vunpack.c.l.b16 %v459
    %v2220 = vunpack.c.h.b16 %v459
    %v2221 = vunpack.c.l.b16 %v460
    %v2222 = vunpack.c.h.b16 %v460
    %v2223 = vunpack.c.l.b16 %v461
    %v2224 = vunpack.c.h.b16 %v461
    %v2225 = vunpack.c.l.b16 %v462
    %v2226 = vunpack.c.h.b16 %v462
    %v2227 = vunpack.c.l.b16 %v463
    %v2228 = vunpack.c.h.b16 %v463
    %v2229 = vunpack.c.l.b16 %v464
    %v2230 = vunpack.c.h.b16 %v464
    %v2231 = vunpack.c.l.b16 %v465
    %v2232 = vunpack.c.h.b16 %v465
    %v2233 = vunpack.c.l.b16 %v466
    %v2234 = vunpack.c.h.b16 %v466
    %v2235 = vunpack.c.l.b16 %v467
    %v2236 = vunpack.c.h.b16 %v467
    %v2237 = vunpack.c.l.b16 %v468
    %v2238 = vunpack.c.h.b16 %v468
    %v2239 = vunpack.c.l.b16 %v469
    %v2240 = vunpack.c.h.b16 %v469
    %v2241 = vunpack.c.l.b16 %v470
    %v2242 = vunpack.c.h.b16 %v470
    %v2243 = vunpack.c.l.b16 %v471
    %v2244 = vunpack.c.h.b16 %v471
    %v2245 = vunpack.c.l.b16 %v472
    %v2246 = vunpack.c.h.b16 %v472
    %v2247 = vunpack.c.l.b16 %v473
    %v2248 = vunpack.c.h.b16 %v473
    %v2249 = vunpack.c.l.b16 %v474
    %v2250 = vunpack.c.h.b16 %v474
    %v2251 = vunpack.c.l.b16 %v475
    %v2252 = vunpack.c.h.b16 %v475
    %v2253 = vunpack.c.l.b16 %v476
    %v2254 = vunpack.c.h.b16 %v476
    %v2255 = vunpack.c.l.b16 %v477
    %v2256 = vunpack.c.h.b16 %v477
    %v2257 = vunpack.c.l.b16 %v478
    %v2258 = vunpack.c.h.b16 %v478
    %v2259 = vunpack.c.l.b16 %v479
    %v2260 = vunpack.c.h.b16 %v479
    %v2261 = vunpack.c.l.b16 %v480
    %v2262 = vunpack.c.h.b16 %v480
    %v2263 = vunpack.c.l.b16 %v481
    %v2264 = vunpack.c.h.b16 %v481
    %v2265 = vunpack.c.l.b16 %v482
    %v2266 = vunpack.c.h.b16 %v482
    %v2267 = vunpack.c.l.b16 %v483
    %v2268 = vunpack.c.h.b16 %v483
    %v2269 = vunpack.c.l.b16 %v484
    %v2270 = vunpack.c.h.b16 %v484
    %v2271 = vunpack.c.l.b16 %v485
    %v2272 = vunpack.c.h.b16 %v485
    %v2273 = vunpack.c.l.b16 %v486
    %v2274 = vunpack.c.h.b16 %v486
    %v2275 = vunpack.c.l.b16 %v487
    %v2276 = vunpack.c.h.b16 %v487
    %v2277 = vunpack.c.l.b16 %v488
    %v2278 = vunpack.c.h.b16 %v488
    %v2279 = vunpack.c.l.b16 %v489
    %v2280 = vunpack.c.h.b16 %v489
    %v2281 = vunpack.c.l.b16 %v490
    %v2282 = vunpack.c.h.b16 %v490
    %v2283 = vunpack.c.l.b16 %v491
    %v2284 = vunpack.c.h.b16 %v491
    %v2285 = vunpack.c.l.b16 %v492
    %v2286 = vunpack.c.h.b16 %v492
    %v2287 = vunpack.c.l.b16 %v493
    %v2288 = vunpack.c.h.b16 %v493
    %v2289 = vunpack.c.l.b16 %v494
    %v2290 = vunpack.c.h.b16 %v494
    %v2291 = vunpack.c.l.b16 %v495
    %v2292 = vunpack.c.h.b16 %v495
    %v2293 = vunpack.c.l.b16 %v496
    %v2294 = vunpack.c.h.b16 %v496
    %v2295 = vunpack.c.l.b16 %v497
    %v2296 = vunpack.c.h.b16 %v497
    %v2297 = vunpack.c.l.b16 %v498
    %v2298 = vunpack.c.h.b16 %v498
    %v2299 = vunpack.c.l.b16 %v499
    %v2300 = vunpack.c.h.b16 %v499
    %v2301 = vunpack.c.l.b16 %v500
    %v2302 = vunpack.c.h.b16 %v500
    %v2303 = vunpack.c.l.b16 %v501
    %v2304 = vunpack.c.h.b16 %v501
    %v2305 = vunpack.c.l.b16 %v502
    %v2306 = vunpack.c.h.b16 %v502
    %v2307 = vunpack.c.l.b16 %v503
    %v2308 = vunpack.c.h.b16 %v503
    %v2309 = vunpack.c.l.b16 %v504
    %v2310 = vunpack.c.h.b16 %v504
    %v2311 = vunpack.c.l.b16 %v505
    %v2312 = vunpack.c.h.b16 %v505
    %v2313 = vunpack.c.l.b16 %v506
    %v2314 = vunpack.c.h.b16 %v506
    %v2315 = vunpack.c.l.b16 %v507
    %v2316 = vunpack.c.h.b16 %v507
    %v2317 = vunpack.c.l.b16 %v508
    %v2318 = vunpack.c.h.b16 %v508
    %v2319 = vunpack.c.l.b16 %v509
    %v2320 = vunpack.c.h.b16 %v509
    %v2321 = vunpack.c.l.b16 %v510
    %v2322 = vunpack.c.h.b16 %v510
    %v2323 = vunpack.c.l.b16 %v511
    %v2324 = vunpack.c.h.b16 %v511
    %v2325 = vunpack.c.l.b16 %v512
    %v2326 = vunpack.c.h.b16 %v512
    %v2327 = vunpack.c.l.b16 %v513
    %v2328 = vunpack.c.h.b16 %v513
    %v2329 = vunpack.c.l.b16 %v514
    %v2330 = vunpack.c.h.b16 %v514
    %v2331 = vunpack.c.l.b16 %v515
    %v2332 = vunpack.c.h.b16 %v515
    %v2333 = vunpack.c.l.b16 %v516
    %v2334 = vunpack.c.h.b16 %v516
    %v2335 = vunpack.c.l.b16 %v517
    %v2336 = vunpack.c.h.b16 %v517
    %v2337 = vunpack.c.l.b16 %v518
    %v2338 = vunpack.c.h.b16 %v518
    %v2339 = vunpack.c.l.b16 %v519
    %v2340 = vunpack.c.h.b16 %v519
    %v2341 = vunpack.c.l.b16 %v520
    %v2342 = vunpack.c.h.b16 %v520
    %v2343 = vunpack.c.l.b16 %v521
    %v2344 = vunpack.c.h.b16 %v521
    %v2345 = vunpack.c.l.b16 %v522
    %v2346 = vunpack.c.h.b16 %v522
    %v2347 = vunpack.c.l.b16 %v523
    %v2348 = vunpack.c.h.b16 %v523
    %v2349 = vunpack.c.l.b16 %v524
    %v2350 = vunpack.c.h.b16 %v524
    %v2351 = vunpack.c.l.b16 %v525
    %v2352 = vunpack.c.h.b16 %v525
    %v2353 = vunpack.c.l.b16 %v526
    %v2354 = vunpack.c.h.b16 %v526
    %v2355 = vunpack.c.l.b16 %v527
    %v2356 = vunpack.c.h.b16 %v527
    %v2357 = vunpack.c.l.b16 %v528
    %v2358 = vunpack.c.h.b16 %v528
    %v2359 = vunpack.c.l.b16 %v529
    %v2360 = vunpack.c.h.b16 %v529
    %v2361 = vunpack.c.l.b16 %v530
    %v2362 = vunpack.c.h.b16 %v530
    %v2363 = vunpack.c.l.b16 %v531
    %v2364 = vunpack.c.h.b16 %v531
    %v2365 = vunpack.c.l.b16 %v532
    %v2366 = vunpack.c.h.b16 %v532
    %v2367 = vunpack.c.l.b16 %v533
    %v2368 = vunpack.c.h.b16 %v533
    %v2369 = vunpack.c.l.b16 %v534
    %v2370 = vunpack.c.h.b16 %v534
    %v2371 = vunpack.c.l.b16 %v535
    %v2372 = vunpack.c.h.b16 %v535
    %v2373 = vunpack.c.l.b16 %v536
    %v2374 = vunpack.c.h.b16 %v536
    %v2375 = vunpack.c.l.b16 %v537
    %v2376 = vunpack.c.h.b16 %v537
    %v2377 = vunpack.c.l.b16 %v538
    %v2378 = vunpack.c.h.b16 %v538
    %v2379 = vunpack.c.l.b16 %v539
    %v2380 = vunpack.c.h.b16 %v539
    %v2381 = vunpack.c.l.b16 %v540
    %v2382 = vunpack.c.h.b16 %v540
    %v2383 = vunpack.c.l.b16 %v541
    %v2384 = vunpack.c.h.b16 %v541
    %v2385 = vunpack.c.l.b16 %v542
    %v2386 = vunpack.c.h.b16 %v542
    %v2387 = vunpack.c.l.b16 %v543
    %v2388 = vunpack.c.h.b16 %v543
    %v2389 = vunpack.c.l.b16 %v544
    %v2390 = vunpack.c.h.b16 %v544
    %v2391 = vunpack.c.l.b16 %v545
    %v2392 = vunpack.c.h.b16 %v545
    %v2393 = vunpack.c.l.b16 %v546
    %v2394 = vunpack.c.h.b16 %v546
    %v2395 = vunpack.c.l.b16 %v547
    %v2396 = vunpack.c.h.b16 %v547
    %v2397 = vunpack.c.l.b16 %v548
    %v2398 = vunpack.c.h.b16 %v548
    %v2399 = vunpack.c.l.b16 %v549
    %v2400 = vunpack.c.h.b16 %v549
    %v2401 = vunpack.c.l.b16 %v550
    %v2402 = vunpack.c.h.b16 %v550
    %v2403 = vunpack.c.l.b16 %v551
    %v2404 = vunpack.c.h.b16 %v551
    %v2405 = vunpack.c.l.b16 %v552
    %v2406 = vunpack.c.h.b16 %v552
    %v2407 = vunpack.c.l.b16 %v553
    %v2408 = vunpack.c.h.b16 %v553
    %v2409 = vunpack.c.l.b16 %v554
    %v2410 = vunpack.c.h.b16 %v554
    %v2411 = vunpack.c.l.b16 %v555
    %v2412 = vunpack.c.h.b16 %v555
    %v2413 = vunpack.c.l.b16 %v556
    %v2414 = vunpack.c.h.b16 %v556
    %v2415 = vunpack.c.l.b16 %v557
    %v2416 = vunpack.c.h.b16 %v557
    %v2417 = vunpack.c.l.b16 %v558
    %v2418 = vunpack.c.h.b16 %v558
    %v2419 = vunpack.c.l.b16 %v559
    %v2420 = vunpack.c.h.b16 %v559
    %v2421 = vunpack.c.l.b16 %v560
    %v2422 = vunpack.c.h.b16 %v560
    %v2423 = vunpack.c.l.b16 %v561
    %v2424 = vunpack.c.h.b16 %v561
    %v2425 = vunpack.c.l.b16 %v562
    %v2426 = vunpack.c.h.b16 %v562
    %v2427 = vunpack.c.l.b16 %v563
    %v2428 = vunpack.c.h.b16 %v563
    %v2429 = vunpack.c.l.b16 %v564
    %v2430 = vunpack.c.h.b16 %v564
    %v2431 = vunpack.c.l.b16 %v565
    %v2432 = vunpack.c.h.b16 %v565
    %v2433 = vunpack.c.l.b16 %v566
    %v2434 = vunpack.c.h.b16 %v566
    %v2435 = vunpack.c.l.b16 %v567
    %v2436 = vunpack.c.h.b16 %v567
    %v2437 = vunpack.c.l.b16 %v568
    %v2438 = vunpack.c.h.b16 %v568
    %v2439 = vunpack.c.l.b16 %v569
    %v2440 = vunpack.c.h.b16 %v569
    %v2441 = vunpack.c.l.b16 %v570
    %v2442 = vunpack.c.h.b16 %v570
    %v2443 = vunpack.c.l.b16 %v571
    %v2444 = vunpack.c.h.b16 %v571
    %v2445 = vunpack.c.l.b16 %v572
    %v2446 = vunpack.c.h.b16 %v572
    %v2447 = vunpack.c.l.b16 %v573
    %v2448 = vunpack.c.h.b16 %v573
    %v2449 = vunpack.c.l.b16 %v574
    %v2450 = vunpack.c.h.b16 %v574
    %v2451 = vunpack.c.l.b16 %v575
    %v2452 = vunpack.c.h.b16 %v575
    %v2453 = vunpack.c.l.b16 %v576
    %v2454 = vunpack.c.h.b16 %v576
    %v2455 = vunpack.c.l.b16 %v577
    %v2456 = vunpack.c.h.b16 %v577
    %v2457 = vunpack.c.l.b16 %v578
    %v2458 = vunpack.c.h.b16 %v578
    %v2459 = vunpack.c.l.b16 %v579
    %v2460 = vunpack.c.h.b16 %v579
    %v2461 = vunpack.c.l.b16 %v580
    %v2462 = vunpack.c.h.b16 %v580
    %v2463 = vunpack.c.l.b16 %v581
    %v2464 = vunpack.c.h.b16 %v581
    %v2465 = vunpack.c.l.b16 %v582
    %v2466 = vunpack.c.h.b16 %v582
    %v2467 = vunpack.c.l.b16 %v583
    %v2468 = vunpack.c.h.b16 %v583
    %v2469 = vunpack.c.l.b16 %v584
    %v2470 = vunpack.c.h.b16 %v584
    %v2471 = vunpack.c.l.b16 %v585
    %v2472 = vunpack.c.h.b16 %v585
    %v2473 = vunpack.c.l.b16 %v586
    %v2474 = vunpack.c.h.b16 %v586
    %v2475 = vunpack.c.l.b16 %v587
    %v2476 = vunpack.c.h.b16 %v587
    %v2477 = vunpack.c.l.b16 %v588
    %v2478 = vunpack.c.h.b16 %v588
    %v2479 = vunpack.c.l.b16 %v589
    %v2480 = vunpack.c.h.b16 %v589
    %v2481 = vunpack.c.l.b16 %v590
    %v2482 = vunpack.c.h.b16 %v590
    %v2483 = vunpack.c.l.b16 %v591
    %v2484 = vunpack.c.h.b16 %v591
    %v2485 = vunpack.c.l.b16 %v592
    %v2486 = vunpack.c.h.b16 %v592
    %v2487 = vunpack.c.l.b16 %v593
    %v2488 = vunpack.c.h.b16 %v593
    %v2489 = vunpack.c.l.b16 %v594
    %v2490 = vunpack.c.h.b16 %v594
    %v2491 = vunpack.c.l.b16 %v595
    %v2492 = vunpack.c.h.b16 %v595
    %v2493 = vunpack.c.l.b16 %v596
    %v2494 = vunpack.c.h.b16 %v596
    %v2495 = vunpack.c.l.b16 %v597
    %v2496 = vunpack.c.h.b16 %v597
    %v2497 = vunpack.c.l.b16 %v598
    %v2498 = vunpack.c.h.b16 %v598
    %v2499 = vunpack.c.l.b16 %v599
    %v2500 = vunpack.c.h.b16 %v599
    %v2501 = vunpack.c.l.b16 %v600
    %v2502 = vunpack.c.h.b16 %v600
    %v2503 = vunpack.c.l.b16 %v601
    %v2504 = vunpack.c.h.b16 %v601
    %v2505 = vunpack.c.l.b16 %v602
    %v2506 = vunpack.c.h.b16 %v602
    %v2507 = vunpack.c.l.b16 %v603
    %v2508 = vunpack.c.h.b16 %v603
    %v2509 = vunpack.c.l.b16 %v604
    %v2510 = vunpack.c.h.b16 %v604
    %v2511 = vunpack.c.l.b16 %v605
    %v2512 = vunpack.c.h.b16 %v605
    %v2513 = vunpack.c.l.b16 %v606
    %v2514 = vunpack.c.h.b16 %v606
    %v2515 = vunpack.c.l.b16 %v607
    %v2516 = vunpack.c.h.b16 %v607
    %v2517 = vunpack.c.l.b16 %v608
    %v2518 = vunpack.c.h.b16 %v608
    %v2519 = vunpack.c.l.b16 %v609
    %v2520 = vunpack.c.h.b16 %v609
    %v2521 = vunpack.c.l.b16 %v610
    %v2522 = vunpack.c.h.b16 %v610
    %v2523 = vunpack.c.l.b16 %v611
    %v2524 = vunpack.c.h.b16 %v611
    %v2525 = vunpack.c.l.b16 %v612
    %v2526 = vunpack.c.h.b16 %v612
    %v2527 = vunpack.c.l.b16 %v613
    %v2528 = vunpack.c.h.b16 %v613
    %v2529 = vunpack.c.l.b16 %v614
    %v2530 = vunpack.c.h.b16 %v614
    %v2531 = vunpack.c.l.b16 %v615
    %v2532 = vunpack.c.h.b16 %v615
    %v2533 = vunpack.c.l.b16 %v616
    %v2534 = vunpack.c.h.b16 %v616
    %v2535 = vunpack.c.l.b16 %v617
    %v2536 = vunpack.c.h.b16 %v617
    %v2537 = vunpack.c.l.b16 %v618
    %v2538 = vunpack.c.h.b16 %v618
    %v2539 = vunpack.c.l.b16 %v619
    %v2540 = vunpack.c.h.b16 %v619
    %v2541 = vunpack.c.l.b16 %v620
    %v2542 = vunpack.c.h.b16 %v620
    %v2543 = vunpack.c.l.b16 %v621
    %v2544 = vunpack.c.h.b16 %v621
    %v2545 = vunpack.c.l.b16 %v622
    %v2546 = vunpack.c.h.b16 %v622
    %v2547 = vunpack.c.l.b16 %v623
    %v2548 = vunpack.c.h.b16 %v623
    %v2549 = vunpack.c.l.b16 %v624
    %v2550 = vunpack.c.h.b16 %v624
    %v2551 = vunpack.c.l.b16 %v625
    %v2552 = vunpack.c.h.b16 %v625
    %v2553 = vunpack.c.l.b16 %v626
    %v2554 = vunpack.c.h.b16 %v626
    %v2555 = vunpack.c.l.b16 %v627
    %v2556 = vunpack.c.h.b16 %v627
    %v2557 = vunpack.c.l.b16 %v628
    %v2558 = vunpack.c.h.b16 %v628
    %v2559 = vunpack.c.l.b16 %v629
    %v2560 = vunpack.c.h.b16 %v629
    %v2561 = vunpack.c.l.b16 %v630
    %v2562 = vunpack.c.h.b16 %v630
    %v2563 = vunpack.c.l.b16 %v631
    %v2564 = vunpack.c.h.b16 %v631
    %v2565 = vunpack.c.l.b16 %v632
    %v2566 = vunpack.c.h.b16 %v632
    %v2567 = vunpack.c.l.b16 %v633
    %v2568 = vunpack.c.h.b16 %v633
    %v2569 = vunpack.c.l.b16 %v634
    %v2570 = vunpack.c.h.b16 %v634
    %v2571 = vunpack.c.l.b16 %v635
    %v2572 = vunpack.c.h.b16 %v635
    %v2573 = vunpack.c.l.b16 %v636
    %v2574 = vunpack.c.h.b16 %v636
    %v2575 = vunpack.c.l.b16 %v637
    %v2576 = vunpack.c.h.b16 %v637
    %v2577 = vunpack.c.l.b16 %v638
    %v2578 = vunpack.c.h.b16 %v638
    %v2579 = vunpack.c.l.b16 %v639
    %v2580 = vunpack.c.h.b16 %v639
    %v2581 = vunpack.c.l.b16 %v640
    %v2582 = vunpack.c.h.b16 %v640
    %v2583 = vunpack.c.l.b16 %v641
    %v2584 = vunpack.c.h.b16 %v641
    %v2585 = vunpack.c.l.b16 %v642
    %v2586 = vunpack.c.h.b16 %v642
    %v2587 = vunpack.c.l.b16 %v643
    %v2588 = vunpack.c.h.b16 %v643
    %v2589 = vunpack.c.l.b16 %v644
    %v2590 = vunpack.c.h.b16 %v644
    %v2591 = vunpack.c.l.b16 %v645
    %v2592 = vunpack.c.h.b16 %v645
    %v2593 = vunpack.c.l.b16 %v646
    %v2594 = vunpack.c.h.b16 %v646
    %v2595 = vunpack.c.l.b16 %v647
    %v2596 = vunpack.c.h.b16 %v647
    %v2597 = vunpack.c.l.b16 %v648
    %v2598 = vunpack.c.h.b16 %v648
    %v2599 = vunpack.c.l.b16 %v649
    %v2600 = vunpack.c.h.b16 %v649
    %v2601 = vunpack.c.l.b16 %v650
    %v2602 = vunpack.c.h.b16 %v650
    %v2603 = vunpack.c.l.b16 %v651
    %v2604 = vunpack.c.h.b16 %v651
    %v2605 = vunpack.c.l.b16 %v652
    %v2606 = vunpack.c.h.b16 %v652
    %v2607 = vunpack.c.l.b16 %v653
    %v2608 = vunpack.c.h.b16 %v653
    %v2609 = vunpack.c.l.b16 %v654
    %v2610 = vunpack.c.h.b16 %v654
    %v2611 = vunpack.c.l.b16 %v655
    %v2612 = vunpack.c.h.b16 %v655
    %v2613 = vunpack.c.l.b16 %v656
    %v2614 = vunpack.c.h.b16 %v656
    %v2615 = vunpack.c.l.b16 %v657
    %v2616 = vunpack.c.h.b16 %v657
    %v2617 = vunpack.c.l.b16 %v658
    %v2618 = vunpack.c.h.b16 %v658
    %v2619 = vunpack.c.l.b16 %v659
    %v2620 = vunpack.c.h.b16 %v659
    %v2621 = vunpack.c.l.b16 %v660
    %v2622 = vunpack.c.h.b16 %v660
    %v2623 = vunpack.c.l.b16 %v661
    %v2624 = vunpack.c.h.b16 %v661
    %v2625 = vunpack.c.l.b16 %v662
    %v2626 = vunpack.c.h.b16 %v662
    %v2627 = vunpack.c.l.b16 %v663
    %v2628 = vunpack.c.h.b16 %v663
    %v2629 = vunpack.c.l.b16 %v664
    %v2630 = vunpack.c.h.b16 %v664
    %v2631 = vunpack.c.l.b16 %v665
    %v2632 = vunpack.c.h.b16 %v665
    %v2633 = vunpack.c.l.b16 %v666
    %v2634 = vunpack.c.h.b16 %v666
    %v2635 = vunpack.c.l.b16 %v667
    %v2636 = vunpack.c.h.b16 %v667
    %v2637 = vunpack.c.l.b16 %v668
    %v2638 = vunpack.c.h.b16 %v668
    %v2639 = vunpack.c.l.b16 %v669
    %v2640 = vunpack.c.h.b16 %v669
    %v2641 = vunpack.c.l.b16 %v670
    %v2642 = vunpack.c.h.b16 %v670
    %v2643 = vunpack.c.l.b16 %v671
    %v2644 = vunpack.c.h.b16 %v671
    %v2645 = vunpack.c.l.b16 %v672
    %v2646 = vunpack.c.h.b16 %v672
    %v2647 = vunpack.c.l.b16 %v673
    %v2648 = vunpack.c.h.b16 %v673
    %v2649 = vunpack.c.l.b16 %v674
    %v2650 = vunpack.c.h.b16 %v674
    %v2651 = vunpack.c.l.b16 %v675
    %v2652 = vunpack.c.h.b16 %v675
    %v2653 = vunpack.c.l.b16 %v676
    %v2654 = vunpack.c.h.b16 %v676
    %v2655 = vunpack.c.l.b16 %v677
    %v2656 = vunpack.c.h.b16 %v677
    %v2657 = vunpack.c.l.b16 %v678
    %v2658 = vunpack.c.h.b16 %v678
    %v2659 = vunpack.c.l.b16 %v679
    %v2660 = vunpack.c.h.b16 %v679
    %v2661 = vunpack.c.l.b16 %v680
    %v2662 = vunpack.c.h.b16 %v680
    %v2663 = vunpack.c.l.b16 %v681
    %v2664 = vunpack.c.h.b16 %v681
    %v2665 = vunpack.c.l.b16 %v682
    %v2666 = vunpack.c.h.b16 %v682
    %v2667 = vunpack.c.l.b16 %v683
    %v2668 = vunpack.c.h.b16 %v683
    %v2669 = vunpack.c.l.b16 %v684
    %v2670 = vunpack.c.h.b16 %v684
    %v2671 = vunpack.c.l.b16 %v685
    %v2672 = vunpack.c.h.b16 %v685
    %v2673 = vunpack.c.l.b16 %v686
    %v2674 = vunpack.c.h.b16 %v686
    %v2675 = vunpack.c.l.b16 %v687
    %v2676 = vunpack.c.h.b16 %v687
    %v2677 = vunpack.c.l.b16 %v688
    %v2678 = vunpack.c.h.b16 %v688
    %v2679 = vunpack.c.l.b16 %v689
    %v2680 = vunpack.c.h.b16 %v689
    %v2681 = vunpack.c.l.b16 %v690
    %v2682 = vunpack.c.h.b16 %v690
    %v2683 = vunpack.c.l.b16 %v691
    %v2684 = vunpack.c.h.b16 %v691
    %v2685 = vunpack.c.l.b16 %v692
    %v2686 = vunpack.c.h.b16 %v692
    %v2687 = vunpack.c.l.b16 %v693
    %v2688 = vunpack.c.h.b16 %v693
    %v2689 = vunpack.c.l.b16 %v694
    %v2690 = vunpack.c.h.b16 %v694
    %v2691 = vunpack.c.l.b16 %v695
    %v2692 = vunpack.c.h.b16 %v695
    %v2693 = vunpack.c.l.b16 %v696
    %v2694 = vunpack.c.h.b16 %v696
    %v2695 = vunpack.c.l.b16 %v697
    %v2696 = vunpack.c.h.b16 %v697
    %v2697 = vunpack.c.l.b16 %v698
    %v2698 = vunpack.c.h.b16 %v698
    %v2699 = vunpack.c.l.b16 %v699
    %v2700 = vunpack.c.h.b16 %v699
    %v2701 = vunpack.c.l.b16 %v700
    %v2702 = vunpack.c.h.b16 %v700
    %v2703 = vunpack.c.l.b16 %v701
    %v2704 = vunpack.c.h.b16 %v701
    %v2705 = vunpack.c.l.b16 %v702
    %v2706 = vunpack.c.h.b16 %v702
    %v2707 = vunpack.c.l.b16 %v703
    %v2708 = vunpack.c.h.b16 %v703
    %v2709 = vunpack.c.l.b16 %v704
    %v2710 = vunpack.c.h.b16 %v704
    %v2711 = vunpack.c.l.b16 %v705
    %v2712 = vunpack.c.h.b16 %v705
    %v2713 = vunpack.c.l.b16 %v706
    %v2714 = vunpack.c.h.b16 %v706
    %v2715 = vunpack.c.l.b16 %v707
    %v2716 = vunpack.c.h.b16 %v707
    %v2717 = vunpack.c.l.b16 %v708
    %v2718 = vunpack.c.h.b16 %v708
    %v2719 = vunpack.c.l.b16 %v709
    %v2720 = vunpack.c.h.b16 %v709
    %v2721 = vunpack.c.l.b16 %v710
    %v2722 = vunpack.c.h.b16 %v710
    %v2723 = vunpack.c.l.b16 %v711
    %v2724 = vunpack.c.h.b16 %v711
    %v2725 = vunpack.c.l.b16 %v712
    %v2726 = vunpack.c.h.b16 %v712
    %v2727 = vunpack.c.l.b16 %v713
    %v2728 = vunpack.c.h.b16 %v713
    %v2729 = vunpack.c.l.b16 %v714
    %v2730 = vunpack.c.h.b16 %v714
    %v2731 = vunpack.c.l.b16 %v715
    %v2732 = vunpack.c.h.b16 %v715
    %v2733 = vunpack.c.l.b16 %v716
    %v2734 = vunpack.c.h.b16 %v716
    %v2735 = vunpack.c.l.b16 %v717
    %v2736 = vunpack.c.h.b16 %v717
    %v2737 = vunpack.c.l.b16 %v718
    %v2738 = vunpack.c.h.b16 %v718
    %v2739 = vunpack.c.l.b16 %v719
    %v2740 = vunpack.c.h.b16 %v719
    %v2741 = vpack.c.b16 %v1847, %v1845
    %v2742 = vpack.c.b16 %v1848, %v1846
    %v2743 = vpack.c.b16 %v1851, %v1849
    %v2744 = vpack.c.b16 %v1852, %v1850
    %v2745 = vpack.c.b16 %v1855, %v1853
    %v2746 = vpack.c.b16 %v1856, %v1854
    %v2747 = vpack.c.b16 %v1859, %v1857
    %v2748 = vpack.c.b16 %v1860, %v1858
    %v2749 = vpack.c.b16 %v1863, %v1861
    %v2750 = vpack.c.b16 %v1864, %v1862
    %v2751 = vpack.c.b16 %v1867, %v1865
    %v2752 = vpack.c.b16 %v1868, %v1866
    %v2753 = vpack.c.b16 %v1871, %v1869
    %v2754 = vpack.c.b16 %v1872, %v1870
    %v2755 = vpack.c.b16 %v1875, %v1873
    %v2756 = vpack.c.b16 %v1876, %v1874
    %v2757 = vpack.c.b16 %v1879, %v1877
    %v2758 = vpack.c.b16 %v1880, %v1878
    %v2759 = vpack.c.b16 %v1883, %v1881
    %v2760 = vpack.c.b16 %v1884, %v1882
    %v2761 = vpack.c.b16 %v1887, %v1885
    %v2762 = vpack.c.b16 %v1888, %v1886
    %v2763 = vpack.c.b16 %v1891, %v1889
    %v2764 = vpack.c.b16 %v1892, %v1890
    %v2765 = vpack.c.b16 %v1895, %v1893
    %v2766 = vpack.c.b16 %v1896, %v1894
    %v2767 = vpack.c.b16 %v1899, %v1897
    %v2768 = vpack.c.b16 %v1900, %v1898
    %v2769 = vpack.c.b16 %v1903, %v1901
    %v2770 = vpack.c.b16 %v1904, %v1902
    %v2771 = vpack.c.b16 %v1907, %v1905
    %v2772 = vpack.c.b16 %v1908, %v1906
    %v2773 = vpack.c.b16 %v1911, %v1909
    %v2774 = vpack.c.b16 %v1912, %v1910
    %v2775 = vpack.c.b16 %v1915, %v1913
    %v2776 = vpack.c.b16 %v1916, %v1914
    %v2777 = vpack.c.b16 %v1919, %v1917
    %v2778 = vpack.c.b16 %v1920, %v1918
    %v2779 = vpack.c.b16 %v1923, %v1921
    %v2780 = vpack.c.b16 %v1924, %v1922
    %v2781 = vpack.c.b16 %v1927, %v1925
    %v2782 = vpack.c.b16 %v1928, %v1926
    %v2783 = vpack.c.b16 %v1931, %v1929
    %v2784 = vpack.c.b16 %v1932, %v1930
    %v2785 = vpack.c.b16 %v1935, %v1933
    %v2786 = vpack.c.b16 %v1936, %v1934
    %v2787 = vpack.c.b16 %v1939, %v1937
    %v2788 = vpack.c.b16 %v1940, %v1938
    %v2789 = vpack.c.b16 %v1943, %v1941
    %v2790 = vpack.c.b16 %v1944, %v1942
    %v2791 = vpack.c.b16 %v1947, %v1945
    %v2792 = vpack.c.b16 %v1948, %v1946
    %v2793 = vpack.c.b16 %v1951, %v1949
    %v2794 = vpack.c.b16 %v1952, %v1950
    %v2795 = vpack.c.b16 %v1955, %v1953
    %v2796 = vpack.c.b16 %v1956, %v1954
    %v2797 = vpack.c.b16 %v1959, %v1957
    %v2798 = vpack.c.b16 %v1960, %v1958
    %v2799 = vpack.c.b16 %v1963, %v1961
    %v2800 = vpack.c.b16 %v1964, %v1962
    %v2801 = vpack.c.b16 %v1967, %v1965
    %v2802 = vpack.c.b16 %v1968, %v1966
    %v2803 = vpack.c.b16 %v1971, %v1969
    %v2804 = vpack.c.b16 %v1972, %v1970
    %v2805 = vpack.c.b16 %v1975, %v1973
    %v2806 = vpack.c.b16 %v1976, %v1974
    %v2807 = vpack.c.b16 %v1979, %v1977
    %v2808 = vpack.c.b16 %v1980, %v1978
    %v2809 = vpack.c.b16 %v1983, %v1981
    %v2810 = vpack.c.b16 %v1984, %v1982
    %v2811 = vpack.c.b16 %v1987, %v1985
    %v2812 = vpack.c.b16 %v1988, %v1986
    %v2813 = vpack.c.b16 %v1991, %v1989
    %v2814 = vpack.c.b16 %v1992, %v1990
    %v2815 = vpack.c.b16 %v1995, %v1993
    %v2816 = vpack.c.b16 %v1996, %v1994
    %v2817 = vpack.c.b16 %v1999, %v1997
    %v2818 = vpack.c.b16 %v2000, %v1998
    %v2819 = vpack.c.b16 %v2003, %v2001
    %v2820 = vpack.c.b16 %v2004, %v2002
    %v2821 = vpack.c.b16 %v2007, %v2005
    %v2822 = vpack.c.b16 %v2008, %v2006
    %v2823 = vpack.c.b16 %v2011, %v2009
    %v2824 = vpack.c.b16 %v2012, %v2010
    %v2825 = vpack.c.b16 %v2015, %v2013
    %v2826 = vpack.c.b16 %v2016, %v2014
    %v2827 = vpack.c.b16 %v2019, %v2017
    %v2828 = vpack.c.b16 %v2020, %v2018
    %v2829 = vpack.c.b16 %v2023, %v2021
    %v2830 = vpack.c.b16 %v2024, %v2022
    %v2831 = vpack.c.b16 %v2027, %v2025
    %v2832 = vpack.c.b16 %v2028, %v2026
    %v2833 = vpack.c.b16 %v2031, %v2029
    %v2834 = vpack.c.b16 %v2032, %v2030
    %v2835 = vpack.c.b16 %v2035, %v2033
    %v2836 = vpack.c.b16 %v2036, %v2034
    %v2837 = vpack.c.b16 %v2039, %v2037
    %v2838 = vpack.c.b16 %v2040, %v2038
    %v2839 = vpack.c.b16 %v2043, %v2041
    %v2840 = vpack.c.b16 %v2044, %v2042
    %v2841 = vpack.c.b16 %v2047, %v2045
    %v2842 = vpack.c.b16 %v2048, %v2046
    %v2843 = vpack.c.b16 %v2051, %v2049
    %v2844 = vpack.c.b16 %v2052, %v2050
    %v2845 = vpack.c.b16 %v2055, %v2053
    %v2846 = vpack.c.b16 %v2056, %v2054
    %v2847 = vpack.c.b16 %v2059, %v2057
    %v2848 = vpack.c.b16 %v2060, %v2058
    %v2849 = vpack.c.b16 %v2063, %v2061
    %v2850 = vpack.c.b16 %v2064, %v2062
    %v2851 = vpack.c.b16 %v2067, %v2065
    %v2852 = vpack.c.b16 %v2068, %v2066
    %v2853 = vpack.c.b16 %v2071, %v2069
    %v2854 = vpack.c.b16 %v2072, %v2070
    %v2855 = vpack.c.b16 %v2075, %v2073
    %v2856 = vpack.c.b16 %v2076, %v2074
    %v2857 = vpack.c.b16 %v2079, %v2077
    %v2858 = vpack.c.b16 %v2080, %v2078
    %v2859 = vpack.c.b16 %v2083, %v2081
    %v2860 = vpack.c.b16 %v2084, %v2082
    %v2861 = vpack.c.b16 %v2087, %v2085
    %v2862 = vpack.c.b16 %v2088, %v2086
    %v2863 = vpack.c.b16 %v2091, %v2089
    %v2864 = vpack.c.b16 %v2092, %v2090
    %v2865 = vpack.c.b16 %v2095, %v2093
    %v2866 = vpack.c.b16 %v2096, %v2094
    %v2867 = vpack.c.b16 %v2099, %v2097
    %v2868 = vpack.c.b16 %v2100, %v2098
    %v2869 = vpack.c.b16 %v2103, %v2101
    %v2870 = vpack.c.b16 %v2104, %v2102
    %v2871 = vpack.c.b16 %v2107, %v2105
    %v2872 = vpack.c.b16 %v2108, %v2106
    %v2873 = vpack.c.b16 %v2111, %v2109
    %v2874 = vpack.c.b16 %v2112, %v2110
    %v2875 = vpack.c.b16 %v2115, %v2113
    %v2876 = vpack.c.b16 %v2116, %v2114
    %v2877 = vpack.c.b16 %v2119, %v2117
    %v2878 = vpack.c.b16 %v2120, %v2118
    %v2879 = vpack.c.b16 %v2123, %v2121
    %v2880 = vpack.c.b16 %v2124, %v2122
    %v2881 = vpack.c.b16 %v2127, %v2125
    %v2882 = vpack.c.b16 %v2128, %v2126
    %v2883 = vpack.c.b16 %v2131, %v2129
    %v2884 = vpack.c.b16 %v2132, %v2130
    %v2885 = vpack.c.b16 %v2135, %v2133
    %v2886 = vpack.c.b16 %v2136, %v2134
    %v2887 = vpack.c.b16 %v2139, %v2137
    %v2888 = vpack.c.b16 %v2140, %v2138
    %v2889 = vpack.c.b16 %v2143, %v2141
    %v2890 = vpack.c.b16 %v2144, %v2142
    %v2891 = vpack.c.b16 %v2147, %v2145
    %v2892 = vpack.c.b16 %v2148, %v2146
    %v2893 = vpack.c.b16 %v2151, %v2149
    %v2894 = vpack.c.b16 %v2152, %v2150
    %v2895 = vpack.c.b16 %v2155, %v2153
    %v2896 = vpack.c.b16 %v2156, %v2154
    %v2897 = vpack.c.b16 %v2159, %v2157
    %v2898 = vpack.c.b16 %v2160, %v2158
    %v2899 = vpack.c.b16 %v2163, %v2161
    %v2900 = vpack.c.b16 %v2164, %v2162
    %v2901 = vpack.c.b16 %v2167, %v2165
    %v2902 = vpack.c.b16 %v2168, %v2166
    %v2903 = vpack.c.b16 %v2171, %v2169
    %v2904 = vpack.c.b16 %v2172, %v2170
    %v2905 = vpack.c.b16 %v2175, %v2173
    %v2906 = vpack.c.b16 %v2176, %v2174
    %v2907 = vpack.c.b16 %v2179, %v2177
    %v2908 = vpack.c.b16 %v2180, %v2178
    %v2909 = vpack.c.b16 %v2183, %v2181
    %v2910 = vpack.c.b16 %v2184, %v2182
    %v2911 = vpack.c.b16 %v2187, %v2185
    %v2912 = vpack.c.b16 %v2188, %v2186
    %v2913 = vpack.c.b16 %v2191, %v2189
    %v2914 = vpack.c.b16 %v2192, %v2190
    %v2915 = vpack.c.b16 %v2195, %v2193
    %v2916 = vpack.c.b16 %v2196, %v2194
    %v2917 = vpack.c.b16 %v2199, %v2197
    %v2918 = vpack.c.b16 %v2200, %v2198
    %v2919 = vpack.c.b16 %v2203, %v2201
    %v2920 = vpack.c.b16 %v2204, %v2202
    %v2921 = vpack.c.b16 %v2207, %v2205
    %v2922 = vpack.c.b16 %v2208, %v2206
    %v2923 = vpack.c.b16 %v2211, %v2209
    %v2924 = vpack.c.b16 %v2212, %v2210
    %v2925 = vpack.c.b16 %v2215, %v2213
    %v2926 = vpack.c.b16 %v2216, %v2214
    %v2927 = vpack.c.b16 %v2219, %v2217
    %v2928 = vpack.c.b16 %v2220, %v2218
    %v2929 = vpack.c.b16 %v2223, %v2221
    %v2930 = vpack.c.b16 %v2224, %v2222
    %v2931 = vpack.c.b16 %v2227, %v2225
    %v2932 = vpack.c.b16 %v2228, %v2226
    %v2933 = vpack.c.b16 %v2231, %v2229
    %v2934 = vpack.c.b16 %v2232, %v2230
    %v2935 = vpack.c.b16 %v2235, %v2233
    %v2936 = vpack.c.b16 %v2236, %v2234
    %v2937 = vpack.c.b16 %v2239, %v2237
    %v2938 = vpack.c.b16 %v2240, %v2238
    %v2939 = vpack.c.b16 %v2243, %v2241
    %v2940 = vpack.c.b16 %v2244, %v2242
    %v2941 = vpack.c.b16 %v2247, %v2245
    %v2942 = vpack.c.b16 %v2248, %v2246
    %v2943 = vpack.c.b16 %v2251, %v2249
    %v2944 = vpack.c.b16 %v2252, %v2250
    %v2945 = vpack.c.b16 %v2255, %v2253
    %v2946 = vpack.c.b16 %v2256, %v2254
    %v2947 = vpack.c.b16 %v2259, %v2257
    %v2948 = vpack.c.b16 %v2260, %v2258
    %v2949 = vpack.c.b16 %v2263, %v2261
    %v2950 = vpack.c.b16 %v2264, %v2262
    %v2951 = vpack.c.b16 %v2267, %v2265
    %v2952 = vpack.c.b16 %v2268, %v2266
    %v2953 = vpack.c.b16 %v2271, %v2269
    %v2954 = vpack.c.b16 %v2272, %v2270
    %v2955 = vpack.c.b16 %v2275, %v2273
    %v2956 = vpack.c.b16 %v2276, %v2274
    %v2957 = vpack.c.b16 %v2279, %v2277
    %v2958 = vpack.c.b16 %v2280, %v2278
    %v2959 = vpack.c.b16 %v2283, %v2281
    %v2960 = vpack.c.b16 %v2284, %v2282
    %v2961 = vpack.c.b16 %v2287, %v2285
    %v2962 = vpack.c.b16 %v2288, %v2286
    %v2963 = vpack.c.b16 %v2291, %v2289
    %v2964 = vpack.c.b16 %v2292, %v2290
    %v2965 = vpack.c.b16 %v2295, %v2293
    %v2966 = vpack.c.b16 %v2296, %v2294
    %v2967 = vpack.c.b16 %v2299, %v2297
    %v2968 = vpack.c.b16 %v2300, %v2298
    %v2969 = vpack.c.b16 %v2303, %v2301
    %v2970 = vpack.c.b16 %v2304, %v2302
    %v2971 = vpack.c.b16 %v2307, %v2305
    %v2972 = vpack.c.b16 %v2308, %v2306
    %v2973 = vpack.c.b16 %v2311, %v2309
    %v2974 = vpack.c.b16 %v2312, %v2310
    %v2975 = vpack.c.b16 %v2315, %v2313
    %v2976 = vpack.c.b16 %v2316, %v2314
    %v2977 = vpack.c.b16 %v2319, %v2317
    %v2978 = vpack.c.b16 %v2320, %v2318
    %v2979 = vpack.c.b16 %v2323, %v2321
    %v2980 = vpack.c.b16 %v2324, %v2322
    %v2981 = vpack.c.b16 %v2327, %v2325
    %v2982 = vpack.c.b16 %v2328, %v2326
    %v2983 = vpack.c.b16 %v2331, %v2329
    %v2984 = vpack.c.b16 %v2332, %v2330
    %v2985 = vpack.c.b16 %v2335, %v2333
    %v2986 = vpack.c.b16 %v2336, %v2334
    %v2987 = vpack.c.b16 %v2339, %v2337
    %v2988 = vpack.c.b16 %v2340, %v2338
    %v2989 = vpack.c.b16 %v2343, %v2341
    %v2990 = vpack.c.b16 %v2344, %v2342
    %v2991 = vpack.c.b16 %v2347, %v2345
    %v2992 = vpack.c.b16 %v2348, %v2346
    %v2993 = vpack.c.b16 %v2351, %v2349
    %v2994 = vpack.c.b16 %v2352, %v2350
    %v2995 = vpack.c.b16 %v2355, %v2353
    %v2996 = vpack.c.b16 %v2356, %v2354
    %v2997 = vpack.c.b16 %v2359, %v2357
    %v2998 = vpack.c.b16 %v2360, %v2358
    %v2999 = vpack.c.b16 %v2363, %v2361
    %v3000 = vpack.c.b16 %v2364, %v2362
    %v3001 = vpack.c.b16 %v2367, %v2365
    %v3002 = vpack.c.b16 %v2368, %v2366
    %v3003 = vpack.c.b16 %v2371, %v2369
    %v3004 = vpack.c.b16 %v2372, %v2370
    %v3005 = vpack.c.b16 %v2375, %v2373
    %v3006 = vpack.c.b16 %v2376, %v2374
    %v3007 = vpack.c.b16 %v2379, %v2377
    %v3008 = vpack.c.b16 %v2380, %v2378
    %v3009 = vpack.c.b16 %v2383, %v2381
    %v3010 = vpack.c.b16 %v2384, %v2382
    %v3011 = vpack.c.b16 %v2387, %v2385
    %v3012 = vpack.c.b16 %v2388, %v2386
    %v3013 = vpack.c.b16 %v2391, %v2389
    %v3014 = vpack.c.b16 %v2392, %v2390
    %v3015 = vpack.c.b16 %v2395, %v2393
    %v3016 = vpack.c.b16 %v2396, %v2394
    %v3017 = vpack.c.b16 %v2399, %v2397
    %v3018 = vpack.c.b16 %v2400, %v2398
    %v3019 = vpack.c.b16 %v2403, %v2401
    %v3020 = vpack.c.b16 %v2404, %v2402
    %v3021 = vpack.c.b16 %v2407, %v2405
    %v3022 = vpack.c.b16 %v2408, %v2406
    %v3023 = vpack.c.b16 %v2411, %v2409
    %v3024 = vpack.c.b16 %v2412, %v2410
    %v3025 = vpack.c.b16 %v2415, %v2413
    %v3026 = vpack.c.b16 %v2416, %v2414
    %v3027 = vpack.c.b16 %v2419, %v2417
    %v3028 = vpack.c.b16 %v2420, %v2418
    %v3029 = vpack.c.b16 %v2423, %v2421
    %v3030 = vpack.c.b16 %v2424, %v2422
    %v3031 = vpack.c.b16 %v2427, %v2425
    %v3032 = vpack.c.b16 %v2428, %v2426
    %v3033 = vpack.c.b16 %v2431, %v2429
    %v3034 = vpack.c.b16 %v2432, %v2430
    %v3035 = vpack.c.b16 %v2435, %v2433
    %v3036 = vpack.c.b16 %v2436, %v2434
    %v3037 = vpack.c.b16 %v2439, %v2437
    %v3038 = vpack.c.b16 %v2440, %v2438
    %v3039 = vpack.c.b16 %v2443, %v2441
    %v3040 = vpack.c.b16 %v2444, %v2442
    %v3041 = vpack.c.b16 %v2447, %v2445
    %v3042 = vpack.c.b16 %v2448, %v2446
    %v3043 = vpack.c.b16 %v2451, %v2449
    %v3044 = vpack.c.b16 %v2452, %v2450
    %v3045 = vpack.c.b16 %v2455, %v2453
    %v3046 = vpack.c.b16 %v2456, %v2454
    %v3047 = vpack.c.b16 %v2459, %v2457
    %v3048 = vpack.c.b16 %v2460, %v2458
    %v3049 = vpack.c.b16 %v2463, %v2461
    %v3050 = vpack.c.b16 %v2464, %v2462
    %v3051 = vpack.c.b16 %v2467, %v2465
    %v3052 = vpack.c.b16 %v2468, %v2466
    %v3053 = vpack.c.b16 %v2471, %v2469
    %v3054 = vpack.c.b16 %v2472, %v2470
    %v3055 = vpack.c.b16 %v2475, %v2473
    %v3056 = vpack.c.b16 %v2476, %v2474
    %v3057 = vpack.c.b16 %v2479, %v2477
    %v3058 = vpack.c.b16 %v2480, %v2478
    %v3059 = vpack.c.b16 %v2483, %v2481
    %v3060 = vpack.c.b16 %v2484, %v2482
    %v3061 = vpack.c.b16 %v2487, %v2485
    %v3062 = vpack.c.b16 %v2488, %v2486
    %v3063 = vpack.c.b16 %v2491, %v2489
    %v3064 = vpack.c.b16 %v2492, %v2490
    %v3065 = vpack.c.b16 %v2495, %v2493
    %v3066 = vpack.c.b16 %v2496, %v2494
    %v3067 = vpack.c.b16 %v2499, %v2497
    %v3068 = vpack.c.b16 %v2500, %v2498
    %v3069 = vpack.c.b16 %v2503, %v2501
    %v3070 = vpack.c.b16 %v2504, %v2502
    %v3071 = vpack.c.b16 %v2507, %v2505
    %v3072 = vpack.c.b16 %v2508, %v2506
    %v3073 = vpack.c.b16 %v2511, %v2509
    %v3074 = vpack.c.b16 %v2512, %v2510
    %v3075 = vpack.c.b16 %v2515, %v2513
    %v3076 = vpack.c.b16 %v2516, %v2514
    %v3077 = vpack.c.b16 %v2519, %v2517
    %v3078 = vpack.c.b16 %v2520, %v2518
    %v3079 = vpack.c.b16 %v2523, %v2521
    %v3080 = vpack.c.b16 %v2524, %v2522
    %v3081 = vpack.c.b16 %v2527, %v2525
    %v3082 = vpack.c.b16 %v2528, %v2526
    %v3083 = vpack.c.b16 %v2531, %v2529
    %v3084 = vpack.c.b16 %v2532, %v2530
    %v3085 = vpack.c.b16 %v2535, %v2533
    %v3086 = vpack.c.b16 %v2536, %v2534
    %v3087 = vpack.c.b16 %v2539, %v2537
    %v3088 = vpack.c.b16 %v2540, %v2538
    %v3089 = vpack.c.b16 %v2543, %v2541
    %v3090 = vpack.c.b16 %v2544, %v2542
    %v3091 = vpack.c.b16 %v2547, %v2545
    %v3092 = vpack.c.b16 %v2548, %v2546
    %v3093 = vpack.c.b16 %v2551, %v2549
    %v3094 = vpack.c.b16 %v2552, %v2550
    %v3095 = vpack.c.b16 %v2555, %v2553
    %v3096 = vpack.c.b16 %v2556, %v2554
    %v3097 = vpack.c.b16 %v2559, %v2557
    %v3098 = vpack.c.b16 %v2560, %v2558
    %v3099 = vpack.c.b16 %v2563, %v2561
    %v3100 = vpack.c.b16 %v2564, %v2562
    %v3101 = vpack.c.b16 %v2567, %v2565
    %v3102 = vpack.c.b16 %v2568, %v2566
    %v3103 = vpack.c.b16 %v2571, %v2569
    %v3104 = vpack.c.b16 %v2572, %v2570
    %v3105 = vpack.c.b16 %v2575, %v2573
    %v3106 = vpack.c.b16 %v2576, %v2574
    %v3107 = vpack.c.b16 %v2579, %v2577
    %v3108 = vpack.c.b16 %v2580, %v2578
    %v3109 = vpack.c.b16 %v2583, %v2581
    %v3110 = vpack.c.b16 %v2584, %v2582
    %v3111 = vpack.c.b16 %v2587, %v2585
    %v3112 = vpack.c.b16 %v2588, %v2586
    %v3113 = vpack.c.b16 %v2591, %v2589
    %v3114 = vpack.c.b16 %v2592, %v2590
    %v3115 = vpack.c.b16 %v2595, %v2593
    %v3116 = vpack.c.b16 %v2596, %v2594
    %v3117 = vpack.c.b16 %v2599, %v2597
    %v3118 = vpack.c.b16 %v2600, %v2598
    %v3119 = vpack.c.b16 %v2603, %v2601
    %v3120 = vpack.c.b16 %v2604, %v2602
    %v3121 = vpack.c.b16 %v2607, %v2605
    %v3122 = vpack.c.b16 %v2608, %v2606
    %v3123 = vpack.c.b16 %v2611, %v2609
    %v3124 = vpack.c.b16 %v2612, %v2610
    %v3125 = vpack.c.b16 %v2615, %v2613
    %v3126 = vpack.c.b16 %v2616, %v2614
    %v3127 = vpack.c.b16 %v2619, %v2617
    %v3128 = vpack.c.b16 %v2620, %v2618
    %v3129 = vpack.c.b16 %v2623, %v2621
    %v3130 = vpack.c.b16 %v2624, %v2622
    %v3131 = vpack.c.b16 %v2627, %v2625
    %v3132 = vpack.c.b16 %v2628, %v2626
    %v3133 = vpack.c.b16 %v2631, %v2629
    %v3134 = vpack.c.b16 %v2632, %v2630
    %v3135 = vpack.c.b16 %v2635, %v2633
    %v3136 = vpack.c.b16 %v2636, %v2634
    %v3137 = vpack.c.b16 %v2639, %v2637
    %v3138 = vpack.c.b16 %v2640, %v2638
    %v3139 = vpack.c.b16 %v2643, %v2641
    %v3140 = vpack.c.b16 %v2644, %v2642
    %v3141 = vpack.c.b16 %v2647, %v2645
    %v3142 = vpack.c.b16 %v2648, %v2646
    %v3143 = vpack.c.b16 %v2651, %v2649
    %v3144 = vpack.c.b16 %v2652, %v2650
    %v3145 = vpack.c.b16 %v2655, %v2653
    %v3146 = vpack.c.b16 %v2656, %v2654
    %v3147 = vpack.c.b16 %v2659, %v2657
    %v3148 = vpack.c.b16 %v2660, %v2658
    %v3149 = vpack.c.b16 %v2663, %v2661
    %v3150 = vpack.c.b16 %v2664, %v2662
    %v3151 = vpack.c.b16 %v2667, %v2665
    %v3152 = vpack.c.b16 %v2668, %v2666
    %v3153 = vpack.c.b16 %v2671, %v2669
    %v3154 = vpack.c.b16 %v2672, %v2670
    %v3155 = vpack.c.b16 %v2675, %v2673
    %v3156 = vpack.c.b16 %v2676, %v2674
    %v3157 = vpack.c.b16 %v2679, %v2677
    %v3158 = vpack.c.b16 %v2680, %v2678
    %v3159 = vpack.c.b16 %v2683, %v2681
    %v3160 = vpack.c.b16 %v2684, %v2682
    %v3161 = vpack.c.b16 %v2687, %v2685
    %v3162 = vpack.c.b16 %v2688, %v2686
    %v3163 = vpack.c.b16 %v2691, %v2689
    %v3164 = vpack.c.b16 %v2692, %v2690
    %v3165 = vpack.c.b16 %v2695, %v2693
    %v3166 = vpack.c.b16 %v2696, %v2694
    %v3167 = vpack.c.b16 %v2699, %v2697
    %v3168 = vpack.c.b16 %v2700, %v2698
    %v3169 = vpack.c.b16 %v2703, %v2701
    %v3170 = vpack.c.b16 %v2704, %v2702
    %v3171 = vpack.c.b16 %v2707, %v2705
    %v3172 = vpack.c.b16 %v2708, %v2706
    %v3173 = vpack.c.b16 %v2711, %v2709
    %v3174 = vpack.c.b16 %v2712, %v2710
    %v3175 = vpack.c.b16 %v2715, %v2713
    %v3176 = vpack.c.b16 %v2716, %v2714
    %v3177 = vpack.c.b16 %v2719, %v2717
    %v3178 = vpack.c.b16 %v2720, %v2718
    %v3179 = vpack.c.b16 %v2723, %v2721
    %v3180 = vpack.c.b16 %v2724, %v2722
    %v3181 = vpack.c.b16 %v2727, %v2725
    %v3182 = vpack.c.b16 %v2728, %v2726
    %v3183 = vpack.c.b16 %v2731, %v2729
    %v3184 = vpack.c.b16 %v2732, %v2730
    %v3185 = vpack.c.b16 %v2735, %v2733
    %v3186 = vpack.c.b16 %v2736, %v2734
    %v3187 = vpack.c.b16 %v2739, %v2737
    %v3188 = vpack.c.b16 %v2740, %v2738
    %3637 = vmatprep.subr.bf16.mxu0 %v2742
    %3638 = vmatpush1.bf16.msra.mxu0 %v2741
    %3639 = vmatprep.subr.bf16.mxu0 %v2744
    %3640 = vmatpush1.bf16.msra.mxu0 %v2743
    %3641 = vmatprep.subr.bf16.mxu0 %v2746
    %3642 = vmatpush1.bf16.msra.mxu0 %v2745
    %3643 = vmatprep.subr.bf16.mxu0 %v2748
    %3644 = vmatpush1.bf16.msra.mxu0 %v2747
    %3645 = vmatprep.subr.bf16.mxu0 %v2750
    %3646 = vmatpush1.bf16.msra.mxu0 %v2749
    %3647 = vmatprep.subr.bf16.mxu0 %v2752
    %3648 = vmatpush1.bf16.msra.mxu0 %v2751
    %3649 = vmatprep.subr.bf16.mxu0 %v2754
    %3650 = vmatpush1.bf16.msra.mxu0 %v2753
    %3651 = vmatprep.subr.bf16.mxu0 %v2756
    %3652 = vmatpush1.bf16.msra.mxu0 %v2755
    %3653 = vmatprep.subr.bf16.mxu0 %v2758
    %3654 = vmatpush1.bf16.msra.mxu0 %v2757
    %3655 = vmatprep.subr.bf16.mxu0 %v2760
    %3656 = vmatpush1.bf16.msra.mxu0 %v2759
    %3657 = vmatprep.subr.bf16.mxu0 %v2762
    %3658 = vmatpush1.bf16.msra.mxu0 %v2761
    %3659 = vmatprep.subr.bf16.mxu0 %v2764
    %3660 = vmatpush1.bf16.msra.mxu0 %v2763
    %3661 = vmatprep.subr.bf16.mxu0 %v2766
    %3662 = vmatpush1.bf16.msra.mxu0 %v2765
    %3663 = vmatprep.subr.bf16.mxu0 %v2768
    %3664 = vmatpush1.bf16.msra.mxu0 %v2767
    %3665 = vmatprep.subr.bf16.mxu0 %v2770
    %3666 = vmatpush1.bf16.msra.mxu0 %v2769
    %3667 = vmatprep.subr.bf16.mxu0 %v2772
    %3668 = vmatpush1.bf16.msra.mxu0 %v2771
    %3669 = vmatprep.mubr.bf16.mxu0 %v1178
    %3670 = vmatmul.mubr.bf16.gmra.mrb[0].mxu0 %v1177
    %v3671 = vpop.f32.mrb[0].mxu0
    %v3672 = vadd.f32 %v1390, %v3671
    %v3673 = vpop.f32.mrb[0].mxu0
    %v3674 = vadd.f32 %v1394, %v3673
    %v3675 = vpop.f32.mrb[0].mxu0
    %v3676 = vadd.f32 %v1390, %v3675
    %v3677 = vpop.f32.mrb[0].mxu0
    %v3678 = vadd.f32 %v1394, %v3677
    %3679 = vmatprep.mubr.bf16.mxu0 %v1182
    %3680 = vmatmul.mubr.bf16.gmra.mrb[0].mxu0 %v1181
    %v3681 = vpop.f32.mrb[0].mxu0
    %v3682 = vadd.f32 %v1390, %v3681
    %v3683 = vpop.f32.mrb[0].mxu0
    %v3684 = vadd.f32 %v1394, %v3683
    %v3685 = vpop.f32.mrb[0].mxu0
    %v3686 = vadd.f32 %v1390, %v3685
    %v3687 = vpop.f32.mrb[0].mxu0
    %v3688 = vadd.f32 %v1394, %v3687
    %3689 = vdwg.mxu0
    %3690 = vmatprep.subr.bf16.mxu0 %v2774
    %3691 = vmatpush1.bf16.msra.mxu0 %v2773
    %3692 = vmatprep.subr.bf16.mxu0 %v2776
    %3693 = vmatpush1.bf16.msra.mxu0 %v2775
    %3694 = vmatprep.subr.bf16.mxu0 %v2778
    %3695 = vmatpush1.bf16.msra.mxu0 %v2777
    %3696 = vmatprep.subr.bf16.mxu0 %v2780
    %3697 = vmatpush1.bf16.msra.mxu0 %v2779
    %3698 = vmatprep.subr.bf16.mxu0 %v2782
    %3699 = vmatpush1.bf16.msra.mxu0 %v2781
    %3700 = vmatprep.subr.bf16.mxu0 %v2784
    %3701 = vmatpush1.bf16.msra.mxu0 %v2783
    %3702 = vmatprep.subr.bf16.mxu0 %v2786
    %3703 = vmatpush1.bf16.msra.mxu0 %v2785
    %3704 = vmatprep.subr.bf16.mxu0 %v2788
    %3705 = vmatpush1.bf16.msra.mxu0 %v2787
    %3706 = vmatprep.subr.bf16.mxu0 %v2790
    %3707 = vmatpush1.bf16.msra.mxu0 %v2789
    %3708 = vmatprep.subr.bf16.mxu0 %v2792
    %3709 = vmatpush1.bf16.msra.mxu0 %v2791
    %3710 = vmatprep.subr.bf16.mxu0 %v2794
    %3711 = vmatpush1.bf16.msra.mxu0 %v2793
    %3712 = vmatprep.subr.bf16.mxu0 %v2796
    %3713 = vmatpush1.bf16.msra.mxu0 %v2795
    %3714 = vmatprep.subr.bf16.mxu0 %v2798
    %3715 = vmatpush1.bf16.msra.mxu0 %v2797
    %3716 = vmatprep.subr.bf16.mxu0 %v2800
    %3717 = vmatpush1.bf16.msra.mxu0 %v2799
    %3718 = vmatprep.subr.bf16.mxu0 %v2802
    %3719 = vmatpush1.bf16.msra.mxu0 %v2801
    %3720 = vmatprep.subr.bf16.mxu0 %v2804
    %3721 = vmatpush1.bf16.msra.mxu0 %v2803
    %3722 = vmatprep.mubr.bf16.mxu0 %v1180
    %3723 = vmatmul.mubr.bf16.gmra.mrb[0].mxu0 %v1179
    %v3724 = vpop.f32.mrb[0].mxu0
    %v3725 = vadd.f32 %v3672, %v3724
    %v3726 = vpop.f32.mrb[0].mxu0
    %v3727 = vadd.f32 %v3674, %v3726
    %v3728 = vpop.f32.mrb[0].mxu0
    %v3729 = vadd.f32 %v3676, %v3728
    %v3730 = vpop.f32.mrb[0].mxu0
    %v3731 = vadd.f32 %v3678, %v3730
    %3732 = vmatprep.mubr.bf16.mxu0 %v1184
    %3733 = vmatmul.mubr.bf16.gmra.mrb[0].mxu0 %v1183
    %v3734 = vpop.f32.mrb[0].mxu0
    %v3735 = vadd.f32 %v3682, %v3734
    %v3736 = vpop.f32.mrb[0].mxu0
    %v3737 = vadd.f32 %v3684, %v3736
    %v3738 = vpop.f32.mrb[0].mxu0
    %v3739 = vadd.f32 %v3686, %v3738
    %v3740 = vpop.f32.mrb[0].mxu0
    %v3741 = vadd.f32 %v3688, %v3740
    %3742 = vdwg.mxu0
    %3743 = vmatprep.subr.bf16.mxu0 %v2806
    %3744 = vmatpush1.bf16.msra.mxu0 %v2805
    %3745 = vmatprep.subr.bf16.mxu0 %v2808
    %3746 = vmatpush1.bf16.msra.mxu0 %v2807
    %3747 = vmatprep.subr.bf16.mxu0 %v2810
    %3748 = vmatpush1.bf16.msra.mxu0 %v2809
    %3749 = vmatprep.subr.bf16.mxu0 %v2812
    %3750 = vmatpush1.bf16.msra.mxu0 %v2811
    %3751 = vmatprep.subr.bf16.mxu0 %v2814
    %3752 = vmatpush1.bf16.msra.mxu0 %v2813
    %3753 = vmatprep.subr.bf16.mxu0 %v2816
    %3754 = vmatpush1.bf16.msra.mxu0 %v2815
    %3755 = vmatprep.subr.bf16.mxu0 %v2818
    %3756 = vmatpush1.bf16.msra.mxu0 %v2817
    %3757 = vmatprep.subr.bf16.mxu0 %v2820
    %3758 = vmatpush1.bf16.msra.mxu0 %v2819
    %3759 = vmatprep.subr.bf16.mxu0 %v2822
    %3760 = vmatpush1.bf16.msra.mxu0 %v2821
    %3761 = vmatprep.subr.bf16.mxu0 %v2824
    %3762 = vmatpush1.bf16.msra.mxu0 %v2823
    %3763 = vmatprep.subr.bf16.mxu0 %v2826
    %3764 = vmatpush1.bf16.msra.mxu0 %v2825
    %3765 = vmatprep.subr.bf16.mxu0 %v2828
    %3766 = vmatpush1.bf16.msra.mxu0 %v2827
    %3767 = vmatprep.subr.bf16.mxu0 %v2830
    %3768 = vmatpush1.bf16.msra.mxu0 %v2829
    %3769 = vmatprep.subr.bf16.mxu0 %v2832
    %3770 = vmatpush1.bf16.msra.mxu0 %v2831
    %3771 = vmatprep.subr.bf16.mxu0 %v2834
    %3772 = vmatpush1.bf16.msra.mxu0 %v2833
    %3773 = vmatprep.subr.bf16.mxu0 %v2836
    %3774 = vmatpush1.bf16.msra.mxu0 %v2835
    %3775 = vmatprep.mubr.bf16.mxu0 %v1210
    %3776 = vmatmul.mubr.bf16.gmra.mrb[0].mxu0 %v1209
    %v3777 = vpop.f32.mrb[0].mxu0
    %v3778 = vadd.f32 %v3725, %v3777
    %v3779 = vpop.f32.mrb[0].mxu0
    %v3780 = vadd.f32 %v3727, %v3779
    %v3781 = vpop.f32.mrb[0].mxu0
    %v3782 = vadd.f32 %v3729, %v3781
    %v3783 = vpop.f32.mrb[0].mxu0
    %v3784 = vadd.f32 %v3731, %v3783
    %3785 = vmatprep.mubr.bf16.mxu0 %v1214
    %3786 = vmatmul.mubr.bf16.gmra.mrb[0].mxu0 %v1213
    %v3787 = vpop.f32.mrb[0].mxu0
    %v3788 = vadd.f32 %v3735, %v3787
    %v3789 = vpop.f32.mrb[0].mxu0
    %v3790 = vadd.f32 %v3737, %v3789
    %v3791 = vpop.f32.mrb[0].mxu0
    %v3792 = vadd.f32 %v3739, %v3791
    %v3793 = vpop.f32.mrb[0].mxu0
    %v3794 = vadd.f32 %v3741, %v3793
    %3795 = vdwg.mxu0
    %3796 = vmatprep.subr.bf16.mxu0 %v2838
    %3797 = vmatpush1.bf16.msra.mxu0 %v2837
    %3798 = vmatprep.subr.bf16.mxu0 %v2840
    %3799 = vmatpush1.bf16.msra.mxu0 %v2839
    %3800 = vmatprep.subr.bf16.mxu0 %v2842
    %3801 = vmatpush1.bf16.msra.mxu0 %v2841
    %3802 = vmatprep.subr.bf16.mxu0 %v2844
    %3803 = vmatpush1.bf16.msra.mxu0 %v2843
    %3804 = vmatprep.subr.bf16.mxu0 %v2846
    %3805 = vmatpush1.bf16.msra.mxu0 %v2845
    %3806 = vmatprep.subr.bf16.mxu0 %v2848
    %3807 = vmatpush1.bf16.msra.mxu0 %v2847
    %3808 = vmatprep.subr.bf16.mxu0 %v2850
    %3809 = vmatpush1.bf16.msra.mxu0 %v2849
    %3810 = vmatprep.subr.bf16.mxu0 %v2852
    %3811 = vmatpush1.bf16.msra.mxu0 %v2851
    %3812 = vmatprep.subr.bf16.mxu0 %v2854
    %3813 = vmatpush1.bf16.msra.mxu0 %v2853
    %3814 = vmatprep.subr.bf16.mxu0 %v2856
    %3815 = vmatpush1.bf16.msra.mxu0 %v2855
    %3816 = vmatprep.subr.bf16.mxu0 %v2858
    %3817 = vmatpush1.bf16.msra.mxu0 %v2857
    %3818 = vmatprep.subr.bf16.mxu0 %v2860
    %3819 = vmatpush1.bf16.msra.mxu0 %v2859
    %3820 = vmatprep.subr.bf16.mxu0 %v2862
    %3821 = vmatpush1.bf16.msra.mxu0 %v2861
    %3822 = vmatprep.subr.bf16.mxu0 %v2864
    %3823 = vmatpush1.bf16.msra.mxu0 %v2863
    %3824 = vmatprep.subr.bf16.mxu0 %v2866
    %3825 = vmatpush1.bf16.msra.mxu0 %v2865
    %3826 = vmatprep.subr.bf16.mxu0 %v2868
    %3827 = vmatpush1.bf16.msra.mxu0 %v2867
    %3828 = vmatprep.mubr.bf16.mxu0 %v1212
    %3829 = vmatmul.mubr.bf16.gmra.mrb[0].mxu0 %v1211
    %v3830 = vpop.f32.mrb[0].mxu0
    %v3831 = vadd.f32 %v3778, %v3830
    %v3832 = vpop.f32.mrb[0].mxu0
    %v3833 = vadd.f32 %v3780, %v3832
    %v3834 = vpop.f32.mrb[0].mxu0
    %v3835 = vadd.f32 %v3782, %v3834
    %v3836 = vpop.f32.mrb[0].mxu0
    %v3837 = vadd.f32 %v3784, %v3836
    %3838 = vmatprep.mubr.bf16.mxu0 %v1216
    %3839 = vmatmul.mubr.bf16.gmra.mrb[0].mxu0 %v1215
    %v3840 = vpop.f32.mrb[0].mxu0
    %v3841 = vadd.f32 %v3788, %v3840
    %v3842 = vpop.f32.mrb[0].mxu0
    %v3843 = vadd.f32 %v3790, %v3842
    %v3844 = vpop.f32.mrb[0].mxu0
    %v3845 = vadd.f32 %v3792, %v3844
    %v3846 = vpop.f32.mrb[0].mxu0
    %v3847 = vadd.f32 %v3794, %v3846
    %3848 = vdwg.mxu0
    %3849 = vmatprep.subr.bf16.mxu0 %v2870
    %3850 = vmatpush1.bf16.msra.mxu0 %v2869
    %3851 = vmatprep.subr.bf16.mxu0 %v2872
    %3852 = vmatpush1.bf16.msra.mxu0 %v2871
    %3853 = vmatprep.subr.bf16.mxu0 %v2874
    %3854 = vmatpush1.bf16.msra.mxu0 %v2873
    %3855 = vmatprep.subr.bf16.mxu0 %v2876
    %3856 = vmatpush1.bf16.msra.mxu0 %v2875
    %3857 = vmatprep.subr.bf16.mxu0 %v2878
    %3858 = vmatpush1.bf16.msra.mxu0 %v2877
    %3859 = vmatprep.subr.bf16.mxu0 %v2880
    %3860 = vmatpush1.bf16.msra.mxu0 %v2879
    %3861 = vmatprep.subr.bf16.mxu0 %v2882
    %3862 = vmatpush1.bf16.msra.mxu0 %v2881
    %3863 = vmatprep.subr.bf16.mxu0 %v2884
    %3864 = vmatpush1.bf16.msra.mxu0 %v2883
    %3865 = vmatprep.subr.bf16.mxu0 %v2886
    %3866 = vmatpush1.bf16.msra.mxu0 %v2885
    %3867 = vmatprep.subr.bf16.mxu0 %v2888
    %3868 = vmatpush1.bf16.msra.mxu0 %v2887
    %3869 = vmatprep.subr.bf16.mxu0 %v2890
    %3870 = vmatpush1.bf16.msra.mxu0 %v2889
    %3871 = vmatprep.subr.bf16.mxu0 %v2892
    %3872 = vmatpush1.bf16.msra.mxu0 %v2891
    %3873 = vmatprep.subr.bf16.mxu0 %v2894
    %3874 = vmatpush1.bf16.msra.mxu0 %v2893
    %3875 = vmatprep.subr.bf16.mxu0 %v2896
    %3876 = vmatpush1.bf16.msra.mxu0 %v2895
    %3877 = vmatprep.subr.bf16.mxu0 %v2898
    %3878 = vmatpush1.bf16.msra.mxu0 %v2897
    %3879 = vmatprep.subr.bf16.mxu0 %v2900
    %3880 = vmatpush1.bf16.msra.mxu0 %v2899
    %3881 = vmatprep.mubr.bf16.mxu0 %v1242
    %3882 = vmatmul.mubr.bf16.gmra.mrb[0].mxu0 %v1241
    %v3883 = vpop.f32.mrb[0].mxu0
    %v3884 = vadd.f32 %v3831, %v3883
    %v3885 = vpop.f32.mrb[0].mxu0
    %v3886 = vadd.f32 %v3833, %v3885
    %v3887 = vpop.f32.mrb[0].mxu0
    %v3888 = vadd.f32 %v3835, %v3887
    %v3889 = vpop.f32.mrb[0].mxu0
    %v3890 = vadd.f32 %v3837, %v3889
    %3891 = vmatprep.mubr.bf16.mxu0 %v1246
    %3892 = vmatmul.mubr.bf16.gmra.mrb[0].mxu0 %v1245
    %v3893 = vpop.f32.mrb[0].mxu0
    %v3894 = vadd.f32 %v3841, %v3893
    %v3895 = vpop.f32.mrb[0].mxu0
    %v3896 = vadd.f32 %v3843, %v3895
    %v3897 = vpop.f32.mrb[0].mxu0
    %v3898 = vadd.f32 %v3845, %v3897
    %v3899 = vpop.f32.mrb[0].mxu0
    %v3900 = vadd.f32 %v3847, %v3899
    %3901 = vdwg.mxu0
    %3902 = vmatprep.subr.bf16.mxu0 %v2902
    %3903 = vmatpush1.bf16.msra.mxu0 %v2901
    %3904 = vmatprep.subr.bf16.mxu0 %v2904
    %3905 = vmatpush1.bf16.msra.mxu0 %v2903
    %3906 = vmatprep.subr.bf16.mxu0 %v2906
    %3907 = vmatpush1.bf16.msra.mxu0 %v2905
    %3908 = vmatprep.subr.bf16.mxu0 %v2908
    %3909 = vmatpush1.bf16.msra.mxu0 %v2907
    %3910 = vmatprep.subr.bf16.mxu0 %v2910
    %3911 = vmatpush1.bf16.msra.mxu0 %v2909
    %3912 = vmatprep.subr.bf16.mxu0 %v2912
    %3913 = vmatpush1.bf16.msra.mxu0 %v2911
    %3914 = vmatprep.subr.bf16.mxu0 %v2914
    %3915 = vmatpush1.bf16.msra.mxu0 %v2913
    %3916 = vmatprep.subr.bf16.mxu0 %v2916
    %3917 = vmatpush1.bf16.msra.mxu0 %v2915
    %3918 = vmatprep.subr.bf16.mxu0 %v2918
    %3919 = vmatpush1.bf16.msra.mxu0 %v2917
    %3920 = vmatprep.subr.bf16.mxu0 %v2920
    %3921 = vmatpush1.bf16.msra.mxu0 %v2919
    %3922 = vmatprep.subr.bf16.mxu0 %v2922
    %3923 = vmatpush1.bf16.msra.mxu0 %v2921
    %3924 = vmatprep.subr.bf16.mxu0 %v2924
    %3925 = vmatpush1.bf16.msra.mxu0 %v2923
    %3926 = vmatprep.subr.bf16.mxu0 %v2926
    %3927 = vmatpush1.bf16.msra.mxu0 %v2925
    %3928 = vmatprep.subr.bf16.mxu0 %v2928
    %3929 = vmatpush1.bf16.msra.mxu0 %v2927
    %3930 = vmatprep.subr.bf16.mxu0 %v2930
    %3931 = vmatpush1.bf16.msra.mxu0 %v2929
    %3932 = vmatprep.subr.bf16.mxu0 %v2932
    %3933 = vmatpush1.bf16.msra.mxu0 %v2931
    %3934 = vmatprep.mubr.bf16.mxu0 %v1244
    %3935 = vmatmul.mubr.bf16.gmra.mrb[0].mxu0 %v1243
    %v3936 = vpop.f32.mrb[0].mxu0
    %v3937 = vadd.f32 %v3884, %v3936
    %v3938 = vpop.f32.mrb[0].mxu0
    %v3939 = vadd.f32 %v3886, %v3938
    %v3940 = vpop.f32.mrb[0].mxu0
    %v3941 = vadd.f32 %v3888, %v3940
    %v3942 = vpop.f32.mrb[0].mxu0
    %v3943 = vadd.f32 %v3890, %v3942
    %3944 = vmatprep.mubr.bf16.mxu0 %v1248
    %3945 = vmatmul.mubr.bf16.gmra.mrb[0].mxu0 %v1247
    %v3946 = vpop.f32.mrb[0].mxu0
    %v3947 = vadd.f32 %v3894, %v3946
    %v3948 = vpop.f32.mrb[0].mxu0
    %v3949 = vadd.f32 %v3896, %v3948
    %v3950 = vpop.f32.mrb[0].mxu0
    %v3951 = vadd.f32 %v3898, %v3950
    %v3952 = vpop.f32.mrb[0].mxu0
    %v3953 = vadd.f32 %v3900, %v3952
    %3954 = vdwg.mxu0
    %3955 = vmatprep.subr.bf16.mxu0 %v2934
    %3956 = vmatpush1.bf16.msra.mxu0 %v2933
    %3957 = vmatprep.subr.bf16.mxu0 %v2936
    %3958 = vmatpush1.bf16.msra.mxu0 %v2935
    %3959 = vmatprep.subr.bf16.mxu0 %v2938
    %3960 = vmatpush1.bf16.msra.mxu0 %v2937
    %3961 = vmatprep.subr.bf16.mxu0 %v2940
    %3962 = vmatpush1.bf16.msra.mxu0 %v2939
    %3963 = vmatprep.subr.bf16.mxu0 %v2942
    %3964 = vmatpush1.bf16.msra.mxu0 %v2941
    %3965 = vmatprep.subr.bf16.mxu0 %v2944
    %3966 = vmatpush1.bf16.msra.mxu0 %v2943
    %3967 = vmatprep.subr.bf16.mxu0 %v2946
    %3968 = vmatpush1.bf16.msra.mxu0 %v2945
    %3969 = vmatprep.subr.bf16.mxu0 %v2948
    %3970 = vmatpush1.bf16.msra.mxu0 %v2947
    %3971 = vmatprep.subr.bf16.mxu0 %v2950
    %3972 = vmatpush1.bf16.msra.mxu0 %v2949
    %3973 = vmatprep.subr.bf16.mxu0 %v2952
    %3974 = vmatpush1.bf16.msra.mxu0 %v2951
    %3975 = vmatprep.subr.bf16.mxu0 %v2954
    %3976 = vmatpush1.bf16.msra.mxu0 %v2953
    %3977 = vmatprep.subr.bf16.mxu0 %v2956
    %3978 = vmatpush1.bf16.msra.mxu0 %v2955
    %3979 = vmatprep.subr.bf16.mxu0 %v2958
    %3980 = vmatpush1.bf16.msra.mxu0 %v2957
    %3981 = vmatprep.subr.bf16.mxu0 %v2960
    %3982 = vmatpush1.bf16.msra.mxu0 %v2959
    %3983 = vmatprep.subr.bf16.mxu0 %v2962
    %3984 = vmatpush1.bf16.msra.mxu0 %v2961
    %3985 = vmatprep.subr.bf16.mxu0 %v2964
    %3986 = vmatpush1.bf16.msra.mxu0 %v2963
    %3987 = vmatprep.mubr.bf16.mxu0 %v1274
    %3988 = vmatmul.mubr.bf16.gmra.mrb[0].mxu0 %v1273
    %v3989 = vpop.f32.mrb[0].mxu0
    %v3990 = vadd.f32 %v3937, %v3989
    %v3991 = vpop.f32.mrb[0].mxu0
    %v3992 = vadd.f32 %v3939, %v3991
    %v3993 = vpop.f32.mrb[0].mxu0
    %v3994 = vadd.f32 %v3941, %v3993
    %v3995 = vpop.f32.mrb[0].mxu0
    %v3996 = vadd.f32 %v3943, %v3995
    %3997 = vmatprep.mubr.bf16.mxu0 %v1278
    %3998 = vmatmul.mubr.bf16.gmra.mrb[0].mxu0 %v1277
    %v3999 = vpop.f32.mrb[0].mxu0
    %v4000 = vadd.f32 %v3947, %v3999
    %v4001 = vpop.f32.mrb[0].mxu0
    %v4002 = vadd.f32 %v3949, %v4001
    %v4003 = vpop.f32.mrb[0].mxu0
    %v4004 = vadd.f32 %v3951, %v4003
    %v4005 = vpop.f32.mrb[0].mxu0
    %v4006 = vadd.f32 %v3953, %v4005
    %4007 = vdwg.mxu0
    %4008 = vmatprep.subr.bf16.mxu0 %v2966
    %4009 = vmatpush1.bf16.msra.mxu0 %v2965
    %4010 = vmatprep.subr.bf16.mxu0 %v2968
    %4011 = vmatpush1.bf16.msra.mxu0 %v2967
    %4012 = vmatprep.subr.bf16.mxu0 %v2970
    %4013 = vmatpush1.bf16.msra.mxu0 %v2969
    %4014 = vmatprep.subr.bf16.mxu0 %v2972
    %4015 = vmatpush1.bf16.msra.mxu0 %v2971
    %4016 = vmatprep.subr.bf16.mxu0 %v2974
    %4017 = vmatpush1.bf16.msra.mxu0 %v2973
    %4018 = vmatprep.subr.bf16.mxu0 %v2976
    %4019 = vmatpush1.bf16.msra.mxu0 %v2975
    %4020 = vmatprep.subr.bf16.mxu0 %v2978
    %4021 = vmatpush1.bf16.msra.mxu0 %v2977
    %4022 = vmatprep.subr.bf16.mxu0 %v2980
    %4023 = vmatpush1.bf16.msra.mxu0 %v2979
    %4024 = vmatprep.subr.bf16.mxu0 %v2982
    %4025 = vmatpush1.bf16.msra.mxu0 %v2981
    %4026 = vmatprep.subr.bf16.mxu0 %v2984
    %4027 = vmatpush1.bf16.msra.mxu0 %v2983
    %4028 = vmatprep.subr.bf16.mxu0 %v2986
    %4029 = vmatpush1.bf16.msra.mxu0 %v2985
    %4030 = vmatprep.subr.bf16.mxu0 %v2988
    %4031 = vmatpush1.bf16.msra.mxu0 %v2987
    %4032 = vmatprep.subr.bf16.mxu0 %v2990
    %4033 = vmatpush1.bf16.msra.mxu0 %v2989
    %4034 = vmatprep.subr.bf16.mxu0 %v2992
    %4035 = vmatpush1.bf16.msra.mxu0 %v2991
    %4036 = vmatprep.subr.bf16.mxu0 %v2994
    %4037 = vmatpush1.bf16.msra.mxu0 %v2993
    %4038 = vmatprep.subr.bf16.mxu0 %v2996
    %4039 = vmatpush1.bf16.msra.mxu0 %v2995
    %4040 = vmatprep.mubr.bf16.mxu0 %v1276
    %4041 = vmatmul.mubr.bf16.gmra.mrb[0].mxu0 %v1275
    %v4042 = vpop.f32.mrb[0].mxu0
    %v4043 = vadd.f32 %v3990, %v4042
    %v4044 = vpop.f32.mrb[0].mxu0
    %v4045 = vadd.f32 %v3992, %v4044
    %v4046 = vpop.f32.mrb[0].mxu0
    %v4047 = vadd.f32 %v3994, %v4046
    %v4048 = vpop.f32.mrb[0].mxu0
    %v4049 = vadd.f32 %v3996, %v4048
    %4050 = vmatprep.mubr.bf16.mxu0 %v1280
    %4051 = vmatmul.mubr.bf16.gmra.mrb[0].mxu0 %v1279
    %v4052 = vpop.f32.mrb[0].mxu0
    %v4053 = vadd.f32 %v4000, %v4052
    %v4054 = vpop.f32.mrb[0].mxu0
    %v4055 = vadd.f32 %v4002, %v4054
    %v4056 = vpop.f32.mrb[0].mxu0
    %v4057 = vadd.f32 %v4004, %v4056
    %v4058 = vpop.f32.mrb[0].mxu0
    %v4059 = vadd.f32 %v4006, %v4058
    %4060 = vdwg.mxu0
    %4061 = vmatprep.subr.bf16.mxu0 %v2998
    %4062 = vmatpush1.bf16.msra.mxu0 %v2997
    %4063 = vmatprep.subr.bf16.mxu0 %v3000
    %4064 = vmatpush1.bf16.msra.mxu0 %v2999
    %4065 = vmatprep.subr.bf16.mxu0 %v3002
    %4066 = vmatpush1.bf16.msra.mxu0 %v3001
    %4067 = vmatprep.subr.bf16.mxu0 %v3004
    %4068 = vmatpush1.bf16.msra.mxu0 %v3003
    %4069 = vmatprep.subr.bf16.mxu0 %v3006
    %4070 = vmatpush1.bf16.msra.mxu0 %v3005
    %4071 = vmatprep.subr.bf16.mxu0 %v3008
    %4072 = vmatpush1.bf16.msra.mxu0 %v3007
    %4073 = vmatprep.subr.bf16.mxu0 %v3010
    %4074 = vmatpush1.bf16.msra.mxu0 %v3009
    %4075 = vmatprep.subr.bf16.mxu0 %v3012
    %4076 = vmatpush1.bf16.msra.mxu0 %v3011
    %4077 = vmatprep.subr.bf16.mxu0 %v3014
    %4078 = vmatpush1.bf16.msra.mxu0 %v3013
    %4079 = vmatprep.subr.bf16.mxu0 %v3016
    %4080 = vmatpush1.bf16.msra.mxu0 %v3015
    %4081 = vmatprep.subr.bf16.mxu0 %v3018
    %4082 = vmatpush1.bf16.msra.mxu0 %v3017
    %4083 = vmatprep.subr.bf16.mxu0 %v3020
    %4084 = vmatpush1.bf16.msra.mxu0 %v3019
    %4085 = vmatprep.subr.bf16.mxu0 %v3022
    %4086 = vmatpush1.bf16.msra.mxu0 %v3021
    %4087 = vmatprep.subr.bf16.mxu0 %v3024
    %4088 = vmatpush1.bf16.msra.mxu0 %v3023
    %4089 = vmatprep.subr.bf16.mxu0 %v3026
    %4090 = vmatpush1.bf16.msra.mxu0 %v3025
    %4091 = vmatprep.subr.bf16.mxu0 %v3028
    %4092 = vmatpush1.bf16.msra.mxu0 %v3027
    %4093 = vmatprep.mubr.bf16.mxu0 %v1306
    %4094 = vmatmul.mubr.bf16.gmra.mrb[0].mxu0 %v1305
    %v4095 = vpop.f32.mrb[0].mxu0
    %v4096 = vadd.f32 %v4043, %v4095
    %v4097 = vpop.f32.mrb[0].mxu0
    %v4098 = vadd.f32 %v4045, %v4097
    %v4099 = vpop.f32.mrb[0].mxu0
    %v4100 = vadd.f32 %v4047, %v4099
    %v4101 = vpop.f32.mrb[0].mxu0
    %v4102 = vadd.f32 %v4049, %v4101
    %4103 = vmatprep.mubr.bf16.mxu0 %v1310
    %4104 = vmatmul.mubr.bf16.gmra.mrb[0].mxu0 %v1309
    %v4105 = vpop.f32.mrb[0].mxu0
    %v4106 = vadd.f32 %v4053, %v4105
    %v4107 = vpop.f32.mrb[0].mxu0
    %v4108 = vadd.f32 %v4055, %v4107
    %v4109 = vpop.f32.mrb[0].mxu0
    %v4110 = vadd.f32 %v4057, %v4109
    %v4111 = vpop.f32.mrb[0].mxu0
    %v4112 = vadd.f32 %v4059, %v4111
    %4113 = vdwg.mxu0
    %4114 = vmatprep.subr.bf16.mxu0 %v3030
    %4115 = vmatpush1.bf16.msra.mxu0 %v3029
    %4116 = vmatprep.subr.bf16.mxu0 %v3032
    %4117 = vmatpush1.bf16.msra.mxu0 %v3031
    %4118 = vmatprep.subr.bf16.mxu0 %v3034
    %4119 = vmatpush1.bf16.msra.mxu0 %v3033
    %4120 = vmatprep.subr.bf16.mxu0 %v3036
    %4121 = vmatpush1.bf16.msra.mxu0 %v3035
    %4122 = vmatprep.subr.bf16.mxu0 %v3038
    %4123 = vmatpush1.bf16.msra.mxu0 %v3037
    %4124 = vmatprep.subr.bf16.mxu0 %v3040
    %4125 = vmatpush1.bf16.msra.mxu0 %v3039
    %4126 = vmatprep.subr.bf16.mxu0 %v3042
    %4127 = vmatpush1.bf16.msra.mxu0 %v3041
    %4128 = vmatprep.subr.bf16.mxu0 %v3044
    %4129 = vmatpush1.bf16.msra.mxu0 %v3043
    %4130 = vmatprep.subr.bf16.mxu0 %v3046
    %4131 = vmatpush1.bf16.msra.mxu0 %v3045
    %4132 = vmatprep.subr.bf16.mxu0 %v3048
    %4133 = vmatpush1.bf16.msra.mxu0 %v3047
    %4134 = vmatprep.subr.bf16.mxu0 %v3050
    %4135 = vmatpush1.bf16.msra.mxu0 %v3049
    %4136 = vmatprep.subr.bf16.mxu0 %v3052
    %4137 = vmatpush1.bf16.msra.mxu0 %v3051
    %4138 = vmatprep.subr.bf16.mxu0 %v3054
    %4139 = vmatpush1.bf16.msra.mxu0 %v3053
    %4140 = vmatprep.subr.bf16.mxu0 %v3056
    %4141 = vmatpush1.bf16.msra.mxu0 %v3055
    %4142 = vmatprep.subr.bf16.mxu0 %v3058
    %4143 = vmatpush1.bf16.msra.mxu0 %v3057
    %4144 = vmatprep.subr.bf16.mxu0 %v3060
    %4145 = vmatpush1.bf16.msra.mxu0 %v3059
    %4146 = vmatprep.mubr.bf16.mxu0 %v1308
    %4147 = vmatmul.mubr.bf16.gmra.mrb[0].mxu0 %v1307
    %v4148 = vpop.f32.mrb[0].mxu0
    %v4149 = vadd.f32 %v4096, %v4148
    %v4150 = vpop.f32.mrb[0].mxu0
    %v4151 = vadd.f32 %v4098, %v4150
    %v4152 = vpop.f32.mrb[0].mxu0
    %v4153 = vadd.f32 %v4100, %v4152
    %v4154 = vpop.f32.mrb[0].mxu0
    %v4155 = vadd.f32 %v4102, %v4154
    %4156 = vmatprep.mubr.bf16.mxu0 %v1312
    %4157 = vmatmul.mubr.bf16.gmra.mrb[0].mxu0 %v1311
    %v4158 = vpop.f32.mrb[0].mxu0
    %v4159 = vadd.f32 %v4106, %v4158
    %v4160 = vpop.f32.mrb[0].mxu0
    %v4161 = vadd.f32 %v4108, %v4160
    %v4162 = vpop.f32.mrb[0].mxu0
    %v4163 = vadd.f32 %v4110, %v4162
    %v4164 = vpop.f32.mrb[0].mxu0
    %v4165 = vadd.f32 %v4112, %v4164
    %4166 = vdwg.mxu0
    %4167 = vmatprep.subr.bf16.mxu0 %v3062
    %4168 = vmatpush1.bf16.msra.mxu0 %v3061
    %4169 = vmatprep.subr.bf16.mxu0 %v3064
    %4170 = vmatpush1.bf16.msra.mxu0 %v3063
    %4171 = vmatprep.subr.bf16.mxu0 %v3066
    %4172 = vmatpush1.bf16.msra.mxu0 %v3065
    %4173 = vmatprep.subr.bf16.mxu0 %v3068
    %4174 = vmatpush1.bf16.msra.mxu0 %v3067
    %4175 = vmatprep.subr.bf16.mxu0 %v3070
    %4176 = vmatpush1.bf16.msra.mxu0 %v3069
    %4177 = vmatprep.subr.bf16.mxu0 %v3072
    %4178 = vmatpush1.bf16.msra.mxu0 %v3071
    %4179 = vmatprep.subr.bf16.mxu0 %v3074
    %4180 = vmatpush1.bf16.msra.mxu0 %v3073
    %4181 = vmatprep.subr.bf16.mxu0 %v3076
    %4182 = vmatpush1.bf16.msra.mxu0 %v3075
    %4183 = vmatprep.subr.bf16.mxu0 %v3078
    %4184 = vmatpush1.bf16.msra.mxu0 %v3077
    %4185 = vmatprep.subr.bf16.mxu0 %v3080
    %4186 = vmatpush1.bf16.msra.mxu0 %v3079
    %4187 = vmatprep.subr.bf16.mxu0 %v3082
    %4188 = vmatpush1.bf16.msra.mxu0 %v3081
    %4189 = vmatprep.subr.bf16.mxu0 %v3084
    %4190 = vmatpush1.bf16.msra.mxu0 %v3083
    %4191 = vmatprep.subr.bf16.mxu0 %v3086
    %4192 = vmatpush1.bf16.msra.mxu0 %v3085
    %4193 = vmatprep.subr.bf16.mxu0 %v3088
    %4194 = vmatpush1.bf16.msra.mxu0 %v3087
    %4195 = vmatprep.subr.bf16.mxu0 %v3090
    %4196 = vmatpush1.bf16.msra.mxu0 %v3089
    %4197 = vmatprep.subr.bf16.mxu0 %v3092
    %4198 = vmatpush1.bf16.msra.mxu0 %v3091
    %4199 = vmatprep.mubr.bf16.mxu0 %v1338
    %4200 = vmatmul.mubr.bf16.gmra.mrb[0].mxu0 %v1337
    %v4201 = vpop.f32.mrb[0].mxu0
    %v4202 = vadd.f32 %v4149, %v4201
    %v4203 = vpop.f32.mrb[0].mxu0
    %v4204 = vadd.f32 %v4151, %v4203
    %v4205 = vpop.f32.mrb[0].mxu0
    %v4206 = vadd.f32 %v4153, %v4205
    %v4207 = vpop.f32.mrb[0].mxu0
    %v4208 = vadd.f32 %v4155, %v4207
    %4209 = vmatprep.mubr.bf16.mxu0 %v1342
    %4210 = vmatmul.mubr.bf16.gmra.mrb[0].mxu0 %v1341
    %v4211 = vpop.f32.mrb[0].mxu0
    %v4212 = vadd.f32 %v4159, %v4211
    %v4213 = vpop.f32.mrb[0].mxu0
    %v4214 = vadd.f32 %v4161, %v4213
    %v4215 = vpop.f32.mrb[0].mxu0
    %v4216 = vadd.f32 %v4163, %v4215
    %v4217 = vpop.f32.mrb[0].mxu0
    %v4218 = vadd.f32 %v4165, %v4217
    %4219 = vdwg.mxu0
    %4220 = vmatprep.subr.bf16.mxu0 %v3094
    %4221 = vmatpush1.bf16.msra.mxu0 %v3093
    %4222 = vmatprep.subr.bf16.mxu0 %v3096
    %4223 = vmatpush1.bf16.msra.mxu0 %v3095
    %4224 = vmatprep.subr.bf16.mxu0 %v3098
    %4225 = vmatpush1.bf16.msra.mxu0 %v3097
    %4226 = vmatprep.subr.bf16.mxu0 %v3100
    %4227 = vmatpush1.bf16.msra.mxu0 %v3099
    %4228 = vmatprep.subr.bf16.mxu0 %v3102
    %4229 = vmatpush1.bf16.msra.mxu0 %v3101
    %4230 = vmatprep.subr.bf16.mxu0 %v3104
    %4231 = vmatpush1.bf16.msra.mxu0 %v3103
    %4232 = vmatprep.subr.bf16.mxu0 %v3106
    %4233 = vmatpush1.bf16.msra.mxu0 %v3105
    %4234 = vmatprep.subr.bf16.mxu0 %v3108
    %4235 = vmatpush1.bf16.msra.mxu0 %v3107
    %4236 = vmatprep.subr.bf16.mxu0 %v3110
    %4237 = vmatpush1.bf16.msra.mxu0 %v3109
    %4238 = vmatprep.subr.bf16.mxu0 %v3112
    %4239 = vmatpush1.bf16.msra.mxu0 %v3111
    %4240 = vmatprep.subr.bf16.mxu0 %v3114
    %4241 = vmatpush1.bf16.msra.mxu0 %v3113
    %4242 = vmatprep.subr.bf16.mxu0 %v3116
    %4243 = vmatpush1.bf16.msra.mxu0 %v3115
    %4244 = vmatprep.subr.bf16.mxu0 %v3118
    %4245 = vmatpush1.bf16.msra.mxu0 %v3117
    %4246 = vmatprep.subr.bf16.mxu0 %v3120
    %4247 = vmatpush1.bf16.msra.mxu0 %v3119
    %4248 = vmatprep.subr.bf16.mxu0 %v3122
    %4249 = vmatpush1.bf16.msra.mxu0 %v3121
    %4250 = vmatprep.subr.bf16.mxu0 %v3124
    %4251 = vmatpush1.bf16.msra.mxu0 %v3123
    %4252 = vmatprep.mubr.bf16.mxu0 %v1340
    %4253 = vmatmul.mubr.bf16.gmra.mrb[0].mxu0 %v1339
    %v4254 = vpop.f32.mrb[0].mxu0
    %v4255 = vadd.f32 %v4202, %v4254
    %v4256 = vpop.f32.mrb[0].mxu0
    %v4257 = vadd.f32 %v4204, %v4256
    %v4258 = vpop.f32.mrb[0].mxu0
    %v4259 = vadd.f32 %v4206, %v4258
    %v4260 = vpop.f32.mrb[0].mxu0
    %v4261 = vadd.f32 %v4208, %v4260
    %4262 = vmatprep.mubr.bf16.mxu0 %v1344
    %4263 = vmatmul.mubr.bf16.gmra.mrb[0].mxu0 %v1343
    %v4264 = vpop.f32.mrb[0].mxu0
    %v4265 = vadd.f32 %v4212, %v4264
    %v4266 = vpop.f32.mrb[0].mxu0
    %v4267 = vadd.f32 %v4214, %v4266
    %v4268 = vpop.f32.mrb[0].mxu0
    %v4269 = vadd.f32 %v4216, %v4268
    %v4270 = vpop.f32.mrb[0].mxu0
    %v4271 = vadd.f32 %v4218, %v4270
    %4272 = vdwg.mxu0
    %4273 = vmatprep.subr.bf16.mxu0 %v3126
    %4274 = vmatpush1.bf16.msra.mxu0 %v3125
    %4275 = vmatprep.subr.bf16.mxu0 %v3128
    %4276 = vmatpush1.bf16.msra.mxu0 %v3127
    %4277 = vmatprep.subr.bf16.mxu0 %v3130
    %4278 = vmatpush1.bf16.msra.mxu0 %v3129
    %4279 = vmatprep.subr.bf16.mxu0 %v3132
    %4280 = vmatpush1.bf16.msra.mxu0 %v3131
    %4281 = vmatprep.subr.bf16.mxu0 %v3134
    %4282 = vmatpush1.bf16.msra.mxu0 %v3133
    %4283 = vmatprep.subr.bf16.mxu0 %v3136
    %4284 = vmatpush1.bf16.msra.mxu0 %v3135
    %4285 = vmatprep.subr.bf16.mxu0 %v3138
    %4286 = vmatpush1.bf16.msra.mxu0 %v3137
    %4287 = vmatprep.subr.bf16.mxu0 %v3140
    %4288 = vmatpush1.bf16.msra.mxu0 %v3139
    %4289 = vmatprep.subr.bf16.mxu0 %v3142
    %4290 = vmatpush1.bf16.msra.mxu0 %v3141
    %4291 = vmatprep.subr.bf16.mxu0 %v3144
    %4292 = vmatpush1.bf16.msra.mxu0 %v3143
    %4293 = vmatprep.subr.bf16.mxu0 %v3146
    %4294 = vmatpush1.bf16.msra.mxu0 %v3145
    %4295 = vmatprep.subr.bf16.mxu0 %v3148
    %4296 = vmatpush1.bf16.msra.mxu0 %v3147
    %4297 = vmatprep.subr.bf16.mxu0 %v3150
    %4298 = vmatpush1.bf16.msra.mxu0 %v3149
    %4299 = vmatprep.subr.bf16.mxu0 %v3152
    %4300 = vmatpush1.bf16.msra.mxu0 %v3151
    %4301 = vmatprep.subr.bf16.mxu0 %v3154
    %4302 = vmatpush1.bf16.msra.mxu0 %v3153
    %4303 = vmatprep.subr.bf16.mxu0 %v3156
    %4304 = vmatpush1.bf16.msra.mxu0 %v3155
    %4305 = vmatprep.mubr.bf16.mxu0 %v1370
    %4306 = vmatmul.mubr.bf16.gmra.mrb[0].mxu0 %v1369
    %v4307 = vpop.f32.mrb[0].mxu0
    %v4308 = vadd.f32 %v4255, %v4307
    %v4309 = vpop.f32.mrb[0].mxu0
    %v4310 = vadd.f32 %v4257, %v4309
    %v4311 = vpop.f32.mrb[0].mxu0
    %v4312 = vadd.f32 %v4259, %v4311
    %v4313 = vpop.f32.mrb[0].mxu0
    %v4314 = vadd.f32 %v4261, %v4313
    %4315 = vmatprep.mubr.bf16.mxu0 %v1374
    %4316 = vmatmul.mubr.bf16.gmra.mrb[0].mxu0 %v1373
    %v4317 = vpop.f32.mrb[0].mxu0
    %v4318 = vadd.f32 %v4265, %v4317
    %v4319 = vpop.f32.mrb[0].mxu0
    %v4320 = vadd.f32 %v4267, %v4319
    %v4321 = vpop.f32.mrb[0].mxu0
    %v4322 = vadd.f32 %v4269, %v4321
    %v4323 = vpop.f32.mrb[0].mxu0
    %v4324 = vadd.f32 %v4271, %v4323
    %4325 = vdwg.mxu0
    %4326 = vmatprep.subr.bf16.mxu0 %v3158
    %4327 = vmatpush1.bf16.msra.mxu0 %v3157
    %4328 = vmatprep.subr.bf16.mxu0 %v3160
    %4329 = vmatpush1.bf16.msra.mxu0 %v3159
    %4330 = vmatprep.subr.bf16.mxu0 %v3162
    %4331 = vmatpush1.bf16.msra.mxu0 %v3161
    %4332 = vmatprep.subr.bf16.mxu0 %v3164
    %4333 = vmatpush1.bf16.msra.mxu0 %v3163
    %4334 = vmatprep.subr.bf16.mxu0 %v3166
    %4335 = vmatpush1.bf16.msra.mxu0 %v3165
    %4336 = vmatprep.subr.bf16.mxu0 %v3168
    %4337 = vmatpush1.bf16.msra.mxu0 %v3167
    %4338 = vmatprep.subr.bf16.mxu0 %v3170
    %4339 = vmatpush1.bf16.msra.mxu0 %v3169
    %4340 = vmatprep.subr.bf16.mxu0 %v3172
    %4341 = vmatpush1.bf16.msra.mxu0 %v3171
    %4342 = vmatprep.subr.bf16.mxu0 %v3174
    %4343 = vmatpush1.bf16.msra.mxu0 %v3173
    %4344 = vmatprep.subr.bf16.mxu0 %v3176
    %4345 = vmatpush1.bf16.msra.mxu0 %v3175
    %4346 = vmatprep.subr.bf16.mxu0 %v3178
    %4347 = vmatpush1.bf16.msra.mxu0 %v3177
    %4348 = vmatprep.subr.bf16.mxu0 %v3180
    %4349 = vmatpush1.bf16.msra.mxu0 %v3179
    %4350 = vmatprep.subr.bf16.mxu0 %v3182
    %4351 = vmatpush1.bf16.msra.mxu0 %v3181
    %4352 = vmatprep.subr.bf16.mxu0 %v3184
    %4353 = vmatpush1.bf16.msra.mxu0 %v3183
    %4354 = vmatprep.subr.bf16.mxu0 %v3186
    %4355 = vmatpush1.bf16.msra.mxu0 %v3185
    %4356 = vmatprep.subr.bf16.mxu0 %v3188
    %4357 = vmatpush1.bf16.msra.mxu0 %v3187
    %4358 = vmatprep.mubr.bf16.mxu0 %v1372
    %4359 = vmatmul.mubr.bf16.gmra.mrb[0].mxu0 %v1371
    %v4360 = vpop.f32.mrb[0].mxu0
    %v4361 = vadd.f32 %v4308, %v4360
    %v4362 = vpop.f32.mrb[0].mxu0
    %v4363 = vadd.f32 %v4310, %v4362
    %v4364 = vpop.f32.mrb[0].mxu0
    %v4365 = vadd.f32 %v4312, %v4364
    %v4366 = vpop.f32.mrb[0].mxu0
    %v4367 = vadd.f32 %v4314, %v4366
    %4368 = vmatprep.mubr.bf16.mxu0 %v1376
    %4369 = vmatmul.mubr.bf16.gmra.mrb[0].mxu0 %v1375
    %v4370 = vpop.f32.mrb[0].mxu0
    %v4371 = vadd.f32 %v4318, %v4370
    %v4372 = vpop.f32.mrb[0].mxu0
    %v4373 = vadd.f32 %v4320, %v4372
    %v4374 = vpop.f32.mrb[0].mxu0
    %v4375 = vadd.f32 %v4322, %v4374
    %v4376 = vpop.f32.mrb[0].mxu0
    %v4377 = vadd.f32 %v4324, %v4376
    %4378 = vdwg.mxu0
    %v4379 = vadd.f32 %v4361, %v4365
    %v4380 = vadd.f32 %v4379, %v4371
    %v4381 = vadd.f32 %v4380, %v4375
    %v4382 = vrot.slane %v4381, 4
    %v4383 = vadd.f32 %v4381, %v4382
    %v4384 = vrot.slane %v4383, 2
    %v4385 = vadd.f32 %v4383, %v4384
    %v4386 = vrot.slane %v4385, 1
    %v4387 = vadd.f32 %v4385, %v4386
    %v4388 = vadd.f32 %v4363, %v4367
    %v4389 = vadd.f32 %v4388, %v4373
    %v4390 = vadd.f32 %v4389, %v4377
    %v4391 = vrot.slane %v4390, 4
    %v4392 = vadd.f32 %v4390, %v4391
    %v4393 = vrot.slane %v4392, 2
    %v4394 = vadd.f32 %v4392, %v4393
    %v4395 = vrot.slane %v4394, 1
    %v4396 = vadd.f32 %v4394, %v4395
    %v4397 = vrcp.pop 32.0
    %v4398 = vmul.f32 %v4387, %v4397
    %v4399 = vmul.f32 %v4396, %v4397
    %v4400 = vsub.f32 %v4361, %v4398
    %v4401 = vsub.f32 %v4363, %v4399
    %v4402 = vsub.f32 %v4365, %v4398
    %v4403 = vsub.f32 %v4367, %v4399
    %v4404 = vsub.f32 %v4371, %v4398
    %v4405 = vsub.f32 %v4373, %v4399
    %v4406 = vsub.f32 %v4375, %v4398
    %v4407 = vsub.f32 %v4377, %v4399
    %v4408 = vmul.f32 %v4400, %v4400
    %v4409 = vmul.f32 %v4401, %v4401
    %v4410 = vmul.f32 %v4402, %v4402
    %v4411 = vmul.f32 %v4403, %v4403
    %v4412 = vmul.f32 %v4404, %v4404
    %v4413 = vmul.f32 %v4405, %v4405
    %v4414 = vmul.f32 %v4406, %v4406
    %v4415 = vmul.f32 %v4407, %v4407
    %v4416 = vadd.f32 %v4408, %v4410
    %v4417 = vadd.f32 %v4416, %v4412
    %v4418 = vadd.f32 %v4417, %v4414
    %v4419 = vrot.slane %v4418, 4
    %v4420 = vadd.f32 %v4418, %v4419
    %v4421 = vrot.slane %v4420, 2
    %v4422 = vadd.f32 %v4420, %v4421
    %v4423 = vrot.slane %v4422, 1
    %v4424 = vadd.f32 %v4422, %v4423
    %v4425 = vadd.f32 %v4409, %v4411
    %v4426 = vadd.f32 %v4425, %v4413
    %v4427 = vadd.f32 %v4426, %v4415
    %v4428 = vrot.slane %v4427, 4
    %v4429 = vadd.f32 %v4427, %v4428
    %v4430 = vrot.slane %v4429, 2
    %v4431 = vadd.f32 %v4429, %v4430
    %v4432 = vrot.slane %v4431, 1
    %v4433 = vadd.f32 %v4431, %v4432
    %v4434 = vmul.f32 %v4424, %v4397
    %v4435 = vmul.f32 %v4433, %v4397
    %v4436 = vadd.f32 %v4434, 1e-05
    %v4437 = vadd.f32 %v4435, 1e-05
    %v4438 = vrsqrt.pop %v4436
    %v4439 = vrsqrt.pop %v4437
    %v4440 = vmul.f32 %v4400, %v4438
    %v4441 = vmul.f32 %v4401, %v4439
    %v4442 = vmul.f32 %v4402, %v4438
    %v4443 = vmul.f32 %v4403, %v4439
    %v4444 = vmul.f32 %v4404, %v4438
    %v4445 = vmul.f32 %v4405, %v4439
    %v4446 = vmul.f32 %v4406, %v4438
    %v4447 = vmul.f32 %v4407, %v4439
    %v4448 = vld [vmem:[#allocation11] ss:$8 sm:$0x3]
    %v4450 = vlaneseq
    %v4451 = vshrl.u32 %v4450, 7
    %v4452 = vsub.s32 0, %v4451
    %v4453 = vrot.slane %v4448, %v4452
    %v4454 = vlaneseq
    %v4455 = vshrl.u32 %v4454, 7
    %v4456 = vsub.s32 1, %v4455
    %v4457 = vrot.slane %v4448, %v4456
    %v4460 = vmul.f32 %v4440, %v4453
    %v4461 = vmul.f32 %v4441, %v4457
    %v4462 = vmul.f32 %v4442, %v4453
    %v4463 = vmul.f32 %v4443, %v4457
    %v4464 = vmul.f32 %v4444, %v4453
    %v4465 = vmul.f32 %v4445, %v4457
    %v4466 = vmul.f32 %v4446, %v4453
    %v4467 = vmul.f32 %v4447, %v4457
    %v4468 = vld [vmem:[#allocation12] ss:$8 sm:$0x3]
    %v4470 = vlaneseq
    %v4471 = vshrl.u32 %v4470, 7
    %v4472 = vsub.s32 0, %v4471
    %v4473 = vrot.slane %v4468, %v4472
    %v4474 = vlaneseq
    %v4475 = vshrl.u32 %v4474, 7
    %v4476 = vsub.s32 1, %v4475
    %v4477 = vrot.slane %v4468, %v4476
    %v4480 = vadd.f32 %v4460, %v4473
    %v4481 = vadd.f32 %v4461, %v4477
    %v4482 = vadd.f32 %v4462, %v4473
    %v4483 = vadd.f32 %v4463, %v4477
    %v4484 = vadd.f32 %v4464, %v4473
    %v4485 = vadd.f32 %v4465, %v4477
    %v4486 = vadd.f32 %v4466, %v4473
    %v4487 = vadd.f32 %v4467, %v4477
    %v4488 = vmax.f32 %v4480, 0.0
    %v4489 = vmax.f32 %v4481, 0.0
    %v4490 = vmax.f32 %v4482, 0.0
    %v4491 = vmax.f32 %v4483, 0.0
    %v4492 = vmax.f32 %v4484, 0.0
    %v4493 = vmax.f32 %v4485, 0.0
    %v4494 = vmax.f32 %v4486, 0.0
    %v4495 = vmax.f32 %v4487, 0.0
    %v4496 = vpack.c.bf16 %v4490, %v4488
    %v4497 = vpack.c.bf16 %v4491, %v4489
    %v4498 = vpack.c.bf16 %v4494, %v4492
    %v4499 = vpack.c.bf16 %v4495, %v4493
    %4500 = vst [vmem:[#allocation3 + $0x20] sm:$0xff] %v4496
    %4501 = vst [vmem:[#allocation3 + $0x28] sm:$0xff] %v4497
    %4502 = vst [vmem:[#allocation3 + $0x70] sm:$0xff] %v4498
    %4503 = vst [vmem:[#allocation3 + $0x78] sm:$0xff] %v4499
    %v4504 = vld [vmem:[#allocation8] sm:$0xff]
    %v4505 = vld [vmem:[#allocation8 + $0x8] sm:$0xff]
    %v4506 = vld [vmem:[#allocation8 + $0x10] sm:$0xff]
    %v4507 = vld [vmem:[#allocation8 + $0x18] sm:$0xff]
    %v4508 = vld [vmem:[#allocation8 + $0x20] sm:$0xff]
    %v4509 = vld [vmem:[#allocation8 + $0x28] sm:$0xff]
    %v4510 = vld [vmem:[#allocation8 + $0x30] sm:$0xff]
    %v4511 = vld [vmem:[#allocation8 + $0x38] sm:$0xff]
    %v4512 = vld [vmem:[#allocation8 + $0x40] sm:$0xff]
    %v4513 = vld [vmem:[#allocation8 + $0x48] sm:$0xff]
    %v4514 = vld [vmem:[#allocation8 + $0x50] sm:$0xff]
    %v4515 = vld [vmem:[#allocation8 + $0x58] sm:$0xff]
    %v4516 = vld [vmem:[#allocation8 + $0x60] sm:$0xff]
    %v4517 = vld [vmem:[#allocation8 + $0x68] sm:$0xff]
    %v4518 = vld [vmem:[#allocation8 + $0x70] sm:$0xff]
    %v4519 = vld [vmem:[#allocation8 + $0x78] sm:$0xff]
    %v4520 = vld [vmem:[#allocation8 + $0x80] sm:$0xff]
    %v4521 = vld [vmem:[#allocation8 + $0x88] sm:$0xff]
    %v4522 = vld [vmem:[#allocation8 + $0x90] sm:$0xff]
    %v4523 = vld [vmem:[#allocation8 + $0x98] sm:$0xff]
    %v4524 = vld [vmem:[#allocation8 + $0xa0] sm:$0xff]
    %v4525 = vld [vmem:[#allocation8 + $0xa8] sm:$0xff]
    %v4526 = vld [vmem:[#allocation8 + $0xb0] sm:$0xff]
    %v4527 = vld [vmem:[#allocation8 + $0xb8] sm:$0xff]
    %v4528 = vld [vmem:[#allocation8 + $0xc0] sm:$0xff]
    %v4529 = vld [vmem:[#allocation8 + $0xc8] sm:$0xff]
    %v4530 = vld [vmem:[#allocation8 + $0xd0] sm:$0xff]
    %v4531 = vld [vmem:[#allocation8 + $0xd8] sm:$0xff]
    %v4532 = vld [vmem:[#allocation8 + $0xe0] sm:$0xff]
    %v4533 = vld [vmem:[#allocation8 + $0xe8] sm:$0xff]
    %v4534 = vld [vmem:[#allocation8 + $0xf0] sm:$0xff]
    %v4535 = vld [vmem:[#allocation8 + $0xf8] sm:$0xff]
    %v4536 = vld [vmem:[#allocation8 + $0x100] sm:$0xff]
    %v4537 = vld [vmem:[#allocation8 + $0x108] sm:$0xff]
    %v4538 = vld [vmem:[#allocation8 + $0x110] sm:$0xff]
    %v4539 = vld [vmem:[#allocation8 + $0x118] sm:$0xff]
    %v4540 = vld [vmem:[#allocation8 + $0x120] sm:$0xff]
    %v4541 = vld [vmem:[#allocation8 + $0x128] sm:$0xff]
    %v4542 = vld [vmem:[#allocation8 + $0x130] sm:$0xff]
    %v4543 = vld [vmem:[#allocation8 + $0x138] sm:$0xff]
    %v4544 = vld [vmem:[#allocation8 + $0x140] sm:$0xff]
    %v4545 = vld [vmem:[#allocation8 + $0x148] sm:$0xff]
    %v4546 = vld [vmem:[#allocation8 + $0x150] sm:$0xff]
    %v4547 = vld [vmem:[#allocation8 + $0x158] sm:$0xff]
    %v4548 = vld [vmem:[#allocation8 + $0x160] sm:$0xff]
    %v4549 = vld [vmem:[#allocation8 + $0x168] sm:$0xff]
    %v4550 = vld [vmem:[#allocation8 + $0x170] sm:$0xff]
    %v4551 = vld [vmem:[#allocation8 + $0x178] sm:$0xff]
    %v4552 = vld [vmem:[#allocation8 + $0x180] sm:$0xff]
    %v4553 = vld [vmem:[#allocation8 + $0x188] sm:$0xff]
    %v4554 = vld [vmem:[#allocation8 + $0x190] sm:$0xff]
    %v4555 = vld [vmem:[#allocation8 + $0x198] sm:$0xff]
    %v4556 = vld [vmem:[#allocation8 + $0x1a0] sm:$0xff]
    %v4557 = vld [vmem:[#allocation8 + $0x1a8] sm:$0xff]
    %v4558 = vld [vmem:[#allocation8 + $0x1b0] sm:$0xff]
    %v4559 = vld [vmem:[#allocation8 + $0x1b8] sm:$0xff]
    %v4560 = vld [vmem:[#allocation8 + $0x1c0] sm:$0xff]
    %v4561 = vld [vmem:[#allocation8 + $0x1c8] sm:$0xff]
    %v4562 = vld [vmem:[#allocation8 + $0x1d0] sm:$0xff]
    %v4563 = vld [vmem:[#allocation8 + $0x1d8] sm:$0xff]
    %v4564 = vld [vmem:[#allocation8 + $0x1e0] sm:$0xff]
    %v4565 = vld [vmem:[#allocation8 + $0x1e8] sm:$0xff]
    %v4566 = vld [vmem:[#allocation8 + $0x1f0] sm:$0xff]
    %v4567 = vld [vmem:[#allocation8 + $0x1f8] sm:$0xff]
    %v4568 = vld [vmem:[#allocation8 + $0x200] sm:$0xff]
    %v4569 = vld [vmem:[#allocation8 + $0x208] sm:$0xff]
    %v4570 = vld [vmem:[#allocation8 + $0x210] sm:$0xff]
    %v4571 = vld [vmem:[#allocation8 + $0x218] sm:$0xff]
    %v4572 = vld [vmem:[#allocation8 + $0x220] sm:$0xff]
    %v4573 = vld [vmem:[#allocation8 + $0x228] sm:$0xff]
    %v4574 = vld [vmem:[#allocation8 + $0x230] sm:$0xff]
    %v4575 = vld [vmem:[#allocation8 + $0x238] sm:$0xff]
    %v4576 = vld [vmem:[#allocation8 + $0x240] sm:$0xff]
    %v4577 = vld [vmem:[#allocation8 + $0x248] sm:$0xff]
    %v4578 = vld [vmem:[#allocation8 + $0x250] sm:$0xff]
    %v4579 = vld [vmem:[#allocation8 + $0x258] sm:$0xff]
    %v4580 = vld [vmem:[#allocation8 + $0x260] sm:$0xff]
    %v4581 = vld [vmem:[#allocation8 + $0x268] sm:$0xff]
    %v4582 = vld [vmem:[#allocation8 + $0x270] sm:$0xff]
    %v4583 = vld [vmem:[#allocation8 + $0x278] sm:$0xff]
    %v4584 = vld [vmem:[#allocation8 + $0x280] sm:$0xff]
    %v4585 = vld [vmem:[#allocation8 + $0x288] sm:$0xff]
    %v4586 = vld [vmem:[#allocation8 + $0x290] sm:$0xff]
    %v4587 = vld [vmem:[#allocation8 + $0x298] sm:$0xff]
    %v4588 = vld [vmem:[#allocation8 + $0x2a0] sm:$0xff]
    %v4589 = vld [vmem:[#allocation8 + $0x2a8] sm:$0xff]
    %v4590 = vld [vmem:[#allocation8 + $0x2b0] sm:$0xff]
    %v4591 = vld [vmem:[#allocation8 + $0x2b8] sm:$0xff]
    %v4592 = vld [vmem:[#allocation8 + $0x2c0] sm:$0xff]
    %v4593 = vld [vmem:[#allocation8 + $0x2c8] sm:$0xff]
    %v4594 = vld [vmem:[#allocation8 + $0x2d0] sm:$0xff]
    %v4595 = vld [vmem:[#allocation8 + $0x2d8] sm:$0xff]
    %v4596 = vld [vmem:[#allocation8 + $0x2e0] sm:$0xff]
    %v4597 = vld [vmem:[#allocation8 + $0x2e8] sm:$0xff]
    %v4598 = vld [vmem:[#allocation8 + $0x2f0] sm:$0xff]
    %v4599 = vld [vmem:[#allocation8 + $0x2f8] sm:$0xff]
    %v4600 = vld [vmem:[#allocation8 + $0x300] sm:$0xff]
    %v4601 = vld [vmem:[#allocation8 + $0x308] sm:$0xff]
    %v4602 = vld [vmem:[#allocation8 + $0x310] sm:$0xff]
    %v4603 = vld [vmem:[#allocation8 + $0x318] sm:$0xff]
    %v4604 = vld [vmem:[#allocation8 + $0x320] sm:$0xff]
    %v4605 = vld [vmem:[#allocation8 + $0x328] sm:$0xff]
    %v4606 = vld [vmem:[#allocation8 + $0x330] sm:$0xff]
    %v4607 = vld [vmem:[#allocation8 + $0x338] sm:$0xff]
    %v4608 = vld [vmem:[#allocation8 + $0x340] sm:$0xff]
    %v4609 = vld [vmem:[#allocation8 + $0x348] sm:$0xff]
    %v4610 = vld [vmem:[#allocation8 + $0x350] sm:$0xff]
    %v4611 = vld [vmem:[#allocation8 + $0x358] sm:$0xff]
    %v4612 = vld [vmem:[#allocation8 + $0x360] sm:$0xff]
    %v4613 = vld [vmem:[#allocation8 + $0x368] sm:$0xff]
    %v4614 = vld [vmem:[#allocation8 + $0x370] sm:$0xff]
    %v4615 = vld [vmem:[#allocation8 + $0x378] sm:$0xff]
    %v4616 = vld [vmem:[#allocation8 + $0x380] sm:$0xff]
    %v4617 = vld [vmem:[#allocation8 + $0x388] sm:$0xff]
    %v4618 = vld [vmem:[#allocation8 + $0x390] sm:$0xff]
    %v4619 = vld [vmem:[#allocation8 + $0x398] sm:$0xff]
    %v4620 = vld [vmem:[#allocation8 + $0x3a0] sm:$0xff]
    %v4621 = vld [vmem:[#allocation8 + $0x3a8] sm:$0xff]
    %v4622 = vld [vmem:[#allocation8 + $0x3b0] sm:$0xff]
    %v4623 = vld [vmem:[#allocation8 + $0x3b8] sm:$0xff]
    %v4624 = vld [vmem:[#allocation8 + $0x3c0] sm:$0xff]
    %v4625 = vld [vmem:[#allocation8 + $0x3c8] sm:$0xff]
    %v4626 = vld [vmem:[#allocation8 + $0x3d0] sm:$0xff]
    %v4627 = vld [vmem:[#allocation8 + $0x3d8] sm:$0xff]
    %v4628 = vld [vmem:[#allocation8 + $0x3e0] sm:$0xff]
    %v4629 = vld [vmem:[#allocation8 + $0x3e8] sm:$0xff]
    %v4630 = vld [vmem:[#allocation8 + $0x3f0] sm:$0xff]
    %v4631 = vld [vmem:[#allocation8 + $0x3f8] sm:$0xff]
    %v4632 = vld [vmem:[#allocation8 + $0x400] sm:$0xff]
    %v4633 = vld [vmem:[#allocation8 + $0x408] sm:$0xff]
    %v4634 = vld [vmem:[#allocation8 + $0x410] sm:$0xff]
    %v4635 = vld [vmem:[#allocation8 + $0x418] sm:$0xff]
    %v4636 = vld [vmem:[#allocation8 + $0x420] sm:$0xff]
    %v4637 = vld [vmem:[#allocation8 + $0x428] sm:$0xff]
    %v4638 = vld [vmem:[#allocation8 + $0x430] sm:$0xff]
    %v4639 = vld [vmem:[#allocation8 + $0x438] sm:$0xff]
    %v4640 = vld [vmem:[#allocation8 + $0x440] sm:$0xff]
    %v4641 = vld [vmem:[#allocation8 + $0x448] sm:$0xff]
    %v4642 = vld [vmem:[#allocation8 + $0x450] sm:$0xff]
    %v4643 = vld [vmem:[#allocation8 + $0x458] sm:$0xff]
    %v4644 = vld [vmem:[#allocation8 + $0x460] sm:$0xff]
    %v4645 = vld [vmem:[#allocation8 + $0x468] sm:$0xff]
    %v4646 = vld [vmem:[#allocation8 + $0x470] sm:$0xff]
    %v4647 = vld [vmem:[#allocation8 + $0x478] sm:$0xff]
    %v4648 = vld [vmem:[#allocation8 + $0x480] sm:$0xff]
    %v4649 = vld [vmem:[#allocation8 + $0x488] sm:$0xff]
    %v4650 = vld [vmem:[#allocation8 + $0x490] sm:$0xff]
    %v4651 = vld [vmem:[#allocation8 + $0x498] sm:$0xff]
    %v4652 = vld [vmem:[#allocation8 + $0x4a0] sm:$0xff]
    %v4653 = vld [vmem:[#allocation8 + $0x4a8] sm:$0xff]
    %v4654 = vld [vmem:[#allocation8 + $0x4b0] sm:$0xff]
    %v4655 = vld [vmem:[#allocation8 + $0x4b8] sm:$0xff]
    %v4656 = vld [vmem:[#allocation8 + $0x4c0] sm:$0xff]
    %v4657 = vld [vmem:[#allocation8 + $0x4c8] sm:$0xff]
    %v4658 = vld [vmem:[#allocation8 + $0x4d0] sm:$0xff]
    %v4659 = vld [vmem:[#allocation8 + $0x4d8] sm:$0xff]
    %v4660 = vld [vmem:[#allocation8 + $0x4e0] sm:$0xff]
    %v4661 = vld [vmem:[#allocation8 + $0x4e8] sm:$0xff]
    %v4662 = vld [vmem:[#allocation8 + $0x4f0] sm:$0xff]
    %v4663 = vld [vmem:[#allocation8 + $0x4f8] sm:$0xff]
    %v4664 = vld [vmem:[#allocation3 + $0x10] sm:$0x80]
    %v4665 = vld [vmem:[#allocation3 + $0x18] sm:$0x80]
    %v4666 = vld [vmem:[#allocation3 + $0x20] sm:$0x7f]
    %v4667 = vld [vmem:[#allocation3 + $0x28] sm:$0x7f]
    %v4668 = vld [vmem:[#allocation3 + $0x60] sm:$0x80]
    %v4669 = vld [vmem:[#allocation3 + $0x68] sm:$0x80]
    %v4670 = vld [vmem:[#allocation3 + $0x70] sm:$0x7f]
    %v4671 = vld [vmem:[#allocation3 + $0x78] sm:$0x7f]
    %v4680 = vrot.slane %v4664, 7
    %v4681 = vrot.slane %v4666, 7
    %v4682 = vsel %vm1126, %v4680, %v4681
    %v4683 = vrot.slane %v4665, 7
    %v4684 = vrot.slane %v4667, 7
    %v4685 = vsel %vm1126, %v4683, %v4684
    %v4686 = vrot.slane %v4668, 7
    %v4687 = vrot.slane %v4670, 7
    %v4688 = vsel %vm1126, %v4686, %v4687
    %v4689 = vrot.slane %v4669, 7
    %v4690 = vrot.slane %v4671, 7
    %v4691 = vsel %vm1126, %v4689, %v4690
    %v4696 = vld [vmem:[#allocation3 + $0x20] sm:$0xff]
    %v4697 = vld [vmem:[#allocation3 + $0x28] sm:$0xff]
    %v4698 = vld [vmem:[#allocation3 + $0x70] sm:$0xff]
    %v4699 = vld [vmem:[#allocation3 + $0x78] sm:$0xff]
    %vm4700 = vsmask.f32 256
    %v4702 = vshrl.u32 %v4664, 16
    %v4704 = vrot.slane %v4702, 7
    %v4706 = vshrl.u32 %v4696, 16
    %v4708 = vrot.slane %v4706, 7
    %v4709 = vshll.u32 %v4696, 16
    %v4711 = vor.u32 %v4708, %v4709
    %v4712 = vsel %vm4700, %v4704, %v4711
    %v4714 = vshrl.u32 %v4665, 16
    %v4716 = vrot.slane %v4714, 7
    %v4718 = vshrl.u32 %v4697, 16
    %v4720 = vrot.slane %v4718, 7
    %v4721 = vshll.u32 %v4697, 16
    %v4723 = vor.u32 %v4720, %v4721
    %v4724 = vsel %vm4700, %v4716, %v4723
    %v4726 = vshrl.u32 %v4668, 16
    %v4728 = vrot.slane %v4726, 7
    %v4730 = vshrl.u32 %v4698, 16
    %v4732 = vrot.slane %v4730, 7
    %v4733 = vshll.u32 %v4698, 16
    %v4735 = vor.u32 %v4732, %v4733
    %v4736 = vsel %vm4700, %v4728, %v4735
    %v4738 = vshrl.u32 %v4669, 16
    %v4740 = vrot.slane %v4738, 7
    %v4742 = vshrl.u32 %v4699, 16
    %v4744 = vrot.slane %v4742, 7
    %v4745 = vshll.u32 %v4699, 16
    %v4747 = vor.u32 %v4744, %v4745
    %v4748 = vsel %vm4700, %v4740, %v4747
    %v4753 = vld [vmem:[#allocation3 + $0x30] sm:$0x1]
    %v4754 = vld [vmem:[#allocation3 + $0x38] sm:$0x1]
    %v4755 = vld [vmem:[#allocation3 + $0x80] sm:$0x1]
    %v4756 = vld [vmem:[#allocation3 + $0x88] sm:$0x1]
    %vm4757 = vsmask.f32 7424
    %v4758 = vrot.slane %v4709, 1
    %v4759 = vor.u32 %v4706, %v4758
    %v4761 = vshll.u32 %v4753, 16
    %v4763 = vrot.slane %v4761, 1
    %v4764 = vsel %vm4757, %v4759, %v4763
    %v4765 = vrot.slane %v4721, 1
    %v4766 = vor.u32 %v4718, %v4765
    %v4768 = vshll.u32 %v4754, 16
    %v4770 = vrot.slane %v4768, 1
    %v4771 = vsel %vm4757, %v4766, %v4770
    %v4772 = vrot.slane %v4733, 1
    %v4773 = vor.u32 %v4730, %v4772
    %v4775 = vshll.u32 %v4755, 16
    %v4777 = vrot.slane %v4775, 1
    %v4778 = vsel %vm4757, %v4773, %v4777
    %v4779 = vrot.slane %v4745, 1
    %v4780 = vor.u32 %v4742, %v4779
    %v4782 = vshll.u32 %v4756, 16
    %v4784 = vrot.slane %v4782, 1
    %v4785 = vsel %vm4757, %v4780, %v4784
    %v4790 = vld [vmem:[#allocation3 + $0x20] sm:$0xfe]
    %v4791 = vld [vmem:[#allocation3 + $0x28] sm:$0xfe]
    %v4792 = vld [vmem:[#allocation3 + $0x70] sm:$0xfe]
    %v4793 = vld [vmem:[#allocation3 + $0x78] sm:$0xfe]
    %vm4802 = vcmask 1046528
    %v4803 = vrot.slane %v4790, 1
    %v4804 = vrot.slane %v4753, 1
    %v4805 = vsel %vm4802, %v4803, %v4804
    %v4806 = vrot.slane %v4791, 1
    %v4807 = vrot.slane %v4754, 1
    %v4808 = vsel %vm4802, %v4806, %v4807
    %v4809 = vrot.slane %v4792, 1
    %v4810 = vrot.slane %v4755, 1
    %v4811 = vsel %vm4802, %v4809, %v4810
    %v4812 = vrot.slane %v4793, 1
    %v4813 = vrot.slane %v4756, 1
    %v4814 = vsel %vm4802, %v4812, %v4813
    %s4819 = scalar_lea.vmem [#allocation9], 1
    %v4820 = vld [vmem:[%s4819] ss:$8 sm:$0x3]
    %v4822 = vlaneseq
    %v4823 = vshrl.u32 %v4822, 7
    %v4824 = vsub.s32 0, %v4823
    %v4825 = vrot.slane %v4820, %v4824
    %v4826 = vlaneseq
    %v4827 = vshrl.u32 %v4826, 7
    %v4828 = vsub.s32 1, %v4827
    %v4829 = vrot.slane %v4820, %v4828
    %v4992 = vunpack.c.l.b16 %v4504
    %v4993 = vunpack.c.h.b16 %v4504
    %v4994 = vunpack.c.l.b16 %v4505
    %v4995 = vunpack.c.h.b16 %v4505
    %v4996 = vunpack.c.l.b16 %v4506
    %v4997 = vunpack.c.h.b16 %v4506
    %v4998 = vunpack.c.l.b16 %v4507
    %v4999 = vunpack.c.h.b16 %v4507
    %v5000 = vunpack.c.l.b16 %v4508
    %v5001 = vunpack.c.h.b16 %v4508
    %v5002 = vunpack.c.l.b16 %v4509
    %v5003 = vunpack.c.h.b16 %v4509
    %v5004 = vunpack.c.l.b16 %v4510
    %v5005 = vunpack.c.h.b16 %v4510
    %v5006 = vunpack.c.l.b16 %v4511
    %v5007 = vunpack.c.h.b16 %v4511
    %v5008 = vunpack.c.l.b16 %v4512
    %v5009 = vunpack.c.h.b16 %v4512
    %v5010 = vunpack.c.l.b16 %v4513
    %v5011 = vunpack.c.h.b16 %v4513
    %v5012 = vunpack.c.l.b16 %v4514
    %v5013 = vunpack.c.h.b16 %v4514
    %v5014 = vunpack.c.l.b16 %v4515
    %v5015 = vunpack.c.h.b16 %v4515
    %v5016 = vunpack.c.l.b16 %v4516
    %v5017 = vunpack.c.h.b16 %v4516
    %v5018 = vunpack.c.l.b16 %v4517
    %v5019 = vunpack.c.h.b16 %v4517
    %v5020 = vunpack.c.l.b16 %v4518
    %v5021 = vunpack.c.h.b16 %v4518
    %v5022 = vunpack.c.l.b16 %v4519
    %v5023 = vunpack.c.h.b16 %v4519
    %v5024 = vunpack.c.l.b16 %v4520
    %v5025 = vunpack.c.h.b16 %v4520
    %v5026 = vunpack.c.l.b16 %v4521
    %v5027 = vunpack.c.h.b16 %v4521
    %v5028 = vunpack.c.l.b16 %v4522
    %v5029 = vunpack.c.h.b16 %v4522
    %v5030 = vunpack.c.l.b16 %v4523
    %v5031 = vunpack.c.h.b16 %v4523
    %v5032 = vunpack.c.l.b16 %v4524
    %v5033 = vunpack.c.h.b16 %v4524
    %v5034 = vunpack.c.l.b16 %v4525
    %v5035 = vunpack.c.h.b16 %v4525
    %v5036 = vunpack.c.l.b16 %v4526
    %v5037 = vunpack.c.h.b16 %v4526
    %v5038 = vunpack.c.l.b16 %v4527
    %v5039 = vunpack.c.h.b16 %v4527
    %v5040 = vunpack.c.l.b16 %v4528
    %v5041 = vunpack.c.h.b16 %v4528
    %v5042 = vunpack.c.l.b16 %v4529
    %v5043 = vunpack.c.h.b16 %v4529
    %v5044 = vunpack.c.l.b16 %v4530
    %v5045 = vunpack.c.h.b16 %v4530
    %v5046 = vunpack.c.l.b16 %v4531
    %v5047 = vunpack.c.h.b16 %v4531
    %v5048 = vunpack.c.l.b16 %v4532
    %v5049 = vunpack.c.h.b16 %v4532
    %v5050 = vunpack.c.l.b16 %v4533
    %v5051 = vunpack.c.h.b16 %v4533
    %v5052 = vunpack.c.l.b16 %v4534
    %v5053 = vunpack.c.h.b16 %v4534
    %v5054 = vunpack.c.l.b16 %v4535
    %v5055 = vunpack.c.h.b16 %v4535
    %v5056 = vunpack.c.l.b16 %v4536
    %v5057 = vunpack.c.h.b16 %v4536
    %v5058 = vunpack.c.l.b16 %v4537
    %v5059 = vunpack.c.h.b16 %v4537
    %v5060 = vunpack.c.l.b16 %v4538
    %v5061 = vunpack.c.h.b16 %v4538
    %v5062 = vunpack.c.l.b16 %v4539
    %v5063 = vunpack.c.h.b16 %v4539
    %v5064 = vunpack.c.l.b16 %v4540
    %v5065 = vunpack.c.h.b16 %v4540
    %v5066 = vunpack.c.l.b16 %v4541
    %v5067 = vunpack.c.h.b16 %v4541
    %v5068 = vunpack.c.l.b16 %v4542
    %v5069 = vunpack.c.h.b16 %v4542
    %v5070 = vunpack.c.l.b16 %v4543
    %v5071 = vunpack.c.h.b16 %v4543
    %v5072 = vunpack.c.l.b16 %v4544
    %v5073 = vunpack.c.h.b16 %v4544
    %v5074 = vunpack.c.l.b16 %v4545
    %v5075 = vunpack.c.h.b16 %v4545
    %v5076 = vunpack.c.l.b16 %v4546
    %v5077 = vunpack.c.h.b16 %v4546
    %v5078 = vunpack.c.l.b16 %v4547
    %v5079 = vunpack.c.h.b16 %v4547
    %v5080 = vunpack.c.l.b16 %v4548
    %v5081 = vunpack.c.h.b16 %v4548
    %v5082 = vunpack.c.l.b16 %v4549
    %v5083 = vunpack.c.h.b16 %v4549
    %v5084 = vunpack.c.l.b16 %v4550
    %v5085 = vunpack.c.h.b16 %v4550
    %v5086 = vunpack.c.l.b16 %v4551
    %v5087 = vunpack.c.h.b16 %v4551
    %v5088 = vunpack.c.l.b16 %v4552
    %v5089 = vunpack.c.h.b16 %v4552
    %v5090 = vunpack.c.l.b16 %v4553
    %v5091 = vunpack.c.h.b16 %v4553
    %v5092 = vunpack.c.l.b16 %v4554
    %v5093 = vunpack.c.h.b16 %v4554
    %v5094 = vunpack.c.l.b16 %v4555
    %v5095 = vunpack.c.h.b16 %v4555
    %v5096 = vunpack.c.l.b16 %v4556
    %v5097 = vunpack.c.h.b16 %v4556
    %v5098 = vunpack.c.l.b16 %v4557
    %v5099 = vunpack.c.h.b16 %v4557
    %v5100 = vunpack.c.l.b16 %v4558
    %v5101 = vunpack.c.h.b16 %v4558
    %v5102 = vunpack.c.l.b16 %v4559
    %v5103 = vunpack.c.h.b16 %v4559
    %v5104 = vunpack.c.l.b16 %v4560
    %v5105 = vunpack.c.h.b16 %v4560
    %v5106 = vunpack.c.l.b16 %v4561
    %v5107 = vunpack.c.h.b16 %v4561
    %v5108 = vunpack.c.l.b16 %v4562
    %v5109 = vunpack.c.h.b16 %v4562
    %v5110 = vunpack.c.l.b16 %v4563
    %v5111 = vunpack.c.h.b16 %v4563
    %v5112 = vunpack.c.l.b16 %v4564
    %v5113 = vunpack.c.h.b16 %v4564
    %v5114 = vunpack.c.l.b16 %v4565
    %v5115 = vunpack.c.h.b16 %v4565
    %v5116 = vunpack.c.l.b16 %v4566
    %v5117 = vunpack.c.h.b16 %v4566
    %v5118 = vunpack.c.l.b16 %v4567
    %v5119 = vunpack.c.h.b16 %v4567
    %v5120 = vunpack.c.l.b16 %v4568
    %v5121 = vunpack.c.h.b16 %v4568
    %v5122 = vunpack.c.l.b16 %v4569
    %v5123 = vunpack.c.h.b16 %v4569
    %v5124 = vunpack.c.l.b16 %v4570
    %v5125 = vunpack.c.h.b16 %v4570
    %v5126 = vunpack.c.l.b16 %v4571
    %v5127 = vunpack.c.h.b16 %v4571
    %v5128 = vunpack.c.l.b16 %v4572
    %v5129 = vunpack.c.h.b16 %v4572
    %v5130 = vunpack.c.l.b16 %v4573
    %v5131 = vunpack.c.h.b16 %v4573
    %v5132 = vunpack.c.l.b16 %v4574
    %v5133 = vunpack.c.h.b16 %v4574
    %v5134 = vunpack.c.l.b16 %v4575
    %v5135 = vunpack.c.h.b16 %v4575
    %v5136 = vunpack.c.l.b16 %v4576
    %v5137 = vunpack.c.h.b16 %v4576
    %v5138 = vunpack.c.l.b16 %v4577
    %v5139 = vunpack.c.h.b16 %v4577
    %v5140 = vunpack.c.l.b16 %v4578
    %v5141 = vunpack.c.h.b16 %v4578
    %v5142 = vunpack.c.l.b16 %v4579
    %v5143 = vunpack.c.h.b16 %v4579
    %v5144 = vunpack.c.l.b16 %v4580
    %v5145 = vunpack.c.h.b16 %v4580
    %v5146 = vunpack.c.l.b16 %v4581
    %v5147 = vunpack.c.h.b16 %v4581
    %v5148 = vunpack.c.l.b16 %v4582
    %v5149 = vunpack.c.h.b16 %v4582
    %v5150 = vunpack.c.l.b16 %v4583
    %v5151 = vunpack.c.h.b16 %v4583
    %v5152 = vunpack.c.l.b16 %v4584
    %v5153 = vunpack.c.h.b16 %v4584
    %v5154 = vunpack.c.l.b16 %v4585
    %v5155 = vunpack.c.h.b16 %v4585
    %v5156 = vunpack.c.l.b16 %v4586
    %v5157 = vunpack.c.h.b16 %v4586
    %v5158 = vunpack.c.l.b16 %v4587
    %v5159 = vunpack.c.h.b16 %v4587
    %v5160 = vunpack.c.l.b16 %v4588
    %v5161 = vunpack.c.h.b16 %v4588
    %v5162 = vunpack.c.l.b16 %v4589
    %v5163 = vunpack.c.h.b16 %v4589
    %v5164 = vunpack.c.l.b16 %v4590
    %v5165 = vunpack.c.h.b16 %v4590
    %v5166 = vunpack.c.l.b16 %v4591
    %v5167 = vunpack.c.h.b16 %v4591
    %v5168 = vunpack.c.l.b16 %v4592
    %v5169 = vunpack.c.h.b16 %v4592
    %v5170 = vunpack.c.l.b16 %v4593
    %v5171 = vunpack.c.h.b16 %v4593
    %v5172 = vunpack.c.l.b16 %v4594
    %v5173 = vunpack.c.h.b16 %v4594
    %v5174 = vunpack.c.l.b16 %v4595
    %v5175 = vunpack.c.h.b16 %v4595
    %v5176 = vunpack.c.l.b16 %v4596
    %v5177 = vunpack.c.h.b16 %v4596
    %v5178 = vunpack.c.l.b16 %v4597
    %v5179 = vunpack.c.h.b16 %v4597
    %v5180 = vunpack.c.l.b16 %v4598
    %v5181 = vunpack.c.h.b16 %v4598
    %v5182 = vunpack.c.l.b16 %v4599
    %v5183 = vunpack.c.h.b16 %v4599
    %v5184 = vunpack.c.l.b16 %v4600
    %v5185 = vunpack.c.h.b16 %v4600
    %v5186 = vunpack.c.l.b16 %v4601
    %v5187 = vunpack.c.h.b16 %v4601
    %v5188 = vunpack.c.l.b16 %v4602
    %v5189 = vunpack.c.h.b16 %v4602
    %v5190 = vunpack.c.l.b16 %v4603
    %v5191 = vunpack.c.h.b16 %v4603
    %v5192 = vunpack.c.l.b16 %v4604
    %v5193 = vunpack.c.h.b16 %v4604
    %v5194 = vunpack.c.l.b16 %v4605
    %v5195 = vunpack.c.h.b16 %v4605
    %v5196 = vunpack.c.l.b16 %v4606
    %v5197 = vunpack.c.h.b16 %v4606
    %v5198 = vunpack.c.l.b16 %v4607
    %v5199 = vunpack.c.h.b16 %v4607
    %v5200 = vunpack.c.l.b16 %v4608
    %v5201 = vunpack.c.h.b16 %v4608
    %v5202 = vunpack.c.l.b16 %v4609
    %v5203 = vunpack.c.h.b16 %v4609
    %v5204 = vunpack.c.l.b16 %v4610
    %v5205 = vunpack.c.h.b16 %v4610
    %v5206 = vunpack.c.l.b16 %v4611
    %v5207 = vunpack.c.h.b16 %v4611
    %v5208 = vunpack.c.l.b16 %v4612
    %v5209 = vunpack.c.h.b16 %v4612
    %v5210 = vunpack.c.l.b16 %v4613
    %v5211 = vunpack.c.h.b16 %v4613
    %v5212 = vunpack.c.l.b16 %v4614
    %v5213 = vunpack.c.h.b16 %v4614
    %v5214 = vunpack.c.l.b16 %v4615
    %v5215 = vunpack.c.h.b16 %v4615
    %v5216 = vunpack.c.l.b16 %v4616
    %v5217 = vunpack.c.h.b16 %v4616
    %v5218 = vunpack.c.l.b16 %v4617
    %v5219 = vunpack.c.h.b16 %v4617
    %v5220 = vunpack.c.l.b16 %v4618
    %v5221 = vunpack.c.h.b16 %v4618
    %v5222 = vunpack.c.l.b16 %v4619
    %v5223 = vunpack.c.h.b16 %v4619
    %v5224 = vunpack.c.l.b16 %v4620
    %v5225 = vunpack.c.h.b16 %v4620
    %v5226 = vunpack.c.l.b16 %v4621
    %v5227 = vunpack.c.h.b16 %v4621
    %v5228 = vunpack.c.l.b16 %v4622
    %v5229 = vunpack.c.h.b16 %v4622
    %v5230 = vunpack.c.l.b16 %v4623
    %v5231 = vunpack.c.h.b16 %v4623
    %v5232 = vunpack.c.l.b16 %v4624
    %v5233 = vunpack.c.h.b16 %v4624
    %v5234 = vunpack.c.l.b16 %v4625
    %v5235 = vunpack.c.h.b16 %v4625
    %v5236 = vunpack.c.l.b16 %v4626
    %v5237 = vunpack.c.h.b16 %v4626
    %v5238 = vunpack.c.l.b16 %v4627
    %v5239 = vunpack.c.h.b16 %v4627
    %v5240 = vunpack.c.l.b16 %v4628
    %v5241 = vunpack.c.h.b16 %v4628
    %v5242 = vunpack.c.l.b16 %v4629
    %v5243 = vunpack.c.h.b16 %v4629
    %v5244 = vunpack.c.l.b16 %v4630
    %v5245 = vunpack.c.h.b16 %v4630
    %v5246 = vunpack.c.l.b16 %v4631
    %v5247 = vunpack.c.h.b16 %v4631
    %v5248 = vunpack.c.l.b16 %v4632
    %v5249 = vunpack.c.h.b16 %v4632
    %v5250 = vunpack.c.l.b16 %v4633
    %v5251 = vunpack.c.h.b16 %v4633
    %v5252 = vunpack.c.l.b16 %v4634
    %v5253 = vunpack.c.h.b16 %v4634
    %v5254 = vunpack.c.l.b16 %v4635
    %v5255 = vunpack.c.h.b16 %v4635
    %v5256 = vunpack.c.l.b16 %v4636
    %v5257 = vunpack.c.h.b16 %v4636
    %v5258 = vunpack.c.l.b16 %v4637
    %v5259 = vunpack.c.h.b16 %v4637
    %v5260 = vunpack.c.l.b16 %v4638
    %v5261 = vunpack.c.h.b16 %v4638
    %v5262 = vunpack.c.l.b16 %v4639
    %v5263 = vunpack.c.h.b16 %v4639
    %v5264 = vunpack.c.l.b16 %v4640
    %v5265 = vunpack.c.h.b16 %v4640
    %v5266 = vunpack.c.l.b16 %v4641
    %v5267 = vunpack.c.h.b16 %v4641
    %v5268 = vunpack.c.l.b16 %v4642
    %v5269 = vunpack.c.h.b16 %v4642
    %v5270 = vunpack.c.l.b16 %v4643
    %v5271 = vunpack.c.h.b16 %v4643
    %v5272 = vunpack.c.l.b16 %v4644
    %v5273 = vunpack.c.h.b16 %v4644
    %v5274 = vunpack.c.l.b16 %v4645
    %v5275 = vunpack.c.h.b16 %v4645
    %v5276 = vunpack.c.l.b16 %v4646
    %v5277 = vunpack.c.h.b16 %v4646
    %v5278 = vunpack.c.l.b16 %v4647
    %v5279 = vunpack.c.h.b16 %v4647
    %v5280 = vunpack.c.l.b16 %v4648
    %v5281 = vunpack.c.h.b16 %v4648
    %v5282 = vunpack.c.l.b16 %v4649
    %v5283 = vunpack.c.h.b16 %v4649
    %v5284 = vunpack.c.l.b16 %v4650
    %v5285 = vunpack.c.h.b16 %v4650
    %v5286 = vunpack.c.l.b16 %v4651
    %v5287 = vunpack.c.h.b16 %v4651
    %v5288 = vunpack.c.l.b16 %v4652
    %v5289 = vunpack.c.h.b16 %v4652
    %v5290 = vunpack.c.l.b16 %v4653
    %v5291 = vunpack.c.h.b16 %v4653
    %v5292 = vunpack.c.l.b16 %v4654
    %v5293 = vunpack.c.h.b16 %v4654
    %v5294 = vunpack.c.l.b16 %v4655
    %v5295 = vunpack.c.h.b16 %v4655
    %v5296 = vunpack.c.l.b16 %v4656
    %v5297 = vunpack.c.h.b16 %v4656
    %v5298 = vunpack.c.l.b16 %v4657
    %v5299 = vunpack.c.h.b16 %v4657
    %v5300 = vunpack.c.l.b16 %v4658
    %v5301 = vunpack.c.h.b16 %v4658
    %v5302 = vunpack.c.l.b16 %v4659
    %v5303 = vunpack.c.h.b16 %v4659
    %v5304 = vunpack.c.l.b16 %v4660
    %v5305 = vunpack.c.h.b16 %v4660
    %v5306 = vunpack.c.l.b16 %v4661
    %v5307 = vunpack.c.h.b16 %v4661
    %v5308 = vunpack.c.l.b16 %v4662
    %v5309 = vunpack.c.h.b16 %v4662
    %v5310 = vunpack.c.l.b16 %v4663
    %v5311 = vunpack.c.h.b16 %v4663
    %v5312 = vpack.c.b16 %v4994, %v4992
    %v5313 = vpack.c.b16 %v4995, %v4993
    %v5314 = vpack.c.b16 %v4998, %v4996
    %v5315 = vpack.c.b16 %v4999, %v4997
    %v5316 = vpack.c.b16 %v5002, %v5000
    %v5317 = vpack.c.b16 %v5003, %v5001
    %v5318 = vpack.c.b16 %v5006, %v5004
    %v5319 = vpack.c.b16 %v5007, %v5005
    %v5320 = vpack.c.b16 %v5010, %v5008
    %v5321 = vpack.c.b16 %v5011, %v5009
    %v5322 = vpack.c.b16 %v5014, %v5012
    %v5323 = vpack.c.b16 %v5015, %v5013
    %v5324 = vpack.c.b16 %v5018, %v5016
    %v5325 = vpack.c.b16 %v5019, %v5017
    %v5326 = vpack.c.b16 %v5022, %v5020
    %v5327 = vpack.c.b16 %v5023, %v5021
    %v5328 = vpack.c.b16 %v5026, %v5024
    %v5329 = vpack.c.b16 %v5027, %v5025
    %v5330 = vpack.c.b16 %v5030, %v5028
    %v5331 = vpack.c.b16 %v5031, %v5029
    %v5332 = vpack.c.b16 %v5034, %v5032
    %v5333 = vpack.c.b16 %v5035, %v5033
    %v5334 = vpack.c.b16 %v5038, %v5036
    %v5335 = vpack.c.b16 %v5039, %v5037
    %v5336 = vpack.c.b16 %v5042, %v5040
    %v5337 = vpack.c.b16 %v5043, %v5041
    %v5338 = vpack.c.b16 %v5046, %v5044
    %v5339 = vpack.c.b16 %v5047, %v5045
    %v5340 = vpack.c.b16 %v5050, %v5048
    %v5341 = vpack.c.b16 %v5051, %v5049
    %v5342 = vpack.c.b16 %v5054, %v5052
    %v5343 = vpack.c.b16 %v5055, %v5053
    %v5344 = vpack.c.b16 %v5058, %v5056
    %v5345 = vpack.c.b16 %v5059, %v5057
    %v5346 = vpack.c.b16 %v5062, %v5060
    %v5347 = vpack.c.b16 %v5063, %v5061
    %v5348 = vpack.c.b16 %v5066, %v5064
    %v5349 = vpack.c.b16 %v5067, %v5065
    %v5350 = vpack.c.b16 %v5070, %v5068
    %v5351 = vpack.c.b16 %v5071, %v5069
    %v5352 = vpack.c.b16 %v5074, %v5072
    %v5353 = vpack.c.b16 %v5075, %v5073
    %v5354 = vpack.c.b16 %v5078, %v5076
    %v5355 = vpack.c.b16 %v5079, %v5077
    %v5356 = vpack.c.b16 %v5082, %v5080
    %v5357 = vpack.c.b16 %v5083, %v5081
    %v5358 = vpack.c.b16 %v5086, %v5084
    %v5359 = vpack.c.b16 %v5087, %v5085
    %v5360 = vpack.c.b16 %v5090, %v5088
    %v5361 = vpack.c.b16 %v5091, %v5089
    %v5362 = vpack.c.b16 %v5094, %v5092
    %v5363 = vpack.c.b16 %v5095, %v5093
    %v5364 = vpack.c.b16 %v5098, %v5096
    %v5365 = vpack.c.b16 %v5099, %v5097
    %v5366 = vpack.c.b16 %v5102, %v5100
    %v5367 = vpack.c.b16 %v5103, %v5101
    %v5368 = vpack.c.b16 %v5106, %v5104
    %v5369 = vpack.c.b16 %v5107, %v5105
    %v5370 = vpack.c.b16 %v5110, %v5108
    %v5371 = vpack.c.b16 %v5111, %v5109
    %v5372 = vpack.c.b16 %v5114, %v5112
    %v5373 = vpack.c.b16 %v5115, %v5113
    %v5374 = vpack.c.b16 %v5118, %v5116
    %v5375 = vpack.c.b16 %v5119, %v5117
    %v5376 = vpack.c.b16 %v5122, %v5120
    %v5377 = vpack.c.b16 %v5123, %v5121
    %v5378 = vpack.c.b16 %v5126, %v5124
    %v5379 = vpack.c.b16 %v5127, %v5125
    %v5380 = vpack.c.b16 %v5130, %v5128
    %v5381 = vpack.c.b16 %v5131, %v5129
    %v5382 = vpack.c.b16 %v5134, %v5132
    %v5383 = vpack.c.b16 %v5135, %v5133
    %v5384 = vpack.c.b16 %v5138, %v5136
    %v5385 = vpack.c.b16 %v5139, %v5137
    %v5386 = vpack.c.b16 %v5142, %v5140
    %v5387 = vpack.c.b16 %v5143, %v5141
    %v5388 = vpack.c.b16 %v5146, %v5144
    %v5389 = vpack.c.b16 %v5147, %v5145
    %v5390 = vpack.c.b16 %v5150, %v5148
    %v5391 = vpack.c.b16 %v5151, %v5149
    %v5392 = vpack.c.b16 %v5154, %v5152
    %v5393 = vpack.c.b16 %v5155, %v5153
    %v5394 = vpack.c.b16 %v5158, %v5156
    %v5395 = vpack.c.b16 %v5159, %v5157
    %v5396 = vpack.c.b16 %v5162, %v5160
    %v5397 = vpack.c.b16 %v5163, %v5161
    %v5398 = vpack.c.b16 %v5166, %v5164
    %v5399 = vpack.c.b16 %v5167, %v5165
    %v5400 = vpack.c.b16 %v5170, %v5168
    %v5401 = vpack.c.b16 %v5171, %v5169
    %v5402 = vpack.c.b16 %v5174, %v5172
    %v5403 = vpack.c.b16 %v5175, %v5173
    %v5404 = vpack.c.b16 %v5178, %v5176
    %v5405 = vpack.c.b16 %v5179, %v5177
    %v5406 = vpack.c.b16 %v5182, %v5180
    %v5407 = vpack.c.b16 %v5183, %v5181
    %v5408 = vpack.c.b16 %v5186, %v5184
    %v5409 = vpack.c.b16 %v5187, %v5185
    %v5410 = vpack.c.b16 %v5190, %v5188
    %v5411 = vpack.c.b16 %v5191, %v5189
    %v5412 = vpack.c.b16 %v5194, %v5192
    %v5413 = vpack.c.b16 %v5195, %v5193
    %v5414 = vpack.c.b16 %v5198, %v5196
    %v5415 = vpack.c.b16 %v5199, %v5197
    %v5416 = vpack.c.b16 %v5202, %v5200
    %v5417 = vpack.c.b16 %v5203, %v5201
    %v5418 = vpack.c.b16 %v5206, %v5204
    %v5419 = vpack.c.b16 %v5207, %v5205
    %v5420 = vpack.c.b16 %v5210, %v5208
    %v5421 = vpack.c.b16 %v5211, %v5209
    %v5422 = vpack.c.b16 %v5214, %v5212
    %v5423 = vpack.c.b16 %v5215, %v5213
    %v5424 = vpack.c.b16 %v5218, %v5216
    %v5425 = vpack.c.b16 %v5219, %v5217
    %v5426 = vpack.c.b16 %v5222, %v5220
    %v5427 = vpack.c.b16 %v5223, %v5221
    %v5428 = vpack.c.b16 %v5226, %v5224
    %v5429 = vpack.c.b16 %v5227, %v5225
    %v5430 = vpack.c.b16 %v5230, %v5228
    %v5431 = vpack.c.b16 %v5231, %v5229
    %v5432 = vpack.c.b16 %v5234, %v5232
    %v5433 = vpack.c.b16 %v5235, %v5233
    %v5434 = vpack.c.b16 %v5238, %v5236
    %v5435 = vpack.c.b16 %v5239, %v5237
    %v5436 = vpack.c.b16 %v5242, %v5240
    %v5437 = vpack.c.b16 %v5243, %v5241
    %v5438 = vpack.c.b16 %v5246, %v5244
    %v5439 = vpack.c.b16 %v5247, %v5245
    %v5440 = vpack.c.b16 %v5250, %v5248
    %v5441 = vpack.c.b16 %v5251, %v5249
    %v5442 = vpack.c.b16 %v5254, %v5252
    %v5443 = vpack.c.b16 %v5255, %v5253
    %v5444 = vpack.c.b16 %v5258, %v5256
    %v5445 = vpack.c.b16 %v5259, %v5257
    %v5446 = vpack.c.b16 %v5262, %v5260
    %v5447 = vpack.c.b16 %v5263, %v5261
    %v5448 = vpack.c.b16 %v5266, %v5264
    %v5449 = vpack.c.b16 %v5267, %v5265
    %v5450 = vpack.c.b16 %v5270, %v5268
    %v5451 = vpack.c.b16 %v5271, %v5269
    %v5452 = vpack.c.b16 %v5274, %v5272
    %v5453 = vpack.c.b16 %v5275, %v5273
    %v5454 = vpack.c.b16 %v5278, %v5276
    %v5455 = vpack.c.b16 %v5279, %v5277
    %v5456 = vpack.c.b16 %v5282, %v5280
    %v5457 = vpack.c.b16 %v5283, %v5281
    %v5458 = vpack.c.b16 %v5286, %v5284
    %v5459 = vpack.c.b16 %v5287, %v5285
    %v5460 = vpack.c.b16 %v5290, %v5288
    %v5461 = vpack.c.b16 %v5291, %v5289
    %v5462 = vpack.c.b16 %v5294, %v5292
    %v5463 = vpack.c.b16 %v5295, %v5293
    %v5464 = vpack.c.b16 %v5298, %v5296
    %v5465 = vpack.c.b16 %v5299, %v5297
    %v5466 = vpack.c.b16 %v5302, %v5300
    %v5467 = vpack.c.b16 %v5303, %v5301
    %v5468 = vpack.c.b16 %v5306, %v5304
    %v5469 = vpack.c.b16 %v5307, %v5305
    %v5470 = vpack.c.b16 %v5310, %v5308
    %v5471 = vpack.c.b16 %v5311, %v5309
    %5632 = vmatprep.subr.bf16.mxu0 %v5313
    %5633 = vmatpush1.bf16.msra.mxu0 %v5312
    %5634 = vmatprep.subr.bf16.mxu0 %v5315
    %5635 = vmatpush1.bf16.msra.mxu0 %v5314
    %5636 = vmatprep.subr.bf16.mxu0 %v5317
    %5637 = vmatpush1.bf16.msra.mxu0 %v5316
    %5638 = vmatprep.subr.bf16.mxu0 %v5319
    %5639 = vmatpush1.bf16.msra.mxu0 %v5318
    %5640 = vmatprep.subr.bf16.mxu0 %v5321
    %5641 = vmatpush1.bf16.msra.mxu0 %v5320
    %5642 = vmatprep.subr.bf16.mxu0 %v5323
    %5643 = vmatpush1.bf16.msra.mxu0 %v5322
    %5644 = vmatprep.subr.bf16.mxu0 %v5325
    %5645 = vmatpush1.bf16.msra.mxu0 %v5324
    %5646 = vmatprep.subr.bf16.mxu0 %v5327
    %5647 = vmatpush1.bf16.msra.mxu0 %v5326
    %5648 = vmatprep.subr.bf16.mxu0 %v5329
    %5649 = vmatpush1.bf16.msra.mxu0 %v5328
    %5650 = vmatprep.subr.bf16.mxu0 %v5331
    %5651 = vmatpush1.bf16.msra.mxu0 %v5330
    %5652 = vmatprep.subr.bf16.mxu0 %v5333
    %5653 = vmatpush1.bf16.msra.mxu0 %v5332
    %5654 = vmatprep.subr.bf16.mxu0 %v5335
    %5655 = vmatpush1.bf16.msra.mxu0 %v5334
    %5656 = vmatprep.subr.bf16.mxu0 %v5337
    %5657 = vmatpush1.bf16.msra.mxu0 %v5336
    %5658 = vmatprep.subr.bf16.mxu0 %v5339
    %5659 = vmatpush1.bf16.msra.mxu0 %v5338
    %5660 = vmatprep.subr.bf16.mxu0 %v5341
    %5661 = vmatpush1.bf16.msra.mxu0 %v5340
    %5662 = vmatprep.subr.bf16.mxu0 %v5343
    %5663 = vmatpush1.bf16.msra.mxu0 %v5342
    %5664 = vmatprep.mubr.bf16.mxu0 %v4685
    %5665 = vmatmul.mubr.bf16.gmra.mrb[0].mxu0 %v4682
    %v5666 = vpop.f32.mrb[0].mxu0
    %v5667 = vadd.f32 %v4825, %v5666
    %v5668 = vpop.f32.mrb[0].mxu0
    %v5669 = vadd.f32 %v4829, %v5668
    %v5670 = vpop.f32.mrb[0].mxu0
    %v5671 = vadd.f32 %v4825, %v5670
    %v5672 = vpop.f32.mrb[0].mxu0
    %v5673 = vadd.f32 %v4829, %v5672
    %5674 = vmatprep.mubr.bf16.mxu0 %v4691
    %5675 = vmatmul.mubr.bf16.gmra.mrb[0].mxu0 %v4688
    %v5676 = vpop.f32.mrb[0].mxu0
    %v5677 = vadd.f32 %v4825, %v5676
    %v5678 = vpop.f32.mrb[0].mxu0
    %v5679 = vadd.f32 %v4829, %v5678
    %v5680 = vpop.f32.mrb[0].mxu0
    %v5681 = vadd.f32 %v4825, %v5680
    %v5682 = vpop.f32.mrb[0].mxu0
    %v5683 = vadd.f32 %v4829, %v5682
    %5684 = vdwg.mxu0
    %5685 = vmatprep.subr.bf16.mxu0 %v5345
    %5686 = vmatpush1.bf16.msra.mxu0 %v5344
    %5687 = vmatprep.subr.bf16.mxu0 %v5347
    %5688 = vmatpush1.bf16.msra.mxu0 %v5346
    %5689 = vmatprep.subr.bf16.mxu0 %v5349
    %5690 = vmatpush1.bf16.msra.mxu0 %v5348
    %5691 = vmatprep.subr.bf16.mxu0 %v5351
    %5692 = vmatpush1.bf16.msra.mxu0 %v5350
    %5693 = vmatprep.subr.bf16.mxu0 %v5353
    %5694 = vmatpush1.bf16.msra.mxu0 %v5352
    %5695 = vmatprep.subr.bf16.mxu0 %v5355
    %5696 = vmatpush1.bf16.msra.mxu0 %v5354
    %5697 = vmatprep.subr.bf16.mxu0 %v5357
    %5698 = vmatpush1.bf16.msra.mxu0 %v5356
    %5699 = vmatprep.subr.bf16.mxu0 %v5359
    %5700 = vmatpush1.bf16.msra.mxu0 %v5358
    %5701 = vmatprep.subr.bf16.mxu0 %v5361
    %5702 = vmatpush1.bf16.msra.mxu0 %v5360
    %5703 = vmatprep.subr.bf16.mxu0 %v5363
    %5704 = vmatpush1.bf16.msra.mxu0 %v5362
    %5705 = vmatprep.subr.bf16.mxu0 %v5365
    %5706 = vmatpush1.bf16.msra.mxu0 %v5364
    %5707 = vmatprep.subr.bf16.mxu0 %v5367
    %5708 = vmatpush1.bf16.msra.mxu0 %v5366
    %5709 = vmatprep.subr.bf16.mxu0 %v5369
    %5710 = vmatpush1.bf16.msra.mxu0 %v5368
    %5711 = vmatprep.subr.bf16.mxu0 %v5371
    %5712 = vmatpush1.bf16.msra.mxu0 %v5370
    %5713 = vmatprep.subr.bf16.mxu0 %v5373
    %5714 = vmatpush1.bf16.msra.mxu0 %v5372
    %5715 = vmatprep.subr.bf16.mxu0 %v5375
    %5716 = vmatpush1.bf16.msra.mxu0 %v5374
    %5717 = vmatprep.mubr.bf16.mxu0 %v4724
    %5718 = vmatmul.mubr.bf16.gmra.mrb[0].mxu0 %v4712
    %v5719 = vpop.f32.mrb[0].mxu0
    %v5720 = vadd.f32 %v5667, %v5719
    %v5721 = vpop.f32.mrb[0].mxu0
    %v5722 = vadd.f32 %v5669, %v5721
    %v5723 = vpop.f32.mrb[0].mxu0
    %v5724 = vadd.f32 %v5671, %v5723
    %v5725 = vpop.f32.mrb[0].mxu0
    %v5726 = vadd.f32 %v5673, %v5725
    %5727 = vmatprep.mubr.bf16.mxu0 %v4748
    %5728 = vmatmul.mubr.bf16.gmra.mrb[0].mxu0 %v4736
    %v5729 = vpop.f32.mrb[0].mxu0
    %v5730 = vadd.f32 %v5677, %v5729
    %v5731 = vpop.f32.mrb[0].mxu0
    %v5732 = vadd.f32 %v5679, %v5731
    %v5733 = vpop.f32.mrb[0].mxu0
    %v5734 = vadd.f32 %v5681, %v5733
    %v5735 = vpop.f32.mrb[0].mxu0
    %v5736 = vadd.f32 %v5683, %v5735
    %5737 = vdwg.mxu0
    %5738 = vmatprep.subr.bf16.mxu0 %v5377
    %5739 = vmatpush1.bf16.msra.mxu0 %v5376
    %5740 = vmatprep.subr.bf16.mxu0 %v5379
    %5741 = vmatpush1.bf16.msra.mxu0 %v5378
    %5742 = vmatprep.subr.bf16.mxu0 %v5381
    %5743 = vmatpush1.bf16.msra.mxu0 %v5380
    %5744 = vmatprep.subr.bf16.mxu0 %v5383
    %5745 = vmatpush1.bf16.msra.mxu0 %v5382
    %5746 = vmatprep.subr.bf16.mxu0 %v5385
    %5747 = vmatpush1.bf16.msra.mxu0 %v5384
    %5748 = vmatprep.subr.bf16.mxu0 %v5387
    %5749 = vmatpush1.bf16.msra.mxu0 %v5386
    %5750 = vmatprep.subr.bf16.mxu0 %v5389
    %5751 = vmatpush1.bf16.msra.mxu0 %v5388
    %5752 = vmatprep.subr.bf16.mxu0 %v5391
    %5753 = vmatpush1.bf16.msra.mxu0 %v5390
    %5754 = vmatprep.subr.bf16.mxu0 %v5393
    %5755 = vmatpush1.bf16.msra.mxu0 %v5392
    %5756 = vmatprep.subr.bf16.mxu0 %v5395
    %5757 = vmatpush1.bf16.msra.mxu0 %v5394
    %5758 = vmatprep.subr.bf16.mxu0 %v5397
    %5759 = vmatpush1.bf16.msra.mxu0 %v5396
    %5760 = vmatprep.subr.bf16.mxu0 %v5399
    %5761 = vmatpush1.bf16.msra.mxu0 %v5398
    %5762 = vmatprep.subr.bf16.mxu0 %v5401
    %5763 = vmatpush1.bf16.msra.mxu0 %v5400
    %5764 = vmatprep.subr.bf16.mxu0 %v5403
    %5765 = vmatpush1.bf16.msra.mxu0 %v5402
    %5766 = vmatprep.subr.bf16.mxu0 %v5405
    %5767 = vmatpush1.bf16.msra.mxu0 %v5404
    %5768 = vmatprep.subr.bf16.mxu0 %v5407
    %5769 = vmatpush1.bf16.msra.mxu0 %v5406
    %5770 = vmatprep.mubr.bf16.mxu0 %v4697
    %5771 = vmatmul.mubr.bf16.gmra.mrb[0].mxu0 %v4696
    %v5772 = vpop.f32.mrb[0].mxu0
    %v5773 = vadd.f32 %v5720, %v5772
    %v5774 = vpop.f32.mrb[0].mxu0
    %v5775 = vadd.f32 %v5722, %v5774
    %v5776 = vpop.f32.mrb[0].mxu0
    %v5777 = vadd.f32 %v5724, %v5776
    %v5778 = vpop.f32.mrb[0].mxu0
    %v5779 = vadd.f32 %v5726, %v5778
    %5780 = vmatprep.mubr.bf16.mxu0 %v4699
    %5781 = vmatmul.mubr.bf16.gmra.mrb[0].mxu0 %v4698
    %v5782 = vpop.f32.mrb[0].mxu0
    %v5783 = vadd.f32 %v5730, %v5782
    %v5784 = vpop.f32.mrb[0].mxu0
    %v5785 = vadd.f32 %v5732, %v5784
    %v5786 = vpop.f32.mrb[0].mxu0
    %v5787 = vadd.f32 %v5734, %v5786
    %v5788 = vpop.f32.mrb[0].mxu0
    %v5789 = vadd.f32 %v5736, %v5788
    %5790 = vdwg.mxu0
    %5791 = vmatprep.subr.bf16.mxu0 %v5409
    %5792 = vmatpush1.bf16.msra.mxu0 %v5408
    %5793 = vmatprep.subr.bf16.mxu0 %v5411
    %5794 = vmatpush1.bf16.msra.mxu0 %v5410
    %5795 = vmatprep.subr.bf16.mxu0 %v5413
    %5796 = vmatpush1.bf16.msra.mxu0 %v5412
    %5797 = vmatprep.subr.bf16.mxu0 %v5415
    %5798 = vmatpush1.bf16.msra.mxu0 %v5414
    %5799 = vmatprep.subr.bf16.mxu0 %v5417
    %5800 = vmatpush1.bf16.msra.mxu0 %v5416
    %5801 = vmatprep.subr.bf16.mxu0 %v5419
    %5802 = vmatpush1.bf16.msra.mxu0 %v5418
    %5803 = vmatprep.subr.bf16.mxu0 %v5421
    %5804 = vmatpush1.bf16.msra.mxu0 %v5420
    %5805 = vmatprep.subr.bf16.mxu0 %v5423
    %5806 = vmatpush1.bf16.msra.mxu0 %v5422
    %5807 = vmatprep.subr.bf16.mxu0 %v5425
    %5808 = vmatpush1.bf16.msra.mxu0 %v5424
    %5809 = vmatprep.subr.bf16.mxu0 %v5427
    %5810 = vmatpush1.bf16.msra.mxu0 %v5426
    %5811 = vmatprep.subr.bf16.mxu0 %v5429
    %5812 = vmatpush1.bf16.msra.mxu0 %v5428
    %5813 = vmatprep.subr.bf16.mxu0 %v5431
    %5814 = vmatpush1.bf16.msra.mxu0 %v5430
    %5815 = vmatprep.subr.bf16.mxu0 %v5433
    %5816 = vmatpush1.bf16.msra.mxu0 %v5432
    %5817 = vmatprep.subr.bf16.mxu0 %v5435
    %5818 = vmatpush1.bf16.msra.mxu0 %v5434
    %5819 = vmatprep.subr.bf16.mxu0 %v5437
    %5820 = vmatpush1.bf16.msra.mxu0 %v5436
    %5821 = vmatprep.subr.bf16.mxu0 %v5439
    %5822 = vmatpush1.bf16.msra.mxu0 %v5438
    %5823 = vmatprep.mubr.bf16.mxu0 %v4771
    %5824 = vmatmul.mubr.bf16.gmra.mrb[0].mxu0 %v4764
    %v5825 = vpop.f32.mrb[0].mxu0
    %v5826 = vadd.f32 %v5773, %v5825
    %v5827 = vpop.f32.mrb[0].mxu0
    %v5828 = vadd.f32 %v5775, %v5827
    %v5829 = vpop.f32.mrb[0].mxu0
    %v5830 = vadd.f32 %v5777, %v5829
    %v5831 = vpop.f32.mrb[0].mxu0
    %v5832 = vadd.f32 %v5779, %v5831
    %5833 = vmatprep.mubr.bf16.mxu0 %v4785
    %5834 = vmatmul.mubr.bf16.gmra.mrb[0].mxu0 %v4778
    %v5835 = vpop.f32.mrb[0].mxu0
    %v5836 = vadd.f32 %v5783, %v5835
    %v5837 = vpop.f32.mrb[0].mxu0
    %v5838 = vadd.f32 %v5785, %v5837
    %v5839 = vpop.f32.mrb[0].mxu0
    %v5840 = vadd.f32 %v5787, %v5839
    %v5841 = vpop.f32.mrb[0].mxu0
    %v5842 = vadd.f32 %v5789, %v5841
    %5843 = vdwg.mxu0
    %5844 = vmatprep.subr.bf16.mxu0 %v5441
    %5845 = vmatpush1.bf16.msra.mxu0 %v5440
    %5846 = vmatprep.subr.bf16.mxu0 %v5443
    %5847 = vmatpush1.bf16.msra.mxu0 %v5442
    %5848 = vmatprep.subr.bf16.mxu0 %v5445
    %5849 = vmatpush1.bf16.msra.mxu0 %v5444
    %5850 = vmatprep.subr.bf16.mxu0 %v5447
    %5851 = vmatpush1.bf16.msra.mxu0 %v5446
    %5852 = vmatprep.subr.bf16.mxu0 %v5449
    %5853 = vmatpush1.bf16.msra.mxu0 %v5448
    %5854 = vmatprep.subr.bf16.mxu0 %v5451
    %5855 = vmatpush1.bf16.msra.mxu0 %v5450
    %5856 = vmatprep.subr.bf16.mxu0 %v5453
    %5857 = vmatpush1.bf16.msra.mxu0 %v5452
    %5858 = vmatprep.subr.bf16.mxu0 %v5455
    %5859 = vmatpush1.bf16.msra.mxu0 %v5454
    %5860 = vmatprep.subr.bf16.mxu0 %v5457
    %5861 = vmatpush1.bf16.msra.mxu0 %v5456
    %5862 = vmatprep.subr.bf16.mxu0 %v5459
    %5863 = vmatpush1.bf16.msra.mxu0 %v5458
    %5864 = vmatprep.subr.bf16.mxu0 %v5461
    %5865 = vmatpush1.bf16.msra.mxu0 %v5460
    %5866 = vmatprep.subr.bf16.mxu0 %v5463
    %5867 = vmatpush1.bf16.msra.mxu0 %v5462
    %5868 = vmatprep.subr.bf16.mxu0 %v5465
    %5869 = vmatpush1.bf16.msra.mxu0 %v5464
    %5870 = vmatprep.subr.bf16.mxu0 %v5467
    %5871 = vmatpush1.bf16.msra.mxu0 %v5466
    %5872 = vmatprep.subr.bf16.mxu0 %v5469
    %5873 = vmatpush1.bf16.msra.mxu0 %v5468
    %5874 = vmatprep.subr.bf16.mxu0 %v5471
    %5875 = vmatpush1.bf16.msra.mxu0 %v5470
    %5876 = vmatprep.mubr.bf16.mxu0 %v4808
    %5877 = vmatmul.mubr.bf16.gmra.mrb[0].mxu0 %v4805
    %v5878 = vpop.f32.mrb[0].mxu0
    %v5879 = vadd.f32 %v5826, %v5878
    %v5880 = vpop.f32.mrb[0].mxu0
    %v5881 = vadd.f32 %v5828, %v5880
    %v5882 = vpop.f32.mrb[0].mxu0
    %v5883 = vadd.f32 %v5830, %v5882
    %v5884 = vpop.f32.mrb[0].mxu0
    %v5885 = vadd.f32 %v5832, %v5884
    %5886 = vmatprep.mubr.bf16.mxu0 %v4814
    %5887 = vmatmul.mubr.bf16.gmra.mrb[0].mxu0 %v4811
    %v5888 = vpop.f32.mrb[0].mxu0
    %v5889 = vadd.f32 %v5836, %v5888
    %v5890 = vpop.f32.mrb[0].mxu0
    %v5891 = vadd.f32 %v5838, %v5890
    %v5892 = vpop.f32.mrb[0].mxu0
    %v5893 = vadd.f32 %v5840, %v5892
    %v5894 = vpop.f32.mrb[0].mxu0
    %v5895 = vadd.f32 %v5842, %v5894
    %5896 = vdwg.mxu0
    %v5897 = vadd.f32 %v5879, %v5883
    %v5898 = vadd.f32 %v5897, %v5889
    %v5899 = vadd.f32 %v5898, %v5893
    %v5900 = vrot.slane %v5899, 4
    %v5901 = vadd.f32 %v5899, %v5900
    %v5902 = vrot.slane %v5901, 2
    %v5903 = vadd.f32 %v5901, %v5902
    %v5904 = vrot.slane %v5903, 1
    %v5905 = vadd.f32 %v5903, %v5904
    %v5906 = vadd.f32 %v5881, %v5885
    %v5907 = vadd.f32 %v5906, %v5891
    %v5908 = vadd.f32 %v5907, %v5895
    %v5909 = vrot.slane %v5908, 4
    %v5910 = vadd.f32 %v5908, %v5909
    %v5911 = vrot.slane %v5910, 2
    %v5912 = vadd.f32 %v5910, %v5911
    %v5913 = vrot.slane %v5912, 1
    %v5914 = vadd.f32 %v5912, %v5913
    %v5915 = vmul.f32 %v5905, %v4397
    %v5916 = vmul.f32 %v5914, %v4397
    %v5917 = vsub.f32 %v5879, %v5915
    %v5918 = vsub.f32 %v5881, %v5916
    %v5919 = vsub.f32 %v5883, %v5915
    %v5920 = vsub.f32 %v5885, %v5916
    %v5921 = vsub.f32 %v5889, %v5915
    %v5922 = vsub.f32 %v5891, %v5916
    %v5923 = vsub.f32 %v5893, %v5915
    %v5924 = vsub.f32 %v5895, %v5916
    %v5925 = vmul.f32 %v5917, %v5917
    %v5926 = vmul.f32 %v5918, %v5918
    %v5927 = vmul.f32 %v5919, %v5919
    %v5928 = vmul.f32 %v5920, %v5920
    %v5929 = vmul.f32 %v5921, %v5921
    %v5930 = vmul.f32 %v5922, %v5922
    %v5931 = vmul.f32 %v5923, %v5923
    %v5932 = vmul.f32 %v5924, %v5924
    %v5933 = vadd.f32 %v5925, %v5927
    %v5934 = vadd.f32 %v5933, %v5929
    %v5935 = vadd.f32 %v5934, %v5931
    %v5936 = vrot.slane %v5935, 4
    %v5937 = vadd.f32 %v5935, %v5936
    %v5938 = vrot.slane %v5937, 2
    %v5939 = vadd.f32 %v5937, %v5938
    %v5940 = vrot.slane %v5939, 1
    %v5941 = vadd.f32 %v5939, %v5940
    %v5942 = vadd.f32 %v5926, %v5928
    %v5943 = vadd.f32 %v5942, %v5930
    %v5944 = vadd.f32 %v5943, %v5932
    %v5945 = vrot.slane %v5944, 4
    %v5946 = vadd.f32 %v5944, %v5945
    %v5947 = vrot.slane %v5946, 2
    %v5948 = vadd.f32 %v5946, %v5947
    %v5949 = vrot.slane %v5948, 1
    %v5950 = vadd.f32 %v5948, %v5949
    %v5951 = vmul.f32 %v5941, %v4397
    %v5952 = vmul.f32 %v5950, %v4397
    %v5953 = vadd.f32 %v5951, 1e-05
    %v5954 = vadd.f32 %v5952, 1e-05
    %v5955 = vrsqrt.pop %v5953
    %v5956 = vrsqrt.pop %v5954
    %v5957 = vmul.f32 %v5917, %v5955
    %v5958 = vmul.f32 %v5918, %v5956
    %v5959 = vmul.f32 %v5919, %v5955
    %v5960 = vmul.f32 %v5920, %v5956
    %v5961 = vmul.f32 %v5921, %v5955
    %v5962 = vmul.f32 %v5922, %v5956
    %v5963 = vmul.f32 %v5923, %v5955
    %v5964 = vmul.f32 %v5924, %v5956
    %s5965 = scalar_lea.vmem [#allocation11], 1
    %v5966 = vld [vmem:[%s5965] ss:$8 sm:$0x3]
    %v5968 = vlaneseq
    %v5969 = vshrl.u32 %v5968, 7
    %v5970 = vsub.s32 0, %v5969
    %v5971 = vrot.slane %v5966, %v5970
    %v5972 = vlaneseq
    %v5973 = vshrl.u32 %v5972, 7
    %v5974 = vsub.s32 1, %v5973
    %v5975 = vrot.slane %v5966, %v5974
    %v5978 = vmul.f32 %v5957, %v5971
    %v5979 = vmul.f32 %v5958, %v5975
    %v5980 = vmul.f32 %v5959, %v5971
    %v5981 = vmul.f32 %v5960, %v5975
    %v5982 = vmul.f32 %v5961, %v5971
    %v5983 = vmul.f32 %v5962, %v5975
    %v5984 = vmul.f32 %v5963, %v5971
    %v5985 = vmul.f32 %v5964, %v5975
    %s5986 = scalar_lea.vmem [#allocation12], 1
    %v5987 = vld [vmem:[%s5986] ss:$8 sm:$0x3]
    %v5989 = vlaneseq
    %v5990 = vshrl.u32 %v5989, 7
    %v5991 = vsub.s32 0, %v5990
    %v5992 = vrot.slane %v5987, %v5991
    %v5993 = vlaneseq
    %v5994 = vshrl.u32 %v5993, 7
    %v5995 = vsub.s32 1, %v5994
    %v5996 = vrot.slane %v5987, %v5995
    %v5999 = vadd.f32 %v5978, %v5992
    %v6000 = vadd.f32 %v5979, %v5996
    %v6001 = vadd.f32 %v5980, %v5992
    %v6002 = vadd.f32 %v5981, %v5996
    %v6003 = vadd.f32 %v5982, %v5992
    %v6004 = vadd.f32 %v5983, %v5996
    %v6005 = vadd.f32 %v5984, %v5992
    %v6006 = vadd.f32 %v5985, %v5996
    %v6007 = vmax.f32 %v5999, 0.0
    %v6008 = vmax.f32 %v6000, 0.0
    %v6009 = vmax.f32 %v6001, 0.0
    %v6010 = vmax.f32 %v6002, 0.0
    %v6011 = vmax.f32 %v6003, 0.0
    %v6012 = vmax.f32 %v6004, 0.0
    %v6013 = vmax.f32 %v6005, 0.0
    %v6014 = vmax.f32 %v6006, 0.0
    %v6015 = vpack.c.bf16 %v6009, %v6007
    %v6016 = vpack.c.bf16 %v6010, %v6008
    %v6017 = vpack.c.bf16 %v6013, %v6011
    %v6018 = vpack.c.bf16 %v6014, %v6012
    %6019 = vst [vmem:[#allocation3 + $0x20] sm:$0xff] %v6015
    %6020 = vst [vmem:[#allocation3 + $0x28] sm:$0xff] %v6016
    %6021 = vst [vmem:[#allocation3 + $0x70] sm:$0xff] %v6017
    %6022 = vst [vmem:[#allocation3 + $0x78] sm:$0xff] %v6018
    %s6023 = scalar_lea.vmem [#allocation8], 1280
    %v6024 = vld [vmem:[%s6023] sm:$0xff]
    %v6025 = vld [vmem:[%s6023 + $0x8] sm:$0xff]
    %v6026 = vld [vmem:[%s6023 + $0x10] sm:$0xff]
    %v6027 = vld [vmem:[%s6023 + $0x18] sm:$0xff]
    %v6028 = vld [vmem:[%s6023 + $0x20] sm:$0xff]
    %v6029 = vld [vmem:[%s6023 + $0x28] sm:$0xff]
    %v6030 = vld [vmem:[%s6023 + $0x30] sm:$0xff]
    %v6031 = vld [vmem:[%s6023 + $0x38] sm:$0xff]
    %v6032 = vld [vmem:[%s6023 + $0x40] sm:$0xff]
    %v6033 = vld [vmem:[%s6023 + $0x48] sm:$0xff]
    %v6034 = vld [vmem:[%s6023 + $0x50] sm:$0xff]
    %v6035 = vld [vmem:[%s6023 + $0x58] sm:$0xff]
    %v6036 = vld [vmem:[%s6023 + $0x60] sm:$0xff]
    %v6037 = vld [vmem:[%s6023 + $0x68] sm:$0xff]
    %v6038 = vld [vmem:[%s6023 + $0x70] sm:$0xff]
    %v6039 = vld [vmem:[%s6023 + $0x78] sm:$0xff]
    %v6040 = vld [vmem:[%s6023 + $0x80] sm:$0xff]
    %v6041 = vld [vmem:[%s6023 + $0x88] sm:$0xff]
    %v6042 = vld [vmem:[%s6023 + $0x90] sm:$0xff]
    %v6043 = vld [vmem:[%s6023 + $0x98] sm:$0xff]
    %v6044 = vld [vmem:[%s6023 + $0xa0] sm:$0xff]
    %v6045 = vld [vmem:[%s6023 + $0xa8] sm:$0xff]
    %v6046 = vld [vmem:[%s6023 + $0xb0] sm:$0xff]
    %v6047 = vld [vmem:[%s6023 + $0xb8] sm:$0xff]
    %v6048 = vld [vmem:[%s6023 + $0xc0] sm:$0xff]
    %v6049 = vld [vmem:[%s6023 + $0xc8] sm:$0xff]
    %v6050 = vld [vmem:[%s6023 + $0xd0] sm:$0xff]
    %v6051 = vld [vmem:[%s6023 + $0xd8] sm:$0xff]
    %v6052 = vld [vmem:[%s6023 + $0xe0] sm:$0xff]
    %v6053 = vld [vmem:[%s6023 + $0xe8] sm:$0xff]
    %v6054 = vld [vmem:[%s6023 + $0xf0] sm:$0xff]
    %v6055 = vld [vmem:[%s6023 + $0xf8] sm:$0xff]
    %v6056 = vld [vmem:[%s6023 + $0x100] sm:$0xff]
    %v6057 = vld [vmem:[%s6023 + $0x108] sm:$0xff]
    %v6058 = vld [vmem:[%s6023 + $0x110] sm:$0xff]
    %v6059 = vld [vmem:[%s6023 + $0x118] sm:$0xff]
    %v6060 = vld [vmem:[%s6023 + $0x120] sm:$0xff]
    %v6061 = vld [vmem:[%s6023 + $0x128] sm:$0xff]
    %v6062 = vld [vmem:[%s6023 + $0x130] sm:$0xff]
    %v6063 = vld [vmem:[%s6023 + $0x138] sm:$0xff]
    %v6064 = vld [vmem:[%s6023 + $0x140] sm:$0xff]
    %v6065 = vld [vmem:[%s6023 + $0x148] sm:$0xff]
    %v6066 = vld [vmem:[%s6023 + $0x150] sm:$0xff]
    %v6067 = vld [vmem:[%s6023 + $0x158] sm:$0xff]
    %v6068 = vld [vmem:[%s6023 + $0x160] sm:$0xff]
    %v6069 = vld [vmem:[%s6023 + $0x168] sm:$0xff]
    %v6070 = vld [vmem:[%s6023 + $0x170] sm:$0xff]
    %v6071 = vld [vmem:[%s6023 + $0x178] sm:$0xff]
    %v6072 = vld [vmem:[%s6023 + $0x180] sm:$0xff]
    %v6073 = vld [vmem:[%s6023 + $0x188] sm:$0xff]
    %v6074 = vld [vmem:[%s6023 + $0x190] sm:$0xff]
    %v6075 = vld [vmem:[%s6023 + $0x198] sm:$0xff]
    %v6076 = vld [vmem:[%s6023 + $0x1a0] sm:$0xff]
    %v6077 = vld [vmem:[%s6023 + $0x1a8] sm:$0xff]
    %v6078 = vld [vmem:[%s6023 + $0x1b0] sm:$0xff]
    %v6079 = vld [vmem:[%s6023 + $0x1b8] sm:$0xff]
    %v6080 = vld [vmem:[%s6023 + $0x1c0] sm:$0xff]
    %v6081 = vld [vmem:[%s6023 + $0x1c8] sm:$0xff]
    %v6082 = vld [vmem:[%s6023 + $0x1d0] sm:$0xff]
    %v6083 = vld [vmem:[%s6023 + $0x1d8] sm:$0xff]
    %v6084 = vld [vmem:[%s6023 + $0x1e0] sm:$0xff]
    %v6085 = vld [vmem:[%s6023 + $0x1e8] sm:$0xff]
    %v6086 = vld [vmem:[%s6023 + $0x1f0] sm:$0xff]
    %v6087 = vld [vmem:[%s6023 + $0x1f8] sm:$0xff]
    %v6088 = vld [vmem:[%s6023 + $0x200] sm:$0xff]
    %v6089 = vld [vmem:[%s6023 + $0x208] sm:$0xff]
    %v6090 = vld [vmem:[%s6023 + $0x210] sm:$0xff]
    %v6091 = vld [vmem:[%s6023 + $0x218] sm:$0xff]
    %v6092 = vld [vmem:[%s6023 + $0x220] sm:$0xff]
    %v6093 = vld [vmem:[%s6023 + $0x228] sm:$0xff]
    %v6094 = vld [vmem:[%s6023 + $0x230] sm:$0xff]
    %v6095 = vld [vmem:[%s6023 + $0x238] sm:$0xff]
    %v6096 = vld [vmem:[%s6023 + $0x240] sm:$0xff]
    %v6097 = vld [vmem:[%s6023 + $0x248] sm:$0xff]
    %v6098 = vld [vmem:[%s6023 + $0x250] sm:$0xff]
    %v6099 = vld [vmem:[%s6023 + $0x258] sm:$0xff]
    %v6100 = vld [vmem:[%s6023 + $0x260] sm:$0xff]
    %v6101 = vld [vmem:[%s6023 + $0x268] sm:$0xff]
    %v6102 = vld [vmem:[%s6023 + $0x270] sm:$0xff]
    %v6103 = vld [vmem:[%s6023 + $0x278] sm:$0xff]
    %v6104 = vld [vmem:[%s6023 + $0x280] sm:$0xff]
    %v6105 = vld [vmem:[%s6023 + $0x288] sm:$0xff]
    %v6106 = vld [vmem:[%s6023 + $0x290] sm:$0xff]
    %v6107 = vld [vmem:[%s6023 + $0x298] sm:$0xff]
    %v6108 = vld [vmem:[%s6023 + $0x2a0] sm:$0xff]
    %v6109 = vld [vmem:[%s6023 + $0x2a8] sm:$0xff]
    %v6110 = vld [vmem:[%s6023 + $0x2b0] sm:$0xff]
    %v6111 = vld [vmem:[%s6023 + $0x2b8] sm:$0xff]
    %v6112 = vld [vmem:[%s6023 + $0x2c0] sm:$0xff]
    %v6113 = vld [vmem:[%s6023 + $0x2c8] sm:$0xff]
    %v6114 = vld [vmem:[%s6023 + $0x2d0] sm:$0xff]
    %v6115 = vld [vmem:[%s6023 + $0x2d8] sm:$0xff]
    %v6116 = vld [vmem:[%s6023 + $0x2e0] sm:$0xff]
    %v6117 = vld [vmem:[%s6023 + $0x2e8] sm:$0xff]
    %v6118 = vld [vmem:[%s6023 + $0x2f0] sm:$0xff]
    %v6119 = vld [vmem:[%s6023 + $0x2f8] sm:$0xff]
    %v6120 = vld [vmem:[%s6023 + $0x300] sm:$0xff]
    %v6121 = vld [vmem:[%s6023 + $0x308] sm:$0xff]
    %v6122 = vld [vmem:[%s6023 + $0x310] sm:$0xff]
    %v6123 = vld [vmem:[%s6023 + $0x318] sm:$0xff]
    %v6124 = vld [vmem:[%s6023 + $0x320] sm:$0xff]
    %v6125 = vld [vmem:[%s6023 + $0x328] sm:$0xff]
    %v6126 = vld [vmem:[%s6023 + $0x330] sm:$0xff]
    %v6127 = vld [vmem:[%s6023 + $0x338] sm:$0xff]
    %v6128 = vld [vmem:[%s6023 + $0x340] sm:$0xff]
    %v6129 = vld [vmem:[%s6023 + $0x348] sm:$0xff]
    %v6130 = vld [vmem:[%s6023 + $0x350] sm:$0xff]
    %v6131 = vld [vmem:[%s6023 + $0x358] sm:$0xff]
    %v6132 = vld [vmem:[%s6023 + $0x360] sm:$0xff]
    %v6133 = vld [vmem:[%s6023 + $0x368] sm:$0xff]
    %v6134 = vld [vmem:[%s6023 + $0x370] sm:$0xff]
    %v6135 = vld [vmem:[%s6023 + $0x378] sm:$0xff]
    %v6136 = vld [vmem:[%s6023 + $0x380] sm:$0xff]
    %v6137 = vld [vmem:[%s6023 + $0x388] sm:$0xff]
    %v6138 = vld [vmem:[%s6023 + $0x390] sm:$0xff]
    %v6139 = vld [vmem:[%s6023 + $0x398] sm:$0xff]
    %v6140 = vld [vmem:[%s6023 + $0x3a0] sm:$0xff]
    %v6141 = vld [vmem:[%s6023 + $0x3a8] sm:$0xff]
    %v6142 = vld [vmem:[%s6023 + $0x3b0] sm:$0xff]
    %v6143 = vld [vmem:[%s6023 + $0x3b8] sm:$0xff]
    %v6144 = vld [vmem:[%s6023 + $0x3c0] sm:$0xff]
    %v6145 = vld [vmem:[%s6023 + $0x3c8] sm:$0xff]
    %v6146 = vld [vmem:[%s6023 + $0x3d0] sm:$0xff]
    %v6147 = vld [vmem:[%s6023 + $0x3d8] sm:$0xff]
    %v6148 = vld [vmem:[%s6023 + $0x3e0] sm:$0xff]
    %v6149 = vld [vmem:[%s6023 + $0x3e8] sm:$0xff]
    %v6150 = vld [vmem:[%s6023 + $0x3f0] sm:$0xff]
    %v6151 = vld [vmem:[%s6023 + $0x3f8] sm:$0xff]
    %v6152 = vld [vmem:[%s6023 + $0x400] sm:$0xff]
    %v6153 = vld [vmem:[%s6023 + $0x408] sm:$0xff]
    %v6154 = vld [vmem:[%s6023 + $0x410] sm:$0xff]
    %v6155 = vld [vmem:[%s6023 + $0x418] sm:$0xff]
    %v6156 = vld [vmem:[%s6023 + $0x420] sm:$0xff]
    %v6157 = vld [vmem:[%s6023 + $0x428] sm:$0xff]
    %v6158 = vld [vmem:[%s6023 + $0x430] sm:$0xff]
    %v6159 = vld [vmem:[%s6023 + $0x438] sm:$0xff]
    %v6160 = vld [vmem:[%s6023 + $0x440] sm:$0xff]
    %v6161 = vld [vmem:[%s6023 + $0x448] sm:$0xff]
    %v6162 = vld [vmem:[%s6023 + $0x450] sm:$0xff]
    %v6163 = vld [vmem:[%s6023 + $0x458] sm:$0xff]
    %v6164 = vld [vmem:[%s6023 + $0x460] sm:$0xff]
    %v6165 = vld [vmem:[%s6023 + $0x468] sm:$0xff]
    %v6166 = vld [vmem:[%s6023 + $0x470] sm:$0xff]
    %v6167 = vld [vmem:[%s6023 + $0x478] sm:$0xff]
    %v6168 = vld [vmem:[%s6023 + $0x480] sm:$0xff]
    %v6169 = vld [vmem:[%s6023 + $0x488] sm:$0xff]
    %v6170 = vld [vmem:[%s6023 + $0x490] sm:$0xff]
    %v6171 = vld [vmem:[%s6023 + $0x498] sm:$0xff]
    %v6172 = vld [vmem:[%s6023 + $0x4a0] sm:$0xff]
    %v6173 = vld [vmem:[%s6023 + $0x4a8] sm:$0xff]
    %v6174 = vld [vmem:[%s6023 + $0x4b0] sm:$0xff]
    %v6175 = vld [vmem:[%s6023 + $0x4b8] sm:$0xff]
    %v6176 = vld [vmem:[%s6023 + $0x4c0] sm:$0xff]
    %v6177 = vld [vmem:[%s6023 + $0x4c8] sm:$0xff]
    %v6178 = vld [vmem:[%s6023 + $0x4d0] sm:$0xff]
    %v6179 = vld [vmem:[%s6023 + $0x4d8] sm:$0xff]
    %v6180 = vld [vmem:[%s6023 + $0x4e0] sm:$0xff]
    %v6181 = vld [vmem:[%s6023 + $0x4e8] sm:$0xff]
    %v6182 = vld [vmem:[%s6023 + $0x4f0] sm:$0xff]
    %v6183 = vld [vmem:[%s6023 + $0x4f8] sm:$0xff]
    %v6184 = vld [vmem:[#allocation3 + $0x10] sm:$0xc0]
    %v6185 = vld [vmem:[#allocation3 + $0x18] sm:$0xc0]
    %v6186 = vld [vmem:[#allocation3 + $0x20] sm:$0x3f]
    %v6187 = vld [vmem:[#allocation3 + $0x28] sm:$0x3f]
    %v6188 = vld [vmem:[#allocation3 + $0x60] sm:$0xc0]
    %v6189 = vld [vmem:[#allocation3 + $0x68] sm:$0xc0]
    %v6190 = vld [vmem:[#allocation3 + $0x70] sm:$0x3f]
    %v6191 = vld [vmem:[#allocation3 + $0x78] sm:$0x3f]
    %v6200 = vrot.slane %v6184, 6
    %v6201 = vrot.slane %v6186, 6
    %v6202 = vsel %vm246, %v6200, %v6201
    %v6203 = vrot.slane %v6185, 6
    %v6204 = vrot.slane %v6187, 6
    %v6205 = vsel %vm246, %v6203, %v6204
    %v6206 = vrot.slane %v6188, 6
    %v6207 = vrot.slane %v6190, 6
    %v6208 = vsel %vm246, %v6206, %v6207
    %v6209 = vrot.slane %v6189, 6
    %v6210 = vrot.slane %v6191, 6
    %v6211 = vsel %vm246, %v6209, %v6210
    %v6216 = vld [vmem:[#allocation3 + $0x10] sm:$0x80]
    %v6217 = vld [vmem:[#allocation3 + $0x18] sm:$0x80]
    %v6218 = vld [vmem:[#allocation3 + $0x20] sm:$0x7f]
    %v6219 = vld [vmem:[#allocation3 + $0x28] sm:$0x7f]
    %v6220 = vld [vmem:[#allocation3 + $0x60] sm:$0x80]
    %v6221 = vld [vmem:[#allocation3 + $0x68] sm:$0x80]
    %v6222 = vld [vmem:[#allocation3 + $0x70] sm:$0x7f]
    %v6223 = vld [vmem:[#allocation3 + $0x78] sm:$0x7f]
    %v6232 = vrot.slane %v6216, 7
    %v6233 = vrot.slane %v6218, 7
    %v6234 = vsel %vm1126, %v6232, %v6233
    %v6235 = vrot.slane %v6217, 7
    %v6236 = vrot.slane %v6219, 7
    %v6237 = vsel %vm1126, %v6235, %v6236
    %v6238 = vrot.slane %v6220, 7
    %v6239 = vrot.slane %v6222, 7
    %v6240 = vsel %vm1126, %v6238, %v6239
    %v6241 = vrot.slane %v6221, 7
    %v6242 = vrot.slane %v6223, 7
    %v6243 = vsel %vm1126, %v6241, %v6242
    %v6248 = vld [vmem:[#allocation3 + $0x20] sm:$0xff]
    %v6249 = vld [vmem:[#allocation3 + $0x28] sm:$0xff]
    %v6250 = vld [vmem:[#allocation3 + $0x70] sm:$0xff]
    %v6251 = vld [vmem:[#allocation3 + $0x78] sm:$0xff]
    %v6252 = vld [vmem:[#allocation3 + $0x20] sm:$0xfe]
    %v6253 = vld [vmem:[#allocation3 + $0x28] sm:$0xfe]
    %v6254 = vld [vmem:[#allocation3 + $0x30] sm:$0x1]
    %v6255 = vld [vmem:[#allocation3 + $0x38] sm:$0x1]
    %v6256 = vld [vmem:[#allocation3 + $0x70] sm:$0xfe]
    %v6257 = vld [vmem:[#allocation3 + $0x78] sm:$0xfe]
    %v6258 = vld [vmem:[#allocation3 + $0x80] sm:$0x1]
    %v6259 = vld [vmem:[#allocation3 + $0x88] sm:$0x1]
    %v6268 = vrot.slane %v6252, 1
    %v6269 = vrot.slane %v6254, 1
    %v6270 = vsel %vm4802, %v6268, %v6269
    %v6271 = vrot.slane %v6253, 1
    %v6272 = vrot.slane %v6255, 1
    %v6273 = vsel %vm4802, %v6271, %v6272
    %v6274 = vrot.slane %v6256, 1
    %v6275 = vrot.slane %v6258, 1
    %v6276 = vsel %vm4802, %v6274, %v6275
    %v6277 = vrot.slane %v6257, 1
    %v6278 = vrot.slane %v6259, 1
    %v6279 = vsel %vm4802, %v6277, %v6278
    %v6284 = vld [vmem:[#allocation3 + $0x20] sm:$0xfc]
    %v6285 = vld [vmem:[#allocation3 + $0x28] sm:$0xfc]
    %v6286 = vld [vmem:[#allocation3 + $0x30] sm:$0x3]
    %v6287 = vld [vmem:[#allocation3 + $0x38] sm:$0x3]
    %v6288 = vld [vmem:[#allocation3 + $0x70] sm:$0xfc]
    %v6289 = vld [vmem:[#allocation3 + $0x78] sm:$0xfc]
    %v6290 = vld [vmem:[#allocation3 + $0x80] sm:$0x3]
    %v6291 = vld [vmem:[#allocation3 + $0x88] sm:$0x3]
    %vm6300 = vcmask 1045504
    %v6301 = vrot.slane %v6284, 2
    %v6302 = vrot.slane %v6286, 2
    %v6303 = vsel %vm6300, %v6301, %v6302
    %v6304 = vrot.slane %v6285, 2
    %v6305 = vrot.slane %v6287, 2
    %v6306 = vsel %vm6300, %v6304, %v6305
    %v6307 = vrot.slane %v6288, 2
    %v6308 = vrot.slane %v6290, 2
    %v6309 = vsel %vm6300, %v6307, %v6308
    %v6310 = vrot.slane %v6289, 2
    %v6311 = vrot.slane %v6291, 2
    %v6312 = vsel %vm6300, %v6310, %v6311
    %s6317 = scalar_lea.vmem [#allocation9], 2
    %v6318 = vld [vmem:[%s6317] ss:$8 sm:$0x3]
    %v6320 = vlaneseq
    %v6321 = vshrl.u32 %v6320, 7
    %v6322 = vsub.s32 0, %v6321
    %v6323 = vrot.slane %v6318, %v6322
    %v6324 = vlaneseq
    %v6325 = vshrl.u32 %v6324, 7
    %v6326 = vsub.s32 1, %v6325
    %v6327 = vrot.slane %v6318, %v6326
    %v6490 = vunpack.c.l.b16 %v6024
    %v6491 = vunpack.c.h.b16 %v6024
    %v6492 = vunpack.c.l.b16 %v6025
    %v6493 = vunpack.c.h.b16 %v6025
    %v6494 = vunpack.c.l.b16 %v6026
    %v6495 = vunpack.c.h.b16 %v6026
    %v6496 = vunpack.c.l.b16 %v6027
    %v6497 = vunpack.c.h.b16 %v6027
    %v6498 = vunpack.c.l.b16 %v6028
    %v6499 = vunpack.c.h.b16 %v6028
    %v6500 = vunpack.c.l.b16 %v6029
    %v6501 = vunpack.c.h.b16 %v6029
    %v6502 = vunpack.c.l.b16 %v6030
    %v6503 = vunpack.c.h.b16 %v6030
    %v6504 = vunpack.c.l.b16 %v6031
    %v6505 = vunpack.c.h.b16 %v6031
    %v6506 = vunpack.c.l.b16 %v6032
    %v6507 = vunpack.c.h.b16 %v6032
    %v6508 = vunpack.c.l.b16 %v6033
    %v6509 = vunpack.c.h.b16 %v6033
    %v6510 = vunpack.c.l.b16 %v6034
    %v6511 = vunpack.c.h.b16 %v6034
    %v6512 = vunpack.c.l.b16 %v6035
    %v6513 = vunpack.c.h.b16 %v6035
    %v6514 = vunpack.c.l.b16 %v6036
    %v6515 = vunpack.c.h.b16 %v6036
    %v6516 = vunpack.c.l.b16 %v6037
    %v6517 = vunpack.c.h.b16 %v6037
    %v6518 = vunpack.c.l.b16 %v6038
    %v6519 = vunpack.c.h.b16 %v6038
    %v6520 = vunpack.c.l.b16 %v6039
    %v6521 = vunpack.c.h.b16 %v6039
    %v6522 = vunpack.c.l.b16 %v6040
    %v6523 = vunpack.c.h.b16 %v6040
    %v6524 = vunpack.c.l.b16 %v6041
    %v6525 = vunpack.c.h.b16 %v6041
    %v6526 = vunpack.c.l.b16 %v6042
    %v6527 = vunpack.c.h.b16 %v6042
    %v6528 = vunpack.c.l.b16 %v6043
    %v6529 = vunpack.c.h.b16 %v6043
    %v6530 = vunpack.c.l.b16 %v6044
    %v6531 = vunpack.c.h.b16 %v6044
    %v6532 = vunpack.c.l.b16 %v6045
    %v6533 = vunpack.c.h.b16 %v6045
    %v6534 = vunpack.c.l.b16 %v6046
    %v6535 = vunpack.c.h.b16 %v6046
    %v6536 = vunpack.c.l.b16 %v6047
    %v6537 = vunpack.c.h.b16 %v6047
    %v6538 = vunpack.c.l.b16 %v6048
    %v6539 = vunpack.c.h.b16 %v6048
    %v6540 = vunpack.c.l.b16 %v6049
    %v6541 = vunpack.c.h.b16 %v6049
    %v6542 = vunpack.c.l.b16 %v6050
    %v6543 = vunpack.c.h.b16 %v6050
    %v6544 = vunpack.c.l.b16 %v6051
    %v6545 = vunpack.c.h.b16 %v6051
    %v6546 = vunpack.c.l.b16 %v6052
    %v6547 = vunpack.c.h.b16 %v6052
    %v6548 = vunpack.c.l.b16 %v6053
    %v6549 = vunpack.c.h.b16 %v6053
    %v6550 = vunpack.c.l.b16 %v6054
    %v6551 = vunpack.c.h.b16 %v6054
    %v6552 = vunpack.c.l.b16 %v6055
    %v6553 = vunpack.c.h.b16 %v6055
    %v6554 = vunpack.c.l.b16 %v6056
    %v6555 = vunpack.c.h.b16 %v6056
    %v6556 = vunpack.c.l.b16 %v6057
    %v6557 = vunpack.c.h.b16 %v6057
    %v6558 = vunpack.c.l.b16 %v6058
    %v6559 = vunpack.c.h.b16 %v6058
    %v6560 = vunpack.c.l.b16 %v6059
    %v6561 = vunpack.c.h.b16 %v6059
    %v6562 = vunpack.c.l.b16 %v6060
    %v6563 = vunpack.c.h.b16 %v6060
    %v6564 = vunpack.c.l.b16 %v6061
    %v6565 = vunpack.c.h.b16 %v6061
    %v6566 = vunpack.c.l.b16 %v6062
    %v6567 = vunpack.c.h.b16 %v6062
    %v6568 = vunpack.c.l.b16 %v6063
    %v6569 = vunpack.c.h.b16 %v6063
    %v6570 = vunpack.c.l.b16 %v6064
    %v6571 = vunpack.c.h.b16 %v6064
    %v6572 = vunpack.c.l.b16 %v6065
    %v6573 = vunpack.c.h.b16 %v6065
    %v6574 = vunpack.c.l.b16 %v6066
    %v6575 = vunpack.c.h.b16 %v6066
    %v6576 = vunpack.c.l.b16 %v6067
    %v6577 = vunpack.c.h.b16 %v6067
    %v6578 = vunpack.c.l.b16 %v6068
    %v6579 = vunpack.c.h.b16 %v6068
    %v6580 = vunpack.c.l.b16 %v6069
    %v6581 = vunpack.c.h.b16 %v6069
    %v6582 = vunpack.c.l.b16 %v6070
    %v6583 = vunpack.c.h.b16 %v6070
    %v6584 = vunpack.c.l.b16 %v6071
    %v6585 = vunpack.c.h.b16 %v6071
    %v6586 = vunpack.c.l.b16 %v6072
    %v6587 = vunpack.c.h.b16 %v6072
    %v6588 = vunpack.c.l.b16 %v6073
    %v6589 = vunpack.c.h.b16 %v6073
    %v6590 = vunpack.c.l.b16 %v6074
    %v6591 = vunpack.c.h.b16 %v6074
    %v6592 = vunpack.c.l.b16 %v6075
    %v6593 = vunpack.c.h.b16 %v6075
    %v6594 = vunpack.c.l.b16 %v6076
    %v6595 = vunpack.c.h.b16 %v6076
    %v6596 = vunpack.c.l.b16 %v6077
    %v6597 = vunpack.c.h.b16 %v6077
    %v6598 = vunpack.c.l.b16 %v6078
    %v6599 = vunpack.c.h.b16 %v6078
    %v6600 = vunpack.c.l.b16 %v6079
    %v6601 = vunpack.c.h.b16 %v6079
    %v6602 = vunpack.c.l.b16 %v6080
    %v6603 = vunpack.c.h.b16 %v6080
    %v6604 = vunpack.c.l.b16 %v6081
    %v6605 = vunpack.c.h.b16 %v6081
    %v6606 = vunpack.c.l.b16 %v6082
    %v6607 = vunpack.c.h.b16 %v6082
    %v6608 = vunpack.c.l.b16 %v6083
    %v6609 = vunpack.c.h.b16 %v6083
    %v6610 = vunpack.c.l.b16 %v6084
    %v6611 = vunpack.c.h.b16 %v6084
    %v6612 = vunpack.c.l.b16 %v6085
    %v6613 = vunpack.c.h.b16 %v6085
    %v6614 = vunpack.c.l.b16 %v6086
    %v6615 = vunpack.c.h.b16 %v6086
    %v6616 = vunpack.c.l.b16 %v6087
    %v6617 = vunpack.c.h.b16 %v6087
    %v6618 = vunpack.c.l.b16 %v6088
    %v6619 = vunpack.c.h.b16 %v6088
    %v6620 = vunpack.c.l.b16 %v6089
    %v6621 = vunpack.c.h.b16 %v6089
    %v6622 = vunpack.c.l.b16 %v6090
    %v6623 = vunpack.c.h.b16 %v6090
    %v6624 = vunpack.c.l.b16 %v6091
    %v6625 = vunpack.c.h.b16 %v6091
    %v6626 = vunpack.c.l.b16 %v6092
    %v6627 = vunpack.c.h.b16 %v6092
    %v6628 = vunpack.c.l.b16 %v6093
    %v6629 = vunpack.c.h.b16 %v6093
    %v6630 = vunpack.c.l.b16 %v6094
    %v6631 = vunpack.c.h.b16 %v6094
    %v6632 = vunpack.c.l.b16 %v6095
    %v6633 = vunpack.c.h.b16 %v6095
    %v6634 = vunpack.c.l.b16 %v6096
    %v6635 = vunpack.c.h.b16 %v6096
    %v6636 = vunpack.c.l.b16 %v6097
    %v6637 = vunpack.c.h.b16 %v6097
    %v6638 = vunpack.c.l.b16 %v6098
    %v6639 = vunpack.c.h.b16 %v6098
    %v6640 = vunpack.c.l.b16 %v6099
    %v6641 = vunpack.c.h.b16 %v6099
    %v6642 = vunpack.c.l.b16 %v6100
    %v6643 = vunpack.c.h.b16 %v6100
    %v6644 = vunpack.c.l.b16 %v6101
    %v6645 = vunpack.c.h.b16 %v6101
    %v6646 = vunpack.c.l.b16 %v6102
    %v6647 = vunpack.c.h.b16 %v6102
    %v6648 = vunpack.c.l.b16 %v6103
    %v6649 = vunpack.c.h.b16 %v6103
    %v6650 = vunpack.c.l.b16 %v6104
    %v6651 = vunpack.c.h.b16 %v6104
    %v6652 = vunpack.c.l.b16 %v6105
    %v6653 = vunpack.c.h.b16 %v6105
    %v6654 = vunpack.c.l.b16 %v6106
    %v6655 = vunpack.c.h.b16 %v6106
    %v6656 = vunpack.c.l.b16 %v6107
    %v6657 = vunpack.c.h.b16 %v6107
    %v6658 = vunpack.c.l.b16 %v6108
    %v6659 = vunpack.c.h.b16 %v6108
    %v6660 = vunpack.c.l.b16 %v6109
    %v6661 = vunpack.c.h.b16 %v6109
    %v6662 = vunpack.c.l.b16 %v6110
    %v6663 = vunpack.c.h.b16 %v6110
    %v6664 = vunpack.c.l.b16 %v6111
    %v6665 = vunpack.c.h.b16 %v6111
    %v6666 = vunpack.c.l.b16 %v6112
    %v6667 = vunpack.c.h.b16 %v6112
    %v6668 = vunpack.c.l.b16 %v6113
    %v6669 = vunpack.c.h.b16 %v6113
    %v6670 = vunpack.c.l.b16 %v6114
    %v6671 = vunpack.c.h.b16 %v6114
    %v6672 = vunpack.c.l.b16 %v6115
    %v6673 = vunpack.c.h.b16 %v6115
    %v6674 = vunpack.c.l.b16 %v6116
    %v6675 = vunpack.c.h.b16 %v6116
    %v6676 = vunpack.c.l.b16 %v6117
    %v6677 = vunpack.c.h.b16 %v6117
    %v6678 = vunpack.c.l.b16 %v6118
    %v6679 = vunpack.c.h.b16 %v6118
    %v6680 = vunpack.c.l.b16 %v6119
    %v6681 = vunpack.c.h.b16 %v6119
    %v6682 = vunpack.c.l.b16 %v6120
    %v6683 = vunpack.c.h.b16 %v6120
    %v6684 = vunpack.c.l.b16 %v6121
    %v6685 = vunpack.c.h.b16 %v6121
    %v6686 = vunpack.c.l.b16 %v6122
    %v6687 = vunpack.c.h.b16 %v6122
    %v6688 = vunpack.c.l.b16 %v6123
    %v6689 = vunpack.c.h.b16 %v6123
    %v6690 = vunpack.c.l.b16 %v6124
    %v6691 = vunpack.c.h.b16 %v6124
    %v6692 = vunpack.c.l.b16 %v6125
    %v6693 = vunpack.c.h.b16 %v6125
    %v6694 = vunpack.c.l.b16 %v6126
    %v6695 = vunpack.c.h.b16 %v6126
    %v6696 = vunpack.c.l.b16 %v6127
    %v6697 = vunpack.c.h.b16 %v6127
    %v6698 = vunpack.c.l.b16 %v6128
    %v6699 = vunpack.c.h.b16 %v6128
    %v6700 = vunpack.c.l.b16 %v6129
    %v6701 = vunpack.c.h.b16 %v6129
    %v6702 = vunpack.c.l.b16 %v6130
    %v6703 = vunpack.c.h.b16 %v6130
    %v6704 = vunpack.c.l.b16 %v6131
    %v6705 = vunpack.c.h.b16 %v6131
    %v6706 = vunpack.c.l.b16 %v6132
    %v6707 = vunpack.c.h.b16 %v6132
    %v6708 = vunpack.c.l.b16 %v6133
    %v6709 = vunpack.c.h.b16 %v6133
    %v6710 = vunpack.c.l.b16 %v6134
    %v6711 = vunpack.c.h.b16 %v6134
    %v6712 = vunpack.c.l.b16 %v6135
    %v6713 = vunpack.c.h.b16 %v6135
    %v6714 = vunpack.c.l.b16 %v6136
    %v6715 = vunpack.c.h.b16 %v6136
    %v6716 = vunpack.c.l.b16 %v6137
    %v6717 = vunpack.c.h.b16 %v6137
    %v6718 = vunpack.c.l.b16 %v6138
    %v6719 = vunpack.c.h.b16 %v6138
    %v6720 = vunpack.c.l.b16 %v6139
    %v6721 = vunpack.c.h.b16 %v6139
    %v6722 = vunpack.c.l.b16 %v6140
    %v6723 = vunpack.c.h.b16 %v6140
    %v6724 = vunpack.c.l.b16 %v6141
    %v6725 = vunpack.c.h.b16 %v6141
    %v6726 = vunpack.c.l.b16 %v6142
    %v6727 = vunpack.c.h.b16 %v6142
    %v6728 = vunpack.c.l.b16 %v6143
    %v6729 = vunpack.c.h.b16 %v6143
    %v6730 = vunpack.c.l.b16 %v6144
    %v6731 = vunpack.c.h.b16 %v6144
    %v6732 = vunpack.c.l.b16 %v6145
    %v6733 = vunpack.c.h.b16 %v6145
    %v6734 = vunpack.c.l.b16 %v6146
    %v6735 = vunpack.c.h.b16 %v6146
    %v6736 = vunpack.c.l.b16 %v6147
    %v6737 = vunpack.c.h.b16 %v6147
    %v6738 = vunpack.c.l.b16 %v6148
    %v6739 = vunpack.c.h.b16 %v6148
    %v6740 = vunpack.c.l.b16 %v6149
    %v6741 = vunpack.c.h.b16 %v6149
    %v6742 = vunpack.c.l.b16 %v6150
    %v6743 = vunpack.c.h.b16 %v6150
    %v6744 = vunpack.c.l.b16 %v6151
    %v6745 = vunpack.c.h.b16 %v6151
    %v6746 = vunpack.c.l.b16 %v6152
    %v6747 = vunpack.c.h.b16 %v6152
    %v6748 = vunpack.c.l.b16 %v6153
    %v6749 = vunpack.c.h.b16 %v6153
    %v6750 = vunpack.c.l.b16 %v6154
    %v6751 = vunpack.c.h.b16 %v6154
    %v6752 = vunpack.c.l.b16 %v6155
    %v6753 = vunpack.c.h.b16 %v6155
    %v6754 = vunpack.c.l.b16 %v6156
    %v6755 = vunpack.c.h.b16 %v6156
    %v6756 = vunpack.c.l.b16 %v6157
    %v6757 = vunpack.c.h.b16 %v6157
    %v6758 = vunpack.c.l.b16 %v6158
    %v6759 = vunpack.c.h.b16 %v6158
    %v6760 = vunpack.c.l.b16 %v6159
    %v6761 = vunpack.c.h.b16 %v6159
    %v6762 = vunpack.c.l.b16 %v6160
    %v6763 = vunpack.c.h.b16 %v6160
    %v6764 = vunpack.c.l.b16 %v6161
    %v6765 = vunpack.c.h.b16 %v6161
    %v6766 = vunpack.c.l.b16 %v6162
    %v6767 = vunpack.c.h.b16 %v6162
    %v6768 = vunpack.c.l.b16 %v6163
    %v6769 = vunpack.c.h.b16 %v6163
    %v6770 = vunpack.c.l.b16 %v6164
    %v6771 = vunpack.c.h.b16 %v6164
    %v6772 = vunpack.c.l.b16 %v6165
    %v6773 = vunpack.c.h.b16 %v6165
    %v6774 = vunpack.c.l.b16 %v6166
    %v6775 = vunpack.c.h.b16 %v6166
    %v6776 = vunpack.c.l.b16 %v6167
    %v6777 = vunpack.c.h.b16 %v6167
    %v6778 = vunpack.c.l.b16 %v6168
    %v6779 = vunpack.c.h.b16 %v6168
    %v6780 = vunpack.c.l.b16 %v6169
    %v6781 = vunpack.c.h.b16 %v6169
    %v6782 = vunpack.c.l.b16 %v6170
    %v6783 = vunpack.c.h.b16 %v6170
    %v6784 = vunpack.c.l.b16 %v6171
    %v6785 = vunpack.c.h.b16 %v6171
    %v6786 = vunpack.c.l.b16 %v6172
    %v6787 = vunpack.c.h.b16 %v6172
    %v6788 = vunpack.c.l.b16 %v6173
    %v6789 = vunpack.c.h.b16 %v6173
    %v6790 = vunpack.c.l.b16 %v6174
    %v6791 = vunpack.c.h.b16 %v6174
    %v6792 = vunpack.c.l.b16 %v6175
    %v6793 = vunpack.c.h.b16 %v6175
    %v6794 = vunpack.c.l.b16 %v6176
    %v6795 = vunpack.c.h.b16 %v6176
    %v6796 = vunpack.c.l.b16 %v6177
    %v6797 = vunpack.c.h.b16 %v6177
    %v6798 = vunpack.c.l.b16 %v6178
    %v6799 = vunpack.c.h.b16 %v6178
    %v6800 = vunpack.c.l.b16 %v6179
    %v6801 = vunpack.c.h.b16 %v6179
    %v6802 = vunpack.c.l.b16 %v6180
    %v6803 = vunpack.c.h.b16 %v6180
    %v6804 = vunpack.c.l.b16 %v6181
    %v6805 = vunpack.c.h.b16 %v6181
    %v6806 = vunpack.c.l.b16 %v6182
    %v6807 = vunpack.c.h.b16 %v6182
    %v6808 = vunpack.c.l.b16 %v6183
    %v6809 = vunpack.c.h.b16 %v6183
    %v6810 = vpack.c.b16 %v6492, %v6490
    %v6811 = vpack.c.b16 %v6493, %v6491
    %v6812 = vpack.c.b16 %v6496, %v6494
    %v6813 = vpack.c.b16 %v6497, %v6495
    %v6814 = vpack.c.b16 %v6500, %v6498
    %v6815 = vpack.c.b16 %v6501, %v6499
    %v6816 = vpack.c.b16 %v6504, %v6502
    %v6817 = vpack.c.b16 %v6505, %v6503
    %v6818 = vpack.c.b16 %v6508, %v6506
    %v6819 = vpack.c.b16 %v6509, %v6507
    %v6820 = vpack.c.b16 %v6512, %v6510
    %v6821 = vpack.c.b16 %v6513, %v6511
    %v6822 = vpack.c.b16 %v6516, %v6514
    %v6823 = vpack.c.b16 %v6517, %v6515
    %v6824 = vpack.c.b16 %v6520, %v6518
    %v6825 = vpack.c.b16 %v6521, %v6519
    %v6826 = vpack.c.b16 %v6524, %v6522
    %v6827 = vpack.c.b16 %v6525, %v6523
    %v6828 = vpack.c.b16 %v6528, %v6526
    %v6829 = vpack.c.b16 %v6529, %v6527
    %v6830 = vpack.c.b16 %v6532, %v6530
    %v6831 = vpack.c.b16 %v6533, %v6531
    %v6832 = vpack.c.b16 %v6536, %v6534
    %v6833 = vpack.c.b16 %v6537, %v6535
    %v6834 = vpack.c.b16 %v6540, %v6538
    %v6835 = vpack.c.b16 %v6541, %v6539
    %v6836 = vpack.c.b16 %v6544, %v6542
    %v6837 = vpack.c.b16 %v6545, %v6543
    %v6838 = vpack.c.b16 %v6548, %v6546
    %v6839 = vpack.c.b16 %v6549, %v6547
    %v6840 = vpack.c.b16 %v6552, %v6550
    %v6841 = vpack.c.b16 %v6553, %v6551
    %v6842 = vpack.c.b16 %v6556, %v6554
    %v6843 = vpack.c.b16 %v6557, %v6555
    %v6844 = vpack.c.b16 %v6560, %v6558
    %v6845 = vpack.c.b16 %v6561, %v6559
    %v6846 = vpack.c.b16 %v6564, %v6562
    %v6847 = vpack.c.b16 %v6565, %v6563
    %v6848 = vpack.c.b16 %v6568, %v6566
    %v6849 = vpack.c.b16 %v6569, %v6567
    %v6850 = vpack.c.b16 %v6572, %v6570
    %v6851 = vpack.c.b16 %v6573, %v6571
    %v6852 = vpack.c.b16 %v6576, %v6574
    %v6853 = vpack.c.b16 %v6577, %v6575
    %v6854 = vpack.c.b16 %v6580, %v6578
    %v6855 = vpack.c.b16 %v6581, %v6579
    %v6856 = vpack.c.b16 %v6584, %v6582
    %v6857 = vpack.c.b16 %v6585, %v6583
    %v6858 = vpack.c.b16 %v6588, %v6586
    %v6859 = vpack.c.b16 %v6589, %v6587
    %v6860 = vpack.c.b16 %v6592, %v6590
    %v6861 = vpack.c.b16 %v6593, %v6591
    %v6862 = vpack.c.b16 %v6596, %v6594
    %v6863 = vpack.c.b16 %v6597, %v6595
    %v6864 = vpack.c.b16 %v6600, %v6598
    %v6865 = vpack.c.b16 %v6601, %v6599
    %v6866 = vpack.c.b16 %v6604, %v6602
    %v6867 = vpack.c.b16 %v6605, %v6603
    %v6868 = vpack.c.b16 %v6608, %v6606
    %v6869 = vpack.c.b16 %v6609, %v6607
    %v6870 = vpack.c.b16 %v6612, %v6610
    %v6871 = vpack.c.b16 %v6613, %v6611
    %v6872 = vpack.c.b16 %v6616, %v6614
    %v6873 = vpack.c.b16 %v6617, %v6615
    %v6874 = vpack.c.b16 %v6620, %v6618
    %v6875 = vpack.c.b16 %v6621, %v6619
    %v6876 = vpack.c.b16 %v6624, %v6622
    %v6877 = vpack.c.b16 %v6625, %v6623
    %v6878 = vpack.c.b16 %v6628, %v6626
    %v6879 = vpack.c.b16 %v6629, %v6627
    %v6880 = vpack.c.b16 %v6632, %v6630
    %v6881 = vpack.c.b16 %v6633, %v6631
    %v6882 = vpack.c.b16 %v6636, %v6634
    %v6883 = vpack.c.b16 %v6637, %v6635
    %v6884 = vpack.c.b16 %v6640, %v6638
    %v6885 = vpack.c.b16 %v6641, %v6639
    %v6886 = vpack.c.b16 %v6644, %v6642
    %v6887 = vpack.c.b16 %v6645, %v6643
    %v6888 = vpack.c.b16 %v6648, %v6646
    %v6889 = vpack.c.b16 %v6649, %v6647
    %v6890 = vpack.c.b16 %v6652, %v6650
    %v6891 = vpack.c.b16 %v6653, %v6651
    %v6892 = vpack.c.b16 %v6656, %v6654
    %v6893 = vpack.c.b16 %v6657, %v6655
    %v6894 = vpack.c.b16 %v6660, %v6658
    %v6895 = vpack.c.b16 %v6661, %v6659
    %v6896 = vpack.c.b16 %v6664, %v6662
    %v6897 = vpack.c.b16 %v6665, %v6663
    %v6898 = vpack.c.b16 %v6668, %v6666
    %v6899 = vpack.c.b16 %v6669, %v6667
    %v6900 = vpack.c.b16 %v6672, %v6670
    %v6901 = vpack.c.b16 %v6673, %v6671
    %v6902 = vpack.c.b16 %v6676, %v6674
    %v6903 = vpack.c.b16 %v6677, %v6675
    %v6904 = vpack.c.b16 %v6680, %v6678
    %v6905 = vpack.c.b16 %v6681, %v6679
    %v6906 = vpack.c.b16 %v6684, %v6682
    %v6907 = vpack.c.b16 %v6685, %v6683
    %v6908 = vpack.c.b16 %v6688, %v6686
    %v6909 = vpack.c.b16 %v6689, %v6687
    %v6910 = vpack.c.b16 %v6692, %v6690
    %v6911 = vpack.c.b16 %v6693, %v6691
    %v6912 = vpack.c.b16 %v6696, %v6694
    %v6913 = vpack.c.b16 %v6697, %v6695
    %v6914 = vpack.c.b16 %v6700, %v6698
    %v6915 = vpack.c.b16 %v6701, %v6699
    %v6916 = vpack.c.b16 %v6704, %v6702
    %v6917 = vpack.c.b16 %v6705, %v6703
    %v6918 = vpack.c.b16 %v6708, %v6706
    %v6919 = vpack.c.b16 %v6709, %v6707
    %v6920 = vpack.c.b16 %v6712, %v6710
    %v6921 = vpack.c.b16 %v6713, %v6711
    %v6922 = vpack.c.b16 %v6716, %v6714
    %v6923 = vpack.c.b16 %v6717, %v6715
    %v6924 = vpack.c.b16 %v6720, %v6718
    %v6925 = vpack.c.b16 %v6721, %v6719
    %v6926 = vpack.c.b16 %v6724, %v6722
    %v6927 = vpack.c.b16 %v6725, %v6723
    %v6928 = vpack.c.b16 %v6728, %v6726
    %v6929 = vpack.c.b16 %v6729, %v6727
    %v6930 = vpack.c.b16 %v6732, %v6730
    %v6931 = vpack.c.b16 %v6733, %v6731
    %v6932 = vpack.c.b16 %v6736, %v6734
    %v6933 = vpack.c.b16 %v6737, %v6735
    %v6934 = vpack.c.b16 %v6740, %v6738
    %v6935 = vpack.c.b16 %v6741, %v6739
    %v6936 = vpack.c.b16 %v6744, %v6742
    %v6937 = vpack.c.b16 %v6745, %v6743
    %v6938 = vpack.c.b16 %v6748, %v6746
    %v6939 = vpack.c.b16 %v6749, %v6747
    %v6940 = vpack.c.b16 %v6752, %v6750
    %v6941 = vpack.c.b16 %v6753, %v6751
    %v6942 = vpack.c.b16 %v6756, %v6754
    %v6943 = vpack.c.b16 %v6757, %v6755
    %v6944 = vpack.c.b16 %v6760, %v6758
    %v6945 = vpack.c.b16 %v6761, %v6759
    %v6946 = vpack.c.b16 %v6764, %v6762
    %v6947 = vpack.c.b16 %v6765, %v6763
    %v6948 = vpack.c.b16 %v6768, %v6766
    %v6949 = vpack.c.b16 %v6769, %v6767
    %v6950 = vpack.c.b16 %v6772, %v6770
    %v6951 = vpack.c.b16 %v6773, %v6771
    %v6952 = vpack.c.b16 %v6776, %v6774
    %v6953 = vpack.c.b16 %v6777, %v6775
    %v6954 = vpack.c.b16 %v6780, %v6778
    %v6955 = vpack.c.b16 %v6781, %v6779
    %v6956 = vpack.c.b16 %v6784, %v6782
    %v6957 = vpack.c.b16 %v6785, %v6783
    %v6958 = vpack.c.b16 %v6788, %v6786
    %v6959 = vpack.c.b16 %v6789, %v6787
    %v6960 = vpack.c.b16 %v6792, %v6790
    %v6961 = vpack.c.b16 %v6793, %v6791
    %v6962 = vpack.c.b16 %v6796, %v6794
    %v6963 = vpack.c.b16 %v6797, %v6795
    %v6964 = vpack.c.b16 %v6800, %v6798
    %v6965 = vpack.c.b16 %v6801, %v6799
    %v6966 = vpack.c.b16 %v6804, %v6802
    %v6967 = vpack.c.b16 %v6805, %v6803
    %v6968 = vpack.c.b16 %v6808, %v6806
    %v6969 = vpack.c.b16 %v6809, %v6807
    %7130 = vmatprep.subr.bf16.mxu0 %v6811
    %7131 = vmatpush1.bf16.msra.mxu0 %v6810
    %7132 = vmatprep.subr.bf16.mxu0 %v6813
    %7133 = vmatpush1.bf16.msra.mxu0 %v6812
    %7134 = vmatprep.subr.bf16.mxu0 %v6815
    %7135 = vmatpush1.bf16.msra.mxu0 %v6814
    %7136 = vmatprep.subr.bf16.mxu0 %v6817
    %7137 = vmatpush1.bf16.msra.mxu0 %v6816
    %7138 = vmatprep.subr.bf16.mxu0 %v6819
    %7139 = vmatpush1.bf16.msra.mxu0 %v6818
    %7140 = vmatprep.subr.bf16.mxu0 %v6821
    %7141 = vmatpush1.bf16.msra.mxu0 %v6820
    %7142 = vmatprep.subr.bf16.mxu0 %v6823
    %7143 = vmatpush1.bf16.msra.mxu0 %v6822
    %7144 = vmatprep.subr.bf16.mxu0 %v6825
    %7145 = vmatpush1.bf16.msra.mxu0 %v6824
    %7146 = vmatprep.subr.bf16.mxu0 %v6827
    %7147 = vmatpush1.bf16.msra.mxu0 %v6826
    %7148 = vmatprep.subr.bf16.mxu0 %v6829
    %7149 = vmatpush1.bf16.msra.mxu0 %v6828
    %7150 = vmatprep.subr.bf16.mxu0 %v6831
    %7151 = vmatpush1.bf16.msra.mxu0 %v6830
    %7152 = vmatprep.subr.bf16.mxu0 %v6833
    %7153 = vmatpush1.bf16.msra.mxu0 %v6832
    %7154 = vmatprep.subr.bf16.mxu0 %v6835
    %7155 = vmatpush1.bf16.msra.mxu0 %v6834
    %7156 = vmatprep.subr.bf16.mxu0 %v6837
    %7157 = vmatpush1.bf16.msra.mxu0 %v6836
    %7158 = vmatprep.subr.bf16.mxu0 %v6839
    %7159 = vmatpush1.bf16.msra.mxu0 %v6838
    %7160 = vmatprep.subr.bf16.mxu0 %v6841
    %7161 = vmatpush1.bf16.msra.mxu0 %v6840
    %7162 = vmatprep.mubr.bf16.mxu0 %v6205
    %7163 = vmatmul.mubr.bf16.gmra.mrb[0].mxu0 %v6202
    %v7164 = vpop.f32.mrb[0].mxu0
    %v7165 = vadd.f32 %v6323, %v7164
    %v7166 = vpop.f32.mrb[0].mxu0
    %v7167 = vadd.f32 %v6327, %v7166
    %v7168 = vpop.f32.mrb[0].mxu0
    %v7169 = vadd.f32 %v6323, %v7168
    %v7170 = vpop.f32.mrb[0].mxu0
    %v7171 = vadd.f32 %v6327, %v7170
    %7172 = vmatprep.mubr.bf16.mxu0 %v6211
    %7173 = vmatmul.mubr.bf16.gmra.mrb[0].mxu0 %v6208
    %v7174 = vpop.f32.mrb[0].mxu0
    %v7175 = vadd.f32 %v6323, %v7174
    %v7176 = vpop.f32.mrb[0].mxu0
    %v7177 = vadd.f32 %v6327, %v7176
    %v7178 = vpop.f32.mrb[0].mxu0
    %v7179 = vadd.f32 %v6323, %v7178
    %v7180 = vpop.f32.mrb[0].mxu0
    %v7181 = vadd.f32 %v6327, %v7180
    %7182 = vdwg.mxu0
    %7183 = vmatprep.subr.bf16.mxu0 %v6843
    %7184 = vmatpush1.bf16.msra.mxu0 %v6842
    %7185 = vmatprep.subr.bf16.mxu0 %v6845
    %7186 = vmatpush1.bf16.msra.mxu0 %v6844
    %7187 = vmatprep.subr.bf16.mxu0 %v6847
    %7188 = vmatpush1.bf16.msra.mxu0 %v6846
    %7189 = vmatprep.subr.bf16.mxu0 %v6849
    %7190 = vmatpush1.bf16.msra.mxu0 %v6848
    %7191 = vmatprep.subr.bf16.mxu0 %v6851
    %7192 = vmatpush1.bf16.msra.mxu0 %v6850
    %7193 = vmatprep.subr.bf16.mxu0 %v6853
    %7194 = vmatpush1.bf16.msra.mxu0 %v6852
    %7195 = vmatprep.subr.bf16.mxu0 %v6855
    %7196 = vmatpush1.bf16.msra.mxu0 %v6854
    %7197 = vmatprep.subr.bf16.mxu0 %v6857
    %7198 = vmatpush1.bf16.msra.mxu0 %v6856
    %7199 = vmatprep.subr.bf16.mxu0 %v6859
    %7200 = vmatpush1.bf16.msra.mxu0 %v6858
    %7201 = vmatprep.subr.bf16.mxu0 %v6861
    %7202 = vmatpush1.bf16.msra.mxu0 %v6860
    %7203 = vmatprep.subr.bf16.mxu0 %v6863
    %7204 = vmatpush1.bf16.msra.mxu0 %v6862
    %7205 = vmatprep.subr.bf16.mxu0 %v6865
    %7206 = vmatpush1.bf16.msra.mxu0 %v6864
    %7207 = vmatprep.subr.bf16.mxu0 %v6867
    %7208 = vmatpush1.bf16.msra.mxu0 %v6866
    %7209 = vmatprep.subr.bf16.mxu0 %v6869
    %7210 = vmatpush1.bf16.msra.mxu0 %v6868
    %7211 = vmatprep.subr.bf16.mxu0 %v6871
    %7212 = vmatpush1.bf16.msra.mxu0 %v6870
    %7213 = vmatprep.subr.bf16.mxu0 %v6873
    %7214 = vmatpush1.bf16.msra.mxu0 %v6872
    %7215 = vmatprep.mubr.bf16.mxu0 %v6237
    %7216 = vmatmul.mubr.bf16.gmra.mrb[0].mxu0 %v6234
    %v7217 = vpop.f32.mrb[0].mxu0
    %v7218 = vadd.f32 %v7165, %v7217
    %v7219 = vpop.f32.mrb[0].mxu0
    %v7220 = vadd.f32 %v7167, %v7219
    %v7221 = vpop.f32.mrb[0].mxu0
    %v7222 = vadd.f32 %v7169, %v7221
    %v7223 = vpop.f32.mrb[0].mxu0
    %v7224 = vadd.f32 %v7171, %v7223
    %7225 = vmatprep.mubr.bf16.mxu0 %v6243
    %7226 = vmatmul.mubr.bf16.gmra.mrb[0].mxu0 %v6240
    %v7227 = vpop.f32.mrb[0].mxu0
    %v7228 = vadd.f32 %v7175, %v7227
    %v7229 = vpop.f32.mrb[0].mxu0
    %v7230 = vadd.f32 %v7177, %v7229
    %v7231 = vpop.f32.mrb[0].mxu0
    %v7232 = vadd.f32 %v7179, %v7231
    %v7233 = vpop.f32.mrb[0].mxu0
    %v7234 = vadd.f32 %v7181, %v7233
    %7235 = vdwg.mxu0
    %7236 = vmatprep.subr.bf16.mxu0 %v6875
    %7237 = vmatpush1.bf16.msra.mxu0 %v6874
    %7238 = vmatprep.subr.bf16.mxu0 %v6877
    %7239 = vmatpush1.bf16.msra.mxu0 %v6876
    %7240 = vmatprep.subr.bf16.mxu0 %v6879
    %7241 = vmatpush1.bf16.msra.mxu0 %v6878
    %7242 = vmatprep.subr.bf16.mxu0 %v6881
    %7243 = vmatpush1.bf16.msra.mxu0 %v6880
    %7244 = vmatprep.subr.bf16.mxu0 %v6883
    %7245 = vmatpush1.bf16.msra.mxu0 %v6882
    %7246 = vmatprep.subr.bf16.mxu0 %v6885
    %7247 = vmatpush1.bf16.msra.mxu0 %v6884
    %7248 = vmatprep.subr.bf16.mxu0 %v6887
    %7249 = vmatpush1.bf16.msra.mxu0 %v6886
    %7250 = vmatprep.subr.bf16.mxu0 %v6889
    %7251 = vmatpush1.bf16.msra.mxu0 %v6888
    %7252 = vmatprep.subr.bf16.mxu0 %v6891
    %7253 = vmatpush1.bf16.msra.mxu0 %v6890
    %7254 = vmatprep.subr.bf16.mxu0 %v6893
    %7255 = vmatpush1.bf16.msra.mxu0 %v6892
    %7256 = vmatprep.subr.bf16.mxu0 %v6895
    %7257 = vmatpush1.bf16.msra.mxu0 %v6894
    %7258 = vmatprep.subr.bf16.mxu0 %v6897
    %7259 = vmatpush1.bf16.msra.mxu0 %v6896
    %7260 = vmatprep.subr.bf16.mxu0 %v6899
    %7261 = vmatpush1.bf16.msra.mxu0 %v6898
    %7262 = vmatprep.subr.bf16.mxu0 %v6901
    %7263 = vmatpush1.bf16.msra.mxu0 %v6900
    %7264 = vmatprep.subr.bf16.mxu0 %v6903
    %7265 = vmatpush1.bf16.msra.mxu0 %v6902
    %7266 = vmatprep.subr.bf16.mxu0 %v6905
    %7267 = vmatpush1.bf16.msra.mxu0 %v6904
    %7268 = vmatprep.mubr.bf16.mxu0 %v6249
    %7269 = vmatmul.mubr.bf16.gmra.mrb[0].mxu0 %v6248
    %v7270 = vpop.f32.mrb[0].mxu0
    %v7271 = vadd.f32 %v7218, %v7270
    %v7272 = vpop.f32.mrb[0].mxu0
    %v7273 = vadd.f32 %v7220, %v7272
    %v7274 = vpop.f32.mrb[0].mxu0
    %v7275 = vadd.f32 %v7222, %v7274
    %v7276 = vpop.f32.mrb[0].mxu0
    %v7277 = vadd.f32 %v7224, %v7276
    %7278 = vmatprep.mubr.bf16.mxu0 %v6251
    %7279 = vmatmul.mubr.bf16.gmra.mrb[0].mxu0 %v6250
    %v7280 = vpop.f32.mrb[0].mxu0
    %v7281 = vadd.f32 %v7228, %v7280
    %v7282 = vpop.f32.mrb[0].mxu0
    %v7283 = vadd.f32 %v7230, %v7282
    %v7284 = vpop.f32.mrb[0].mxu0
    %v7285 = vadd.f32 %v7232, %v7284
    %v7286 = vpop.f32.mrb[0].mxu0
    %v7287 = vadd.f32 %v7234, %v7286
    %7288 = vdwg.mxu0
    %7289 = vmatprep.subr.bf16.mxu0 %v6907
    %7290 = vmatpush1.bf16.msra.mxu0 %v6906
    %7291 = vmatprep.subr.bf16.mxu0 %v6909
    %7292 = vmatpush1.bf16.msra.mxu0 %v6908
    %7293 = vmatprep.subr.bf16.mxu0 %v6911
    %7294 = vmatpush1.bf16.msra.mxu0 %v6910
    %7295 = vmatprep.subr.bf16.mxu0 %v6913
    %7296 = vmatpush1.bf16.msra.mxu0 %v6912
    %7297 = vmatprep.subr.bf16.mxu0 %v6915
    %7298 = vmatpush1.bf16.msra.mxu0 %v6914
    %7299 = vmatprep.subr.bf16.mxu0 %v6917
    %7300 = vmatpush1.bf16.msra.mxu0 %v6916
    %7301 = vmatprep.subr.bf16.mxu0 %v6919
    %7302 = vmatpush1.bf16.msra.mxu0 %v6918
    %7303 = vmatprep.subr.bf16.mxu0 %v6921
    %7304 = vmatpush1.bf16.msra.mxu0 %v6920
    %7305 = vmatprep.subr.bf16.mxu0 %v6923
    %7306 = vmatpush1.bf16.msra.mxu0 %v6922
    %7307 = vmatprep.subr.bf16.mxu0 %v6925
    %7308 = vmatpush1.bf16.msra.mxu0 %v6924
    %7309 = vmatprep.subr.bf16.mxu0 %v6927
    %7310 = vmatpush1.bf16.msra.mxu0 %v6926
    %7311 = vmatprep.subr.bf16.mxu0 %v6929
    %7312 = vmatpush1.bf16.msra.mxu0 %v6928
    %7313 = vmatprep.subr.bf16.mxu0 %v6931
    %7314 = vmatpush1.bf16.msra.mxu0 %v6930
    %7315 = vmatprep.subr.bf16.mxu0 %v6933
    %7316 = vmatpush1.bf16.msra.mxu0 %v6932
    %7317 = vmatprep.subr.bf16.mxu0 %v6935
    %7318 = vmatpush1.bf16.msra.mxu0 %v6934
    %7319 = vmatprep.subr.bf16.mxu0 %v6937
    %7320 = vmatpush1.bf16.msra.mxu0 %v6936
    %7321 = vmatprep.mubr.bf16.mxu0 %v6273
    %7322 = vmatmul.mubr.bf16.gmra.mrb[0].mxu0 %v6270
    %v7323 = vpop.f32.mrb[0].mxu0
    %v7324 = vadd.f32 %v7271, %v7323
    %v7325 = vpop.f32.mrb[0].mxu0
    %v7326 = vadd.f32 %v7273, %v7325
    %v7327 = vpop.f32.mrb[0].mxu0
    %v7328 = vadd.f32 %v7275, %v7327
    %v7329 = vpop.f32.mrb[0].mxu0
    %v7330 = vadd.f32 %v7277, %v7329
    %7331 = vmatprep.mubr.bf16.mxu0 %v6279
    %7332 = vmatmul.mubr.bf16.gmra.mrb[0].mxu0 %v6276
    %v7333 = vpop.f32.mrb[0].mxu0
    %v7334 = vadd.f32 %v7281, %v7333
    %v7335 = vpop.f32.mrb[0].mxu0
    %v7336 = vadd.f32 %v7283, %v7335
    %v7337 = vpop.f32.mrb[0].mxu0
    %v7338 = vadd.f32 %v7285, %v7337
    %v7339 = vpop.f32.mrb[0].mxu0
    %v7340 = vadd.f32 %v7287, %v7339
    %7341 = vdwg.mxu0
    %7342 = vmatprep.subr.bf16.mxu0 %v6939
    %7343 = vmatpush1.bf16.msra.mxu0 %v6938
    %7344 = vmatprep.subr.bf16.mxu0 %v6941
    %7345 = vmatpush1.bf16.msra.mxu0 %v6940
    %7346 = vmatprep.subr.bf16.mxu0 %v6943
    %7347 = vmatpush1.bf16.msra.mxu0 %v6942
    %7348 = vmatprep.subr.bf16.mxu0 %v6945
    %7349 = vmatpush1.bf16.msra.mxu0 %v6944
    %7350 = vmatprep.subr.bf16.mxu0 %v6947
    %7351 = vmatpush1.bf16.msra.mxu0 %v6946
    %7352 = vmatprep.subr.bf16.mxu0 %v6949
    %7353 = vmatpush1.bf16.msra.mxu0 %v6948
    %7354 = vmatprep.subr.bf16.mxu0 %v6951
    %7355 = vmatpush1.bf16.msra.mxu0 %v6950
    %7356 = vmatprep.subr.bf16.mxu0 %v6953
    %7357 = vmatpush1.bf16.msra.mxu0 %v6952
    %7358 = vmatprep.subr.bf16.mxu0 %v6955
    %7359 = vmatpush1.bf16.msra.mxu0 %v6954
    %7360 = vmatprep.subr.bf16.mxu0 %v6957
    %7361 = vmatpush1.bf16.msra.mxu0 %v6956
    %7362 = vmatprep.subr.bf16.mxu0 %v6959
    %7363 = vmatpush1.bf16.msra.mxu0 %v6958
    %7364 = vmatprep.subr.bf16.mxu0 %v6961
    %7365 = vmatpush1.bf16.msra.mxu0 %v6960
    %7366 = vmatprep.subr.bf16.mxu0 %v6963
    %7367 = vmatpush1.bf16.msra.mxu0 %v6962
    %7368 = vmatprep.subr.bf16.mxu0 %v6965
    %7369 = vmatpush1.bf16.msra.mxu0 %v6964
    %7370 = vmatprep.subr.bf16.mxu0 %v6967
    %7371 = vmatpush1.bf16.msra.mxu0 %v6966
    %7372 = vmatprep.subr.bf16.mxu0 %v6969
    %7373 = vmatpush1.bf16.msra.mxu0 %v6968
    %7374 = vmatprep.mubr.bf16.mxu0 %v6306
    %7375 = vmatmul.mubr.bf16.gmra.mrb[0].mxu0 %v6303
    %v7376 = vpop.f32.mrb[0].mxu0
    %v7377 = vadd.f32 %v7324, %v7376
    %v7378 = vpop.f32.mrb[0].mxu0
    %v7379 = vadd.f32 %v7326, %v7378
    %v7380 = vpop.f32.mrb[0].mxu0
    %v7381 = vadd.f32 %v7328, %v7380
    %v7382 = vpop.f32.mrb[0].mxu0
    %v7383 = vadd.f32 %v7330, %v7382
    %7384 = vmatprep.mubr.bf16.mxu0 %v6312
    %7385 = vmatmul.mubr.bf16.gmra.mrb[0].mxu0 %v6309
    %v7386 = vpop.f32.mrb[0].mxu0
    %v7387 = vadd.f32 %v7334, %v7386
    %v7388 = vpop.f32.mrb[0].mxu0
    %v7389 = vadd.f32 %v7336, %v7388
    %v7390 = vpop.f32.mrb[0].mxu0
    %v7391 = vadd.f32 %v7338, %v7390
    %v7392 = vpop.f32.mrb[0].mxu0
    %v7393 = vadd.f32 %v7340, %v7392
    %7394 = vdwg.mxu0
    %v7395 = vadd.f32 %v7377, %v7381
    %v7396 = vadd.f32 %v7395, %v7387
    %v7397 = vadd.f32 %v7396, %v7391
    %v7398 = vrot.slane %v7397, 4
    %v7399 = vadd.f32 %v7397, %v7398
    %v7400 = vrot.slane %v7399, 2
    %v7401 = vadd.f32 %v7399, %v7400
    %v7402 = vrot.slane %v7401, 1
    %v7403 = vadd.f32 %v7401, %v7402
    %v7404 = vadd.f32 %v7379, %v7383
    %v7405 = vadd.f32 %v7404, %v7389
    %v7406 = vadd.f32 %v7405, %v7393
    %v7407 = vrot.slane %v7406, 4
    %v7408 = vadd.f32 %v7406, %v7407
    %v7409 = vrot.slane %v7408, 2
    %v7410 = vadd.f32 %v7408, %v7409
    %v7411 = vrot.slane %v7410, 1
    %v7412 = vadd.f32 %v7410, %v7411
    %v7413 = vmul.f32 %v7403, %v4397
    %v7414 = vmul.f32 %v7412, %v4397
    %v7415 = vsub.f32 %v7377, %v7413
    %v7416 = vsub.f32 %v7379, %v7414
    %v7417 = vsub.f32 %v7381, %v7413
    %v7418 = vsub.f32 %v7383, %v7414
    %v7419 = vsub.f32 %v7387, %v7413
    %v7420 = vsub.f32 %v7389, %v7414
    %v7421 = vsub.f32 %v7391, %v7413
    %v7422 = vsub.f32 %v7393, %v7414
    %v7423 = vmul.f32 %v7415, %v7415
    %v7424 = vmul.f32 %v7416, %v7416
    %v7425 = vmul.f32 %v7417, %v7417
    %v7426 = vmul.f32 %v7418, %v7418
    %v7427 = vmul.f32 %v7419, %v7419
    %v7428 = vmul.f32 %v7420, %v7420
    %v7429 = vmul.f32 %v7421, %v7421
    %v7430 = vmul.f32 %v7422, %v7422
    %v7431 = vadd.f32 %v7423, %v7425
    %v7432 = vadd.f32 %v7431, %v7427
    %v7433 = vadd.f32 %v7432, %v7429
    %v7434 = vrot.slane %v7433, 4
    %v7435 = vadd.f32 %v7433, %v7434
    %v7436 = vrot.slane %v7435, 2
    %v7437 = vadd.f32 %v7435, %v7436
    %v7438 = vrot.slane %v7437, 1
    %v7439 = vadd.f32 %v7437, %v7438
    %v7440 = vadd.f32 %v7424, %v7426
    %v7441 = vadd.f32 %v7440, %v7428
    %v7442 = vadd.f32 %v7441, %v7430
    %v7443 = vrot.slane %v7442, 4
    %v7444 = vadd.f32 %v7442, %v7443
    %v7445 = vrot.slane %v7444, 2
    %v7446 = vadd.f32 %v7444, %v7445
    %v7447 = vrot.slane %v7446, 1
    %v7448 = vadd.f32 %v7446, %v7447
    %v7449 = vmul.f32 %v7439, %v4397
    %v7450 = vmul.f32 %v7448, %v4397
    %v7451 = vadd.f32 %v7449, 1e-05
    %v7452 = vadd.f32 %v7450, 1e-05
    %v7453 = vrsqrt.pop %v7451
    %v7454 = vrsqrt.pop %v7452
    %v7455 = vmul.f32 %v7415, %v7453
    %v7456 = vmul.f32 %v7416, %v7454
    %v7457 = vmul.f32 %v7417, %v7453
    %v7458 = vmul.f32 %v7418, %v7454
    %v7459 = vmul.f32 %v7419, %v7453
    %v7460 = vmul.f32 %v7420, %v7454
    %v7461 = vmul.f32 %v7421, %v7453
    %v7462 = vmul.f32 %v7422, %v7454
    %s7463 = scalar_lea.vmem [#allocation11], 2
    %v7464 = vld [vmem:[%s7463] ss:$8 sm:$0x3]
    %v7466 = vlaneseq
    %v7467 = vshrl.u32 %v7466, 7
    %v7468 = vsub.s32 0, %v7467
    %v7469 = vrot.slane %v7464, %v7468
    %v7470 = vlaneseq
    %v7471 = vshrl.u32 %v7470, 7
    %v7472 = vsub.s32 1, %v7471
    %v7473 = vrot.slane %v7464, %v7472
    %v7476 = vmul.f32 %v7455, %v7469
    %v7477 = vmul.f32 %v7456, %v7473
    %v7478 = vmul.f32 %v7457, %v7469
    %v7479 = vmul.f32 %v7458, %v7473
    %v7480 = vmul.f32 %v7459, %v7469
    %v7481 = vmul.f32 %v7460, %v7473
    %v7482 = vmul.f32 %v7461, %v7469
    %v7483 = vmul.f32 %v7462, %v7473
    %s7484 = scalar_lea.vmem [#allocation12], 2
    %v7485 = vld [vmem:[%s7484] ss:$8 sm:$0x3]
    %v7487 = vlaneseq
    %v7488 = vshrl.u32 %v7487, 7
    %v7489 = vsub.s32 0, %v7488
    %v7490 = vrot.slane %v7485, %v7489
    %v7491 = vlaneseq
    %v7492 = vshrl.u32 %v7491, 7
    %v7493 = vsub.s32 1, %v7492
    %v7494 = vrot.slane %v7485, %v7493
    %v7497 = vadd.f32 %v7476, %v7490
    %v7498 = vadd.f32 %v7477, %v7494
    %v7499 = vadd.f32 %v7478, %v7490
    %v7500 = vadd.f32 %v7479, %v7494
    %v7501 = vadd.f32 %v7480, %v7490
    %v7502 = vadd.f32 %v7481, %v7494
    %v7503 = vadd.f32 %v7482, %v7490
    %v7504 = vadd.f32 %v7483, %v7494
    %v7505 = vmax.f32 %v7497, 0.0
    %v7506 = vmax.f32 %v7498, 0.0
    %v7507 = vmax.f32 %v7499, 0.0
    %v7508 = vmax.f32 %v7500, 0.0
    %v7509 = vmax.f32 %v7501, 0.0
    %v7510 = vmax.f32 %v7502, 0.0
    %v7511 = vmax.f32 %v7503, 0.0
    %v7512 = vmax.f32 %v7504, 0.0
    %v7513 = vpack.c.bf16 %v7507, %v7505
    %v7514 = vpack.c.bf16 %v7508, %v7506
    %v7515 = vpack.c.bf16 %v7511, %v7509
    %v7516 = vpack.c.bf16 %v7512, %v7510
    %7517 = vst [vmem:[#allocation3 + $0x20] sm:$0xff] %v7513
    %7518 = vst [vmem:[#allocation3 + $0x28] sm:$0xff] %v7514
    %7519 = vst [vmem:[#allocation3 + $0x70] sm:$0xff] %v7515
    %7520 = vst [vmem:[#allocation3 + $0x78] sm:$0xff] %v7516
    %s7521 = scalar_lea.vmem [#allocation8], 2560
    %v7522 = vld [vmem:[%s7521] sm:$0xff]
    %v7523 = vld [vmem:[%s7521 + $0x8] sm:$0xff]
    %v7524 = vld [vmem:[%s7521 + $0x10] sm:$0xff]
    %v7525 = vld [vmem:[%s7521 + $0x18] sm:$0xff]
    %v7526 = vld [vmem:[%s7521 + $0x20] sm:$0xff]
    %v7527 = vld [vmem:[%s7521 + $0x28] sm:$0xff]
    %v7528 = vld [vmem:[%s7521 + $0x30] sm:$0xff]
    %v7529 = vld [vmem:[%s7521 + $0x38] sm:$0xff]
    %v7530 = vld [vmem:[%s7521 + $0x40] sm:$0xff]
    %v7531 = vld [vmem:[%s7521 + $0x48] sm:$0xff]
    %v7532 = vld [vmem:[%s7521 + $0x50] sm:$0xff]
    %v7533 = vld [vmem:[%s7521 + $0x58] sm:$0xff]
    %v7534 = vld [vmem:[%s7521 + $0x60] sm:$0xff]
    %v7535 = vld [vmem:[%s7521 + $0x68] sm:$0xff]
    %v7536 = vld [vmem:[%s7521 + $0x70] sm:$0xff]
    %v7537 = vld [vmem:[%s7521 + $0x78] sm:$0xff]
    %v7538 = vld [vmem:[%s7521 + $0x80] sm:$0xff]
    %v7539 = vld [vmem:[%s7521 + $0x88] sm:$0xff]
    %v7540 = vld [vmem:[%s7521 + $0x90] sm:$0xff]
    %v7541 = vld [vmem:[%s7521 + $0x98] sm:$0xff]
    %v7542 = vld [vmem:[%s7521 + $0xa0] sm:$0xff]
    %v7543 = vld [vmem:[%s7521 + $0xa8] sm:$0xff]
    %v7544 = vld [vmem:[%s7521 + $0xb0] sm:$0xff]
    %v7545 = vld [vmem:[%s7521 + $0xb8] sm:$0xff]
    %v7546 = vld [vmem:[%s7521 + $0xc0] sm:$0xff]
    %v7547 = vld [vmem:[%s7521 + $0xc8] sm:$0xff]
    %v7548 = vld [vmem:[%s7521 + $0xd0] sm:$0xff]
    %v7549 = vld [vmem:[%s7521 + $0xd8] sm:$0xff]
    %v7550 = vld [vmem:[%s7521 + $0xe0] sm:$0xff]
    %v7551 = vld [vmem:[%s7521 + $0xe8] sm:$0xff]
    %v7552 = vld [vmem:[%s7521 + $0xf0] sm:$0xff]
    %v7553 = vld [vmem:[%s7521 + $0xf8] sm:$0xff]
    %v7554 = vld [vmem:[%s7521 + $0x100] sm:$0xff]
    %v7555 = vld [vmem:[%s7521 + $0x108] sm:$0xff]
    %v7556 = vld [vmem:[%s7521 + $0x110] sm:$0xff]
    %v7557 = vld [vmem:[%s7521 + $0x118] sm:$0xff]
    %v7558 = vld [vmem:[%s7521 + $0x120] sm:$0xff]
    %v7559 = vld [vmem:[%s7521 + $0x128] sm:$0xff]
    %v7560 = vld [vmem:[%s7521 + $0x130] sm:$0xff]
    %v7561 = vld [vmem:[%s7521 + $0x138] sm:$0xff]
    %v7562 = vld [vmem:[%s7521 + $0x140] sm:$0xff]
    %v7563 = vld [vmem:[%s7521 + $0x148] sm:$0xff]
    %v7564 = vld [vmem:[%s7521 + $0x150] sm:$0xff]
    %v7565 = vld [vmem:[%s7521 + $0x158] sm:$0xff]
    %v7566 = vld [vmem:[%s7521 + $0x160] sm:$0xff]
    %v7567 = vld [vmem:[%s7521 + $0x168] sm:$0xff]
    %v7568 = vld [vmem:[%s7521 + $0x170] sm:$0xff]
    %v7569 = vld [vmem:[%s7521 + $0x178] sm:$0xff]
    %v7570 = vld [vmem:[%s7521 + $0x180] sm:$0xff]
    %v7571 = vld [vmem:[%s7521 + $0x188] sm:$0xff]
    %v7572 = vld [vmem:[%s7521 + $0x190] sm:$0xff]
    %v7573 = vld [vmem:[%s7521 + $0x198] sm:$0xff]
    %v7574 = vld [vmem:[%s7521 + $0x1a0] sm:$0xff]
    %v7575 = vld [vmem:[%s7521 + $0x1a8] sm:$0xff]
    %v7576 = vld [vmem:[%s7521 + $0x1b0] sm:$0xff]
    %v7577 = vld [vmem:[%s7521 + $0x1b8] sm:$0xff]
    %v7578 = vld [vmem:[%s7521 + $0x1c0] sm:$0xff]
    %v7579 = vld [vmem:[%s7521 + $0x1c8] sm:$0xff]
    %v7580 = vld [vmem:[%s7521 + $0x1d0] sm:$0xff]
    %v7581 = vld [vmem:[%s7521 + $0x1d8] sm:$0xff]
    %v7582 = vld [vmem:[%s7521 + $0x1e0] sm:$0xff]
    %v7583 = vld [vmem:[%s7521 + $0x1e8] sm:$0xff]
    %v7584 = vld [vmem:[%s7521 + $0x1f0] sm:$0xff]
    %v7585 = vld [vmem:[%s7521 + $0x1f8] sm:$0xff]
    %v7586 = vld [vmem:[%s7521 + $0x200] sm:$0xff]
    %v7587 = vld [vmem:[%s7521 + $0x208] sm:$0xff]
    %v7588 = vld [vmem:[%s7521 + $0x210] sm:$0xff]
    %v7589 = vld [vmem:[%s7521 + $0x218] sm:$0xff]
    %v7590 = vld [vmem:[%s7521 + $0x220] sm:$0xff]
    %v7591 = vld [vmem:[%s7521 + $0x228] sm:$0xff]
    %v7592 = vld [vmem:[%s7521 + $0x230] sm:$0xff]
    %v7593 = vld [vmem:[%s7521 + $0x238] sm:$0xff]
    %v7594 = vld [vmem:[%s7521 + $0x240] sm:$0xff]
    %v7595 = vld [vmem:[%s7521 + $0x248] sm:$0xff]
    %v7596 = vld [vmem:[%s7521 + $0x250] sm:$0xff]
    %v7597 = vld [vmem:[%s7521 + $0x258] sm:$0xff]
    %v7598 = vld [vmem:[%s7521 + $0x260] sm:$0xff]
    %v7599 = vld [vmem:[%s7521 + $0x268] sm:$0xff]
    %v7600 = vld [vmem:[%s7521 + $0x270] sm:$0xff]
    %v7601 = vld [vmem:[%s7521 + $0x278] sm:$0xff]
    %v7602 = vld [vmem:[%s7521 + $0x280] sm:$0xff]
    %v7603 = vld [vmem:[%s7521 + $0x288] sm:$0xff]
    %v7604 = vld [vmem:[%s7521 + $0x290] sm:$0xff]
    %v7605 = vld [vmem:[%s7521 + $0x298] sm:$0xff]
    %v7606 = vld [vmem:[%s7521 + $0x2a0] sm:$0xff]
    %v7607 = vld [vmem:[%s7521 + $0x2a8] sm:$0xff]
    %v7608 = vld [vmem:[%s7521 + $0x2b0] sm:$0xff]
    %v7609 = vld [vmem:[%s7521 + $0x2b8] sm:$0xff]
    %v7610 = vld [vmem:[%s7521 + $0x2c0] sm:$0xff]
    %v7611 = vld [vmem:[%s7521 + $0x2c8] sm:$0xff]
    %v7612 = vld [vmem:[%s7521 + $0x2d0] sm:$0xff]
    %v7613 = vld [vmem:[%s7521 + $0x2d8] sm:$0xff]
    %v7614 = vld [vmem:[%s7521 + $0x2e0] sm:$0xff]
    %v7615 = vld [vmem:[%s7521 + $0x2e8] sm:$0xff]
    %v7616 = vld [vmem:[%s7521 + $0x2f0] sm:$0xff]
    %v7617 = vld [vmem:[%s7521 + $0x2f8] sm:$0xff]
    %v7618 = vld [vmem:[%s7521 + $0x300] sm:$0xff]
    %v7619 = vld [vmem:[%s7521 + $0x308] sm:$0xff]
    %v7620 = vld [vmem:[%s7521 + $0x310] sm:$0xff]
    %v7621 = vld [vmem:[%s7521 + $0x318] sm:$0xff]
    %v7622 = vld [vmem:[%s7521 + $0x320] sm:$0xff]
    %v7623 = vld [vmem:[%s7521 + $0x328] sm:$0xff]
    %v7624 = vld [vmem:[%s7521 + $0x330] sm:$0xff]
    %v7625 = vld [vmem:[%s7521 + $0x338] sm:$0xff]
    %v7626 = vld [vmem:[%s7521 + $0x340] sm:$0xff]
    %v7627 = vld [vmem:[%s7521 + $0x348] sm:$0xff]
    %v7628 = vld [vmem:[%s7521 + $0x350] sm:$0xff]
    %v7629 = vld [vmem:[%s7521 + $0x358] sm:$0xff]
    %v7630 = vld [vmem:[%s7521 + $0x360] sm:$0xff]
    %v7631 = vld [vmem:[%s7521 + $0x368] sm:$0xff]
    %v7632 = vld [vmem:[%s7521 + $0x370] sm:$0xff]
    %v7633 = vld [vmem:[%s7521 + $0x378] sm:$0xff]
    %v7634 = vld [vmem:[%s7521 + $0x380] sm:$0xff]
    %v7635 = vld [vmem:[%s7521 + $0x388] sm:$0xff]
    %v7636 = vld [vmem:[%s7521 + $0x390] sm:$0xff]
    %v7637 = vld [vmem:[%s7521 + $0x398] sm:$0xff]
    %v7638 = vld [vmem:[%s7521 + $0x3a0] sm:$0xff]
    %v7639 = vld [vmem:[%s7521 + $0x3a8] sm:$0xff]
    %v7640 = vld [vmem:[%s7521 + $0x3b0] sm:$0xff]
    %v7641 = vld [vmem:[%s7521 + $0x3b8] sm:$0xff]
    %v7642 = vld [vmem:[%s7521 + $0x3c0] sm:$0xff]
    %v7643 = vld [vmem:[%s7521 + $0x3c8] sm:$0xff]
    %v7644 = vld [vmem:[%s7521 + $0x3d0] sm:$0xff]
    %v7645 = vld [vmem:[%s7521 + $0x3d8] sm:$0xff]
    %v7646 = vld [vmem:[%s7521 + $0x3e0] sm:$0xff]
    %v7647 = vld [vmem:[%s7521 + $0x3e8] sm:$0xff]
    %v7648 = vld [vmem:[%s7521 + $0x3f0] sm:$0xff]
    %v7649 = vld [vmem:[%s7521 + $0x3f8] sm:$0xff]
    %v7650 = vld [vmem:[%s7521 + $0x400] sm:$0xff]
    %v7651 = vld [vmem:[%s7521 + $0x408] sm:$0xff]
    %v7652 = vld [vmem:[%s7521 + $0x410] sm:$0xff]
    %v7653 = vld [vmem:[%s7521 + $0x418] sm:$0xff]
    %v7654 = vld [vmem:[%s7521 + $0x420] sm:$0xff]
    %v7655 = vld [vmem:[%s7521 + $0x428] sm:$0xff]
    %v7656 = vld [vmem:[%s7521 + $0x430] sm:$0xff]
    %v7657 = vld [vmem:[%s7521 + $0x438] sm:$0xff]
    %v7658 = vld [vmem:[%s7521 + $0x440] sm:$0xff]
    %v7659 = vld [vmem:[%s7521 + $0x448] sm:$0xff]
    %v7660 = vld [vmem:[%s7521 + $0x450] sm:$0xff]
    %v7661 = vld [vmem:[%s7521 + $0x458] sm:$0xff]
    %v7662 = vld [vmem:[%s7521 + $0x460] sm:$0xff]
    %v7663 = vld [vmem:[%s7521 + $0x468] sm:$0xff]
    %v7664 = vld [vmem:[%s7521 + $0x470] sm:$0xff]
    %v7665 = vld [vmem:[%s7521 + $0x478] sm:$0xff]
    %v7666 = vld [vmem:[%s7521 + $0x480] sm:$0xff]
    %v7667 = vld [vmem:[%s7521 + $0x488] sm:$0xff]
    %v7668 = vld [vmem:[%s7521 + $0x490] sm:$0xff]
    %v7669 = vld [vmem:[%s7521 + $0x498] sm:$0xff]
    %v7670 = vld [vmem:[%s7521 + $0x4a0] sm:$0xff]
    %v7671 = vld [vmem:[%s7521 + $0x4a8] sm:$0xff]
    %v7672 = vld [vmem:[%s7521 + $0x4b0] sm:$0xff]
    %v7673 = vld [vmem:[%s7521 + $0x4b8] sm:$0xff]
    %v7674 = vld [vmem:[%s7521 + $0x4c0] sm:$0xff]
    %v7675 = vld [vmem:[%s7521 + $0x4c8] sm:$0xff]
    %v7676 = vld [vmem:[%s7521 + $0x4d0] sm:$0xff]
    %v7677 = vld [vmem:[%s7521 + $0x4d8] sm:$0xff]
    %v7678 = vld [vmem:[%s7521 + $0x4e0] sm:$0xff]
    %v7679 = vld [vmem:[%s7521 + $0x4e8] sm:$0xff]
    %v7680 = vld [vmem:[%s7521 + $0x4f0] sm:$0xff]
    %v7681 = vld [vmem:[%s7521 + $0x4f8] sm:$0xff]
    %v7682 = vld [vmem:[#allocation3 + $0x10] sm:$0xf0]
    %v7683 = vld [vmem:[#allocation3 + $0x18] sm:$0xf0]
    %v7684 = vld [vmem:[#allocation3 + $0x20] sm:$0xf]
    %v7685 = vld [vmem:[#allocation3 + $0x28] sm:$0xf]
    %v7686 = vld [vmem:[#allocation3 + $0x60] sm:$0xf0]
    %v7687 = vld [vmem:[#allocation3 + $0x68] sm:$0xf0]
    %v7688 = vld [vmem:[#allocation3 + $0x70] sm:$0xf]
    %v7689 = vld [vmem:[#allocation3 + $0x78] sm:$0xf]
    %vm7698 = vcmask 1043456
    %v7699 = vrot.slane %v7682, 4
    %v7700 = vrot.slane %v7684, 4
    %v7701 = vsel %vm7698, %v7699, %v7700
    %v7702 = vrot.slane %v7683, 4
    %v7703 = vrot.slane %v7685, 4
    %v7704 = vsel %vm7698, %v7702, %v7703
    %v7705 = vrot.slane %v7686, 4
    %v7706 = vrot.slane %v7688, 4
    %v7707 = vsel %vm7698, %v7705, %v7706
    %v7708 = vrot.slane %v7687, 4
    %v7709 = vrot.slane %v7689, 4
    %v7710 = vsel %vm7698, %v7708, %v7709
    %v7715 = vld [vmem:[#allocation3 + $0x10] sm:$0xc0]
    %v7716 = vld [vmem:[#allocation3 + $0x18] sm:$0xc0]
    %v7717 = vld [vmem:[#allocation3 + $0x20] sm:$0x3f]
    %v7718 = vld [vmem:[#allocation3 + $0x28] sm:$0x3f]
    %v7719 = vld [vmem:[#allocation3 + $0x60] sm:$0xc0]
    %v7720 = vld [vmem:[#allocation3 + $0x68] sm:$0xc0]
    %v7721 = vld [vmem:[#allocation3 + $0x70] sm:$0x3f]
    %v7722 = vld [vmem:[#allocation3 + $0x78] sm:$0x3f]
    %v7731 = vrot.slane %v7715, 6
    %v7732 = vrot.slane %v7717, 6
    %v7733 = vsel %vm246, %v7731, %v7732
    %v7734 = vrot.slane %v7716, 6
    %v7735 = vrot.slane %v7718, 6
    %v7736 = vsel %vm246, %v7734, %v7735
    %v7737 = vrot.slane %v7719, 6
    %v7738 = vrot.slane %v7721, 6
    %v7739 = vsel %vm246, %v7737, %v7738
    %v7740 = vrot.slane %v7720, 6
    %v7741 = vrot.slane %v7722, 6
    %v7742 = vsel %vm246, %v7740, %v7741
    %v7747 = vld [vmem:[#allocation3 + $0x20] sm:$0xff]
    %v7748 = vld [vmem:[#allocation3 + $0x28] sm:$0xff]
    %v7749 = vld [vmem:[#allocation3 + $0x70] sm:$0xff]
    %v7750 = vld [vmem:[#allocation3 + $0x78] sm:$0xff]
    %v7751 = vld [vmem:[#allocation3 + $0x20] sm:$0xfc]
    %v7752 = vld [vmem:[#allocation3 + $0x28] sm:$0xfc]
    %v7753 = vld [vmem:[#allocation3 + $0x30] sm:$0x3]
    %v7754 = vld [vmem:[#allocation3 + $0x38] sm:$0x3]
    %v7755 = vld [vmem:[#allocation3 + $0x70] sm:$0xfc]
    %v7756 = vld [vmem:[#allocation3 + $0x78] sm:$0xfc]
    %v7757 = vld [vmem:[#allocation3 + $0x80] sm:$0x3]
    %v7758 = vld [vmem:[#allocation3 + $0x88] sm:$0x3]
    %v7767 = vrot.slane %v7751, 2
    %v7768 = vrot.slane %v7753, 2
    %v7769 = vsel %vm6300, %v7767, %v7768
    %v7770 = vrot.slane %v7752, 2
    %v7771 = vrot.slane %v7754, 2
    %v7772 = vsel %vm6300, %v7770, %v7771
    %v7773 = vrot.slane %v7755, 2
    %v7774 = vrot.slane %v7757, 2
    %v7775 = vsel %vm6300, %v7773, %v7774
    %v7776 = vrot.slane %v7756, 2
    %v7777 = vrot.slane %v7758, 2
    %v7778 = vsel %vm6300, %v7776, %v7777
    %v7783 = vld [vmem:[#allocation3 + $0x20] sm:$0xf0]
    %v7784 = vld [vmem:[#allocation3 + $0x28] sm:$0xf0]
    %v7785 = vld [vmem:[#allocation3 + $0x30] sm:$0xf]
    %v7786 = vld [vmem:[#allocation3 + $0x38] sm:$0xf]
    %v7787 = vld [vmem:[#allocation3 + $0x70] sm:$0xf0]
    %v7788 = vld [vmem:[#allocation3 + $0x78] sm:$0xf0]
    %v7789 = vld [vmem:[#allocation3 + $0x80] sm:$0xf]
    %v7790 = vld [vmem:[#allocation3 + $0x88] sm:$0xf]
    %v7799 = vrot.slane %v7783, 4
    %v7800 = vrot.slane %v7785, 4
    %v7801 = vsel %vm7698, %v7799, %v7800
    %v7802 = vrot.slane %v7784, 4
    %v7803 = vrot.slane %v7786, 4
    %v7804 = vsel %vm7698, %v7802, %v7803
    %v7805 = vrot.slane %v7787, 4
    %v7806 = vrot.slane %v7789, 4
    %v7807 = vsel %vm7698, %v7805, %v7806
    %v7808 = vrot.slane %v7788, 4
    %v7809 = vrot.slane %v7790, 4
    %v7810 = vsel %vm7698, %v7808, %v7809
    %s7815 = scalar_lea.vmem [#allocation9], 3
    %v7816 = vld [vmem:[%s7815] ss:$8 sm:$0x3]
    %v7818 = vlaneseq
    %v7819 = vshrl.u32 %v7818, 7
    %v7820 = vsub.s32 0, %v7819
    %v7821 = vrot.slane %v7816, %v7820
    %v7822 = vlaneseq
    %v7823 = vshrl.u32 %v7822, 7
    %v7824 = vsub.s32 1, %v7823
    %v7825 = vrot.slane %v7816, %v7824
    %v7988 = vunpack.c.l.b16 %v7522
    %v7989 = vunpack.c.h.b16 %v7522
    %v7990 = vunpack.c.l.b16 %v7523
    %v7991 = vunpack.c.h.b16 %v7523
    %v7992 = vunpack.c.l.b16 %v7524
    %v7993 = vunpack.c.h.b16 %v7524
    %v7994 = vunpack.c.l.b16 %v7525
    %v7995 = vunpack.c.h.b16 %v7525
    %v7996 = vunpack.c.l.b16 %v7526
    %v7997 = vunpack.c.h.b16 %v7526
    %v7998 = vunpack.c.l.b16 %v7527
    %v7999 = vunpack.c.h.b16 %v7527
    %v8000 = vunpack.c.l.b16 %v7528
    %v8001 = vunpack.c.h.b16 %v7528
    %v8002 = vunpack.c.l.b16 %v7529
    %v8003 = vunpack.c.h.b16 %v7529
    %v8004 = vunpack.c.l.b16 %v7530
    %v8005 = vunpack.c.h.b16 %v7530
    %v8006 = vunpack.c.l.b16 %v7531
    %v8007 = vunpack.c.h.b16 %v7531
    %v8008 = vunpack.c.l.b16 %v7532
    %v8009 = vunpack.c.h.b16 %v7532
    %v8010 = vunpack.c.l.b16 %v7533
    %v8011 = vunpack.c.h.b16 %v7533
    %v8012 = vunpack.c.l.b16 %v7534
    %v8013 = vunpack.c.h.b16 %v7534
    %v8014 = vunpack.c.l.b16 %v7535
    %v8015 = vunpack.c.h.b16 %v7535
    %v8016 = vunpack.c.l.b16 %v7536
    %v8017 = vunpack.c.h.b16 %v7536
    %v8018 = vunpack.c.l.b16 %v7537
    %v8019 = vunpack.c.h.b16 %v7537
    %v8020 = vunpack.c.l.b16 %v7538
    %v8021 = vunpack.c.h.b16 %v7538
    %v8022 = vunpack.c.l.b16 %v7539
    %v8023 = vunpack.c.h.b16 %v7539
    %v8024 = vunpack.c.l.b16 %v7540
    %v8025 = vunpack.c.h.b16 %v7540
    %v8026 = vunpack.c.l.b16 %v7541
    %v8027 = vunpack.c.h.b16 %v7541
    %v8028 = vunpack.c.l.b16 %v7542
    %v8029 = vunpack.c.h.b16 %v7542
    %v8030 = vunpack.c.l.b16 %v7543
    %v8031 = vunpack.c.h.b16 %v7543
    %v8032 = vunpack.c.l.b16 %v7544
    %v8033 = vunpack.c.h.b16 %v7544
    %v8034 = vunpack.c.l.b16 %v7545
    %v8035 = vunpack.c.h.b16 %v7545
    %v8036 = vunpack.c.l.b16 %v7546
    %v8037 = vunpack.c.h.b16 %v7546
    %v8038 = vunpack.c.l.b16 %v7547
    %v8039 = vunpack.c.h.b16 %v7547
    %v8040 = vunpack.c.l.b16 %v7548
    %v8041 = vunpack.c.h.b16 %v7548
    %v8042 = vunpack.c.l.b16 %v7549
    %v8043 = vunpack.c.h.b16 %v7549
    %v8044 = vunpack.c.l.b16 %v7550
    %v8045 = vunpack.c.h.b16 %v7550
    %v8046 = vunpack.c.l.b16 %v7551
    %v8047 = vunpack.c.h.b16 %v7551
    %v8048 = vunpack.c.l.b16 %v7552
    %v8049 = vunpack.c.h.b16 %v7552
    %v8050 = vunpack.c.l.b16 %v7553
    %v8051 = vunpack.c.h.b16 %v7553
    %v8052 = vunpack.c.l.b16 %v7554
    %v8053 = vunpack.c.h.b16 %v7554
    %v8054 = vunpack.c.l.b16 %v7555
    %v8055 = vunpack.c.h.b16 %v7555
    %v8056 = vunpack.c.l.b16 %v7556
    %v8057 = vunpack.c.h.b16 %v7556
    %v8058 = vunpack.c.l.b16 %v7557
    %v8059 = vunpack.c.h.b16 %v7557
    %v8060 = vunpack.c.l.b16 %v7558
    %v8061 = vunpack.c.h.b16 %v7558
    %v8062 = vunpack.c.l.b16 %v7559
    %v8063 = vunpack.c.h.b16 %v7559
    %v8064 = vunpack.c.l.b16 %v7560
    %v8065 = vunpack.c.h.b16 %v7560
    %v8066 = vunpack.c.l.b16 %v7561
    %v8067 = vunpack.c.h.b16 %v7561
    %v8068 = vunpack.c.l.b16 %v7562
    %v8069 = vunpack.c.h.b16 %v7562
    %v8070 = vunpack.c.l.b16 %v7563
    %v8071 = vunpack.c.h.b16 %v7563
    %v8072 = vunpack.c.l.b16 %v7564
    %v8073 = vunpack.c.h.b16 %v7564
    %v8074 = vunpack.c.l.b16 %v7565
    %v8075 = vunpack.c.h.b16 %v7565
    %v8076 = vunpack.c.l.b16 %v7566
    %v8077 = vunpack.c.h.b16 %v7566
    %v8078 = vunpack.c.l.b16 %v7567
    %v8079 = vunpack.c.h.b16 %v7567
    %v8080 = vunpack.c.l.b16 %v7568
    %v8081 = vunpack.c.h.b16 %v7568
    %v8082 = vunpack.c.l.b16 %v7569
    %v8083 = vunpack.c.h.b16 %v7569
    %v8084 = vunpack.c.l.b16 %v7570
    %v8085 = vunpack.c.h.b16 %v7570
    %v8086 = vunpack.c.l.b16 %v7571
    %v8087 = vunpack.c.h.b16 %v7571
    %v8088 = vunpack.c.l.b16 %v7572
    %v8089 = vunpack.c.h.b16 %v7572
    %v8090 = vunpack.c.l.b16 %v7573
    %v8091 = vunpack.c.h.b16 %v7573
    %v8092 = vunpack.c.l.b16 %v7574
    %v8093 = vunpack.c.h.b16 %v7574
    %v8094 = vunpack.c.l.b16 %v7575
    %v8095 = vunpack.c.h.b16 %v7575
    %v8096 = vunpack.c.l.b16 %v7576
    %v8097 = vunpack.c.h.b16 %v7576
    %v8098 = vunpack.c.l.b16 %v7577
    %v8099 = vunpack.c.h.b16 %v7577
    %v8100 = vunpack.c.l.b16 %v7578
    %v8101 = vunpack.c.h.b16 %v7578
    %v8102 = vunpack.c.l.b16 %v7579
    %v8103 = vunpack.c.h.b16 %v7579
    %v8104 = vunpack.c.l.b16 %v7580
    %v8105 = vunpack.c.h.b16 %v7580
    %v8106 = vunpack.c.l.b16 %v7581
    %v8107 = vunpack.c.h.b16 %v7581
    %v8108 = vunpack.c.l.b16 %v7582
    %v8109 = vunpack.c.h.b16 %v7582
    %v8110 = vunpack.c.l.b16 %v7583
    %v8111 = vunpack.c.h.b16 %v7583
    %v8112 = vunpack.c.l.b16 %v7584
    %v8113 = vunpack.c.h.b16 %v7584
    %v8114 = vunpack.c.l.b16 %v7585
    %v8115 = vunpack.c.h.b16 %v7585
    %v8116 = vunpack.c.l.b16 %v7586
    %v8117 = vunpack.c.h.b16 %v7586
    %v8118 = vunpack.c.l.b16 %v7587
    %v8119 = vunpack.c.h.b16 %v7587
    %v8120 = vunpack.c.l.b16 %v7588
    %v8121 = vunpack.c.h.b16 %v7588
    %v8122 = vunpack.c.l.b16 %v7589
    %v8123 = vunpack.c.h.b16 %v7589
    %v8124 = vunpack.c.l.b16 %v7590
    %v8125 = vunpack.c.h.b16 %v7590
    %v8126 = vunpack.c.l.b16 %v7591
    %v8127 = vunpack.c.h.b16 %v7591
    %v8128 = vunpack.c.l.b16 %v7592
    %v8129 = vunpack.c.h.b16 %v7592
    %v8130 = vunpack.c.l.b16 %v7593
    %v8131 = vunpack.c.h.b16 %v7593
    %v8132 = vunpack.c.l.b16 %v7594
    %v8133 = vunpack.c.h.b16 %v7594
    %v8134 = vunpack.c.l.b16 %v7595
    %v8135 = vunpack.c.h.b16 %v7595
    %v8136 = vunpack.c.l.b16 %v7596
    %v8137 = vunpack.c.h.b16 %v7596
    %v8138 = vunpack.c.l.b16 %v7597
    %v8139 = vunpack.c.h.b16 %v7597
    %v8140 = vunpack.c.l.b16 %v7598
    %v8141 = vunpack.c.h.b16 %v7598
    %v8142 = vunpack.c.l.b16 %v7599
    %v8143 = vunpack.c.h.b16 %v7599
    %v8144 = vunpack.c.l.b16 %v7600
    %v8145 = vunpack.c.h.b16 %v7600
    %v8146 = vunpack.c.l.b16 %v7601
    %v8147 = vunpack.c.h.b16 %v7601
    %v8148 = vunpack.c.l.b16 %v7602
    %v8149 = vunpack.c.h.b16 %v7602
    %v8150 = vunpack.c.l.b16 %v7603
    %v8151 = vunpack.c.h.b16 %v7603
    %v8152 = vunpack.c.l.b16 %v7604
    %v8153 = vunpack.c.h.b16 %v7604
    %v8154 = vunpack.c.l.b16 %v7605
    %v8155 = vunpack.c.h.b16 %v7605
    %v8156 = vunpack.c.l.b16 %v7606
    %v8157 = vunpack.c.h.b16 %v7606
    %v8158 = vunpack.c.l.b16 %v7607
    %v8159 = vunpack.c.h.b16 %v7607
    %v8160 = vunpack.c.l.b16 %v7608
    %v8161 = vunpack.c.h.b16 %v7608
    %v8162 = vunpack.c.l.b16 %v7609
    %v8163 = vunpack.c.h.b16 %v7609
    %v8164 = vunpack.c.l.b16 %v7610
    %v8165 = vunpack.c.h.b16 %v7610
    %v8166 = vunpack.c.l.b16 %v7611
    %v8167 = vunpack.c.h.b16 %v7611
    %v8168 = vunpack.c.l.b16 %v7612
    %v8169 = vunpack.c.h.b16 %v7612
    %v8170 = vunpack.c.l.b16 %v7613
    %v8171 = vunpack.c.h.b16 %v7613
    %v8172 = vunpack.c.l.b16 %v7614
    %v8173 = vunpack.c.h.b16 %v7614
    %v8174 = vunpack.c.l.b16 %v7615
    %v8175 = vunpack.c.h.b16 %v7615
    %v8176 = vunpack.c.l.b16 %v7616
    %v8177 = vunpack.c.h.b16 %v7616
    %v8178 = vunpack.c.l.b16 %v7617
    %v8179 = vunpack.c.h.b16 %v7617
    %v8180 = vunpack.c.l.b16 %v7618
    %v8181 = vunpack.c.h.b16 %v7618
    %v8182 = vunpack.c.l.b16 %v7619
    %v8183 = vunpack.c.h.b16 %v7619
    %v8184 = vunpack.c.l.b16 %v7620
    %v8185 = vunpack.c.h.b16 %v7620
    %v8186 = vunpack.c.l.b16 %v7621
    %v8187 = vunpack.c.h.b16 %v7621
    %v8188 = vunpack.c.l.b16 %v7622
    %v8189 = vunpack.c.h.b16 %v7622
    %v8190 = vunpack.c.l.b16 %v7623
    %v8191 = vunpack.c.h.b16 %v7623
    %v8192 = vunpack.c.l.b16 %v7624
    %v8193 = vunpack.c.h.b16 %v7624
    %v8194 = vunpack.c.l.b16 %v7625
    %v8195 = vunpack.c.h.b16 %v7625
    %v8196 = vunpack.c.l.b16 %v7626
    %v8197 = vunpack.c.h.b16 %v7626
    %v8198 = vunpack.c.l.b16 %v7627
    %v8199 = vunpack.c.h.b16 %v7627
    %v8200 = vunpack.c.l.b16 %v7628
    %v8201 = vunpack.c.h.b16 %v7628
    %v8202 = vunpack.c.l.b16 %v7629
    %v8203 = vunpack.c.h.b16 %v7629
    %v8204 = vunpack.c.l.b16 %v7630
    %v8205 = vunpack.c.h.b16 %v7630
    %v8206 = vunpack.c.l.b16 %v7631
    %v8207 = vunpack.c.h.b16 %v7631
    %v8208 = vunpack.c.l.b16 %v7632
    %v8209 = vunpack.c.h.b16 %v7632
    %v8210 = vunpack.c.l.b16 %v7633
    %v8211 = vunpack.c.h.b16 %v7633
    %v8212 = vunpack.c.l.b16 %v7634
    %v8213 = vunpack.c.h.b16 %v7634
    %v8214 = vunpack.c.l.b16 %v7635
    %v8215 = vunpack.c.h.b16 %v7635
    %v8216 = vunpack.c.l.b16 %v7636
    %v8217 = vunpack.c.h.b16 %v7636
    %v8218 = vunpack.c.l.b16 %v7637
    %v8219 = vunpack.c.h.b16 %v7637
    %v8220 = vunpack.c.l.b16 %v7638
    %v8221 = vunpack.c.h.b16 %v7638
    %v8222 = vunpack.c.l.b16 %v7639
    %v8223 = vunpack.c.h.b16 %v7639
    %v8224 = vunpack.c.l.b16 %v7640
    %v8225 = vunpack.c.h.b16 %v7640
    %v8226 = vunpack.c.l.b16 %v7641
    %v8227 = vunpack.c.h.b16 %v7641
    %v8228 = vunpack.c.l.b16 %v7642
    %v8229 = vunpack.c.h.b16 %v7642
    %v8230 = vunpack.c.l.b16 %v7643
    %v8231 = vunpack.c.h.b16 %v7643
    %v8232 = vunpack.c.l.b16 %v7644
    %v8233 = vunpack.c.h.b16 %v7644
    %v8234 = vunpack.c.l.b16 %v7645
    %v8235 = vunpack.c.h.b16 %v7645
    %v8236 = vunpack.c.l.b16 %v7646
    %v8237 = vunpack.c.h.b16 %v7646
    %v8238 = vunpack.c.l.b16 %v7647
    %v8239 = vunpack.c.h.b16 %v7647
    %v8240 = vunpack.c.l.b16 %v7648
    %v8241 = vunpack.c.h.b16 %v7648
    %v8242 = vunpack.c.l.b16 %v7649
    %v8243 = vunpack.c.h.b16 %v7649
    %v8244 = vunpack.c.l.b16 %v7650
    %v8245 = vunpack.c.h.b16 %v7650
    %v8246 = vunpack.c.l.b16 %v7651
    %v8247 = vunpack.c.h.b16 %v7651
    %v8248 = vunpack.c.l.b16 %v7652
    %v8249 = vunpack.c.h.b16 %v7652
    %v8250 = vunpack.c.l.b16 %v7653
    %v8251 = vunpack.c.h.b16 %v7653
    %v8252 = vunpack.c.l.b16 %v7654
    %v8253 = vunpack.c.h.b16 %v7654
    %v8254 = vunpack.c.l.b16 %v7655
    %v8255 = vunpack.c.h.b16 %v7655
    %v8256 = vunpack.c.l.b16 %v7656
    %v8257 = vunpack.c.h.b16 %v7656
    %v8258 = vunpack.c.l.b16 %v7657
    %v8259 = vunpack.c.h.b16 %v7657
    %v8260 = vunpack.c.l.b16 %v7658
    %v8261 = vunpack.c.h.b16 %v7658
    %v8262 = vunpack.c.l.b16 %v7659
    %v8263 = vunpack.c.h.b16 %v7659
    %v8264 = vunpack.c.l.b16 %v7660
    %v8265 = vunpack.c.h.b16 %v7660
    %v8266 = vunpack.c.l.b16 %v7661
    %v8267 = vunpack.c.h.b16 %v7661
    %v8268 = vunpack.c.l.b16 %v7662
    %v8269 = vunpack.c.h.b16 %v7662
    %v8270 = vunpack.c.l.b16 %v7663
    %v8271 = vunpack.c.h.b16 %v7663
    %v8272 = vunpack.c.l.b16 %v7664
    %v8273 = vunpack.c.h.b16 %v7664
    %v8274 = vunpack.c.l.b16 %v7665
    %v8275 = vunpack.c.h.b16 %v7665
    %v8276 = vunpack.c.l.b16 %v7666
    %v8277 = vunpack.c.h.b16 %v7666
    %v8278 = vunpack.c.l.b16 %v7667
    %v8279 = vunpack.c.h.b16 %v7667
    %v8280 = vunpack.c.l.b16 %v7668
    %v8281 = vunpack.c.h.b16 %v7668
    %v8282 = vunpack.c.l.b16 %v7669
    %v8283 = vunpack.c.h.b16 %v7669
    %v8284 = vunpack.c.l.b16 %v7670
    %v8285 = vunpack.c.h.b16 %v7670
    %v8286 = vunpack.c.l.b16 %v7671
    %v8287 = vunpack.c.h.b16 %v7671
    %v8288 = vunpack.c.l.b16 %v7672
    %v8289 = vunpack.c.h.b16 %v7672
    %v8290 = vunpack.c.l.b16 %v7673
    %v8291 = vunpack.c.h.b16 %v7673
    %v8292 = vunpack.c.l.b16 %v7674
    %v8293 = vunpack.c.h.b16 %v7674
    %v8294 = vunpack.c.l.b16 %v7675
    %v8295 = vunpack.c.h.b16 %v7675
    %v8296 = vunpack.c.l.b16 %v7676
    %v8297 = vunpack.c.h.b16 %v7676
    %v8298 = vunpack.c.l.b16 %v7677
    %v8299 = vunpack.c.h.b16 %v7677
    %v8300 = vunpack.c.l.b16 %v7678
    %v8301 = vunpack.c.h.b16 %v7678
    %v8302 = vunpack.c.l.b16 %v7679
    %v8303 = vunpack.c.h.b16 %v7679
    %v8304 = vunpack.c.l.b16 %v7680
    %v8305 = vunpack.c.h.b16 %v7680
    %v8306 = vunpack.c.l.b16 %v7681
    %v8307 = vunpack.c.h.b16 %v7681
    %v8308 = vpack.c.b16 %v7990, %v7988
    %v8309 = vpack.c.b16 %v7991, %v7989
    %v8310 = vpack.c.b16 %v7994, %v7992
    %v8311 = vpack.c.b16 %v7995, %v7993
    %v8312 = vpack.c.b16 %v7998, %v7996
    %v8313 = vpack.c.b16 %v7999, %v7997
    %v8314 = vpack.c.b16 %v8002, %v8000
    %v8315 = vpack.c.b16 %v8003, %v8001
    %v8316 = vpack.c.b16 %v8006, %v8004
    %v8317 = vpack.c.b16 %v8007, %v8005
    %v8318 = vpack.c.b16 %v8010, %v8008
    %v8319 = vpack.c.b16 %v8011, %v8009
    %v8320 = vpack.c.b16 %v8014, %v8012
    %v8321 = vpack.c.b16 %v8015, %v8013
    %v8322 = vpack.c.b16 %v8018, %v8016
    %v8323 = vpack.c.b16 %v8019, %v8017
    %v8324 = vpack.c.b16 %v8022, %v8020
    %v8325 = vpack.c.b16 %v8023, %v8021
    %v8326 = vpack.c.b16 %v8026, %v8024
    %v8327 = vpack.c.b16 %v8027, %v8025
    %v8328 = vpack.c.b16 %v8030, %v8028
    %v8329 = vpack.c.b16 %v8031, %v8029
    %v8330 = vpack.c.b16 %v8034, %v8032
    %v8331 = vpack.c.b16 %v8035, %v8033
    %v8332 = vpack.c.b16 %v8038, %v8036
    %v8333 = vpack.c.b16 %v8039, %v8037
    %v8334 = vpack.c.b16 %v8042, %v8040
    %v8335 = vpack.c.b16 %v8043, %v8041
    %v8336 = vpack.c.b16 %v8046, %v8044
    %v8337 = vpack.c.b16 %v8047, %v8045
    %v8338 = vpack.c.b16 %v8050, %v8048
    %v8339 = vpack.c.b16 %v8051, %v8049
    %v8340 = vpack.c.b16 %v8054, %v8052
    %v8341 = vpack.c.b16 %v8055, %v8053
    %v8342 = vpack.c.b16 %v8058, %v8056
    %v8343 = vpack.c.b16 %v8059, %v8057
    %v8344 = vpack.c.b16 %v8062, %v8060
    %v8345 = vpack.c.b16 %v8063, %v8061
    %v8346 = vpack.c.b16 %v8066, %v8064
    %v8347 = vpack.c.b16 %v8067, %v8065
    %v8348 = vpack.c.b16 %v8070, %v8068
    %v8349 = vpack.c.b16 %v8071, %v8069
    %v8350 = vpack.c.b16 %v8074, %v8072
    %v8351 = vpack.c.b16 %v8075, %v8073
    %v8352 = vpack.c.b16 %v8078, %v8076
    %v8353 = vpack.c.b16 %v8079, %v8077
    %v8354 = vpack.c.b16 %v8082, %v8080
    %v8355 = vpack.c.b16 %v8083, %v8081
    %v8356 = vpack.c.b16 %v8086, %v8084
    %v8357 = vpack.c.b16 %v8087, %v8085
    %v8358 = vpack.c.b16 %v8090, %v8088
    %v8359 = vpack.c.b16 %v8091, %v8089
    %v8360 = vpack.c.b16 %v8094, %v8092
    %v8361 = vpack.c.b16 %v8095, %v8093
    %v8362 = vpack.c.b16 %v8098, %v8096
    %v8363 = vpack.c.b16 %v8099, %v8097
    %v8364 = vpack.c.b16 %v8102, %v8100
    %v8365 = vpack.c.b16 %v8103, %v8101
    %v8366 = vpack.c.b16 %v8106, %v8104
    %v8367 = vpack.c.b16 %v8107, %v8105
    %v8368 = vpack.c.b16 %v8110, %v8108
    %v8369 = vpack.c.b16 %v8111, %v8109
    %v8370 = vpack.c.b16 %v8114, %v8112
    %v8371 = vpack.c.b16 %v8115, %v8113
    %v8372 = vpack.c.b16 %v8118, %v8116
    %v8373 = vpack.c.b16 %v8119, %v8117
    %v8374 = vpack.c.b16 %v8122, %v8120
    %v8375 = vpack.c.b16 %v8123, %v8121
    %v8376 = vpack.c.b16 %v8126, %v8124
    %v8377 = vpack.c.b16 %v8127, %v8125
    %v8378 = vpack.c.b16 %v8130, %v8128
    %v8379 = vpack.c.b16 %v8131, %v8129
    %v8380 = vpack.c.b16 %v8134, %v8132
    %v8381 = vpack.c.b16 %v8135, %v8133
    %v8382 = vpack.c.b16 %v8138, %v8136
    %v8383 = vpack.c.b16 %v8139, %v8137
    %v8384 = vpack.c.b16 %v8142, %v8140
    %v8385 = vpack.c.b16 %v8143, %v8141
    %v8386 = vpack.c.b16 %v8146, %v8144
    %v8387 = vpack.c.b16 %v8147, %v8145
    %v8388 = vpack.c.b16 %v8150, %v8148
    %v8389 = vpack.c.b16 %v8151, %v8149
    %v8390 = vpack.c.b16 %v8154, %v8152
    %v8391 = vpack.c.b16 %v8155, %v8153
    %v8392 = vpack.c.b16 %v8158, %v8156
    %v8393 = vpack.c.b16 %v8159, %v8157
    %v8394 = vpack.c.b16 %v8162, %v8160
    %v8395 = vpack.c.b16 %v8163, %v8161
    %v8396 = vpack.c.b16 %v8166, %v8164
    %v8397 = vpack.c.b16 %v8167, %v8165
    %v8398 = vpack.c.b16 %v8170, %v8168
    %v8399 = vpack.c.b16 %v8171, %v8169
    %v8400 = vpack.c.b16 %v8174, %v8172
    %v8401 = vpack.c.b16 %v8175, %v8173
    %v8402 = vpack.c.b16 %v8178, %v8176
    %v8403 = vpack.c.b16 %v8179, %v8177
    %v8404 = vpack.c.b16 %v8182, %v8180
    %v8405 = vpack.c.b16 %v8183, %v8181
    %v8406 = vpack.c.b16 %v8186, %v8184
    %v8407 = vpack.c.b16 %v8187, %v8185
    %v8408 = vpack.c.b16 %v8190, %v8188
    %v8409 = vpack.c.b16 %v8191, %v8189
    %v8410 = vpack.c.b16 %v8194, %v8192
    %v8411 = vpack.c.b16 %v8195, %v8193
    %v8412 = vpack.c.b16 %v8198, %v8196
    %v8413 = vpack.c.b16 %v8199, %v8197
    %v8414 = vpack.c.b16 %v8202, %v8200
    %v8415 = vpack.c.b16 %v8203, %v8201
    %v8416 = vpack.c.b16 %v8206, %v8204
    %v8417 = vpack.c.b16 %v8207, %v8205
    %v8418 = vpack.c.b16 %v8210, %v8208
    %v8419 = vpack.c.b16 %v8211, %v8209
    %v8420 = vpack.c.b16 %v8214, %v8212
    %v8421 = vpack.c.b16 %v8215, %v8213
    %v8422 = vpack.c.b16 %v8218, %v8216
    %v8423 = vpack.c.b16 %v8219, %v8217
    %v8424 = vpack.c.b16 %v8222, %v8220
    %v8425 = vpack.c.b16 %v8223, %v8221
    %v8426 = vpack.c.b16 %v8226, %v8224
    %v8427 = vpack.c.b16 %v8227, %v8225
    %v8428 = vpack.c.b16 %v8230, %v8228
    %v8429 = vpack.c.b16 %v8231, %v8229
    %v8430 = vpack.c.b16 %v8234, %v8232
    %v8431 = vpack.c.b16 %v8235, %v8233
    %v8432 = vpack.c.b16 %v8238, %v8236
    %v8433 = vpack.c.b16 %v8239, %v8237
    %v8434 = vpack.c.b16 %v8242, %v8240
    %v8435 = vpack.c.b16 %v8243, %v8241
    %v8436 = vpack.c.b16 %v8246, %v8244
    %v8437 = vpack.c.b16 %v8247, %v8245
    %v8438 = vpack.c.b16 %v8250, %v8248
    %v8439 = vpack.c.b16 %v8251, %v8249
    %v8440 = vpack.c.b16 %v8254, %v8252
    %v8441 = vpack.c.b16 %v8255, %v8253
    %v8442 = vpack.c.b16 %v8258, %v8256
    %v8443 = vpack.c.b16 %v8259, %v8257
    %v8444 = vpack.c.b16 %v8262, %v8260
    %v8445 = vpack.c.b16 %v8263, %v8261
    %v8446 = vpack.c.b16 %v8266, %v8264
    %v8447 = vpack.c.b16 %v8267, %v8265
    %v8448 = vpack.c.b16 %v8270, %v8268
    %v8449 = vpack.c.b16 %v8271, %v8269
    %v8450 = vpack.c.b16 %v8274, %v8272
    %v8451 = vpack.c.b16 %v8275, %v8273
    %v8452 = vpack.c.b16 %v8278, %v8276
    %v8453 = vpack.c.b16 %v8279, %v8277
    %v8454 = vpack.c.b16 %v8282, %v8280
    %v8455 = vpack.c.b16 %v8283, %v8281
    %v8456 = vpack.c.b16 %v8286, %v8284
    %v8457 = vpack.c.b16 %v8287, %v8285
    %v8458 = vpack.c.b16 %v8290, %v8288
    %v8459 = vpack.c.b16 %v8291, %v8289
    %v8460 = vpack.c.b16 %v8294, %v8292
    %v8461 = vpack.c.b16 %v8295, %v8293
    %v8462 = vpack.c.b16 %v8298, %v8296
    %v8463 = vpack.c.b16 %v8299, %v8297
    %v8464 = vpack.c.b16 %v8302, %v8300
    %v8465 = vpack.c.b16 %v8303, %v8301
    %v8466 = vpack.c.b16 %v8306, %v8304
    %v8467 = vpack.c.b16 %v8307, %v8305
    %8628 = vmatprep.subr.bf16.mxu0 %v8309
    %8629 = vmatpush1.bf16.msra.mxu0 %v8308
    %8630 = vmatprep.subr.bf16.mxu0 %v8311
    %8631 = vmatpush1.bf16.msra.mxu0 %v8310
    %8632 = vmatprep.subr.bf16.mxu0 %v8313
    %8633 = vmatpush1.bf16.msra.mxu0 %v8312
    %8634 = vmatprep.subr.bf16.mxu0 %v8315
    %8635 = vmatpush1.bf16.msra.mxu0 %v8314
    %8636 = vmatprep.subr.bf16.mxu0 %v8317
    %8637 = vmatpush1.bf16.msra.mxu0 %v8316
    %8638 = vmatprep.subr.bf16.mxu0 %v8319
    %8639 = vmatpush1.bf16.msra.mxu0 %v8318
    %8640 = vmatprep.subr.bf16.mxu0 %v8321
    %8641 = vmatpush1.bf16.msra.mxu0 %v8320
    %8642 = vmatprep.subr.bf16.mxu0 %v8323
    %8643 = vmatpush1.bf16.msra.mxu0 %v8322
    %8644 = vmatprep.subr.bf16.mxu0 %v8325
    %8645 = vmatpush1.bf16.msra.mxu0 %v8324
    %8646 = vmatprep.subr.bf16.mxu0 %v8327
    %8647 = vmatpush1.bf16.msra.mxu0 %v8326
    %8648 = vmatprep.subr.bf16.mxu0 %v8329
    %8649 = vmatpush1.bf16.msra.mxu0 %v8328
    %8650 = vmatprep.subr.bf16.mxu0 %v8331
    %8651 = vmatpush1.bf16.msra.mxu0 %v8330
    %8652 = vmatprep.subr.bf16.mxu0 %v8333
    %8653 = vmatpush1.bf16.msra.mxu0 %v8332
    %8654 = vmatprep.subr.bf16.mxu0 %v8335
    %8655 = vmatpush1.bf16.msra.mxu0 %v8334
    %8656 = vmatprep.subr.bf16.mxu0 %v8337
    %8657 = vmatpush1.bf16.msra.mxu0 %v8336
    %8658 = vmatprep.subr.bf16.mxu0 %v8339
    %8659 = vmatpush1.bf16.msra.mxu0 %v8338
    %8660 = vmatprep.mubr.bf16.mxu0 %v7704
    %8661 = vmatmul.mubr.bf16.gmra.mrb[0].mxu0 %v7701
    %v8662 = vpop.f32.mrb[0].mxu0
    %v8663 = vadd.f32 %v7821, %v8662
    %v8664 = vpop.f32.mrb[0].mxu0
    %v8665 = vadd.f32 %v7825, %v8664
    %v8666 = vpop.f32.mrb[0].mxu0
    %v8667 = vadd.f32 %v7821, %v8666
    %v8668 = vpop.f32.mrb[0].mxu0
    %v8669 = vadd.f32 %v7825, %v8668
    %8670 = vmatprep.mubr.bf16.mxu0 %v7710
    %8671 = vmatmul.mubr.bf16.gmra.mrb[0].mxu0 %v7707
    %v8672 = vpop.f32.mrb[0].mxu0
    %v8673 = vadd.f32 %v7821, %v8672
    %v8674 = vpop.f32.mrb[0].mxu0
    %v8675 = vadd.f32 %v7825, %v8674
    %v8676 = vpop.f32.mrb[0].mxu0
    %v8677 = vadd.f32 %v7821, %v8676
    %v8678 = vpop.f32.mrb[0].mxu0
    %v8679 = vadd.f32 %v7825, %v8678
    %8680 = vdwg.mxu0
    %8681 = vmatprep.subr.bf16.mxu0 %v8341
    %8682 = vmatpush1.bf16.msra.mxu0 %v8340
    %8683 = vmatprep.subr.bf16.mxu0 %v8343
    %8684 = vmatpush1.bf16.msra.mxu0 %v8342
    %8685 = vmatprep.subr.bf16.mxu0 %v8345
    %8686 = vmatpush1.bf16.msra.mxu0 %v8344
    %8687 = vmatprep.subr.bf16.mxu0 %v8347
    %8688 = vmatpush1.bf16.msra.mxu0 %v8346
    %8689 = vmatprep.subr.bf16.mxu0 %v8349
    %8690 = vmatpush1.bf16.msra.mxu0 %v8348
    %8691 = vmatprep.subr.bf16.mxu0 %v8351
    %8692 = vmatpush1.bf16.msra.mxu0 %v8350
    %8693 = vmatprep.subr.bf16.mxu0 %v8353
    %8694 = vmatpush1.bf16.msra.mxu0 %v8352
    %8695 = vmatprep.subr.bf16.mxu0 %v8355
    %8696 = vmatpush1.bf16.msra.mxu0 %v8354
    %8697 = vmatprep.subr.bf16.mxu0 %v8357
    %8698 = vmatpush1.bf16.msra.mxu0 %v8356
    %8699 = vmatprep.subr.bf16.mxu0 %v8359
    %8700 = vmatpush1.bf16.msra.mxu0 %v8358
    %8701 = vmatprep.subr.bf16.mxu0 %v8361
    %8702 = vmatpush1.bf16.msra.mxu0 %v8360
    %8703 = vmatprep.subr.bf16.mxu0 %v8363
    %8704 = vmatpush1.bf16.msra.mxu0 %v8362
    %8705 = vmatprep.subr.bf16.mxu0 %v8365
    %8706 = vmatpush1.bf16.msra.mxu0 %v8364
    %8707 = vmatprep.subr.bf16.mxu0 %v8367
    %8708 = vmatpush1.bf16.msra.mxu0 %v8366
    %8709 = vmatprep.subr.bf16.mxu0 %v8369
    %8710 = vmatpush1.bf16.msra.mxu0 %v8368
    %8711 = vmatprep.subr.bf16.mxu0 %v8371
    %8712 = vmatpush1.bf16.msra.mxu0 %v8370
    %8713 = vmatprep.mubr.bf16.mxu0 %v7736
    %8714 = vmatmul.mubr.bf16.gmra.mrb[0].mxu0 %v7733
    %v8715 = vpop.f32.mrb[0].mxu0
    %v8716 = vadd.f32 %v8663, %v8715
    %v8717 = vpop.f32.mrb[0].mxu0
    %v8718 = vadd.f32 %v8665, %v8717
    %v8719 = vpop.f32.mrb[0].mxu0
    %v8720 = vadd.f32 %v8667, %v8719
    %v8721 = vpop.f32.mrb[0].mxu0
    %v8722 = vadd.f32 %v8669, %v8721
    %8723 = vmatprep.mubr.bf16.mxu0 %v7742
    %8724 = vmatmul.mubr.bf16.gmra.mrb[0].mxu0 %v7739
    %v8725 = vpop.f32.mrb[0].mxu0
    %v8726 = vadd.f32 %v8673, %v8725
    %v8727 = vpop.f32.mrb[0].mxu0
    %v8728 = vadd.f32 %v8675, %v8727
    %v8729 = vpop.f32.mrb[0].mxu0
    %v8730 = vadd.f32 %v8677, %v8729
    %v8731 = vpop.f32.mrb[0].mxu0
    %v8732 = vadd.f32 %v8679, %v8731
    %8733 = vdwg.mxu0
    %8734 = vmatprep.subr.bf16.mxu0 %v8373
    %8735 = vmatpush1.bf16.msra.mxu0 %v8372
    %8736 = vmatprep.subr.bf16.mxu0 %v8375
    %8737 = vmatpush1.bf16.msra.mxu0 %v8374
    %8738 = vmatprep.subr.bf16.mxu0 %v8377
    %8739 = vmatpush1.bf16.msra.mxu0 %v8376
    %8740 = vmatprep.subr.bf16.mxu0 %v8379
    %8741 = vmatpush1.bf16.msra.mxu0 %v8378
    %8742 = vmatprep.subr.bf16.mxu0 %v8381
    %8743 = vmatpush1.bf16.msra.mxu0 %v8380
    %8744 = vmatprep.subr.bf16.mxu0 %v8383
    %8745 = vmatpush1.bf16.msra.mxu0 %v8382
    %8746 = vmatprep.subr.bf16.mxu0 %v8385
    %8747 = vmatpush1.bf16.msra.mxu0 %v8384
    %8748 = vmatprep.subr.bf16.mxu0 %v8387
    %8749 = vmatpush1.bf16.msra.mxu0 %v8386
    %8750 = vmatprep.subr.bf16.mxu0 %v8389
    %8751 = vmatpush1.bf16.msra.mxu0 %v8388
    %8752 = vmatprep.subr.bf16.mxu0 %v8391
    %8753 = vmatpush1.bf16.msra.mxu0 %v8390
    %8754 = vmatprep.subr.bf16.mxu0 %v8393
    %8755 = vmatpush1.bf16.msra.mxu0 %v8392
    %8756 = vmatprep.subr.bf16.mxu0 %v8395
    %8757 = vmatpush1.bf16.msra.mxu0 %v8394
    %8758 = vmatprep.subr.bf16.mxu0 %v8397
    %8759 = vmatpush1.bf16.msra.mxu0 %v8396
    %8760 = vmatprep.subr.bf16.mxu0 %v8399
    %8761 = vmatpush1.bf16.msra.mxu0 %v8398
    %8762 = vmatprep.subr.bf16.mxu0 %v8401
    %8763 = vmatpush1.bf16.msra.mxu0 %v8400
    %8764 = vmatprep.subr.bf16.mxu0 %v8403
    %8765 = vmatpush1.bf16.msra.mxu0 %v8402
    %8766 = vmatprep.mubr.bf16.mxu0 %v7748
    %8767 = vmatmul.mubr.bf16.gmra.mrb[0].mxu0 %v7747
    %v8768 = vpop.f32.mrb[0].mxu0
    %v8769 = vadd.f32 %v8716, %v8768
    %v8770 = vpop.f32.mrb[0].mxu0
    %v8771 = vadd.f32 %v8718, %v8770
    %v8772 = vpop.f32.mrb[0].mxu0
    %v8773 = vadd.f32 %v8720, %v8772
    %v8774 = vpop.f32.mrb[0].mxu0
    %v8775 = vadd.f32 %v8722, %v8774
    %8776 = vmatprep.mubr.bf16.mxu0 %v7750
    %8777 = vmatmul.mubr.bf16.gmra.mrb[0].mxu0 %v7749
    %v8778 = vpop.f32.mrb[0].mxu0
    %v8779 = vadd.f32 %v8726, %v8778
    %v8780 = vpop.f32.mrb[0].mxu0
    %v8781 = vadd.f32 %v8728, %v8780
    %v8782 = vpop.f32.mrb[0].mxu0
    %v8783 = vadd.f32 %v8730, %v8782
    %v8784 = vpop.f32.mrb[0].mxu0
    %v8785 = vadd.f32 %v8732, %v8784
    %8786 = vdwg.mxu0
    %8787 = vmatprep.subr.bf16.mxu0 %v8405
    %8788 = vmatpush1.bf16.msra.mxu0 %v8404
    %8789 = vmatprep.subr.bf16.mxu0 %v8407
    %8790 = vmatpush1.bf16.msra.mxu0 %v8406
    %8791 = vmatprep.subr.bf16.mxu0 %v8409
    %8792 = vmatpush1.bf16.msra.mxu0 %v8408
    %8793 = vmatprep.subr.bf16.mxu0 %v8411
    %8794 = vmatpush1.bf16.msra.mxu0 %v8410
    %8795 = vmatprep.subr.bf16.mxu0 %v8413
    %8796 = vmatpush1.bf16.msra.mxu0 %v8412
    %8797 = vmatprep.subr.bf16.mxu0 %v8415
    %8798 = vmatpush1.bf16.msra.mxu0 %v8414
    %8799 = vmatprep.subr.bf16.mxu0 %v8417
    %8800 = vmatpush1.bf16.msra.mxu0 %v8416
    %8801 = vmatprep.subr.bf16.mxu0 %v8419
    %8802 = vmatpush1.bf16.msra.mxu0 %v8418
    %8803 = vmatprep.subr.bf16.mxu0 %v8421
    %8804 = vmatpush1.bf16.msra.mxu0 %v8420
    %8805 = vmatprep.subr.bf16.mxu0 %v8423
    %8806 = vmatpush1.bf16.msra.mxu0 %v8422
    %8807 = vmatprep.subr.bf16.mxu0 %v8425
    %8808 = vmatpush1.bf16.msra.mxu0 %v8424
    %8809 = vmatprep.subr.bf16.mxu0 %v8427
    %8810 = vmatpush1.bf16.msra.mxu0 %v8426
    %8811 = vmatprep.subr.bf16.mxu0 %v8429
    %8812 = vmatpush1.bf16.msra.mxu0 %v8428
    %8813 = vmatprep.subr.bf16.mxu0 %v8431
    %8814 = vmatpush1.bf16.msra.mxu0 %v8430
    %8815 = vmatprep.subr.bf16.mxu0 %v8433
    %8816 = vmatpush1.bf16.msra.mxu0 %v8432
    %8817 = vmatprep.subr.bf16.mxu0 %v8435
    %8818 = vmatpush1.bf16.msra.mxu0 %v8434
    %8819 = vmatprep.mubr.bf16.mxu0 %v7772
    %8820 = vmatmul.mubr.bf16.gmra.mrb[0].mxu0 %v7769
    %v8821 = vpop.f32.mrb[0].mxu0
    %v8822 = vadd.f32 %v8769, %v8821
    %v8823 = vpop.f32.mrb[0].mxu0
    %v8824 = vadd.f32 %v8771, %v8823
    %v8825 = vpop.f32.mrb[0].mxu0
    %v8826 = vadd.f32 %v8773, %v8825
    %v8827 = vpop.f32.mrb[0].mxu0
    %v8828 = vadd.f32 %v8775, %v8827
    %8829 = vmatprep.mubr.bf16.mxu0 %v7778
    %8830 = vmatmul.mubr.bf16.gmra.mrb[0].mxu0 %v7775
    %v8831 = vpop.f32.mrb[0].mxu0
    %v8832 = vadd.f32 %v8779, %v8831
    %v8833 = vpop.f32.mrb[0].mxu0
    %v8834 = vadd.f32 %v8781, %v8833
    %v8835 = vpop.f32.mrb[0].mxu0
    %v8836 = vadd.f32 %v8783, %v8835
    %v8837 = vpop.f32.mrb[0].mxu0
    %v8838 = vadd.f32 %v8785, %v8837
    %8839 = vdwg.mxu0
    %8840 = vmatprep.subr.bf16.mxu0 %v8437
    %8841 = vmatpush1.bf16.msra.mxu0 %v8436
    %8842 = vmatprep.subr.bf16.mxu0 %v8439
    %8843 = vmatpush1.bf16.msra.mxu0 %v8438
    %8844 = vmatprep.subr.bf16.mxu0 %v8441
    %8845 = vmatpush1.bf16.msra.mxu0 %v8440
    %8846 = vmatprep.subr.bf16.mxu0 %v8443
    %8847 = vmatpush1.bf16.msra.mxu0 %v8442
    %8848 = vmatprep.subr.bf16.mxu0 %v8445
    %8849 = vmatpush1.bf16.msra.mxu0 %v8444
    %8850 = vmatprep.subr.bf16.mxu0 %v8447
    %8851 = vmatpush1.bf16.msra.mxu0 %v8446
    %8852 = vmatprep.subr.bf16.mxu0 %v8449
    %8853 = vmatpush1.bf16.msra.mxu0 %v8448
    %8854 = vmatprep.subr.bf16.mxu0 %v8451
    %8855 = vmatpush1.bf16.msra.mxu0 %v8450
    %8856 = vmatprep.subr.bf16.mxu0 %v8453
    %8857 = vmatpush1.bf16.msra.mxu0 %v8452
    %8858 = vmatprep.subr.bf16.mxu0 %v8455
    %8859 = vmatpush1.bf16.msra.mxu0 %v8454
    %8860 = vmatprep.subr.bf16.mxu0 %v8457
    %8861 = vmatpush1.bf16.msra.mxu0 %v8456
    %8862 = vmatprep.subr.bf16.mxu0 %v8459
    %8863 = vmatpush1.bf16.msra.mxu0 %v8458
    %8864 = vmatprep.subr.bf16.mxu0 %v8461
    %8865 = vmatpush1.bf16.msra.mxu0 %v8460
    %8866 = vmatprep.subr.bf16.mxu0 %v8463
    %8867 = vmatpush1.bf16.msra.mxu0 %v8462
    %8868 = vmatprep.subr.bf16.mxu0 %v8465
    %8869 = vmatpush1.bf16.msra.mxu0 %v8464
    %8870 = vmatprep.subr.bf16.mxu0 %v8467
    %8871 = vmatpush1.bf16.msra.mxu0 %v8466
    %8872 = vmatprep.mubr.bf16.mxu0 %v7804
    %8873 = vmatmul.mubr.bf16.gmra.mrb[0].mxu0 %v7801
    %v8874 = vpop.f32.mrb[0].mxu0
    %v8875 = vadd.f32 %v8822, %v8874
    %v8876 = vpop.f32.mrb[0].mxu0
    %v8877 = vadd.f32 %v8824, %v8876
    %v8878 = vpop.f32.mrb[0].mxu0
    %v8879 = vadd.f32 %v8826, %v8878
    %v8880 = vpop.f32.mrb[0].mxu0
    %v8881 = vadd.f32 %v8828, %v8880
    %8882 = vmatprep.mubr.bf16.mxu0 %v7810
    %8883 = vmatmul.mubr.bf16.gmra.mrb[0].mxu0 %v7807
    %v8884 = vpop.f32.mrb[0].mxu0
    %v8885 = vadd.f32 %v8832, %v8884
    %v8886 = vpop.f32.mrb[0].mxu0
    %v8887 = vadd.f32 %v8834, %v8886
    %v8888 = vpop.f32.mrb[0].mxu0
    %v8889 = vadd.f32 %v8836, %v8888
    %v8890 = vpop.f32.mrb[0].mxu0
    %v8891 = vadd.f32 %v8838, %v8890
    %8892 = vdwg.mxu0
    %v8893 = vadd.f32 %v8875, %v8879
    %v8894 = vadd.f32 %v8893, %v8885
    %v8895 = vadd.f32 %v8894, %v8889
    %v8896 = vrot.slane %v8895, 4
    %v8897 = vadd.f32 %v8895, %v8896
    %v8898 = vrot.slane %v8897, 2
    %v8899 = vadd.f32 %v8897, %v8898
    %v8900 = vrot.slane %v8899, 1
    %v8901 = vadd.f32 %v8899, %v8900
    %v8902 = vadd.f32 %v8877, %v8881
    %v8903 = vadd.f32 %v8902, %v8887
    %v8904 = vadd.f32 %v8903, %v8891
    %v8905 = vrot.slane %v8904, 4
    %v8906 = vadd.f32 %v8904, %v8905
    %v8907 = vrot.slane %v8906, 2
    %v8908 = vadd.f32 %v8906, %v8907
    %v8909 = vrot.slane %v8908, 1
    %v8910 = vadd.f32 %v8908, %v8909
    %v8911 = vmul.f32 %v8901, %v4397
    %v8912 = vmul.f32 %v8910, %v4397
    %v8913 = vsub.f32 %v8875, %v8911
    %v8914 = vsub.f32 %v8877, %v8912
    %v8915 = vsub.f32 %v8879, %v8911
    %v8916 = vsub.f32 %v8881, %v8912
    %v8917 = vsub.f32 %v8885, %v8911
    %v8918 = vsub.f32 %v8887, %v8912
    %v8919 = vsub.f32 %v8889, %v8911
    %v8920 = vsub.f32 %v8891, %v8912
    %v8921 = vmul.f32 %v8913, %v8913
    %v8922 = vmul.f32 %v8914, %v8914
    %v8923 = vmul.f32 %v8915, %v8915
    %v8924 = vmul.f32 %v8916, %v8916
    %v8925 = vmul.f32 %v8917, %v8917
    %v8926 = vmul.f32 %v8918, %v8918
    %v8927 = vmul.f32 %v8919, %v8919
    %v8928 = vmul.f32 %v8920, %v8920
    %v8929 = vadd.f32 %v8921, %v8923
    %v8930 = vadd.f32 %v8929, %v8925
    %v8931 = vadd.f32 %v8930, %v8927
    %v8932 = vrot.slane %v8931, 4
    %v8933 = vadd.f32 %v8931, %v8932
    %v8934 = vrot.slane %v8933, 2
    %v8935 = vadd.f32 %v8933, %v8934
    %v8936 = vrot.slane %v8935, 1
    %v8937 = vadd.f32 %v8935, %v8936
    %v8938 = vadd.f32 %v8922, %v8924
    %v8939 = vadd.f32 %v8938, %v8926
    %v8940 = vadd.f32 %v8939, %v8928
    %v8941 = vrot.slane %v8940, 4
    %v8942 = vadd.f32 %v8940, %v8941
    %v8943 = vrot.slane %v8942, 2
    %v8944 = vadd.f32 %v8942, %v8943
    %v8945 = vrot.slane %v8944, 1
    %v8946 = vadd.f32 %v8944, %v8945
    %v8947 = vmul.f32 %v8937, %v4397
    %v8948 = vmul.f32 %v8946, %v4397
    %v8949 = vadd.f32 %v8947, 1e-05
    %v8950 = vadd.f32 %v8948, 1e-05
    %v8951 = vrsqrt.pop %v8949
    %v8952 = vrsqrt.pop %v8950
    %v8953 = vmul.f32 %v8913, %v8951
    %v8954 = vmul.f32 %v8914, %v8952
    %v8955 = vmul.f32 %v8915, %v8951
    %v8956 = vmul.f32 %v8916, %v8952
    %v8957 = vmul.f32 %v8917, %v8951
    %v8958 = vmul.f32 %v8918, %v8952
    %v8959 = vmul.f32 %v8919, %v8951
    %v8960 = vmul.f32 %v8920, %v8952
    %s8961 = scalar_lea.vmem [#allocation11], 3
    %v8962 = vld [vmem:[%s8961] ss:$8 sm:$0x3]
    %v8964 = vlaneseq
    %v8965 = vshrl.u32 %v8964, 7
    %v8966 = vsub.s32 0, %v8965
    %v8967 = vrot.slane %v8962, %v8966
    %v8968 = vlaneseq
    %v8969 = vshrl.u32 %v8968, 7
    %v8970 = vsub.s32 1, %v8969
    %v8971 = vrot.slane %v8962, %v8970
    %v8974 = vmul.f32 %v8953, %v8967
    %v8975 = vmul.f32 %v8954, %v8971
    %v8976 = vmul.f32 %v8955, %v8967
    %v8977 = vmul.f32 %v8956, %v8971
    %v8978 = vmul.f32 %v8957, %v8967
    %v8979 = vmul.f32 %v8958, %v8971
    %v8980 = vmul.f32 %v8959, %v8967
    %v8981 = vmul.f32 %v8960, %v8971
    %s8982 = scalar_lea.vmem [#allocation12], 3
    %v8983 = vld [vmem:[%s8982] ss:$8 sm:$0x3]
    %v8985 = vlaneseq
    %v8986 = vshrl.u32 %v8985, 7
    %v8987 = vsub.s32 0, %v8986
    %v8988 = vrot.slane %v8983, %v8987
    %v8989 = vlaneseq
    %v8990 = vshrl.u32 %v8989, 7
    %v8991 = vsub.s32 1, %v8990
    %v8992 = vrot.slane %v8983, %v8991
    %v8995 = vadd.f32 %v8974, %v8988
    %v8996 = vadd.f32 %v8975, %v8992
    %v8997 = vadd.f32 %v8976, %v8988
    %v8998 = vadd.f32 %v8977, %v8992
    %v8999 = vadd.f32 %v8978, %v8988
    %v9000 = vadd.f32 %v8979, %v8992
    %v9001 = vadd.f32 %v8980, %v8988
    %v9002 = vadd.f32 %v8981, %v8992
    %v9003 = vmax.f32 %v8995, 0.0
    %v9004 = vmax.f32 %v8996, 0.0
    %v9005 = vmax.f32 %v8997, 0.0
    %v9006 = vmax.f32 %v8998, 0.0
    %v9007 = vmax.f32 %v8999, 0.0
    %v9008 = vmax.f32 %v9000, 0.0
    %v9009 = vmax.f32 %v9001, 0.0
    %v9010 = vmax.f32 %v9002, 0.0
    %v9011 = vpack.c.bf16 %v9005, %v9003
    %v9012 = vpack.c.bf16 %v9006, %v9004
    %v9013 = vpack.c.bf16 %v9009, %v9007
    %v9014 = vpack.c.bf16 %v9010, %v9008
    %9015 = vst [vmem:[#allocation3 + $0x20] sm:$0xff] %v9011
    %9016 = vst [vmem:[#allocation3 + $0x28] sm:$0xff] %v9012
    %9017 = vst [vmem:[#allocation3 + $0x70] sm:$0xff] %v9013
    %9018 = vst [vmem:[#allocation3 + $0x78] sm:$0xff] %v9014
    %s9019 = scalar_lea.vmem [#allocation8], 3840
    %v9020 = vld [vmem:[%s9019] sm:$0xff]
    %v9021 = vld [vmem:[%s9019 + $0x8] sm:$0xff]
    %v9022 = vld [vmem:[%s9019 + $0x10] sm:$0xff]
    %v9023 = vld [vmem:[%s9019 + $0x18] sm:$0xff]
    %v9024 = vld [vmem:[%s9019 + $0x20] sm:$0xff]
    %v9025 = vld [vmem:[%s9019 + $0x28] sm:$0xff]
    %v9026 = vld [vmem:[%s9019 + $0x30] sm:$0xff]
    %v9027 = vld [vmem:[%s9019 + $0x38] sm:$0xff]
    %v9028 = vld [vmem:[%s9019 + $0x40] sm:$0xff]
    %v9029 = vld [vmem:[%s9019 + $0x48] sm:$0xff]
    %v9030 = vld [vmem:[%s9019 + $0x50] sm:$0xff]
    %v9031 = vld [vmem:[%s9019 + $0x58] sm:$0xff]
    %v9032 = vld [vmem:[%s9019 + $0x60] sm:$0xff]
    %v9033 = vld [vmem:[%s9019 + $0x68] sm:$0xff]
    %v9034 = vld [vmem:[%s9019 + $0x70] sm:$0xff]
    %v9035 = vld [vmem:[%s9019 + $0x78] sm:$0xff]
    %v9036 = vld [vmem:[%s9019 + $0x80] sm:$0xff]
    %v9037 = vld [vmem:[%s9019 + $0x88] sm:$0xff]
    %v9038 = vld [vmem:[%s9019 + $0x90] sm:$0xff]
    %v9039 = vld [vmem:[%s9019 + $0x98] sm:$0xff]
    %v9040 = vld [vmem:[%s9019 + $0xa0] sm:$0xff]
    %v9041 = vld [vmem:[%s9019 + $0xa8] sm:$0xff]
    %v9042 = vld [vmem:[%s9019 + $0xb0] sm:$0xff]
    %v9043 = vld [vmem:[%s9019 + $0xb8] sm:$0xff]
    %v9044 = vld [vmem:[%s9019 + $0xc0] sm:$0xff]
    %v9045 = vld [vmem:[%s9019 + $0xc8] sm:$0xff]
    %v9046 = vld [vmem:[%s9019 + $0xd0] sm:$0xff]
    %v9047 = vld [vmem:[%s9019 + $0xd8] sm:$0xff]
    %v9048 = vld [vmem:[%s9019 + $0xe0] sm:$0xff]
    %v9049 = vld [vmem:[%s9019 + $0xe8] sm:$0xff]
    %v9050 = vld [vmem:[%s9019 + $0xf0] sm:$0xff]
    %v9051 = vld [vmem:[%s9019 + $0xf8] sm:$0xff]
    %v9052 = vld [vmem:[%s9019 + $0x100] sm:$0xff]
    %v9053 = vld [vmem:[%s9019 + $0x108] sm:$0xff]
    %v9054 = vld [vmem:[%s9019 + $0x110] sm:$0xff]
    %v9055 = vld [vmem:[%s9019 + $0x118] sm:$0xff]
    %v9056 = vld [vmem:[%s9019 + $0x120] sm:$0xff]
    %v9057 = vld [vmem:[%s9019 + $0x128] sm:$0xff]
    %v9058 = vld [vmem:[%s9019 + $0x130] sm:$0xff]
    %v9059 = vld [vmem:[%s9019 + $0x138] sm:$0xff]
    %v9060 = vld [vmem:[%s9019 + $0x140] sm:$0xff]
    %v9061 = vld [vmem:[%s9019 + $0x148] sm:$0xff]
    %v9062 = vld [vmem:[%s9019 + $0x150] sm:$0xff]
    %v9063 = vld [vmem:[%s9019 + $0x158] sm:$0xff]
    %v9064 = vld [vmem:[%s9019 + $0x160] sm:$0xff]
    %v9065 = vld [vmem:[%s9019 + $0x168] sm:$0xff]
    %v9066 = vld [vmem:[%s9019 + $0x170] sm:$0xff]
    %v9067 = vld [vmem:[%s9019 + $0x178] sm:$0xff]
    %v9068 = vld [vmem:[%s9019 + $0x180] sm:$0xff]
    %v9069 = vld [vmem:[%s9019 + $0x188] sm:$0xff]
    %v9070 = vld [vmem:[%s9019 + $0x190] sm:$0xff]
    %v9071 = vld [vmem:[%s9019 + $0x198] sm:$0xff]
    %v9072 = vld [vmem:[%s9019 + $0x1a0] sm:$0xff]
    %v9073 = vld [vmem:[%s9019 + $0x1a8] sm:$0xff]
    %v9074 = vld [vmem:[%s9019 + $0x1b0] sm:$0xff]
    %v9075 = vld [vmem:[%s9019 + $0x1b8] sm:$0xff]
    %v9076 = vld [vmem:[%s9019 + $0x1c0] sm:$0xff]
    %v9077 = vld [vmem:[%s9019 + $0x1c8] sm:$0xff]
    %v9078 = vld [vmem:[%s9019 + $0x1d0] sm:$0xff]
    %v9079 = vld [vmem:[%s9019 + $0x1d8] sm:$0xff]
    %v9080 = vld [vmem:[%s9019 + $0x1e0] sm:$0xff]
    %v9081 = vld [vmem:[%s9019 + $0x1e8] sm:$0xff]
    %v9082 = vld [vmem:[%s9019 + $0x1f0] sm:$0xff]
    %v9083 = vld [vmem:[%s9019 + $0x1f8] sm:$0xff]
    %v9084 = vld [vmem:[%s9019 + $0x200] sm:$0xff]
    %v9085 = vld [vmem:[%s9019 + $0x208] sm:$0xff]
    %v9086 = vld [vmem:[%s9019 + $0x210] sm:$0xff]
    %v9087 = vld [vmem:[%s9019 + $0x218] sm:$0xff]
    %v9088 = vld [vmem:[%s9019 + $0x220] sm:$0xff]
    %v9089 = vld [vmem:[%s9019 + $0x228] sm:$0xff]
    %v9090 = vld [vmem:[%s9019 + $0x230] sm:$0xff]
    %v9091 = vld [vmem:[%s9019 + $0x238] sm:$0xff]
    %v9092 = vld [vmem:[%s9019 + $0x240] sm:$0xff]
    %v9093 = vld [vmem:[%s9019 + $0x248] sm:$0xff]
    %v9094 = vld [vmem:[%s9019 + $0x250] sm:$0xff]
    %v9095 = vld [vmem:[%s9019 + $0x258] sm:$0xff]
    %v9096 = vld [vmem:[%s9019 + $0x260] sm:$0xff]
    %v9097 = vld [vmem:[%s9019 + $0x268] sm:$0xff]
    %v9098 = vld [vmem:[%s9019 + $0x270] sm:$0xff]
    %v9099 = vld [vmem:[%s9019 + $0x278] sm:$0xff]
    %v9100 = vld [vmem:[%s9019 + $0x280] sm:$0xff]
    %v9101 = vld [vmem:[%s9019 + $0x288] sm:$0xff]
    %v9102 = vld [vmem:[%s9019 + $0x290] sm:$0xff]
    %v9103 = vld [vmem:[%s9019 + $0x298] sm:$0xff]
    %v9104 = vld [vmem:[%s9019 + $0x2a0] sm:$0xff]
    %v9105 = vld [vmem:[%s9019 + $0x2a8] sm:$0xff]
    %v9106 = vld [vmem:[%s9019 + $0x2b0] sm:$0xff]
    %v9107 = vld [vmem:[%s9019 + $0x2b8] sm:$0xff]
    %v9108 = vld [vmem:[%s9019 + $0x2c0] sm:$0xff]
    %v9109 = vld [vmem:[%s9019 + $0x2c8] sm:$0xff]
    %v9110 = vld [vmem:[%s9019 + $0x2d0] sm:$0xff]
    %v9111 = vld [vmem:[%s9019 + $0x2d8] sm:$0xff]
    %v9112 = vld [vmem:[%s9019 + $0x2e0] sm:$0xff]
    %v9113 = vld [vmem:[%s9019 + $0x2e8] sm:$0xff]
    %v9114 = vld [vmem:[%s9019 + $0x2f0] sm:$0xff]
    %v9115 = vld [vmem:[%s9019 + $0x2f8] sm:$0xff]
    %v9116 = vld [vmem:[%s9019 + $0x300] sm:$0xff]
    %v9117 = vld [vmem:[%s9019 + $0x308] sm:$0xff]
    %v9118 = vld [vmem:[%s9019 + $0x310] sm:$0xff]
    %v9119 = vld [vmem:[%s9019 + $0x318] sm:$0xff]
    %v9120 = vld [vmem:[%s9019 + $0x320] sm:$0xff]
    %v9121 = vld [vmem:[%s9019 + $0x328] sm:$0xff]
    %v9122 = vld [vmem:[%s9019 + $0x330] sm:$0xff]
    %v9123 = vld [vmem:[%s9019 + $0x338] sm:$0xff]
    %v9124 = vld [vmem:[%s9019 + $0x340] sm:$0xff]
    %v9125 = vld [vmem:[%s9019 + $0x348] sm:$0xff]
    %v9126 = vld [vmem:[%s9019 + $0x350] sm:$0xff]
    %v9127 = vld [vmem:[%s9019 + $0x358] sm:$0xff]
    %v9128 = vld [vmem:[%s9019 + $0x360] sm:$0xff]
    %v9129 = vld [vmem:[%s9019 + $0x368] sm:$0xff]
    %v9130 = vld [vmem:[%s9019 + $0x370] sm:$0xff]
    %v9131 = vld [vmem:[%s9019 + $0x378] sm:$0xff]
    %v9132 = vld [vmem:[%s9019 + $0x380] sm:$0xff]
    %v9133 = vld [vmem:[%s9019 + $0x388] sm:$0xff]
    %v9134 = vld [vmem:[%s9019 + $0x390] sm:$0xff]
    %v9135 = vld [vmem:[%s9019 + $0x398] sm:$0xff]
    %v9136 = vld [vmem:[%s9019 + $0x3a0] sm:$0xff]
    %v9137 = vld [vmem:[%s9019 + $0x3a8] sm:$0xff]
    %v9138 = vld [vmem:[%s9019 + $0x3b0] sm:$0xff]
    %v9139 = vld [vmem:[%s9019 + $0x3b8] sm:$0xff]
    %v9140 = vld [vmem:[%s9019 + $0x3c0] sm:$0xff]
    %v9141 = vld [vmem:[%s9019 + $0x3c8] sm:$0xff]
    %v9142 = vld [vmem:[%s9019 + $0x3d0] sm:$0xff]
    %v9143 = vld [vmem:[%s9019 + $0x3d8] sm:$0xff]
    %v9144 = vld [vmem:[%s9019 + $0x3e0] sm:$0xff]
    %v9145 = vld [vmem:[%s9019 + $0x3e8] sm:$0xff]
    %v9146 = vld [vmem:[%s9019 + $0x3f0] sm:$0xff]
    %v9147 = vld [vmem:[%s9019 + $0x3f8] sm:$0xff]
    %v9148 = vld [vmem:[%s9019 + $0x400] sm:$0xff]
    %v9149 = vld [vmem:[%s9019 + $0x408] sm:$0xff]
    %v9150 = vld [vmem:[%s9019 + $0x410] sm:$0xff]
    %v9151 = vld [vmem:[%s9019 + $0x418] sm:$0xff]
    %v9152 = vld [vmem:[%s9019 + $0x420] sm:$0xff]
    %v9153 = vld [vmem:[%s9019 + $0x428] sm:$0xff]
    %v9154 = vld [vmem:[%s9019 + $0x430] sm:$0xff]
    %v9155 = vld [vmem:[%s9019 + $0x438] sm:$0xff]
    %v9156 = vld [vmem:[%s9019 + $0x440] sm:$0xff]
    %v9157 = vld [vmem:[%s9019 + $0x448] sm:$0xff]
    %v9158 = vld [vmem:[%s9019 + $0x450] sm:$0xff]
    %v9159 = vld [vmem:[%s9019 + $0x458] sm:$0xff]
    %v9160 = vld [vmem:[%s9019 + $0x460] sm:$0xff]
    %v9161 = vld [vmem:[%s9019 + $0x468] sm:$0xff]
    %v9162 = vld [vmem:[%s9019 + $0x470] sm:$0xff]
    %v9163 = vld [vmem:[%s9019 + $0x478] sm:$0xff]
    %v9164 = vld [vmem:[%s9019 + $0x480] sm:$0xff]
    %v9165 = vld [vmem:[%s9019 + $0x488] sm:$0xff]
    %v9166 = vld [vmem:[%s9019 + $0x490] sm:$0xff]
    %v9167 = vld [vmem:[%s9019 + $0x498] sm:$0xff]
    %v9168 = vld [vmem:[%s9019 + $0x4a0] sm:$0xff]
    %v9169 = vld [vmem:[%s9019 + $0x4a8] sm:$0xff]
    %v9170 = vld [vmem:[%s9019 + $0x4b0] sm:$0xff]
    %v9171 = vld [vmem:[%s9019 + $0x4b8] sm:$0xff]
    %v9172 = vld [vmem:[%s9019 + $0x4c0] sm:$0xff]
    %v9173 = vld [vmem:[%s9019 + $0x4c8] sm:$0xff]
    %v9174 = vld [vmem:[%s9019 + $0x4d0] sm:$0xff]
    %v9175 = vld [vmem:[%s9019 + $0x4d8] sm:$0xff]
    %v9176 = vld [vmem:[%s9019 + $0x4e0] sm:$0xff]
    %v9177 = vld [vmem:[%s9019 + $0x4e8] sm:$0xff]
    %v9178 = vld [vmem:[%s9019 + $0x4f0] sm:$0xff]
    %v9179 = vld [vmem:[%s9019 + $0x4f8] sm:$0xff]
    %v9180 = vld [vmem:[#allocation3 + $0x10] sm:$0xff]
    %v9181 = vld [vmem:[#allocation3 + $0x18] sm:$0xff]
    %v9182 = vld [vmem:[#allocation3 + $0x60] sm:$0xff]
    %v9183 = vld [vmem:[#allocation3 + $0x68] sm:$0xff]
    %v9184 = vld [vmem:[#allocation3 + $0x10] sm:$0xf0]
    %v9185 = vld [vmem:[#allocation3 + $0x18] sm:$0xf0]
    %v9186 = vld [vmem:[#allocation3 + $0x20] sm:$0xf]
    %v9187 = vld [vmem:[#allocation3 + $0x28] sm:$0xf]
    %v9188 = vld [vmem:[#allocation3 + $0x60] sm:$0xf0]
    %v9189 = vld [vmem:[#allocation3 + $0x68] sm:$0xf0]
    %v9190 = vld [vmem:[#allocation3 + $0x70] sm:$0xf]
    %v9191 = vld [vmem:[#allocation3 + $0x78] sm:$0xf]
    %v9200 = vrot.slane %v9184, 4
    %v9201 = vrot.slane %v9186, 4
    %v9202 = vsel %vm7698, %v9200, %v9201
    %v9203 = vrot.slane %v9185, 4
    %v9204 = vrot.slane %v9187, 4
    %v9205 = vsel %vm7698, %v9203, %v9204
    %v9206 = vrot.slane %v9188, 4
    %v9207 = vrot.slane %v9190, 4
    %v9208 = vsel %vm7698, %v9206, %v9207
    %v9209 = vrot.slane %v9189, 4
    %v9210 = vrot.slane %v9191, 4
    %v9211 = vsel %vm7698, %v9209, %v9210
    %v9216 = vld [vmem:[#allocation3 + $0x20] sm:$0xff]
    %v9217 = vld [vmem:[#allocation3 + $0x28] sm:$0xff]
    %v9218 = vld [vmem:[#allocation3 + $0x70] sm:$0xff]
    %v9219 = vld [vmem:[#allocation3 + $0x78] sm:$0xff]
    %v9220 = vld [vmem:[#allocation3 + $0x20] sm:$0xf0]
    %v9221 = vld [vmem:[#allocation3 + $0x28] sm:$0xf0]
    %v9222 = vld [vmem:[#allocation3 + $0x30] sm:$0xf]
    %v9223 = vld [vmem:[#allocation3 + $0x38] sm:$0xf]
    %v9224 = vld [vmem:[#allocation3 + $0x70] sm:$0xf0]
    %v9225 = vld [vmem:[#allocation3 + $0x78] sm:$0xf0]
    %v9226 = vld [vmem:[#allocation3 + $0x80] sm:$0xf]
    %v9227 = vld [vmem:[#allocation3 + $0x88] sm:$0xf]
    %v9236 = vrot.slane %v9220, 4
    %v9237 = vrot.slane %v9222, 4
    %v9238 = vsel %vm7698, %v9236, %v9237
    %v9239 = vrot.slane %v9221, 4
    %v9240 = vrot.slane %v9223, 4
    %v9241 = vsel %vm7698, %v9239, %v9240
    %v9242 = vrot.slane %v9224, 4
    %v9243 = vrot.slane %v9226, 4
    %v9244 = vsel %vm7698, %v9242, %v9243
    %v9245 = vrot.slane %v9225, 4
    %v9246 = vrot.slane %v9227, 4
    %v9247 = vsel %vm7698, %v9245, %v9246
    %v9252 = vld [vmem:[#allocation3 + $0x30] sm:$0xff]
    %v9253 = vld [vmem:[#allocation3 + $0x38] sm:$0xff]
    %v9254 = vld [vmem:[#allocation3 + $0x80] sm:$0xff]
    %v9255 = vld [vmem:[#allocation3 + $0x88] sm:$0xff]
    %s9256 = scalar_lea.vmem [#allocation9], 4
    %v9257 = vld [vmem:[%s9256] ss:$8 sm:$0x3]
    %v9259 = vlaneseq
    %v9260 = vshrl.u32 %v9259, 7
    %v9261 = vsub.s32 0, %v9260
    %v9262 = vrot.slane %v9257, %v9261
    %v9263 = vlaneseq
    %v9264 = vshrl.u32 %v9263, 7
    %v9265 = vsub.s32 1, %v9264
    %v9266 = vrot.slane %v9257, %v9265
    %v9429 = vunpack.c.l.b16 %v9020
    %v9430 = vunpack.c.h.b16 %v9020
    %v9431 = vunpack.c.l.b16 %v9021
    %v9432 = vunpack.c.h.b16 %v9021
    %v9433 = vunpack.c.l.b16 %v9022
    %v9434 = vunpack.c.h.b16 %v9022
    %v9435 = vunpack.c.l.b16 %v9023
    %v9436 = vunpack.c.h.b16 %v9023
    %v9437 = vunpack.c.l.b16 %v9024
    %v9438 = vunpack.c.h.b16 %v9024
    %v9439 = vunpack.c.l.b16 %v9025
    %v9440 = vunpack.c.h.b16 %v9025
    %v9441 = vunpack.c.l.b16 %v9026
    %v9442 = vunpack.c.h.b16 %v9026
    %v9443 = vunpack.c.l.b16 %v9027
    %v9444 = vunpack.c.h.b16 %v9027
    %v9445 = vunpack.c.l.b16 %v9028
    %v9446 = vunpack.c.h.b16 %v9028
    %v9447 = vunpack.c.l.b16 %v9029
    %v9448 = vunpack.c.h.b16 %v9029
    %v9449 = vunpack.c.l.b16 %v9030
    %v9450 = vunpack.c.h.b16 %v9030
    %v9451 = vunpack.c.l.b16 %v9031
    %v9452 = vunpack.c.h.b16 %v9031
    %v9453 = vunpack.c.l.b16 %v9032
    %v9454 = vunpack.c.h.b16 %v9032
    %v9455 = vunpack.c.l.b16 %v9033
    %v9456 = vunpack.c.h.b16 %v9033
    %v9457 = vunpack.c.l.b16 %v9034
    %v9458 = vunpack.c.h.b16 %v9034
    %v9459 = vunpack.c.l.b16 %v9035
    %v9460 = vunpack.c.h.b16 %v9035
    %v9461 = vunpack.c.l.b16 %v9036
    %v9462 = vunpack.c.h.b16 %v9036
    %v9463 = vunpack.c.l.b16 %v9037
    %v9464 = vunpack.c.h.b16 %v9037
    %v9465 = vunpack.c.l.b16 %v9038
    %v9466 = vunpack.c.h.b16 %v9038
    %v9467 = vunpack.c.l.b16 %v9039
    %v9468 = vunpack.c.h.b16 %v9039
    %v9469 = vunpack.c.l.b16 %v9040
    %v9470 = vunpack.c.h.b16 %v9040
    %v9471 = vunpack.c.l.b16 %v9041
    %v9472 = vunpack.c.h.b16 %v9041
    %v9473 = vunpack.c.l.b16 %v9042
    %v9474 = vunpack.c.h.b16 %v9042
    %v9475 = vunpack.c.l.b16 %v9043
    %v9476 = vunpack.c.h.b16 %v9043
    %v9477 = vunpack.c.l.b16 %v9044
    %v9478 = vunpack.c.h.b16 %v9044
    %v9479 = vunpack.c.l.b16 %v9045
    %v9480 = vunpack.c.h.b16 %v9045
    %v9481 = vunpack.c.l.b16 %v9046
    %v9482 = vunpack.c.h.b16 %v9046
    %v9483 = vunpack.c.l.b16 %v9047
    %v9484 = vunpack.c.h.b16 %v9047
    %v9485 = vunpack.c.l.b16 %v9048
    %v9486 = vunpack.c.h.b16 %v9048
    %v9487 = vunpack.c.l.b16 %v9049
    %v9488 = vunpack.c.h.b16 %v9049
    %v9489 = vunpack.c.l.b16 %v9050
    %v9490 = vunpack.c.h.b16 %v9050
    %v9491 = vunpack.c.l.b16 %v9051
    %v9492 = vunpack.c.h.b16 %v9051
    %v9493 = vunpack.c.l.b16 %v9052
    %v9494 = vunpack.c.h.b16 %v9052
    %v9495 = vunpack.c.l.b16 %v9053
    %v9496 = vunpack.c.h.b16 %v9053
    %v9497 = vunpack.c.l.b16 %v9054
    %v9498 = vunpack.c.h.b16 %v9054
    %v9499 = vunpack.c.l.b16 %v9055
    %v9500 = vunpack.c.h.b16 %v9055
    %v9501 = vunpack.c.l.b16 %v9056
    %v9502 = vunpack.c.h.b16 %v9056
    %v9503 = vunpack.c.l.b16 %v9057
    %v9504 = vunpack.c.h.b16 %v9057
    %v9505 = vunpack.c.l.b16 %v9058
    %v9506 = vunpack.c.h.b16 %v9058
    %v9507 = vunpack.c.l.b16 %v9059
    %v9508 = vunpack.c.h.b16 %v9059
    %v9509 = vunpack.c.l.b16 %v9060
    %v9510 = vunpack.c.h.b16 %v9060
    %v9511 = vunpack.c.l.b16 %v9061
    %v9512 = vunpack.c.h.b16 %v9061
    %v9513 = vunpack.c.l.b16 %v9062
    %v9514 = vunpack.c.h.b16 %v9062
    %v9515 = vunpack.c.l.b16 %v9063
    %v9516 = vunpack.c.h.b16 %v9063
    %v9517 = vunpack.c.l.b16 %v9064
    %v9518 = vunpack.c.h.b16 %v9064
    %v9519 = vunpack.c.l.b16 %v9065
    %v9520 = vunpack.c.h.b16 %v9065
    %v9521 = vunpack.c.l.b16 %v9066
    %v9522 = vunpack.c.h.b16 %v9066
    %v9523 = vunpack.c.l.b16 %v9067
    %v9524 = vunpack.c.h.b16 %v9067
    %v9525 = vunpack.c.l.b16 %v9068
    %v9526 = vunpack.c.h.b16 %v9068
    %v9527 = vunpack.c.l.b16 %v9069
    %v9528 = vunpack.c.h.b16 %v9069
    %v9529 = vunpack.c.l.b16 %v9070
    %v9530 = vunpack.c.h.b16 %v9070
    %v9531 = vunpack.c.l.b16 %v9071
    %v9532 = vunpack.c.h.b16 %v9071
    %v9533 = vunpack.c.l.b16 %v9072
    %v9534 = vunpack.c.h.b16 %v9072
    %v9535 = vunpack.c.l.b16 %v9073
    %v9536 = vunpack.c.h.b16 %v9073
    %v9537 = vunpack.c.l.b16 %v9074
    %v9538 = vunpack.c.h.b16 %v9074
    %v9539 = vunpack.c.l.b16 %v9075
    %v9540 = vunpack.c.h.b16 %v9075
    %v9541 = vunpack.c.l.b16 %v9076
    %v9542 = vunpack.c.h.b16 %v9076
    %v9543 = vunpack.c.l.b16 %v9077
    %v9544 = vunpack.c.h.b16 %v9077
    %v9545 = vunpack.c.l.b16 %v9078
    %v9546 = vunpack.c.h.b16 %v9078
    %v9547 = vunpack.c.l.b16 %v9079
    %v9548 = vunpack.c.h.b16 %v9079
    %v9549 = vunpack.c.l.b16 %v9080
    %v9550 = vunpack.c.h.b16 %v9080
    %v9551 = vunpack.c.l.b16 %v9081
    %v9552 = vunpack.c.h.b16 %v9081
    %v9553 = vunpack.c.l.b16 %v9082
    %v9554 = vunpack.c.h.b16 %v9082
    %v9555 = vunpack.c.l.b16 %v9083
    %v9556 = vunpack.c.h.b16 %v9083
    %v9557 = vunpack.c.l.b16 %v9084
    %v9558 = vunpack.c.h.b16 %v9084
    %v9559 = vunpack.c.l.b16 %v9085
    %v9560 = vunpack.c.h.b16 %v9085
    %v9561 = vunpack.c.l.b16 %v9086
    %v9562 = vunpack.c.h.b16 %v9086
    %v9563 = vunpack.c.l.b16 %v9087
    %v9564 = vunpack.c.h.b16 %v9087
    %v9565 = vunpack.c.l.b16 %v9088
    %v9566 = vunpack.c.h.b16 %v9088
    %v9567 = vunpack.c.l.b16 %v9089
    %v9568 = vunpack.c.h.b16 %v9089
    %v9569 = vunpack.c.l.b16 %v9090
    %v9570 = vunpack.c.h.b16 %v9090
    %v9571 = vunpack.c.l.b16 %v9091
    %v9572 = vunpack.c.h.b16 %v9091
    %v9573 = vunpack.c.l.b16 %v9092
    %v9574 = vunpack.c.h.b16 %v9092
    %v9575 = vunpack.c.l.b16 %v9093
    %v9576 = vunpack.c.h.b16 %v9093
    %v9577 = vunpack.c.l.b16 %v9094
    %v9578 = vunpack.c.h.b16 %v9094
    %v9579 = vunpack.c.l.b16 %v9095
    %v9580 = vunpack.c.h.b16 %v9095
    %v9581 = vunpack.c.l.b16 %v9096
    %v9582 = vunpack.c.h.b16 %v9096
    %v9583 = vunpack.c.l.b16 %v9097
    %v9584 = vunpack.c.h.b16 %v9097
    %v9585 = vunpack.c.l.b16 %v9098
    %v9586 = vunpack.c.h.b16 %v9098
    %v9587 = vunpack.c.l.b16 %v9099
    %v9588 = vunpack.c.h.b16 %v9099
    %v9589 = vunpack.c.l.b16 %v9100
    %v9590 = vunpack.c.h.b16 %v9100
    %v9591 = vunpack.c.l.b16 %v9101
    %v9592 = vunpack.c.h.b16 %v9101
    %v9593 = vunpack.c.l.b16 %v9102
    %v9594 = vunpack.c.h.b16 %v9102
    %v9595 = vunpack.c.l.b16 %v9103
    %v9596 = vunpack.c.h.b16 %v9103
    %v9597 = vunpack.c.l.b16 %v9104
    %v9598 = vunpack.c.h.b16 %v9104
    %v9599 = vunpack.c.l.b16 %v9105
    %v9600 = vunpack.c.h.b16 %v9105
    %v9601 = vunpack.c.l.b16 %v9106
    %v9602 = vunpack.c.h.b16 %v9106
    %v9603 = vunpack.c.l.b16 %v9107
    %v9604 = vunpack.c.h.b16 %v9107
    %v9605 = vunpack.c.l.b16 %v9108
    %v9606 = vunpack.c.h.b16 %v9108
    %v9607 = vunpack.c.l.b16 %v9109
    %v9608 = vunpack.c.h.b16 %v9109
    %v9609 = vunpack.c.l.b16 %v9110
    %v9610 = vunpack.c.h.b16 %v9110
    %v9611 = vunpack.c.l.b16 %v9111
    %v9612 = vunpack.c.h.b16 %v9111
    %v9613 = vunpack.c.l.b16 %v9112
    %v9614 = vunpack.c.h.b16 %v9112
    %v9615 = vunpack.c.l.b16 %v9113
    %v9616 = vunpack.c.h.b16 %v9113
    %v9617 = vunpack.c.l.b16 %v9114
    %v9618 = vunpack.c.h.b16 %v9114
    %v9619 = vunpack.c.l.b16 %v9115
    %v9620 = vunpack.c.h.b16 %v9115
    %v9621 = vunpack.c.l.b16 %v9116
    %v9622 = vunpack.c.h.b16 %v9116
    %v9623 = vunpack.c.l.b16 %v9117
    %v9624 = vunpack.c.h.b16 %v9117
    %v9625 = vunpack.c.l.b16 %v9118
    %v9626 = vunpack.c.h.b16 %v9118
    %v9627 = vunpack.c.l.b16 %v9119
    %v9628 = vunpack.c.h.b16 %v9119
    %v9629 = vunpack.c.l.b16 %v9120
    %v9630 = vunpack.c.h.b16 %v9120
    %v9631 = vunpack.c.l.b16 %v9121
    %v9632 = vunpack.c.h.b16 %v9121
    %v9633 = vunpack.c.l.b16 %v9122
    %v9634 = vunpack.c.h.b16 %v9122
    %v9635 = vunpack.c.l.b16 %v9123
    %v9636 = vunpack.c.h.b16 %v9123
    %v9637 = vunpack.c.l.b16 %v9124
    %v9638 = vunpack.c.h.b16 %v9124
    %v9639 = vunpack.c.l.b16 %v9125
    %v9640 = vunpack.c.h.b16 %v9125
    %v9641 = vunpack.c.l.b16 %v9126
    %v9642 = vunpack.c.h.b16 %v9126
    %v9643 = vunpack.c.l.b16 %v9127
    %v9644 = vunpack.c.h.b16 %v9127
    %v9645 = vunpack.c.l.b16 %v9128
    %v9646 = vunpack.c.h.b16 %v9128
    %v9647 = vunpack.c.l.b16 %v9129
    %v9648 = vunpack.c.h.b16 %v9129
    %v9649 = vunpack.c.l.b16 %v9130
    %v9650 = vunpack.c.h.b16 %v9130
    %v9651 = vunpack.c.l.b16 %v9131
    %v9652 = vunpack.c.h.b16 %v9131
    %v9653 = vunpack.c.l.b16 %v9132
    %v9654 = vunpack.c.h.b16 %v9132
    %v9655 = vunpack.c.l.b16 %v9133
    %v9656 = vunpack.c.h.b16 %v9133
    %v9657 = vunpack.c.l.b16 %v9134
    %v9658 = vunpack.c.h.b16 %v9134
    %v9659 = vunpack.c.l.b16 %v9135
    %v9660 = vunpack.c.h.b16 %v9135
    %v9661 = vunpack.c.l.b16 %v9136
    %v9662 = vunpack.c.h.b16 %v9136
    %v9663 = vunpack.c.l.b16 %v9137
    %v9664 = vunpack.c.h.b16 %v9137
    %v9665 = vunpack.c.l.b16 %v9138
    %v9666 = vunpack.c.h.b16 %v9138
    %v9667 = vunpack.c.l.b16 %v9139
    %v9668 = vunpack.c.h.b16 %v9139
    %v9669 = vunpack.c.l.b16 %v9140
    %v9670 = vunpack.c.h.b16 %v9140
    %v9671 = vunpack.c.l.b16 %v9141
    %v9672 = vunpack.c.h.b16 %v9141
    %v9673 = vunpack.c.l.b16 %v9142
    %v9674 = vunpack.c.h.b16 %v9142
    %v9675 = vunpack.c.l.b16 %v9143
    %v9676 = vunpack.c.h.b16 %v9143
    %v9677 = vunpack.c.l.b16 %v9144
    %v9678 = vunpack.c.h.b16 %v9144
    %v9679 = vunpack.c.l.b16 %v9145
    %v9680 = vunpack.c.h.b16 %v9145
    %v9681 = vunpack.c.l.b16 %v9146
    %v9682 = vunpack.c.h.b16 %v9146
    %v9683 = vunpack.c.l.b16 %v9147
    %v9684 = vunpack.c.h.b16 %v9147
    %v9685 = vunpack.c.l.b16 %v9148
    %v9686 = vunpack.c.h.b16 %v9148
    %v9687 = vunpack.c.l.b16 %v9149
    %v9688 = vunpack.c.h.b16 %v9149
    %v9689 = vunpack.c.l.b16 %v9150
    %v9690 = vunpack.c.h.b16 %v9150
    %v9691 = vunpack.c.l.b16 %v9151
    %v9692 = vunpack.c.h.b16 %v9151
    %v9693 = vunpack.c.l.b16 %v9152
    %v9694 = vunpack.c.h.b16 %v9152
    %v9695 = vunpack.c.l.b16 %v9153
    %v9696 = vunpack.c.h.b16 %v9153
    %v9697 = vunpack.c.l.b16 %v9154
    %v9698 = vunpack.c.h.b16 %v9154
    %v9699 = vunpack.c.l.b16 %v9155
    %v9700 = vunpack.c.h.b16 %v9155
    %v9701 = vunpack.c.l.b16 %v9156
    %v9702 = vunpack.c.h.b16 %v9156
    %v9703 = vunpack.c.l.b16 %v9157
    %v9704 = vunpack.c.h.b16 %v9157
    %v9705 = vunpack.c.l.b16 %v9158
    %v9706 = vunpack.c.h.b16 %v9158
    %v9707 = vunpack.c.l.b16 %v9159
    %v9708 = vunpack.c.h.b16 %v9159
    %v9709 = vunpack.c.l.b16 %v9160
    %v9710 = vunpack.c.h.b16 %v9160
    %v9711 = vunpack.c.l.b16 %v9161
    %v9712 = vunpack.c.h.b16 %v9161
    %v9713 = vunpack.c.l.b16 %v9162
    %v9714 = vunpack.c.h.b16 %v9162
    %v9715 = vunpack.c.l.b16 %v9163
    %v9716 = vunpack.c.h.b16 %v9163
    %v9717 = vunpack.c.l.b16 %v9164
    %v9718 = vunpack.c.h.b16 %v9164
    %v9719 = vunpack.c.l.b16 %v9165
    %v9720 = vunpack.c.h.b16 %v9165
    %v9721 = vunpack.c.l.b16 %v9166
    %v9722 = vunpack.c.h.b16 %v9166
    %v9723 = vunpack.c.l.b16 %v9167
    %v9724 = vunpack.c.h.b16 %v9167
    %v9725 = vunpack.c.l.b16 %v9168
    %v9726 = vunpack.c.h.b16 %v9168
    %v9727 = vunpack.c.l.b16 %v9169
    %v9728 = vunpack.c.h.b16 %v9169
    %v9729 = vunpack.c.l.b16 %v9170
    %v9730 = vunpack.c.h.b16 %v9170
    %v9731 = vunpack.c.l.b16 %v9171
    %v9732 = vunpack.c.h.b16 %v9171
    %v9733 = vunpack.c.l.b16 %v9172
    %v9734 = vunpack.c.h.b16 %v9172
    %v9735 = vunpack.c.l.b16 %v9173
    %v9736 = vunpack.c.h.b16 %v9173
    %v9737 = vunpack.c.l.b16 %v9174
    %v9738 = vunpack.c.h.b16 %v9174
    %v9739 = vunpack.c.l.b16 %v9175
    %v9740 = vunpack.c.h.b16 %v9175
    %v9741 = vunpack.c.l.b16 %v9176
    %v9742 = vunpack.c.h.b16 %v9176
    %v9743 = vunpack.c.l.b16 %v9177
    %v9744 = vunpack.c.h.b16 %v9177
    %v9745 = vunpack.c.l.b16 %v9178
    %v9746 = vunpack.c.h.b16 %v9178
    %v9747 = vunpack.c.l.b16 %v9179
    %v9748 = vunpack.c.h.b16 %v9179
    %v9749 = vpack.c.b16 %v9431, %v9429
    %v9750 = vpack.c.b16 %v9432, %v9430
    %v9751 = vpack.c.b16 %v9435, %v9433
    %v9752 = vpack.c.b16 %v9436, %v9434
    %v9753 = vpack.c.b16 %v9439, %v9437
    %v9754 = vpack.c.b16 %v9440, %v9438
    %v9755 = vpack.c.b16 %v9443, %v9441
    %v9756 = vpack.c.b16 %v9444, %v9442
    %v9757 = vpack.c.b16 %v9447, %v9445
    %v9758 = vpack.c.b16 %v9448, %v9446
    %v9759 = vpack.c.b16 %v9451, %v9449
    %v9760 = vpack.c.b16 %v9452, %v9450
    %v9761 = vpack.c.b16 %v9455, %v9453
    %v9762 = vpack.c.b16 %v9456, %v9454
    %v9763 = vpack.c.b16 %v9459, %v9457
    %v9764 = vpack.c.b16 %v9460, %v9458
    %v9765 = vpack.c.b16 %v9463, %v9461
    %v9766 = vpack.c.b16 %v9464, %v9462
    %v9767 = vpack.c.b16 %v9467, %v9465
    %v9768 = vpack.c.b16 %v9468, %v9466
    %v9769 = vpack.c.b16 %v9471, %v9469
    %v9770 = vpack.c.b16 %v9472, %v9470
    %v9771 = vpack.c.b16 %v9475, %v9473
    %v9772 = vpack.c.b16 %v9476, %v9474
    %v9773 = vpack.c.b16 %v9479, %v9477
    %v9774 = vpack.c.b16 %v9480, %v9478
    %v9775 = vpack.c.b16 %v9483, %v9481
    %v9776 = vpack.c.b16 %v9484, %v9482
    %v9777 = vpack.c.b16 %v9487, %v9485
    %v9778 = vpack.c.b16 %v9488, %v9486
    %v9779 = vpack.c.b16 %v9491, %v9489
    %v9780 = vpack.c.b16 %v9492, %v9490
    %v9781 = vpack.c.b16 %v9495, %v9493
    %v9782 = vpack.c.b16 %v9496, %v9494
    %v9783 = vpack.c.b16 %v9499, %v9497
    %v9784 = vpack.c.b16 %v9500, %v9498
    %v9785 = vpack.c.b16 %v9503, %v9501
    %v9786 = vpack.c.b16 %v9504, %v9502
    %v9787 = vpack.c.b16 %v9507, %v9505
    %v9788 = vpack.c.b16 %v9508, %v9506
    %v9789 = vpack.c.b16 %v9511, %v9509
    %v9790 = vpack.c.b16 %v9512, %v9510
    %v9791 = vpack.c.b16 %v9515, %v9513
    %v9792 = vpack.c.b16 %v9516, %v9514
    %v9793 = vpack.c.b16 %v9519, %v9517
    %v9794 = vpack.c.b16 %v9520, %v9518
    %v9795 = vpack.c.b16 %v9523, %v9521
    %v9796 = vpack.c.b16 %v9524, %v9522
    %v9797 = vpack.c.b16 %v9527, %v9525
    %v9798 = vpack.c.b16 %v9528, %v9526
    %v9799 = vpack.c.b16 %v9531, %v9529
    %v9800 = vpack.c.b16 %v9532, %v9530
    %v9801 = vpack.c.b16 %v9535, %v9533
    %v9802 = vpack.c.b16 %v9536, %v9534
    %v9803 = vpack.c.b16 %v9539, %v9537
    %v9804 = vpack.c.b16 %v9540, %v9538
    %v9805 = vpack.c.b16 %v9543, %v9541
    %v9806 = vpack.c.b16 %v9544, %v9542
    %v9807 = vpack.c.b16 %v9547, %v9545
    %v9808 = vpack.c.b16 %v9548, %v9546
    %v9809 = vpack.c.b16 %v9551, %v9549
    %v9810 = vpack.c.b16 %v9552, %v9550
    %v9811 = vpack.c.b16 %v9555, %v9553
    %v9812 = vpack.c.b16 %v9556, %v9554
    %v9813 = vpack.c.b16 %v9559, %v9557
    %v9814 = vpack.c.b16 %v9560, %v9558
    %v9815 = vpack.c.b16 %v9563, %v9561
    %v9816 = vpack.c.b16 %v9564, %v9562
    %v9817 = vpack.c.b16 %v9567, %v9565
    %v9818 = vpack.c.b16 %v9568, %v9566
    %v9819 = vpack.c.b16 %v9571, %v9569
    %v9820 = vpack.c.b16 %v9572, %v9570
    %v9821 = vpack.c.b16 %v9575, %v9573
    %v9822 = vpack.c.b16 %v9576, %v9574
    %v9823 = vpack.c.b16 %v9579, %v9577
    %v9824 = vpack.c.b16 %v9580, %v9578
    %v9825 = vpack.c.b16 %v9583, %v9581
    %v9826 = vpack.c.b16 %v9584, %v9582
    %v9827 = vpack.c.b16 %v9587, %v9585
    %v9828 = vpack.c.b16 %v9588, %v9586
    %v9829 = vpack.c.b16 %v9591, %v9589
    %v9830 = vpack.c.b16 %v9592, %v9590
    %v9831 = vpack.c.b16 %v9595, %v9593
    %v9832 = vpack.c.b16 %v9596, %v9594
    %v9833 = vpack.c.b16 %v9599, %v9597
    %v9834 = vpack.c.b16 %v9600, %v9598
    %v9835 = vpack.c.b16 %v9603, %v9601
    %v9836 = vpack.c.b16 %v9604, %v9602
    %v9837 = vpack.c.b16 %v9607, %v9605
    %v9838 = vpack.c.b16 %v9608, %v9606
    %v9839 = vpack.c.b16 %v9611, %v9609
    %v9840 = vpack.c.b16 %v9612, %v9610
    %v9841 = vpack.c.b16 %v9615, %v9613
    %v9842 = vpack.c.b16 %v9616, %v9614
    %v9843 = vpack.c.b16 %v9619, %v9617
    %v9844 = vpack.c.b16 %v9620, %v9618
    %v9845 = vpack.c.b16 %v9623, %v9621
    %v9846 = vpack.c.b16 %v9624, %v9622
    %v9847 = vpack.c.b16 %v9627, %v9625
    %v9848 = vpack.c.b16 %v9628, %v9626
    %v9849 = vpack.c.b16 %v9631, %v9629
    %v9850 = vpack.c.b16 %v9632, %v9630
    %v9851 = vpack.c.b16 %v9635, %v9633
    %v9852 = vpack.c.b16 %v9636, %v9634
    %v9853 = vpack.c.b16 %v9639, %v9637
    %v9854 = vpack.c.b16 %v9640, %v9638
    %v9855 = vpack.c.b16 %v9643, %v9641
    %v9856 = vpack.c.b16 %v9644, %v9642
    %v9857 = vpack.c.b16 %v9647, %v9645
    %v9858 = vpack.c.b16 %v9648, %v9646
    %v9859 = vpack.c.b16 %v9651, %v9649
    %v9860 = vpack.c.b16 %v9652, %v9650
    %v9861 = vpack.c.b16 %v9655, %v9653
    %v9862 = vpack.c.b16 %v9656, %v9654
    %v9863 = vpack.c.b16 %v9659, %v9657
    %v9864 = vpack.c.b16 %v9660, %v9658
    %v9865 = vpack.c.b16 %v9663, %v9661
    %v9866 = vpack.c.b16 %v9664, %v9662
    %v9867 = vpack.c.b16 %v9667, %v9665
    %v9868 = vpack.c.b16 %v9668, %v9666
    %v9869 = vpack.c.b16 %v9671, %v9669
    %v9870 = vpack.c.b16 %v9672, %v9670
    %v9871 = vpack.c.b16 %v9675, %v9673
    %v9872 = vpack.c.b16 %v9676, %v9674
    %v9873 = vpack.c.b16 %v9679, %v9677
    %v9874 = vpack.c.b16 %v9680, %v9678
    %v9875 = vpack.c.b16 %v9683, %v9681
    %v9876 = vpack.c.b16 %v9684, %v9682
    %v9877 = vpack.c.b16 %v9687, %v9685
    %v9878 = vpack.c.b16 %v9688, %v9686
    %v9879 = vpack.c.b16 %v9691, %v9689
    %v9880 = vpack.c.b16 %v9692, %v9690
    %v9881 = vpack.c.b16 %v9695, %v9693
    %v9882 = vpack.c.b16 %v9696, %v9694
    %v9883 = vpack.c.b16 %v9699, %v9697
    %v9884 = vpack.c.b16 %v9700, %v9698
    %v9885 = vpack.c.b16 %v9703, %v9701
    %v9886 = vpack.c.b16 %v9704, %v9702
    %v9887 = vpack.c.b16 %v9707, %v9705
    %v9888 = vpack.c.b16 %v9708, %v9706
    %v9889 = vpack.c.b16 %v9711, %v9709
    %v9890 = vpack.c.b16 %v9712, %v9710
    %v9891 = vpack.c.b16 %v9715, %v9713
    %v9892 = vpack.c.b16 %v9716, %v9714
    %v9893 = vpack.c.b16 %v9719, %v9717
    %v9894 = vpack.c.b16 %v9720, %v9718
    %v9895 = vpack.c.b16 %v9723, %v9721
    %v9896 = vpack.c.b16 %v9724, %v9722
    %v9897 = vpack.c.b16 %v9727, %v9725
    %v9898 = vpack.c.b16 %v9728, %v9726
    %v9899 = vpack.c.b16 %v9731, %v9729
    %v9900 = vpack.c.b16 %v9732, %v9730
    %v9901 = vpack.c.b16 %v9735, %v9733
    %v9902 = vpack.c.b16 %v9736, %v9734
    %v9903 = vpack.c.b16 %v9739, %v9737
    %v9904 = vpack.c.b16 %v9740, %v9738
    %v9905 = vpack.c.b16 %v9743, %v9741
    %v9906 = vpack.c.b16 %v9744, %v9742
    %v9907 = vpack.c.b16 %v9747, %v9745
    %v9908 = vpack.c.b16 %v9748, %v9746
    %10069 = vmatprep.subr.bf16.mxu0 %v9750
    %10070 = vmatpush1.bf16.msra.mxu0 %v9749
    %10071 = vmatprep.subr.bf16.mxu0 %v9752
    %10072 = vmatpush1.bf16.msra.mxu0 %v9751
    %10073 = vmatprep.subr.bf16.mxu0 %v9754
    %10074 = vmatpush1.bf16.msra.mxu0 %v9753
    %10075 = vmatprep.subr.bf16.mxu0 %v9756
    %10076 = vmatpush1.bf16.msra.mxu0 %v9755
    %10077 = vmatprep.subr.bf16.mxu0 %v9758
    %10078 = vmatpush1.bf16.msra.mxu0 %v9757
    %10079 = vmatprep.subr.bf16.mxu0 %v9760
    %10080 = vmatpush1.bf16.msra.mxu0 %v9759
    %10081 = vmatprep.subr.bf16.mxu0 %v9762
    %10082 = vmatpush1.bf16.msra.mxu0 %v9761
    %10083 = vmatprep.subr.bf16.mxu0 %v9764
    %10084 = vmatpush1.bf16.msra.mxu0 %v9763
    %10085 = vmatprep.subr.bf16.mxu0 %v9766
    %10086 = vmatpush1.bf16.msra.mxu0 %v9765
    %10087 = vmatprep.subr.bf16.mxu0 %v9768
    %10088 = vmatpush1.bf16.msra.mxu0 %v9767
    %10089 = vmatprep.subr.bf16.mxu0 %v9770
    %10090 = vmatpush1.bf16.msra.mxu0 %v9769
    %10091 = vmatprep.subr.bf16.mxu0 %v9772
    %10092 = vmatpush1.bf16.msra.mxu0 %v9771
    %10093 = vmatprep.subr.bf16.mxu0 %v9774
    %10094 = vmatpush1.bf16.msra.mxu0 %v9773
    %10095 = vmatprep.subr.bf16.mxu0 %v9776
    %10096 = vmatpush1.bf16.msra.mxu0 %v9775
    %10097 = vmatprep.subr.bf16.mxu0 %v9778
    %10098 = vmatpush1.bf16.msra.mxu0 %v9777
    %10099 = vmatprep.subr.bf16.mxu0 %v9780
    %10100 = vmatpush1.bf16.msra.mxu0 %v9779
    %10101 = vmatprep.mubr.bf16.mxu0 %v9181
    %10102 = vmatmul.mubr.bf16.gmra.mrb[0].mxu0 %v9180
    %v10103 = vpop.f32.mrb[0].mxu0
    %v10104 = vadd.f32 %v9262, %v10103
    %v10105 = vpop.f32.mrb[0].mxu0
    %v10106 = vadd.f32 %v9266, %v10105
    %v10107 = vpop.f32.mrb[0].mxu0
    %v10108 = vadd.f32 %v9262, %v10107
    %v10109 = vpop.f32.mrb[0].mxu0
    %v10110 = vadd.f32 %v9266, %v10109
    %10111 = vmatprep.mubr.bf16.mxu0 %v9183
    %10112 = vmatmul.mubr.bf16.gmra.mrb[0].mxu0 %v9182
    %v10113 = vpop.f32.mrb[0].mxu0
    %v10114 = vadd.f32 %v9262, %v10113
    %v10115 = vpop.f32.mrb[0].mxu0
    %v10116 = vadd.f32 %v9266, %v10115
    %v10117 = vpop.f32.mrb[0].mxu0
    %v10118 = vadd.f32 %v9262, %v10117
    %v10119 = vpop.f32.mrb[0].mxu0
    %v10120 = vadd.f32 %v9266, %v10119
    %10121 = vdwg.mxu0
    %10122 = vmatprep.subr.bf16.mxu0 %v9782
    %10123 = vmatpush1.bf16.msra.mxu0 %v9781
    %10124 = vmatprep.subr.bf16.mxu0 %v9784
    %10125 = vmatpush1.bf16.msra.mxu0 %v9783
    %10126 = vmatprep.subr.bf16.mxu0 %v9786
    %10127 = vmatpush1.bf16.msra.mxu0 %v9785
    %10128 = vmatprep.subr.bf16.mxu0 %v9788
    %10129 = vmatpush1.bf16.msra.mxu0 %v9787
    %10130 = vmatprep.subr.bf16.mxu0 %v9790
    %10131 = vmatpush1.bf16.msra.mxu0 %v9789
    %10132 = vmatprep.subr.bf16.mxu0 %v9792
    %10133 = vmatpush1.bf16.msra.mxu0 %v9791
    %10134 = vmatprep.subr.bf16.mxu0 %v9794
    %10135 = vmatpush1.bf16.msra.mxu0 %v9793
    %10136 = vmatprep.subr.bf16.mxu0 %v9796
    %10137 = vmatpush1.bf16.msra.mxu0 %v9795
    %10138 = vmatprep.subr.bf16.mxu0 %v9798
    %10139 = vmatpush1.bf16.msra.mxu0 %v9797
    %10140 = vmatprep.subr.bf16.mxu0 %v9800
    %10141 = vmatpush1.bf16.msra.mxu0 %v9799
    %10142 = vmatprep.subr.bf16.mxu0 %v9802
    %10143 = vmatpush1.bf16.msra.mxu0 %v9801
    %10144 = vmatprep.subr.bf16.mxu0 %v9804
    %10145 = vmatpush1.bf16.msra.mxu0 %v9803
    %10146 = vmatprep.subr.bf16.mxu0 %v9806
    %10147 = vmatpush1.bf16.msra.mxu0 %v9805
    %10148 = vmatprep.subr.bf16.mxu0 %v9808
    %10149 = vmatpush1.bf16.msra.mxu0 %v9807
    %10150 = vmatprep.subr.bf16.mxu0 %v9810
    %10151 = vmatpush1.bf16.msra.mxu0 %v9809
    %10152 = vmatprep.subr.bf16.mxu0 %v9812
    %10153 = vmatpush1.bf16.msra.mxu0 %v9811
    %10154 = vmatprep.mubr.bf16.mxu0 %v9205
    %10155 = vmatmul.mubr.bf16.gmra.mrb[0].mxu0 %v9202
    %v10156 = vpop.f32.mrb[0].mxu0
    %v10157 = vadd.f32 %v10104, %v10156
    %v10158 = vpop.f32.mrb[0].mxu0
    %v10159 = vadd.f32 %v10106, %v10158
    %v10160 = vpop.f32.mrb[0].mxu0
    %v10161 = vadd.f32 %v10108, %v10160
    %v10162 = vpop.f32.mrb[0].mxu0
    %v10163 = vadd.f32 %v10110, %v10162
    %10164 = vmatprep.mubr.bf16.mxu0 %v9211
    %10165 = vmatmul.mubr.bf16.gmra.mrb[0].mxu0 %v9208
    %v10166 = vpop.f32.mrb[0].mxu0
    %v10167 = vadd.f32 %v10114, %v10166
    %v10168 = vpop.f32.mrb[0].mxu0
    %v10169 = vadd.f32 %v10116, %v10168
    %v10170 = vpop.f32.mrb[0].mxu0
    %v10171 = vadd.f32 %v10118, %v10170
    %v10172 = vpop.f32.mrb[0].mxu0
    %v10173 = vadd.f32 %v10120, %v10172
    %10174 = vdwg.mxu0
    %10175 = vmatprep.subr.bf16.mxu0 %v9814
    %10176 = vmatpush1.bf16.msra.mxu0 %v9813
    %10177 = vmatprep.subr.bf16.mxu0 %v9816
    %10178 = vmatpush1.bf16.msra.mxu0 %v9815
    %10179 = vmatprep.subr.bf16.mxu0 %v9818
    %10180 = vmatpush1.bf16.msra.mxu0 %v9817
    %10181 = vmatprep.subr.bf16.mxu0 %v9820
    %10182 = vmatpush1.bf16.msra.mxu0 %v9819
    %10183 = vmatprep.subr.bf16.mxu0 %v9822
    %10184 = vmatpush1.bf16.msra.mxu0 %v9821
    %10185 = vmatprep.subr.bf16.mxu0 %v9824
    %10186 = vmatpush1.bf16.msra.mxu0 %v9823
    %10187 = vmatprep.subr.bf16.mxu0 %v9826
    %10188 = vmatpush1.bf16.msra.mxu0 %v9825
    %10189 = vmatprep.subr.bf16.mxu0 %v9828
    %10190 = vmatpush1.bf16.msra.mxu0 %v9827
    %10191 = vmatprep.subr.bf16.mxu0 %v9830
    %10192 = vmatpush1.bf16.msra.mxu0 %v9829
    %10193 = vmatprep.subr.bf16.mxu0 %v9832
    %10194 = vmatpush1.bf16.msra.mxu0 %v9831
    %10195 = vmatprep.subr.bf16.mxu0 %v9834
    %10196 = vmatpush1.bf16.msra.mxu0 %v9833
    %10197 = vmatprep.subr.bf16.mxu0 %v9836
    %10198 = vmatpush1.bf16.msra.mxu0 %v9835
    %10199 = vmatprep.subr.bf16.mxu0 %v9838
    %10200 = vmatpush1.bf16.msra.mxu0 %v9837
    %10201 = vmatprep.subr.bf16.mxu0 %v9840
    %10202 = vmatpush1.bf16.msra.mxu0 %v9839
    %10203 = vmatprep.subr.bf16.mxu0 %v9842
    %10204 = vmatpush1.bf16.msra.mxu0 %v9841
    %10205 = vmatprep.subr.bf16.mxu0 %v9844
    %10206 = vmatpush1.bf16.msra.mxu0 %v9843
    %10207 = vmatprep.mubr.bf16.mxu0 %v9217
    %10208 = vmatmul.mubr.bf16.gmra.mrb[0].mxu0 %v9216
    %v10209 = vpop.f32.mrb[0].mxu0
    %v10210 = vadd.f32 %v10157, %v10209
    %v10211 = vpop.f32.mrb[0].mxu0
    %v10212 = vadd.f32 %v10159, %v10211
    %v10213 = vpop.f32.mrb[0].mxu0
    %v10214 = vadd.f32 %v10161, %v10213
    %v10215 = vpop.f32.mrb[0].mxu0
    %v10216 = vadd.f32 %v10163, %v10215
    %10217 = vmatprep.mubr.bf16.mxu0 %v9219
    %10218 = vmatmul.mubr.bf16.gmra.mrb[0].mxu0 %v9218
    %v10219 = vpop.f32.mrb[0].mxu0
    %v10220 = vadd.f32 %v10167, %v10219
    %v10221 = vpop.f32.mrb[0].mxu0
    %v10222 = vadd.f32 %v10169, %v10221
    %v10223 = vpop.f32.mrb[0].mxu0
    %v10224 = vadd.f32 %v10171, %v10223
    %v10225 = vpop.f32.mrb[0].mxu0
    %v10226 = vadd.f32 %v10173, %v10225
    %10227 = vdwg.mxu0
    %10228 = vmatprep.subr.bf16.mxu0 %v9846
    %10229 = vmatpush1.bf16.msra.mxu0 %v9845
    %10230 = vmatprep.subr.bf16.mxu0 %v9848
    %10231 = vmatpush1.bf16.msra.mxu0 %v9847
    %10232 = vmatprep.subr.bf16.mxu0 %v9850
    %10233 = vmatpush1.bf16.msra.mxu0 %v9849
    %10234 = vmatprep.subr.bf16.mxu0 %v9852
    %10235 = vmatpush1.bf16.msra.mxu0 %v9851
    %10236 = vmatprep.subr.bf16.mxu0 %v9854
    %10237 = vmatpush1.bf16.msra.mxu0 %v9853
    %10238 = vmatprep.subr.bf16.mxu0 %v9856
    %10239 = vmatpush1.bf16.msra.mxu0 %v9855
    %10240 = vmatprep.subr.bf16.mxu0 %v9858
    %10241 = vmatpush1.bf16.msra.mxu0 %v9857
    %10242 = vmatprep.subr.bf16.mxu0 %v9860
    %10243 = vmatpush1.bf16.msra.mxu0 %v9859
    %10244 = vmatprep.subr.bf16.mxu0 %v9862
    %10245 = vmatpush1.bf16.msra.mxu0 %v9861
    %10246 = vmatprep.subr.bf16.mxu0 %v9864
    %10247 = vmatpush1.bf16.msra.mxu0 %v9863
    %10248 = vmatprep.subr.bf16.mxu0 %v9866
    %10249 = vmatpush1.bf16.msra.mxu0 %v9865
    %10250 = vmatprep.subr.bf16.mxu0 %v9868
    %10251 = vmatpush1.bf16.msra.mxu0 %v9867
    %10252 = vmatprep.subr.bf16.mxu0 %v9870
    %10253 = vmatpush1.bf16.msra.mxu0 %v9869
    %10254 = vmatprep.subr.bf16.mxu0 %v9872
    %10255 = vmatpush1.bf16.msra.mxu0 %v9871
    %10256 = vmatprep.subr.bf16.mxu0 %v9874
    %10257 = vmatpush1.bf16.msra.mxu0 %v9873
    %10258 = vmatprep.subr.bf16.mxu0 %v9876
    %10259 = vmatpush1.bf16.msra.mxu0 %v9875
    %10260 = vmatprep.mubr.bf16.mxu0 %v9241
    %10261 = vmatmul.mubr.bf16.gmra.mrb[0].mxu0 %v9238
    %v10262 = vpop.f32.mrb[0].mxu0
    %v10263 = vadd.f32 %v10210, %v10262
    %v10264 = vpop.f32.mrb[0].mxu0
    %v10265 = vadd.f32 %v10212, %v10264
    %v10266 = vpop.f32.mrb[0].mxu0
    %v10267 = vadd.f32 %v10214, %v10266
    %v10268 = vpop.f32.mrb[0].mxu0
    %v10269 = vadd.f32 %v10216, %v10268
    %10270 = vmatprep.mubr.bf16.mxu0 %v9247
    %10271 = vmatmul.mubr.bf16.gmra.mrb[0].mxu0 %v9244
    %v10272 = vpop.f32.mrb[0].mxu0
    %v10273 = vadd.f32 %v10220, %v10272
    %v10274 = vpop.f32.mrb[0].mxu0
    %v10275 = vadd.f32 %v10222, %v10274
    %v10276 = vpop.f32.mrb[0].mxu0
    %v10277 = vadd.f32 %v10224, %v10276
    %v10278 = vpop.f32.mrb[0].mxu0
    %v10279 = vadd.f32 %v10226, %v10278
    %10280 = vdwg.mxu0
    %10281 = vmatprep.subr.bf16.mxu0 %v9878
    %10282 = vmatpush1.bf16.msra.mxu0 %v9877
    %10283 = vmatprep.subr.bf16.mxu0 %v9880
    %10284 = vmatpush1.bf16.msra.mxu0 %v9879
    %10285 = vmatprep.subr.bf16.mxu0 %v9882
    %10286 = vmatpush1.bf16.msra.mxu0 %v9881
    %10287 = vmatprep.subr.bf16.mxu0 %v9884
    %10288 = vmatpush1.bf16.msra.mxu0 %v9883
    %10289 = vmatprep.subr.bf16.mxu0 %v9886
    %10290 = vmatpush1.bf16.msra.mxu0 %v9885
    %10291 = vmatprep.subr.bf16.mxu0 %v9888
    %10292 = vmatpush1.bf16.msra.mxu0 %v9887
    %10293 = vmatprep.subr.bf16.mxu0 %v9890
    %10294 = vmatpush1.bf16.msra.mxu0 %v9889
    %10295 = vmatprep.subr.bf16.mxu0 %v9892
    %10296 = vmatpush1.bf16.msra.mxu0 %v9891
    %10297 = vmatprep.subr.bf16.mxu0 %v9894
    %10298 = vmatpush1.bf16.msra.mxu0 %v9893
    %10299 = vmatprep.subr.bf16.mxu0 %v9896
    %10300 = vmatpush1.bf16.msra.mxu0 %v9895
    %10301 = vmatprep.subr.bf16.mxu0 %v9898
    %10302 = vmatpush1.bf16.msra.mxu0 %v9897
    %10303 = vmatprep.subr.bf16.mxu0 %v9900
    %10304 = vmatpush1.bf16.msra.mxu0 %v9899
    %10305 = vmatprep.subr.bf16.mxu0 %v9902
    %10306 = vmatpush1.bf16.msra.mxu0 %v9901
    %10307 = vmatprep.subr.bf16.mxu0 %v9904
    %10308 = vmatpush1.bf16.msra.mxu0 %v9903
    %10309 = vmatprep.subr.bf16.mxu0 %v9906
    %10310 = vmatpush1.bf16.msra.mxu0 %v9905
    %10311 = vmatprep.subr.bf16.mxu0 %v9908
    %10312 = vmatpush1.bf16.msra.mxu0 %v9907
    %10313 = vmatprep.mubr.bf16.mxu0 %v9253
    %10314 = vmatmul.mubr.bf16.gmra.mrb[0].mxu0 %v9252
    %v10315 = vpop.f32.mrb[0].mxu0
    %v10316 = vadd.f32 %v10263, %v10315
    %v10317 = vpop.f32.mrb[0].mxu0
    %v10318 = vadd.f32 %v10265, %v10317
    %v10319 = vpop.f32.mrb[0].mxu0
    %v10320 = vadd.f32 %v10267, %v10319
    %v10321 = vpop.f32.mrb[0].mxu0
    %v10322 = vadd.f32 %v10269, %v10321
    %10323 = vmatprep.mubr.bf16.mxu0 %v9255
    %10324 = vmatmul.mubr.bf16.gmra.mrb[0].mxu0 %v9254
    %v10325 = vpop.f32.mrb[0].mxu0
    %v10326 = vadd.f32 %v10273, %v10325
    %v10327 = vpop.f32.mrb[0].mxu0
    %v10328 = vadd.f32 %v10275, %v10327
    %v10329 = vpop.f32.mrb[0].mxu0
    %v10330 = vadd.f32 %v10277, %v10329
    %v10331 = vpop.f32.mrb[0].mxu0
    %v10332 = vadd.f32 %v10279, %v10331
    %10333 = vdwg.mxu0
    %v10334 = vadd.f32 %v10316, %v10320
    %v10335 = vadd.f32 %v10334, %v10326
    %v10336 = vadd.f32 %v10335, %v10330
    %v10337 = vrot.slane %v10336, 4
    %v10338 = vadd.f32 %v10336, %v10337
    %v10339 = vrot.slane %v10338, 2
    %v10340 = vadd.f32 %v10338, %v10339
    %v10341 = vrot.slane %v10340, 1
    %v10342 = vadd.f32 %v10340, %v10341
    %v10343 = vadd.f32 %v10318, %v10322
    %v10344 = vadd.f32 %v10343, %v10328
    %v10345 = vadd.f32 %v10344, %v10332
    %v10346 = vrot.slane %v10345, 4
    %v10347 = vadd.f32 %v10345, %v10346
    %v10348 = vrot.slane %v10347, 2
    %v10349 = vadd.f32 %v10347, %v10348
    %v10350 = vrot.slane %v10349, 1
    %v10351 = vadd.f32 %v10349, %v10350
    %v10352 = vmul.f32 %v10342, %v4397
    %v10353 = vmul.f32 %v10351, %v4397
    %v10354 = vsub.f32 %v10316, %v10352
    %v10355 = vsub.f32 %v10318, %v10353
    %v10356 = vsub.f32 %v10320, %v10352
    %v10357 = vsub.f32 %v10322, %v10353
    %v10358 = vsub.f32 %v10326, %v10352
    %v10359 = vsub.f32 %v10328, %v10353
    %v10360 = vsub.f32 %v10330, %v10352
    %v10361 = vsub.f32 %v10332, %v10353
    %v10362 = vmul.f32 %v10354, %v10354
    %v10363 = vmul.f32 %v10355, %v10355
    %v10364 = vmul.f32 %v10356, %v10356
    %v10365 = vmul.f32 %v10357, %v10357
    %v10366 = vmul.f32 %v10358, %v10358
    %v10367 = vmul.f32 %v10359, %v10359
    %v10368 = vmul.f32 %v10360, %v10360
    %v10369 = vmul.f32 %v10361, %v10361
    %v10370 = vadd.f32 %v10362, %v10364
    %v10371 = vadd.f32 %v10370, %v10366
    %v10372 = vadd.f32 %v10371, %v10368
    %v10373 = vrot.slane %v10372, 4
    %v10374 = vadd.f32 %v10372, %v10373
    %v10375 = vrot.slane %v10374, 2
    %v10376 = vadd.f32 %v10374, %v10375
    %v10377 = vrot.slane %v10376, 1
    %v10378 = vadd.f32 %v10376, %v10377
    %v10379 = vadd.f32 %v10363, %v10365
    %v10380 = vadd.f32 %v10379, %v10367
    %v10381 = vadd.f32 %v10380, %v10369
    %v10382 = vrot.slane %v10381, 4
    %v10383 = vadd.f32 %v10381, %v10382
    %v10384 = vrot.slane %v10383, 2
    %v10385 = vadd.f32 %v10383, %v10384
    %v10386 = vrot.slane %v10385, 1
    %v10387 = vadd.f32 %v10385, %v10386
    %v10388 = vmul.f32 %v10378, %v4397
    %v10389 = vmul.f32 %v10387, %v4397
    %v10390 = vadd.f32 %v10388, 1e-05
    %v10391 = vadd.f32 %v10389, 1e-05
    %v10392 = vrsqrt.pop %v10390
    %v10393 = vrsqrt.pop %v10391
    %v10394 = vmul.f32 %v10354, %v10392
    %v10395 = vmul.f32 %v10355, %v10393
    %v10396 = vmul.f32 %v10356, %v10392
    %v10397 = vmul.f32 %v10357, %v10393
    %v10398 = vmul.f32 %v10358, %v10392
    %v10399 = vmul.f32 %v10359, %v10393
    %v10400 = vmul.f32 %v10360, %v10392
    %v10401 = vmul.f32 %v10361, %v10393
    %s10402 = scalar_lea.vmem [#allocation11], 4
    %v10403 = vld [vmem:[%s10402] ss:$8 sm:$0x3]
    %v10405 = vlaneseq
    %v10406 = vshrl.u32 %v10405, 7
    %v10407 = vsub.s32 0, %v10406
    %v10408 = vrot.slane %v10403, %v10407
    %v10409 = vlaneseq
    %v10410 = vshrl.u32 %v10409, 7
    %v10411 = vsub.s32 1, %v10410
    %v10412 = vrot.slane %v10403, %v10411
    %v10415 = vmul.f32 %v10394, %v10408
    %v10416 = vmul.f32 %v10395, %v10412
    %v10417 = vmul.f32 %v10396, %v10408
    %v10418 = vmul.f32 %v10397, %v10412
    %v10419 = vmul.f32 %v10398, %v10408
    %v10420 = vmul.f32 %v10399, %v10412
    %v10421 = vmul.f32 %v10400, %v10408
    %v10422 = vmul.f32 %v10401, %v10412
    %s10423 = scalar_lea.vmem [#allocation12], 4
    %v10424 = vld [vmem:[%s10423] ss:$8 sm:$0x3]
    %v10426 = vlaneseq
    %v10427 = vshrl.u32 %v10426, 7
    %v10428 = vsub.s32 0, %v10427
    %v10429 = vrot.slane %v10424, %v10428
    %v10430 = vlaneseq
    %v10431 = vshrl.u32 %v10430, 7
    %v10432 = vsub.s32 1, %v10431
    %v10433 = vrot.slane %v10424, %v10432
    %v10436 = vadd.f32 %v10415, %v10429
    %v10437 = vadd.f32 %v10416, %v10433
    %v10438 = vadd.f32 %v10417, %v10429
    %v10439 = vadd.f32 %v10418, %v10433
    %v10440 = vadd.f32 %v10419, %v10429
    %v10441 = vadd.f32 %v10420, %v10433
    %v10442 = vadd.f32 %v10421, %v10429
    %v10443 = vadd.f32 %v10422, %v10433
    %v10444 = vmax.f32 %v10436, 0.0
    %v10445 = vmax.f32 %v10437, 0.0
    %v10446 = vmax.f32 %v10438, 0.0
    %v10447 = vmax.f32 %v10439, 0.0
    %v10448 = vmax.f32 %v10440, 0.0
    %v10449 = vmax.f32 %v10441, 0.0
    %v10450 = vmax.f32 %v10442, 0.0
    %v10451 = vmax.f32 %v10443, 0.0
    %v10452 = vpack.c.bf16 %v10446, %v10444
    %v10453 = vpack.c.bf16 %v10447, %v10445
    %v10454 = vpack.c.bf16 %v10450, %v10448
    %v10455 = vpack.c.bf16 %v10451, %v10449
    %10456 = vst [vmem:[#allocation3 + $0x20] sm:$0xff] %v10452
    %10457 = vst [vmem:[#allocation3 + $0x28] sm:$0xff] %v10453
    %10458 = vst [vmem:[#allocation3 + $0x70] sm:$0xff] %v10454
    %10459 = vst [vmem:[#allocation3 + $0x78] sm:$0xff] %v10455
    %s10460 = scalar_lea.vmem [#allocation8], 5120
    %v10461 = vld [vmem:[%s10460] sm:$0xff]
    %v10462 = vld [vmem:[%s10460 + $0x8] sm:$0xff]
    %v10463 = vld [vmem:[%s10460 + $0x10] sm:$0xff]
    %v10464 = vld [vmem:[%s10460 + $0x18] sm:$0xff]
    %v10465 = vld [vmem:[%s10460 + $0x20] sm:$0xff]
    %v10466 = vld [vmem:[%s10460 + $0x28] sm:$0xff]
    %v10467 = vld [vmem:[%s10460 + $0x30] sm:$0xff]
    %v10468 = vld [vmem:[%s10460 + $0x38] sm:$0xff]
    %v10469 = vld [vmem:[%s10460 + $0x40] sm:$0xff]
    %v10470 = vld [vmem:[%s10460 + $0x48] sm:$0xff]
    %v10471 = vld [vmem:[%s10460 + $0x50] sm:$0xff]
    %v10472 = vld [vmem:[%s10460 + $0x58] sm:$0xff]
    %v10473 = vld [vmem:[%s10460 + $0x60] sm:$0xff]
    %v10474 = vld [vmem:[%s10460 + $0x68] sm:$0xff]
    %v10475 = vld [vmem:[%s10460 + $0x70] sm:$0xff]
    %v10476 = vld [vmem:[%s10460 + $0x78] sm:$0xff]
    %v10477 = vld [vmem:[%s10460 + $0x80] sm:$0xff]
    %v10478 = vld [vmem:[%s10460 + $0x88] sm:$0xff]
    %v10479 = vld [vmem:[%s10460 + $0x90] sm:$0xff]
    %v10480 = vld [vmem:[%s10460 + $0x98] sm:$0xff]
    %v10481 = vld [vmem:[%s10460 + $0xa0] sm:$0xff]
    %v10482 = vld [vmem:[%s10460 + $0xa8] sm:$0xff]
    %v10483 = vld [vmem:[%s10460 + $0xb0] sm:$0xff]
    %v10484 = vld [vmem:[%s10460 + $0xb8] sm:$0xff]
    %v10485 = vld [vmem:[%s10460 + $0xc0] sm:$0xff]
    %v10486 = vld [vmem:[%s10460 + $0xc8] sm:$0xff]
    %v10487 = vld [vmem:[%s10460 + $0xd0] sm:$0xff]
    %v10488 = vld [vmem:[%s10460 + $0xd8] sm:$0xff]
    %v10489 = vld [vmem:[%s10460 + $0xe0] sm:$0xff]
    %v10490 = vld [vmem:[%s10460 + $0xe8] sm:$0xff]
    %v10491 = vld [vmem:[%s10460 + $0xf0] sm:$0xff]
    %v10492 = vld [vmem:[%s10460 + $0xf8] sm:$0xff]
    %v10493 = vld [vmem:[%s10460 + $0x100] sm:$0xff]
    %v10494 = vld [vmem:[%s10460 + $0x108] sm:$0xff]
    %v10495 = vld [vmem:[%s10460 + $0x110] sm:$0xff]
    %v10496 = vld [vmem:[%s10460 + $0x118] sm:$0xff]
    %v10497 = vld [vmem:[%s10460 + $0x120] sm:$0xff]
    %v10498 = vld [vmem:[%s10460 + $0x128] sm:$0xff]
    %v10499 = vld [vmem:[%s10460 + $0x130] sm:$0xff]
    %v10500 = vld [vmem:[%s10460 + $0x138] sm:$0xff]
    %v10501 = vld [vmem:[%s10460 + $0x140] sm:$0xff]
    %v10502 = vld [vmem:[%s10460 + $0x148] sm:$0xff]
    %v10503 = vld [vmem:[%s10460 + $0x150] sm:$0xff]
    %v10504 = vld [vmem:[%s10460 + $0x158] sm:$0xff]
    %v10505 = vld [vmem:[%s10460 + $0x160] sm:$0xff]
    %v10506 = vld [vmem:[%s10460 + $0x168] sm:$0xff]
    %v10507 = vld [vmem:[%s10460 + $0x170] sm:$0xff]
    %v10508 = vld [vmem:[%s10460 + $0x178] sm:$0xff]
    %v10509 = vld [vmem:[%s10460 + $0x180] sm:$0xff]
    %v10510 = vld [vmem:[%s10460 + $0x188] sm:$0xff]
    %v10511 = vld [vmem:[%s10460 + $0x190] sm:$0xff]
    %v10512 = vld [vmem:[%s10460 + $0x198] sm:$0xff]
    %v10513 = vld [vmem:[%s10460 + $0x1a0] sm:$0xff]
    %v10514 = vld [vmem:[%s10460 + $0x1a8] sm:$0xff]
    %v10515 = vld [vmem:[%s10460 + $0x1b0] sm:$0xff]
    %v10516 = vld [vmem:[%s10460 + $0x1b8] sm:$0xff]
    %v10517 = vld [vmem:[%s10460 + $0x1c0] sm:$0xff]
    %v10518 = vld [vmem:[%s10460 + $0x1c8] sm:$0xff]
    %v10519 = vld [vmem:[%s10460 + $0x1d0] sm:$0xff]
    %v10520 = vld [vmem:[%s10460 + $0x1d8] sm:$0xff]
    %v10521 = vld [vmem:[%s10460 + $0x1e0] sm:$0xff]
    %v10522 = vld [vmem:[%s10460 + $0x1e8] sm:$0xff]
    %v10523 = vld [vmem:[%s10460 + $0x1f0] sm:$0xff]
    %v10524 = vld [vmem:[%s10460 + $0x1f8] sm:$0xff]
    %v10525 = vld [vmem:[%s10460 + $0x200] sm:$0xff]
    %v10526 = vld [vmem:[%s10460 + $0x208] sm:$0xff]
    %v10527 = vld [vmem:[%s10460 + $0x210] sm:$0xff]
    %v10528 = vld [vmem:[%s10460 + $0x218] sm:$0xff]
    %v10529 = vld [vmem:[%s10460 + $0x220] sm:$0xff]
    %v10530 = vld [vmem:[%s10460 + $0x228] sm:$0xff]
    %v10531 = vld [vmem:[%s10460 + $0x230] sm:$0xff]
    %v10532 = vld [vmem:[%s10460 + $0x238] sm:$0xff]
    %v10533 = vld [vmem:[%s10460 + $0x240] sm:$0xff]
    %v10534 = vld [vmem:[%s10460 + $0x248] sm:$0xff]
    %v10535 = vld [vmem:[%s10460 + $0x250] sm:$0xff]
    %v10536 = vld [vmem:[%s10460 + $0x258] sm:$0xff]
    %v10537 = vld [vmem:[%s10460 + $0x260] sm:$0xff]
    %v10538 = vld [vmem:[%s10460 + $0x268] sm:$0xff]
    %v10539 = vld [vmem:[%s10460 + $0x270] sm:$0xff]
    %v10540 = vld [vmem:[%s10460 + $0x278] sm:$0xff]
    %v10541 = vld [vmem:[%s10460 + $0x280] sm:$0xff]
    %v10542 = vld [vmem:[%s10460 + $0x288] sm:$0xff]
    %v10543 = vld [vmem:[%s10460 + $0x290] sm:$0xff]
    %v10544 = vld [vmem:[%s10460 + $0x298] sm:$0xff]
    %v10545 = vld [vmem:[%s10460 + $0x2a0] sm:$0xff]
    %v10546 = vld [vmem:[%s10460 + $0x2a8] sm:$0xff]
    %v10547 = vld [vmem:[%s10460 + $0x2b0] sm:$0xff]
    %v10548 = vld [vmem:[%s10460 + $0x2b8] sm:$0xff]
    %v10549 = vld [vmem:[%s10460 + $0x2c0] sm:$0xff]
    %v10550 = vld [vmem:[%s10460 + $0x2c8] sm:$0xff]
    %v10551 = vld [vmem:[%s10460 + $0x2d0] sm:$0xff]
    %v10552 = vld [vmem:[%s10460 + $0x2d8] sm:$0xff]
    %v10553 = vld [vmem:[%s10460 + $0x2e0] sm:$0xff]
    %v10554 = vld [vmem:[%s10460 + $0x2e8] sm:$0xff]
    %v10555 = vld [vmem:[%s10460 + $0x2f0] sm:$0xff]
    %v10556 = vld [vmem:[%s10460 + $0x2f8] sm:$0xff]
    %v10557 = vld [vmem:[%s10460 + $0x300] sm:$0xff]
    %v10558 = vld [vmem:[%s10460 + $0x308] sm:$0xff]
    %v10559 = vld [vmem:[%s10460 + $0x310] sm:$0xff]
    %v10560 = vld [vmem:[%s10460 + $0x318] sm:$0xff]
    %v10561 = vld [vmem:[%s10460 + $0x320] sm:$0xff]
    %v10562 = vld [vmem:[%s10460 + $0x328] sm:$0xff]
    %v10563 = vld [vmem:[%s10460 + $0x330] sm:$0xff]
    %v10564 = vld [vmem:[%s10460 + $0x338] sm:$0xff]
    %v10565 = vld [vmem:[%s10460 + $0x340] sm:$0xff]
    %v10566 = vld [vmem:[%s10460 + $0x348] sm:$0xff]
    %v10567 = vld [vmem:[%s10460 + $0x350] sm:$0xff]
    %v10568 = vld [vmem:[%s10460 + $0x358] sm:$0xff]
    %v10569 = vld [vmem:[%s10460 + $0x360] sm:$0xff]
    %v10570 = vld [vmem:[%s10460 + $0x368] sm:$0xff]
    %v10571 = vld [vmem:[%s10460 + $0x370] sm:$0xff]
    %v10572 = vld [vmem:[%s10460 + $0x378] sm:$0xff]
    %v10573 = vld [vmem:[%s10460 + $0x380] sm:$0xff]
    %v10574 = vld [vmem:[%s10460 + $0x388] sm:$0xff]
    %v10575 = vld [vmem:[%s10460 + $0x390] sm:$0xff]
    %v10576 = vld [vmem:[%s10460 + $0x398] sm:$0xff]
    %v10577 = vld [vmem:[%s10460 + $0x3a0] sm:$0xff]
    %v10578 = vld [vmem:[%s10460 + $0x3a8] sm:$0xff]
    %v10579 = vld [vmem:[%s10460 + $0x3b0] sm:$0xff]
    %v10580 = vld [vmem:[%s10460 + $0x3b8] sm:$0xff]
    %v10581 = vld [vmem:[%s10460 + $0x3c0] sm:$0xff]
    %v10582 = vld [vmem:[%s10460 + $0x3c8] sm:$0xff]
    %v10583 = vld [vmem:[%s10460 + $0x3d0] sm:$0xff]
    %v10584 = vld [vmem:[%s10460 + $0x3d8] sm:$0xff]
    %v10585 = vld [vmem:[%s10460 + $0x3e0] sm:$0xff]
    %v10586 = vld [vmem:[%s10460 + $0x3e8] sm:$0xff]
    %v10587 = vld [vmem:[%s10460 + $0x3f0] sm:$0xff]
    %v10588 = vld [vmem:[%s10460 + $0x3f8] sm:$0xff]
    %v10589 = vld [vmem:[%s10460 + $0x400] sm:$0xff]
    %v10590 = vld [vmem:[%s10460 + $0x408] sm:$0xff]
    %v10591 = vld [vmem:[%s10460 + $0x410] sm:$0xff]
    %v10592 = vld [vmem:[%s10460 + $0x418] sm:$0xff]
    %v10593 = vld [vmem:[%s10460 + $0x420] sm:$0xff]
    %v10594 = vld [vmem:[%s10460 + $0x428] sm:$0xff]
    %v10595 = vld [vmem:[%s10460 + $0x430] sm:$0xff]
    %v10596 = vld [vmem:[%s10460 + $0x438] sm:$0xff]
    %v10597 = vld [vmem:[%s10460 + $0x440] sm:$0xff]
    %v10598 = vld [vmem:[%s10460 + $0x448] sm:$0xff]
    %v10599 = vld [vmem:[%s10460 + $0x450] sm:$0xff]
    %v10600 = vld [vmem:[%s10460 + $0x458] sm:$0xff]
    %v10601 = vld [vmem:[%s10460 + $0x460] sm:$0xff]
    %v10602 = vld [vmem:[%s10460 + $0x468] sm:$0xff]
    %v10603 = vld [vmem:[%s10460 + $0x470] sm:$0xff]
    %v10604 = vld [vmem:[%s10460 + $0x478] sm:$0xff]
    %v10605 = vld [vmem:[%s10460 + $0x480] sm:$0xff]
    %v10606 = vld [vmem:[%s10460 + $0x488] sm:$0xff]
    %v10607 = vld [vmem:[%s10460 + $0x490] sm:$0xff]
    %v10608 = vld [vmem:[%s10460 + $0x498] sm:$0xff]
    %v10609 = vld [vmem:[%s10460 + $0x4a0] sm:$0xff]
    %v10610 = vld [vmem:[%s10460 + $0x4a8] sm:$0xff]
    %v10611 = vld [vmem:[%s10460 + $0x4b0] sm:$0xff]
    %v10612 = vld [vmem:[%s10460 + $0x4b8] sm:$0xff]
    %v10613 = vld [vmem:[%s10460 + $0x4c0] sm:$0xff]
    %v10614 = vld [vmem:[%s10460 + $0x4c8] sm:$0xff]
    %v10615 = vld [vmem:[%s10460 + $0x4d0] sm:$0xff]
    %v10616 = vld [vmem:[%s10460 + $0x4d8] sm:$0xff]
    %v10617 = vld [vmem:[%s10460 + $0x4e0] sm:$0xff]
    %v10618 = vld [vmem:[%s10460 + $0x4e8] sm:$0xff]
    %v10619 = vld [vmem:[%s10460 + $0x4f0] sm:$0xff]
    %v10620 = vld [vmem:[%s10460 + $0x4f8] sm:$0xff]
    %v10621 = vld [vmem:[#allocation3] sm:$0xff]
    %v10622 = vld [vmem:[#allocation3 + $0x8] sm:$0xff]
    %v10623 = vld [vmem:[#allocation3 + $0x50] sm:$0xff]
    %v10624 = vld [vmem:[#allocation3 + $0x58] sm:$0xff]
    %v10625 = vld [vmem:[#allocation3 + $0x10] sm:$0xff]
    %v10626 = vld [vmem:[#allocation3 + $0x18] sm:$0xff]
    %v10627 = vld [vmem:[#allocation3 + $0x60] sm:$0xff]
    %v10628 = vld [vmem:[#allocation3 + $0x68] sm:$0xff]
    %v10629 = vld [vmem:[#allocation3 + $0x20] sm:$0xff]
    %v10630 = vld [vmem:[#allocation3 + $0x28] sm:$0xff]
    %v10631 = vld [vmem:[#allocation3 + $0x70] sm:$0xff]
    %v10632 = vld [vmem:[#allocation3 + $0x78] sm:$0xff]
    %v10633 = vld [vmem:[#allocation3 + $0x30] sm:$0xff]
    %v10634 = vld [vmem:[#allocation3 + $0x38] sm:$0xff]
    %v10635 = vld [vmem:[#allocation3 + $0x80] sm:$0xff]
    %v10636 = vld [vmem:[#allocation3 + $0x88] sm:$0xff]
    %v10637 = vld [vmem:[#allocation3 + $0x40] sm:$0xff]
    %v10638 = vld [vmem:[#allocation3 + $0x48] sm:$0xff]
    %v10639 = vld [vmem:[#allocation3 + $0x90] sm:$0xff]
    %v10640 = vld [vmem:[#allocation3 + $0x98] sm:$0xff]
    %s10641 = scalar_lea.vmem [#allocation9], 5
    %v10642 = vld [vmem:[%s10641] ss:$8 sm:$0x3]
    %v10644 = vlaneseq
    %v10645 = vshrl.u32 %v10644, 7
    %v10646 = vsub.s32 0, %v10645
    %v10647 = vrot.slane %v10642, %v10646
    %v10648 = vlaneseq
    %v10649 = vshrl.u32 %v10648, 7
    %v10650 = vsub.s32 1, %v10649
    %v10651 = vrot.slane %v10642, %v10650
    %v10814 = vunpack.c.l.b16 %v10461
    %v10815 = vunpack.c.h.b16 %v10461
    %v10816 = vunpack.c.l.b16 %v10462
    %v10817 = vunpack.c.h.b16 %v10462
    %v10818 = vunpack.c.l.b16 %v10463
    %v10819 = vunpack.c.h.b16 %v10463
    %v10820 = vunpack.c.l.b16 %v10464
    %v10821 = vunpack.c.h.b16 %v10464
    %v10822 = vunpack.c.l.b16 %v10465
    %v10823 = vunpack.c.h.b16 %v10465
    %v10824 = vunpack.c.l.b16 %v10466
    %v10825 = vunpack.c.h.b16 %v10466
    %v10826 = vunpack.c.l.b16 %v10467
    %v10827 = vunpack.c.h.b16 %v10467
    %v10828 = vunpack.c.l.b16 %v10468
    %v10829 = vunpack.c.h.b16 %v10468
    %v10830 = vunpack.c.l.b16 %v10469
    %v10831 = vunpack.c.h.b16 %v10469
    %v10832 = vunpack.c.l.b16 %v10470
    %v10833 = vunpack.c.h.b16 %v10470
    %v10834 = vunpack.c.l.b16 %v10471
    %v10835 = vunpack.c.h.b16 %v10471
    %v10836 = vunpack.c.l.b16 %v10472
    %v10837 = vunpack.c.h.b16 %v10472
    %v10838 = vunpack.c.l.b16 %v10473
    %v10839 = vunpack.c.h.b16 %v10473
    %v10840 = vunpack.c.l.b16 %v10474
    %v10841 = vunpack.c.h.b16 %v10474
    %v10842 = vunpack.c.l.b16 %v10475
    %v10843 = vunpack.c.h.b16 %v10475
    %v10844 = vunpack.c.l.b16 %v10476
    %v10845 = vunpack.c.h.b16 %v10476
    %v10846 = vunpack.c.l.b16 %v10477
    %v10847 = vunpack.c.h.b16 %v10477
    %v10848 = vunpack.c.l.b16 %v10478
    %v10849 = vunpack.c.h.b16 %v10478
    %v10850 = vunpack.c.l.b16 %v10479
    %v10851 = vunpack.c.h.b16 %v10479
    %v10852 = vunpack.c.l.b16 %v10480
    %v10853 = vunpack.c.h.b16 %v10480
    %v10854 = vunpack.c.l.b16 %v10481
    %v10855 = vunpack.c.h.b16 %v10481
    %v10856 = vunpack.c.l.b16 %v10482
    %v10857 = vunpack.c.h.b16 %v10482
    %v10858 = vunpack.c.l.b16 %v10483
    %v10859 = vunpack.c.h.b16 %v10483
    %v10860 = vunpack.c.l.b16 %v10484
    %v10861 = vunpack.c.h.b16 %v10484
    %v10862 = vunpack.c.l.b16 %v10485
    %v10863 = vunpack.c.h.b16 %v10485
    %v10864 = vunpack.c.l.b16 %v10486
    %v10865 = vunpack.c.h.b16 %v10486
    %v10866 = vunpack.c.l.b16 %v10487
    %v10867 = vunpack.c.h.b16 %v10487
    %v10868 = vunpack.c.l.b16 %v10488
    %v10869 = vunpack.c.h.b16 %v10488
    %v10870 = vunpack.c.l.b16 %v10489
    %v10871 = vunpack.c.h.b16 %v10489
    %v10872 = vunpack.c.l.b16 %v10490
    %v10873 = vunpack.c.h.b16 %v10490
    %v10874 = vunpack.c.l.b16 %v10491
    %v10875 = vunpack.c.h.b16 %v10491
    %v10876 = vunpack.c.l.b16 %v10492
    %v10877 = vunpack.c.h.b16 %v10492
    %v10878 = vunpack.c.l.b16 %v10493
    %v10879 = vunpack.c.h.b16 %v10493
    %v10880 = vunpack.c.l.b16 %v10494
    %v10881 = vunpack.c.h.b16 %v10494
    %v10882 = vunpack.c.l.b16 %v10495
    %v10883 = vunpack.c.h.b16 %v10495
    %v10884 = vunpack.c.l.b16 %v10496
    %v10885 = vunpack.c.h.b16 %v10496
    %v10886 = vunpack.c.l.b16 %v10497
    %v10887 = vunpack.c.h.b16 %v10497
    %v10888 = vunpack.c.l.b16 %v10498
    %v10889 = vunpack.c.h.b16 %v10498
    %v10890 = vunpack.c.l.b16 %v10499
    %v10891 = vunpack.c.h.b16 %v10499
    %v10892 = vunpack.c.l.b16 %v10500
    %v10893 = vunpack.c.h.b16 %v10500
    %v10894 = vunpack.c.l.b16 %v10501
    %v10895 = vunpack.c.h.b16 %v10501
    %v10896 = vunpack.c.l.b16 %v10502
    %v10897 = vunpack.c.h.b16 %v10502
    %v10898 = vunpack.c.l.b16 %v10503
    %v10899 = vunpack.c.h.b16 %v10503
    %v10900 = vunpack.c.l.b16 %v10504
    %v10901 = vunpack.c.h.b16 %v10504
    %v10902 = vunpack.c.l.b16 %v10505
    %v10903 = vunpack.c.h.b16 %v10505
    %v10904 = vunpack.c.l.b16 %v10506
    %v10905 = vunpack.c.h.b16 %v10506
    %v10906 = vunpack.c.l.b16 %v10507
    %v10907 = vunpack.c.h.b16 %v10507
    %v10908 = vunpack.c.l.b16 %v10508
    %v10909 = vunpack.c.h.b16 %v10508
    %v10910 = vunpack.c.l.b16 %v10509
    %v10911 = vunpack.c.h.b16 %v10509
    %v10912 = vunpack.c.l.b16 %v10510
    %v10913 = vunpack.c.h.b16 %v10510
    %v10914 = vunpack.c.l.b16 %v10511
    %v10915 = vunpack.c.h.b16 %v10511
    %v10916 = vunpack.c.l.b16 %v10512
    %v10917 = vunpack.c.h.b16 %v10512
    %v10918 = vunpack.c.l.b16 %v10513
    %v10919 = vunpack.c.h.b16 %v10513
    %v10920 = vunpack.c.l.b16 %v10514
    %v10921 = vunpack.c.h.b16 %v10514
    %v10922 = vunpack.c.l.b16 %v10515
    %v10923 = vunpack.c.h.b16 %v10515
    %v10924 = vunpack.c.l.b16 %v10516
    %v10925 = vunpack.c.h.b16 %v10516
    %v10926 = vunpack.c.l.b16 %v10517
    %v10927 = vunpack.c.h.b16 %v10517
    %v10928 = vunpack.c.l.b16 %v10518
    %v10929 = vunpack.c.h.b16 %v10518
    %v10930 = vunpack.c.l.b16 %v10519
    %v10931 = vunpack.c.h.b16 %v10519
    %v10932 = vunpack.c.l.b16 %v10520
    %v10933 = vunpack.c.h.b16 %v10520
    %v10934 = vunpack.c.l.b16 %v10521
    %v10935 = vunpack.c.h.b16 %v10521
    %v10936 = vunpack.c.l.b16 %v10522
    %v10937 = vunpack.c.h.b16 %v10522
    %v10938 = vunpack.c.l.b16 %v10523
    %v10939 = vunpack.c.h.b16 %v10523
    %v10940 = vunpack.c.l.b16 %v10524
    %v10941 = vunpack.c.h.b16 %v10524
    %v10942 = vunpack.c.l.b16 %v10525
    %v10943 = vunpack.c.h.b16 %v10525
    %v10944 = vunpack.c.l.b16 %v10526
    %v10945 = vunpack.c.h.b16 %v10526
    %v10946 = vunpack.c.l.b16 %v10527
    %v10947 = vunpack.c.h.b16 %v10527
    %v10948 = vunpack.c.l.b16 %v10528
    %v10949 = vunpack.c.h.b16 %v10528
    %v10950 = vunpack.c.l.b16 %v10529
    %v10951 = vunpack.c.h.b16 %v10529
    %v10952 = vunpack.c.l.b16 %v10530
    %v10953 = vunpack.c.h.b16 %v10530
    %v10954 = vunpack.c.l.b16 %v10531
    %v10955 = vunpack.c.h.b16 %v10531
    %v10956 = vunpack.c.l.b16 %v10532
    %v10957 = vunpack.c.h.b16 %v10532
    %v10958 = vunpack.c.l.b16 %v10533
    %v10959 = vunpack.c.h.b16 %v10533
    %v10960 = vunpack.c.l.b16 %v10534
    %v10961 = vunpack.c.h.b16 %v10534
    %v10962 = vunpack.c.l.b16 %v10535
    %v10963 = vunpack.c.h.b16 %v10535
    %v10964 = vunpack.c.l.b16 %v10536
    %v10965 = vunpack.c.h.b16 %v10536
    %v10966 = vunpack.c.l.b16 %v10537
    %v10967 = vunpack.c.h.b16 %v10537
    %v10968 = vunpack.c.l.b16 %v10538
    %v10969 = vunpack.c.h.b16 %v10538
    %v10970 = vunpack.c.l.b16 %v10539
    %v10971 = vunpack.c.h.b16 %v10539
    %v10972 = vunpack.c.l.b16 %v10540
    %v10973 = vunpack.c.h.b16 %v10540
    %v10974 = vunpack.c.l.b16 %v10541
    %v10975 = vunpack.c.h.b16 %v10541
    %v10976 = vunpack.c.l.b16 %v10542
    %v10977 = vunpack.c.h.b16 %v10542
    %v10978 = vunpack.c.l.b16 %v10543
    %v10979 = vunpack.c.h.b16 %v10543
    %v10980 = vunpack.c.l.b16 %v10544
    %v10981 = vunpack.c.h.b16 %v10544
    %v10982 = vunpack.c.l.b16 %v10545
    %v10983 = vunpack.c.h.b16 %v10545
    %v10984 = vunpack.c.l.b16 %v10546
    %v10985 = vunpack.c.h.b16 %v10546
    %v10986 = vunpack.c.l.b16 %v10547
    %v10987 = vunpack.c.h.b16 %v10547
    %v10988 = vunpack.c.l.b16 %v10548
    %v10989 = vunpack.c.h.b16 %v10548
    %v10990 = vunpack.c.l.b16 %v10549
    %v10991 = vunpack.c.h.b16 %v10549
    %v10992 = vunpack.c.l.b16 %v10550
    %v10993 = vunpack.c.h.b16 %v10550
    %v10994 = vunpack.c.l.b16 %v10551
    %v10995 = vunpack.c.h.b16 %v10551
    %v10996 = vunpack.c.l.b16 %v10552
    %v10997 = vunpack.c.h.b16 %v10552
    %v10998 = vunpack.c.l.b16 %v10553
    %v10999 = vunpack.c.h.b16 %v10553
    %v11000 = vunpack.c.l.b16 %v10554
    %v11001 = vunpack.c.h.b16 %v10554
    %v11002 = vunpack.c.l.b16 %v10555
    %v11003 = vunpack.c.h.b16 %v10555
    %v11004 = vunpack.c.l.b16 %v10556
    %v11005 = vunpack.c.h.b16 %v10556
    %v11006 = vunpack.c.l.b16 %v10557
    %v11007 = vunpack.c.h.b16 %v10557
    %v11008 = vunpack.c.l.b16 %v10558
    %v11009 = vunpack.c.h.b16 %v10558
    %v11010 = vunpack.c.l.b16 %v10559
    %v11011 = vunpack.c.h.b16 %v10559
    %v11012 = vunpack.c.l.b16 %v10560
    %v11013 = vunpack.c.h.b16 %v10560
    %v11014 = vunpack.c.l.b16 %v10561
    %v11015 = vunpack.c.h.b16 %v10561
    %v11016 = vunpack.c.l.b16 %v10562
    %v11017 = vunpack.c.h.b16 %v10562
    %v11018 = vunpack.c.l.b16 %v10563
    %v11019 = vunpack.c.h.b16 %v10563
    %v11020 = vunpack.c.l.b16 %v10564
    %v11021 = vunpack.c.h.b16 %v10564
    %v11022 = vunpack.c.l.b16 %v10565
    %v11023 = vunpack.c.h.b16 %v10565
    %v11024 = vunpack.c.l.b16 %v10566
    %v11025 = vunpack.c.h.b16 %v10566
    %v11026 = vunpack.c.l.b16 %v10567
    %v11027 = vunpack.c.h.b16 %v10567
    %v11028 = vunpack.c.l.b16 %v10568
    %v11029 = vunpack.c.h.b16 %v10568
    %v11030 = vunpack.c.l.b16 %v10569
    %v11031 = vunpack.c.h.b16 %v10569
    %v11032 = vunpack.c.l.b16 %v10570
    %v11033 = vunpack.c.h.b16 %v10570
    %v11034 = vunpack.c.l.b16 %v10571
    %v11035 = vunpack.c.h.b16 %v10571
    %v11036 = vunpack.c.l.b16 %v10572
    %v11037 = vunpack.c.h.b16 %v10572
    %v11038 = vunpack.c.l.b16 %v10573
    %v11039 = vunpack.c.h.b16 %v10573
    %v11040 = vunpack.c.l.b16 %v10574
    %v11041 = vunpack.c.h.b16 %v10574
    %v11042 = vunpack.c.l.b16 %v10575
    %v11043 = vunpack.c.h.b16 %v10575
    %v11044 = vunpack.c.l.b16 %v10576
    %v11045 = vunpack.c.h.b16 %v10576
    %v11046 = vunpack.c.l.b16 %v10577
    %v11047 = vunpack.c.h.b16 %v10577
    %v11048 = vunpack.c.l.b16 %v10578
    %v11049 = vunpack.c.h.b16 %v10578
    %v11050 = vunpack.c.l.b16 %v10579
    %v11051 = vunpack.c.h.b16 %v10579
    %v11052 = vunpack.c.l.b16 %v10580
    %v11053 = vunpack.c.h.b16 %v10580
    %v11054 = vunpack.c.l.b16 %v10581
    %v11055 = vunpack.c.h.b16 %v10581
    %v11056 = vunpack.c.l.b16 %v10582
    %v11057 = vunpack.c.h.b16 %v10582
    %v11058 = vunpack.c.l.b16 %v10583
    %v11059 = vunpack.c.h.b16 %v10583
    %v11060 = vunpack.c.l.b16 %v10584
    %v11061 = vunpack.c.h.b16 %v10584
    %v11062 = vunpack.c.l.b16 %v10585
    %v11063 = vunpack.c.h.b16 %v10585
    %v11064 = vunpack.c.l.b16 %v10586
    %v11065 = vunpack.c.h.b16 %v10586
    %v11066 = vunpack.c.l.b16 %v10587
    %v11067 = vunpack.c.h.b16 %v10587
    %v11068 = vunpack.c.l.b16 %v10588
    %v11069 = vunpack.c.h.b16 %v10588
    %v11070 = vunpack.c.l.b16 %v10589
    %v11071 = vunpack.c.h.b16 %v10589
    %v11072 = vunpack.c.l.b16 %v10590
    %v11073 = vunpack.c.h.b16 %v10590
    %v11074 = vunpack.c.l.b16 %v10591
    %v11075 = vunpack.c.h.b16 %v10591
    %v11076 = vunpack.c.l.b16 %v10592
    %v11077 = vunpack.c.h.b16 %v10592
    %v11078 = vunpack.c.l.b16 %v10593
    %v11079 = vunpack.c.h.b16 %v10593
    %v11080 = vunpack.c.l.b16 %v10594
    %v11081 = vunpack.c.h.b16 %v10594
    %v11082 = vunpack.c.l.b16 %v10595
    %v11083 = vunpack.c.h.b16 %v10595
    %v11084 = vunpack.c.l.b16 %v10596
    %v11085 = vunpack.c.h.b16 %v10596
    %v11086 = vunpack.c.l.b16 %v10597
    %v11087 = vunpack.c.h.b16 %v10597
    %v11088 = vunpack.c.l.b16 %v10598
    %v11089 = vunpack.c.h.b16 %v10598
    %v11090 = vunpack.c.l.b16 %v10599
    %v11091 = vunpack.c.h.b16 %v10599
    %v11092 = vunpack.c.l.b16 %v10600
    %v11093 = vunpack.c.h.b16 %v10600
    %v11094 = vunpack.c.l.b16 %v10601
    %v11095 = vunpack.c.h.b16 %v10601
    %v11096 = vunpack.c.l.b16 %v10602
    %v11097 = vunpack.c.h.b16 %v10602
    %v11098 = vunpack.c.l.b16 %v10603
    %v11099 = vunpack.c.h.b16 %v10603
    %v11100 = vunpack.c.l.b16 %v10604
    %v11101 = vunpack.c.h.b16 %v10604
    %v11102 = vunpack.c.l.b16 %v10605
    %v11103 = vunpack.c.h.b16 %v10605
    %v11104 = vunpack.c.l.b16 %v10606
    %v11105 = vunpack.c.h.b16 %v10606
    %v11106 = vunpack.c.l.b16 %v10607
    %v11107 = vunpack.c.h.b16 %v10607
    %v11108 = vunpack.c.l.b16 %v10608
    %v11109 = vunpack.c.h.b16 %v10608
    %v11110 = vunpack.c.l.b16 %v10609
    %v11111 = vunpack.c.h.b16 %v10609
    %v11112 = vunpack.c.l.b16 %v10610
    %v11113 = vunpack.c.h.b16 %v10610
    %v11114 = vunpack.c.l.b16 %v10611
    %v11115 = vunpack.c.h.b16 %v10611
    %v11116 = vunpack.c.l.b16 %v10612
    %v11117 = vunpack.c.h.b16 %v10612
    %v11118 = vunpack.c.l.b16 %v10613
    %v11119 = vunpack.c.h.b16 %v10613
    %v11120 = vunpack.c.l.b16 %v10614
    %v11121 = vunpack.c.h.b16 %v10614
    %v11122 = vunpack.c.l.b16 %v10615
    %v11123 = vunpack.c.h.b16 %v10615
    %v11124 = vunpack.c.l.b16 %v10616
    %v11125 = vunpack.c.h.b16 %v10616
    %v11126 = vunpack.c.l.b16 %v10617
    %v11127 = vunpack.c.h.b16 %v10617
    %v11128 = vunpack.c.l.b16 %v10618
    %v11129 = vunpack.c.h.b16 %v10618
    %v11130 = vunpack.c.l.b16 %v10619
    %v11131 = vunpack.c.h.b16 %v10619
    %v11132 = vunpack.c.l.b16 %v10620
    %v11133 = vunpack.c.h.b16 %v10620
    %v11134 = vpack.c.b16 %v10816, %v10814
    %v11135 = vpack.c.b16 %v10817, %v10815
    %v11136 = vpack.c.b16 %v10820, %v10818
    %v11137 = vpack.c.b16 %v10821, %v10819
    %v11138 = vpack.c.b16 %v10824, %v10822
    %v11139 = vpack.c.b16 %v10825, %v10823
    %v11140 = vpack.c.b16 %v10828, %v10826
    %v11141 = vpack.c.b16 %v10829, %v10827
    %v11142 = vpack.c.b16 %v10832, %v10830
    %v11143 = vpack.c.b16 %v10833, %v10831
    %v11144 = vpack.c.b16 %v10836, %v10834
    %v11145 = vpack.c.b16 %v10837, %v10835
    %v11146 = vpack.c.b16 %v10840, %v10838
    %v11147 = vpack.c.b16 %v10841, %v10839
    %v11148 = vpack.c.b16 %v10844, %v10842
    %v11149 = vpack.c.b16 %v10845, %v10843
    %v11150 = vpack.c.b16 %v10848, %v10846
    %v11151 = vpack.c.b16 %v10849, %v10847
    %v11152 = vpack.c.b16 %v10852, %v10850
    %v11153 = vpack.c.b16 %v10853, %v10851
    %v11154 = vpack.c.b16 %v10856, %v10854
    %v11155 = vpack.c.b16 %v10857, %v10855
    %v11156 = vpack.c.b16 %v10860, %v10858
    %v11157 = vpack.c.b16 %v10861, %v10859
    %v11158 = vpack.c.b16 %v10864, %v10862
    %v11159 = vpack.c.b16 %v10865, %v10863
    %v11160 = vpack.c.b16 %v10868, %v10866
    %v11161 = vpack.c.b16 %v10869, %v10867
    %v11162 = vpack.c.b16 %v10872, %v10870
    %v11163 = vpack.c.b16 %v10873, %v10871
    %v11164 = vpack.c.b16 %v10876, %v10874
    %v11165 = vpack.c.b16 %v10877, %v10875
    %v11166 = vpack.c.b16 %v10880, %v10878
    %v11167 = vpack.c.b16 %v10881, %v10879
    %v11168 = vpack.c.b16 %v10884, %v10882
    %v11169 = vpack.c.b16 %v10885, %v10883
    %v11170 = vpack.c.b16 %v10888, %v10886
    %v11171 = vpack.c.b16 %v10889, %v10887
    %v11172 = vpack.c.b16 %v10892, %v10890
    %v11173 = vpack.c.b16 %v10893, %v10891
    %v11174 = vpack.c.b16 %v10896, %v10894
    %v11175 = vpack.c.b16 %v10897, %v10895
    %v11176 = vpack.c.b16 %v10900, %v10898
    %v11177 = vpack.c.b16 %v10901, %v10899
    %v11178 = vpack.c.b16 %v10904, %v10902
    %v11179 = vpack.c.b16 %v10905, %v10903
    %v11180 = vpack.c.b16 %v10908, %v10906
    %v11181 = vpack.c.b16 %v10909, %v10907
    %v11182 = vpack.c.b16 %v10912, %v10910
    %v11183 = vpack.c.b16 %v10913, %v10911
    %v11184 = vpack.c.b16 %v10916, %v10914
    %v11185 = vpack.c.b16 %v10917, %v10915
    %v11186 = vpack.c.b16 %v10920, %v10918
    %v11187 = vpack.c.b16 %v10921, %v10919
    %v11188 = vpack.c.b16 %v10924, %v10922
    %v11189 = vpack.c.b16 %v10925, %v10923
    %v11190 = vpack.c.b16 %v10928, %v10926
    %v11191 = vpack.c.b16 %v10929, %v10927
    %v11192 = vpack.c.b16 %v10932, %v10930
    %v11193 = vpack.c.b16 %v10933, %v10931
    %v11194 = vpack.c.b16 %v10936, %v10934
    %v11195 = vpack.c.b16 %v10937, %v10935
    %v11196 = vpack.c.b16 %v10940, %v10938
    %v11197 = vpack.c.b16 %v10941, %v10939
    %v11198 = vpack.c.b16 %v10944, %v10942
    %v11199 = vpack.c.b16 %v10945, %v10943
    %v11200 = vpack.c.b16 %v10948, %v10946
    %v11201 = vpack.c.b16 %v10949, %v10947
    %v11202 = vpack.c.b16 %v10952, %v10950
    %v11203 = vpack.c.b16 %v10953, %v10951
    %v11204 = vpack.c.b16 %v10956, %v10954
    %v11205 = vpack.c.b16 %v10957, %v10955
    %v11206 = vpack.c.b16 %v10960, %v10958
    %v11207 = vpack.c.b16 %v10961, %v10959
    %v11208 = vpack.c.b16 %v10964, %v10962
    %v11209 = vpack.c.b16 %v10965, %v10963
    %v11210 = vpack.c.b16 %v10968, %v10966
    %v11211 = vpack.c.b16 %v10969, %v10967
    %v11212 = vpack.c.b16 %v10972, %v10970
    %v11213 = vpack.c.b16 %v10973, %v10971
    %v11214 = vpack.c.b16 %v10976, %v10974
    %v11215 = vpack.c.b16 %v10977, %v10975
    %v11216 = vpack.c.b16 %v10980, %v10978
    %v11217 = vpack.c.b16 %v10981, %v10979
    %v11218 = vpack.c.b16 %v10984, %v10982
    %v11219 = vpack.c.b16 %v10985, %v10983
    %v11220 = vpack.c.b16 %v10988, %v10986
    %v11221 = vpack.c.b16 %v10989, %v10987
    %v11222 = vpack.c.b16 %v10992, %v10990
    %v11223 = vpack.c.b16 %v10993, %v10991
    %v11224 = vpack.c.b16 %v10996, %v10994
    %v11225 = vpack.c.b16 %v10997, %v10995
    %v11226 = vpack.c.b16 %v11000, %v10998
    %v11227 = vpack.c.b16 %v11001, %v10999
    %v11228 = vpack.c.b16 %v11004, %v11002
    %v11229 = vpack.c.b16 %v11005, %v11003
    %v11230 = vpack.c.b16 %v11008, %v11006
    %v11231 = vpack.c.b16 %v11009, %v11007
    %v11232 = vpack.c.b16 %v11012, %v11010
    %v11233 = vpack.c.b16 %v11013, %v11011
    %v11234 = vpack.c.b16 %v11016, %v11014
    %v11235 = vpack.c.b16 %v11017, %v11015
    %v11236 = vpack.c.b16 %v11020, %v11018
    %v11237 = vpack.c.b16 %v11021, %v11019
    %v11238 = vpack.c.b16 %v11024, %v11022
    %v11239 = vpack.c.b16 %v11025, %v11023
    %v11240 = vpack.c.b16 %v11028, %v11026
    %v11241 = vpack.c.b16 %v11029, %v11027
    %v11242 = vpack.c.b16 %v11032, %v11030
    %v11243 = vpack.c.b16 %v11033, %v11031
    %v11244 = vpack.c.b16 %v11036, %v11034
    %v11245 = vpack.c.b16 %v11037, %v11035
    %v11246 = vpack.c.b16 %v11040, %v11038
    %v11247 = vpack.c.b16 %v11041, %v11039
    %v11248 = vpack.c.b16 %v11044, %v11042
    %v11249 = vpack.c.b16 %v11045, %v11043
    %v11250 = vpack.c.b16 %v11048, %v11046
    %v11251 = vpack.c.b16 %v11049, %v11047
    %v11252 = vpack.c.b16 %v11052, %v11050
    %v11253 = vpack.c.b16 %v11053, %v11051
    %v11254 = vpack.c.b16 %v11056, %v11054
    %v11255 = vpack.c.b16 %v11057, %v11055
    %v11256 = vpack.c.b16 %v11060, %v11058
    %v11257 = vpack.c.b16 %v11061, %v11059
    %v11258 = vpack.c.b16 %v11064, %v11062
    %v11259 = vpack.c.b16 %v11065, %v11063
    %v11260 = vpack.c.b16 %v11068, %v11066
    %v11261 = vpack.c.b16 %v11069, %v11067
    %v11262 = vpack.c.b16 %v11072, %v11070
    %v11263 = vpack.c.b16 %v11073, %v11071
    %v11264 = vpack.c.b16 %v11076, %v11074
    %v11265 = vpack.c.b16 %v11077, %v11075
    %v11266 = vpack.c.b16 %v11080, %v11078
    %v11267 = vpack.c.b16 %v11081, %v11079
    %v11268 = vpack.c.b16 %v11084, %v11082
    %v11269 = vpack.c.b16 %v11085, %v11083
    %v11270 = vpack.c.b16 %v11088, %v11086
    %v11271 = vpack.c.b16 %v11089, %v11087
    %v11272 = vpack.c.b16 %v11092, %v11090
    %v11273 = vpack.c.b16 %v11093, %v11091
    %v11274 = vpack.c.b16 %v11096, %v11094
    %v11275 = vpack.c.b16 %v11097, %v11095
    %v11276 = vpack.c.b16 %v11100, %v11098
    %v11277 = vpack.c.b16 %v11101, %v11099
    %v11278 = vpack.c.b16 %v11104, %v11102
    %v11279 = vpack.c.b16 %v11105, %v11103
    %v11280 = vpack.c.b16 %v11108, %v11106
    %v11281 = vpack.c.b16 %v11109, %v11107
    %v11282 = vpack.c.b16 %v11112, %v11110
    %v11283 = vpack.c.b16 %v11113, %v11111
    %v11284 = vpack.c.b16 %v11116, %v11114
    %v11285 = vpack.c.b16 %v11117, %v11115
    %v11286 = vpack.c.b16 %v11120, %v11118
    %v11287 = vpack.c.b16 %v11121, %v11119
    %v11288 = vpack.c.b16 %v11124, %v11122
    %v11289 = vpack.c.b16 %v11125, %v11123
    %v11290 = vpack.c.b16 %v11128, %v11126
    %v11291 = vpack.c.b16 %v11129, %v11127
    %v11292 = vpack.c.b16 %v11132, %v11130
    %v11293 = vpack.c.b16 %v11133, %v11131
    %11454 = vmatprep.subr.bf16.mxu0 %v11135
    %11455 = vmatpush1.bf16.msra.mxu0 %v11134
    %11456 = vmatprep.subr.bf16.mxu0 %v11137
    %11457 = vmatpush1.bf16.msra.mxu0 %v11136
    %11458 = vmatprep.subr.bf16.mxu0 %v11139
    %11459 = vmatpush1.bf16.msra.mxu0 %v11138
    %11460 = vmatprep.subr.bf16.mxu0 %v11141
    %11461 = vmatpush1.bf16.msra.mxu0 %v11140
    %11462 = vmatprep.subr.bf16.mxu0 %v11143
    %11463 = vmatpush1.bf16.msra.mxu0 %v11142
    %11464 = vmatprep.subr.bf16.mxu0 %v11145
    %11465 = vmatpush1.bf16.msra.mxu0 %v11144
    %11466 = vmatprep.subr.bf16.mxu0 %v11147
    %11467 = vmatpush1.bf16.msra.mxu0 %v11146
    %11468 = vmatprep.subr.bf16.mxu0 %v11149
    %11469 = vmatpush1.bf16.msra.mxu0 %v11148
    %11470 = vmatprep.subr.bf16.mxu0 %v11151
    %11471 = vmatpush1.bf16.msra.mxu0 %v11150
    %11472 = vmatprep.subr.bf16.mxu0 %v11153
    %11473 = vmatpush1.bf16.msra.mxu0 %v11152
    %11474 = vmatprep.subr.bf16.mxu0 %v11155
    %11475 = vmatpush1.bf16.msra.mxu0 %v11154
    %11476 = vmatprep.subr.bf16.mxu0 %v11157
    %11477 = vmatpush1.bf16.msra.mxu0 %v11156
    %11478 = vmatprep.subr.bf16.mxu0 %v11159
    %11479 = vmatpush1.bf16.msra.mxu0 %v11158
    %11480 = vmatprep.subr.bf16.mxu0 %v11161
    %11481 = vmatpush1.bf16.msra.mxu0 %v11160
    %11482 = vmatprep.subr.bf16.mxu0 %v11163
    %11483 = vmatpush1.bf16.msra.mxu0 %v11162
    %11484 = vmatprep.subr.bf16.mxu0 %v11165
    %11485 = vmatpush1.bf16.msra.mxu0 %v11164
    %11486 = vmatprep.mubr.bf16.mxu0 %v10622
    %11487 = vmatmul.mubr.bf16.gmra.mrb[0].mxu0 %v10621
    %v11488 = vpop.f32.mrb[0].mxu0
    %v11489 = vadd.f32 %v10647, %v11488
    %v11490 = vpop.f32.mrb[0].mxu0
    %v11491 = vadd.f32 %v10651, %v11490
    %v11492 = vpop.f32.mrb[0].mxu0
    %v11493 = vadd.f32 %v10647, %v11492
    %v11494 = vpop.f32.mrb[0].mxu0
    %v11495 = vadd.f32 %v10651, %v11494
    %11496 = vmatprep.mubr.bf16.mxu0 %v10624
    %11497 = vmatmul.mubr.bf16.gmra.mrb[0].mxu0 %v10623
    %v11498 = vpop.f32.mrb[0].mxu0
    %v11499 = vadd.f32 %v10647, %v11498
    %v11500 = vpop.f32.mrb[0].mxu0
    %v11501 = vadd.f32 %v10651, %v11500
    %v11502 = vpop.f32.mrb[0].mxu0
    %v11503 = vadd.f32 %v10647, %v11502
    %v11504 = vpop.f32.mrb[0].mxu0
    %v11505 = vadd.f32 %v10651, %v11504
    %11506 = vdwg.mxu0
    %11507 = vmatprep.subr.bf16.mxu0 %v11167
    %11508 = vmatpush1.bf16.msra.mxu0 %v11166
    %11509 = vmatprep.subr.bf16.mxu0 %v11169
    %11510 = vmatpush1.bf16.msra.mxu0 %v11168
    %11511 = vmatprep.subr.bf16.mxu0 %v11171
    %11512 = vmatpush1.bf16.msra.mxu0 %v11170
    %11513 = vmatprep.subr.bf16.mxu0 %v11173
    %11514 = vmatpush1.bf16.msra.mxu0 %v11172
    %11515 = vmatprep.subr.bf16.mxu0 %v11175
    %11516 = vmatpush1.bf16.msra.mxu0 %v11174
    %11517 = vmatprep.subr.bf16.mxu0 %v11177
    %11518 = vmatpush1.bf16.msra.mxu0 %v11176
    %11519 = vmatprep.subr.bf16.mxu0 %v11179
    %11520 = vmatpush1.bf16.msra.mxu0 %v11178
    %11521 = vmatprep.subr.bf16.mxu0 %v11181
    %11522 = vmatpush1.bf16.msra.mxu0 %v11180
    %11523 = vmatprep.subr.bf16.mxu0 %v11183
    %11524 = vmatpush1.bf16.msra.mxu0 %v11182
    %11525 = vmatprep.subr.bf16.mxu0 %v11185
    %11526 = vmatpush1.bf16.msra.mxu0 %v11184
    %11527 = vmatprep.subr.bf16.mxu0 %v11187
    %11528 = vmatpush1.bf16.msra.mxu0 %v11186
    %11529 = vmatprep.subr.bf16.mxu0 %v11189
    %11530 = vmatpush1.bf16.msra.mxu0 %v11188
    %11531 = vmatprep.subr.bf16.mxu0 %v11191
    %11532 = vmatpush1.bf16.msra.mxu0 %v11190
    %11533 = vmatprep.subr.bf16.mxu0 %v11193
    %11534 = vmatpush1.bf16.msra.mxu0 %v11192
    %11535 = vmatprep.subr.bf16.mxu0 %v11195
    %11536 = vmatpush1.bf16.msra.mxu0 %v11194
    %11537 = vmatprep.subr.bf16.mxu0 %v11197
    %11538 = vmatpush1.bf16.msra.mxu0 %v11196
    %11539 = vmatprep.mubr.bf16.mxu0 %v10626
    %11540 = vmatmul.mubr.bf16.gmra.mrb[0].mxu0 %v10625
    %v11541 = vpop.f32.mrb[0].mxu0
    %v11542 = vadd.f32 %v11489, %v11541
    %v11543 = vpop.f32.mrb[0].mxu0
    %v11544 = vadd.f32 %v11491, %v11543
    %v11545 = vpop.f32.mrb[0].mxu0
    %v11546 = vadd.f32 %v11493, %v11545
    %v11547 = vpop.f32.mrb[0].mxu0
    %v11548 = vadd.f32 %v11495, %v11547
    %11549 = vmatprep.mubr.bf16.mxu0 %v10628
    %11550 = vmatmul.mubr.bf16.gmra.mrb[0].mxu0 %v10627
    %v11551 = vpop.f32.mrb[0].mxu0
    %v11552 = vadd.f32 %v11499, %v11551
    %v11553 = vpop.f32.mrb[0].mxu0
    %v11554 = vadd.f32 %v11501, %v11553
    %v11555 = vpop.f32.mrb[0].mxu0
    %v11556 = vadd.f32 %v11503, %v11555
    %v11557 = vpop.f32.mrb[0].mxu0
    %v11558 = vadd.f32 %v11505, %v11557
    %11559 = vdwg.mxu0
    %11560 = vmatprep.subr.bf16.mxu0 %v11199
    %11561 = vmatpush1.bf16.msra.mxu0 %v11198
    %11562 = vmatprep.subr.bf16.mxu0 %v11201
    %11563 = vmatpush1.bf16.msra.mxu0 %v11200
    %11564 = vmatprep.subr.bf16.mxu0 %v11203
    %11565 = vmatpush1.bf16.msra.mxu0 %v11202
    %11566 = vmatprep.subr.bf16.mxu0 %v11205
    %11567 = vmatpush1.bf16.msra.mxu0 %v11204
    %11568 = vmatprep.subr.bf16.mxu0 %v11207
    %11569 = vmatpush1.bf16.msra.mxu0 %v11206
    %11570 = vmatprep.subr.bf16.mxu0 %v11209
    %11571 = vmatpush1.bf16.msra.mxu0 %v11208
    %11572 = vmatprep.subr.bf16.mxu0 %v11211
    %11573 = vmatpush1.bf16.msra.mxu0 %v11210
    %11574 = vmatprep.subr.bf16.mxu0 %v11213
    %11575 = vmatpush1.bf16.msra.mxu0 %v11212
    %11576 = vmatprep.subr.bf16.mxu0 %v11215
    %11577 = vmatpush1.bf16.msra.mxu0 %v11214
    %11578 = vmatprep.subr.bf16.mxu0 %v11217
    %11579 = vmatpush1.bf16.msra.mxu0 %v11216
    %11580 = vmatprep.subr.bf16.mxu0 %v11219
    %11581 = vmatpush1.bf16.msra.mxu0 %v11218
    %11582 = vmatprep.subr.bf16.mxu0 %v11221
    %11583 = vmatpush1.bf16.msra.mxu0 %v11220
    %11584 = vmatprep.subr.bf16.mxu0 %v11223
    %11585 = vmatpush1.bf16.msra.mxu0 %v11222
    %11586 = vmatprep.subr.bf16.mxu0 %v11225
    %11587 = vmatpush1.bf16.msra.mxu0 %v11224
    %11588 = vmatprep.subr.bf16.mxu0 %v11227
    %11589 = vmatpush1.bf16.msra.mxu0 %v11226
    %11590 = vmatprep.subr.bf16.mxu0 %v11229
    %11591 = vmatpush1.bf16.msra.mxu0 %v11228
    %11592 = vmatprep.mubr.bf16.mxu0 %v10630
    %11593 = vmatmul.mubr.bf16.gmra.mrb[0].mxu0 %v10629
    %v11594 = vpop.f32.mrb[0].mxu0
    %v11595 = vadd.f32 %v11542, %v11594
    %v11596 = vpop.f32.mrb[0].mxu0
    %v11597 = vadd.f32 %v11544, %v11596
    %v11598 = vpop.f32.mrb[0].mxu0
    %v11599 = vadd.f32 %v11546, %v11598
    %v11600 = vpop.f32.mrb[0].mxu0
    %v11601 = vadd.f32 %v11548, %v11600
    %11602 = vmatprep.mubr.bf16.mxu0 %v10632
    %11603 = vmatmul.mubr.bf16.gmra.mrb[0].mxu0 %v10631
    %v11604 = vpop.f32.mrb[0].mxu0
    %v11605 = vadd.f32 %v11552, %v11604
    %v11606 = vpop.f32.mrb[0].mxu0
    %v11607 = vadd.f32 %v11554, %v11606
    %v11608 = vpop.f32.mrb[0].mxu0
    %v11609 = vadd.f32 %v11556, %v11608
    %v11610 = vpop.f32.mrb[0].mxu0
    %v11611 = vadd.f32 %v11558, %v11610
    %11612 = vdwg.mxu0
    %11613 = vmatprep.subr.bf16.mxu0 %v11231
    %11614 = vmatpush1.bf16.msra.mxu0 %v11230
    %11615 = vmatprep.subr.bf16.mxu0 %v11233
    %11616 = vmatpush1.bf16.msra.mxu0 %v11232
    %11617 = vmatprep.subr.bf16.mxu0 %v11235
    %11618 = vmatpush1.bf16.msra.mxu0 %v11234
    %11619 = vmatprep.subr.bf16.mxu0 %v11237
    %11620 = vmatpush1.bf16.msra.mxu0 %v11236
    %11621 = vmatprep.subr.bf16.mxu0 %v11239
    %11622 = vmatpush1.bf16.msra.mxu0 %v11238
    %11623 = vmatprep.subr.bf16.mxu0 %v11241
    %11624 = vmatpush1.bf16.msra.mxu0 %v11240
    %11625 = vmatprep.subr.bf16.mxu0 %v11243
    %11626 = vmatpush1.bf16.msra.mxu0 %v11242
    %11627 = vmatprep.subr.bf16.mxu0 %v11245
    %11628 = vmatpush1.bf16.msra.mxu0 %v11244
    %11629 = vmatprep.subr.bf16.mxu0 %v11247
    %11630 = vmatpush1.bf16.msra.mxu0 %v11246
    %11631 = vmatprep.subr.bf16.mxu0 %v11249
    %11632 = vmatpush1.bf16.msra.mxu0 %v11248
    %11633 = vmatprep.subr.bf16.mxu0 %v11251
    %11634 = vmatpush1.bf16.msra.mxu0 %v11250
    %11635 = vmatprep.subr.bf16.mxu0 %v11253
    %11636 = vmatpush1.bf16.msra.mxu0 %v11252
    %11637 = vmatprep.subr.bf16.mxu0 %v11255
    %11638 = vmatpush1.bf16.msra.mxu0 %v11254
    %11639 = vmatprep.subr.bf16.mxu0 %v11257
    %11640 = vmatpush1.bf16.msra.mxu0 %v11256
    %11641 = vmatprep.subr.bf16.mxu0 %v11259
    %11642 = vmatpush1.bf16.msra.mxu0 %v11258
    %11643 = vmatprep.subr.bf16.mxu0 %v11261
    %11644 = vmatpush1.bf16.msra.mxu0 %v11260
    %11645 = vmatprep.mubr.bf16.mxu0 %v10634
    %11646 = vmatmul.mubr.bf16.gmra.mrb[0].mxu0 %v10633
    %v11647 = vpop.f32.mrb[0].mxu0
    %v11648 = vadd.f32 %v11595, %v11647
    %v11649 = vpop.f32.mrb[0].mxu0
    %v11650 = vadd.f32 %v11597, %v11649
    %v11651 = vpop.f32.mrb[0].mxu0
    %v11652 = vadd.f32 %v11599, %v11651
    %v11653 = vpop.f32.mrb[0].mxu0
    %v11654 = vadd.f32 %v11601, %v11653
    %11655 = vmatprep.mubr.bf16.mxu0 %v10636
    %11656 = vmatmul.mubr.bf16.gmra.mrb[0].mxu0 %v10635
    %v11657 = vpop.f32.mrb[0].mxu0
    %v11658 = vadd.f32 %v11605, %v11657
    %v11659 = vpop.f32.mrb[0].mxu0
    %v11660 = vadd.f32 %v11607, %v11659
    %v11661 = vpop.f32.mrb[0].mxu0
    %v11662 = vadd.f32 %v11609, %v11661
    %v11663 = vpop.f32.mrb[0].mxu0
    %v11664 = vadd.f32 %v11611, %v11663
    %11665 = vdwg.mxu0
    %11666 = vmatprep.subr.bf16.mxu0 %v11263
    %11667 = vmatpush1.bf16.msra.mxu0 %v11262
    %11668 = vmatprep.subr.bf16.mxu0 %v11265
    %11669 = vmatpush1.bf16.msra.mxu0 %v11264
    %11670 = vmatprep.subr.bf16.mxu0 %v11267
    %11671 = vmatpush1.bf16.msra.mxu0 %v11266
    %11672 = vmatprep.subr.bf16.mxu0 %v11269
    %11673 = vmatpush1.bf16.msra.mxu0 %v11268
    %11674 = vmatprep.subr.bf16.mxu0 %v11271
    %11675 = vmatpush1.bf16.msra.mxu0 %v11270
    %11676 = vmatprep.subr.bf16.mxu0 %v11273
    %11677 = vmatpush1.bf16.msra.mxu0 %v11272
    %11678 = vmatprep.subr.bf16.mxu0 %v11275
    %11679 = vmatpush1.bf16.msra.mxu0 %v11274
    %11680 = vmatprep.subr.bf16.mxu0 %v11277
    %11681 = vmatpush1.bf16.msra.mxu0 %v11276
    %11682 = vmatprep.subr.bf16.mxu0 %v11279
    %11683 = vmatpush1.bf16.msra.mxu0 %v11278
    %11684 = vmatprep.subr.bf16.mxu0 %v11281
    %11685 = vmatpush1.bf16.msra.mxu0 %v11280
    %11686 = vmatprep.subr.bf16.mxu0 %v11283
    %11687 = vmatpush1.bf16.msra.mxu0 %v11282
    %11688 = vmatprep.subr.bf16.mxu0 %v11285
    %11689 = vmatpush1.bf16.msra.mxu0 %v11284
    %11690 = vmatprep.subr.bf16.mxu0 %v11287
    %11691 = vmatpush1.bf16.msra.mxu0 %v11286
    %11692 = vmatprep.subr.bf16.mxu0 %v11289
    %11693 = vmatpush1.bf16.msra.mxu0 %v11288
    %11694 = vmatprep.subr.bf16.mxu0 %v11291
    %11695 = vmatpush1.bf16.msra.mxu0 %v11290
    %11696 = vmatprep.subr.bf16.mxu0 %v11293
    %11697 = vmatpush1.bf16.msra.mxu0 %v11292
    %11698 = vmatprep.mubr.bf16.mxu0 %v10638
    %11699 = vmatmul.mubr.bf16.gmra.mrb[0].mxu0 %v10637
    %v11700 = vpop.f32.mrb[0].mxu0
    %v11701 = vadd.f32 %v11648, %v11700
    %v11702 = vpop.f32.mrb[0].mxu0
    %v11703 = vadd.f32 %v11650, %v11702
    %v11704 = vpop.f32.mrb[0].mxu0
    %v11705 = vadd.f32 %v11652, %v11704
    %v11706 = vpop.f32.mrb[0].mxu0
    %v11707 = vadd.f32 %v11654, %v11706
    %11708 = vmatprep.mubr.bf16.mxu0 %v10640
    %11709 = vmatmul.mubr.bf16.gmra.mrb[0].mxu0 %v10639
    %v11710 = vpop.f32.mrb[0].mxu0
    %v11711 = vadd.f32 %v11658, %v11710
    %v11712 = vpop.f32.mrb[0].mxu0
    %v11713 = vadd.f32 %v11660, %v11712
    %v11714 = vpop.f32.mrb[0].mxu0
    %v11715 = vadd.f32 %v11662, %v11714
    %v11716 = vpop.f32.mrb[0].mxu0
    %v11717 = vadd.f32 %v11664, %v11716
    %11718 = vdwg.mxu0
    %v11719 = vadd.f32 %v11701, %v11705
    %v11720 = vadd.f32 %v11719, %v11711
    %v11721 = vadd.f32 %v11720, %v11715
    %v11722 = vrot.slane %v11721, 4
    %v11723 = vadd.f32 %v11721, %v11722
    %v11724 = vrot.slane %v11723, 2
    %v11725 = vadd.f32 %v11723, %v11724
    %v11726 = vrot.slane %v11725, 1
    %v11727 = vadd.f32 %v11725, %v11726
    %v11728 = vadd.f32 %v11703, %v11707
    %v11729 = vadd.f32 %v11728, %v11713
    %v11730 = vadd.f32 %v11729, %v11717
    %v11731 = vrot.slane %v11730, 4
    %v11732 = vadd.f32 %v11730, %v11731
    %v11733 = vrot.slane %v11732, 2
    %v11734 = vadd.f32 %v11732, %v11733
    %v11735 = vrot.slane %v11734, 1
    %v11736 = vadd.f32 %v11734, %v11735
    %v11737 = vmul.f32 %v11727, %v4397
    %v11738 = vmul.f32 %v11736, %v4397
    %v11739 = vsub.f32 %v11701, %v11737
    %v11740 = vsub.f32 %v11703, %v11738
    %v11741 = vsub.f32 %v11705, %v11737
    %v11742 = vsub.f32 %v11707, %v11738
    %v11743 = vsub.f32 %v11711, %v11737
    %v11744 = vsub.f32 %v11713, %v11738
    %v11745 = vsub.f32 %v11715, %v11737
    %v11746 = vsub.f32 %v11717, %v11738
    %v11747 = vmul.f32 %v11739, %v11739
    %v11748 = vmul.f32 %v11740, %v11740
    %v11749 = vmul.f32 %v11741, %v11741
    %v11750 = vmul.f32 %v11742, %v11742
    %v11751 = vmul.f32 %v11743, %v11743
    %v11752 = vmul.f32 %v11744, %v11744
    %v11753 = vmul.f32 %v11745, %v11745
    %v11754 = vmul.f32 %v11746, %v11746
    %v11755 = vadd.f32 %v11747, %v11749
    %v11756 = vadd.f32 %v11755, %v11751
    %v11757 = vadd.f32 %v11756, %v11753
    %v11758 = vrot.slane %v11757, 4
    %v11759 = vadd.f32 %v11757, %v11758
    %v11760 = vrot.slane %v11759, 2
    %v11761 = vadd.f32 %v11759, %v11760
    %v11762 = vrot.slane %v11761, 1
    %v11763 = vadd.f32 %v11761, %v11762
    %v11764 = vadd.f32 %v11748, %v11750
    %v11765 = vadd.f32 %v11764, %v11752
    %v11766 = vadd.f32 %v11765, %v11754
    %v11767 = vrot.slane %v11766, 4
    %v11768 = vadd.f32 %v11766, %v11767
    %v11769 = vrot.slane %v11768, 2
    %v11770 = vadd.f32 %v11768, %v11769
    %v11771 = vrot.slane %v11770, 1
    %v11772 = vadd.f32 %v11770, %v11771
    %v11773 = vmul.f32 %v11763, %v4397
    %v11774 = vmul.f32 %v11772, %v4397
    %v11775 = vadd.f32 %v11773, 1e-05
    %v11776 = vadd.f32 %v11774, 1e-05
    %v11777 = vrsqrt.pop %v11775
    %v11778 = vrsqrt.pop %v11776
    %v11779 = vmul.f32 %v11739, %v11777
    %v11780 = vmul.f32 %v11740, %v11778
    %v11781 = vmul.f32 %v11741, %v11777
    %v11782 = vmul.f32 %v11742, %v11778
    %v11783 = vmul.f32 %v11743, %v11777
    %v11784 = vmul.f32 %v11744, %v11778
    %v11785 = vmul.f32 %v11745, %v11777
    %v11786 = vmul.f32 %v11746, %v11778
    %s11787 = scalar_lea.vmem [#allocation11], 5
    %v11788 = vld [vmem:[%s11787] ss:$8 sm:$0x3]
    %v11790 = vlaneseq
    %v11791 = vshrl.u32 %v11790, 7
    %v11792 = vsub.s32 0, %v11791
    %v11793 = vrot.slane %v11788, %v11792
    %v11794 = vlaneseq
    %v11795 = vshrl.u32 %v11794, 7
    %v11796 = vsub.s32 1, %v11795
    %v11797 = vrot.slane %v11788, %v11796
    %v11800 = vmul.f32 %v11779, %v11793
    %v11801 = vmul.f32 %v11780, %v11797
    %v11802 = vmul.f32 %v11781, %v11793
    %v11803 = vmul.f32 %v11782, %v11797
    %v11804 = vmul.f32 %v11783, %v11793
    %v11805 = vmul.f32 %v11784, %v11797
    %v11806 = vmul.f32 %v11785, %v11793
    %v11807 = vmul.f32 %v11786, %v11797
    %s11808 = scalar_lea.vmem [#allocation12], 5
    %v11809 = vld [vmem:[%s11808] ss:$8 sm:$0x3]
    %v11811 = vlaneseq
    %v11812 = vshrl.u32 %v11811, 7
    %v11813 = vsub.s32 0, %v11812
    %v11814 = vrot.slane %v11809, %v11813
    %v11815 = vlaneseq
    %v11816 = vshrl.u32 %v11815, 7
    %v11817 = vsub.s32 1, %v11816
    %v11818 = vrot.slane %v11809, %v11817
    %v11821 = vadd.f32 %v11800, %v11814
    %v11822 = vadd.f32 %v11801, %v11818
    %v11823 = vadd.f32 %v11802, %v11814
    %v11824 = vadd.f32 %v11803, %v11818
    %v11825 = vadd.f32 %v11804, %v11814
    %v11826 = vadd.f32 %v11805, %v11818
    %v11827 = vadd.f32 %v11806, %v11814
    %v11828 = vadd.f32 %v11807, %v11818
    %v11829 = vmax.f32 %v11821, 0.0
    %v11830 = vmax.f32 %v11822, 0.0
    %v11831 = vmax.f32 %v11823, 0.0
    %v11832 = vmax.f32 %v11824, 0.0
    %v11833 = vmax.f32 %v11825, 0.0
    %v11834 = vmax.f32 %v11826, 0.0
    %v11835 = vmax.f32 %v11827, 0.0
    %v11836 = vmax.f32 %v11828, 0.0
    %v11837 = vlaneseq
    %v11838 = vshrl.u32 %v11837, 7
    %v11839 = vsub.s32 0, %v11838
    %v11840 = vrot.slane %v11829, %v11839
    %v11841 = vlaneseq
    %v11842 = vshrl.u32 %v11841, 7
    %v11843 = vsub.s32 0, %v11842
    %v11844 = vrot.slane %v11830, %v11843
    %v11845 = vlaneseq
    %v11846 = vshrl.u32 %v11845, 7
    %v11847 = vsub.s32 0, %v11846
    %v11848 = vrot.slane %v11833, %v11847
    %v11849 = vlaneseq
    %v11850 = vshrl.u32 %v11849, 7
    %v11851 = vsub.s32 0, %v11850
    %v11852 = vrot.slane %v11834, %v11851
    %11853 = vst [vmem:[%s6] sm:$0xff] %v11840
    %11854 = vst [vmem:[%s6 + $0x8] sm:$0xff] %v11844
    %11855 = vst [vmem:[%s6 + $0x10] sm:$0xff] %v11840
    %11856 = vst [vmem:[%s6 + $0x18] sm:$0xff] %v11844
    %11857 = vst [vmem:[%s6 + $0x20] sm:$0x7] %v11840
    %11858 = vst [vmem:[%s6 + $0x28] sm:$0x7] %v11844
    %11859 = vst [vmem:[%s6 + $0x260] sm:$0xff] %v11848
    %11860 = vst [vmem:[%s6 + $0x268] sm:$0xff] %v11852
    %11861 = vst [vmem:[%s6 + $0x270] sm:$0xff] %v11848
    %11862 = vst [vmem:[%s6 + $0x278] sm:$0xff] %v11852
    %11863 = vst [vmem:[%s6 + $0x280] sm:$0x7] %v11848
    %11864 = vst [vmem:[%s6 + $0x288] sm:$0x7] %v11852
    %v11865 = vlaneseq
    %v11866 = vshrl.u32 %v11865, 7
    %v11867 = vsub.s32 1, %v11866
    %v11868 = vrot.slane %v11829, %v11867
    %v11869 = vlaneseq
    %v11870 = vshrl.u32 %v11869, 7
    %v11871 = vsub.s32 1, %v11870
    %v11872 = vrot.slane %v11830, %v11871
    %v11873 = vlaneseq
    %v11874 = vshrl.u32 %v11873, 7
    %v11875 = vsub.s32 1, %v11874
    %v11876 = vrot.slane %v11833, %v11875
    %v11877 = vlaneseq
    %v11878 = vshrl.u32 %v11877, 7
    %v11879 = vsub.s32 1, %v11878
    %v11880 = vrot.slane %v11834, %v11879
    %11881 = vst [vmem:[%s6 + $0x20] sm:$0xf8] %v11868
    %11882 = vst [vmem:[%s6 + $0x28] sm:$0xf8] %v11872
    %11883 = vst [vmem:[%s6 + $0x30] sm:$0xff] %v11868
    %11884 = vst [vmem:[%s6 + $0x38] sm:$0xff] %v11872
    %11885 = vst [vmem:[%s6 + $0x40] sm:$0x3f] %v11868
    %11886 = vst [vmem:[%s6 + $0x48] sm:$0x3f] %v11872
    %11887 = vst [vmem:[%s6 + $0x280] sm:$0xf8] %v11876
    %11888 = vst [vmem:[%s6 + $0x288] sm:$0xf8] %v11880
    %11889 = vst [vmem:[%s6 + $0x290] sm:$0xff] %v11876
    %11890 = vst [vmem:[%s6 + $0x298] sm:$0xff] %v11880
    %11891 = vst [vmem:[%s6 + $0x2a0] sm:$0x3f] %v11876
    %11892 = vst [vmem:[%s6 + $0x2a8] sm:$0x3f] %v11880
    %v11893 = vlaneseq
    %v11894 = vshrl.u32 %v11893, 7
    %v11895 = vsub.s32 2, %v11894
    %v11896 = vrot.slane %v11829, %v11895
    %v11897 = vlaneseq
    %v11898 = vshrl.u32 %v11897, 7
    %v11899 = vsub.s32 2, %v11898
    %v11900 = vrot.slane %v11830, %v11899
    %v11901 = vlaneseq
    %v11902 = vshrl.u32 %v11901, 7
    %v11903 = vsub.s32 2, %v11902
    %v11904 = vrot.slane %v11833, %v11903
    %v11905 = vlaneseq
    %v11906 = vshrl.u32 %v11905, 7
    %v11907 = vsub.s32 2, %v11906
    %v11908 = vrot.slane %v11834, %v11907
    %11909 = vst [vmem:[%s6 + $0x40] sm:$0xc0] %v11896
    %11910 = vst [vmem:[%s6 + $0x48] sm:$0xc0] %v11900
    %11911 = vst [vmem:[%s6 + $0x50] sm:$0xff] %v11896
    %11912 = vst [vmem:[%s6 + $0x58] sm:$0xff] %v11900
    %11913 = vst [vmem:[%s6 + $0x60] sm:$0xff] %v11896
    %11914 = vst [vmem:[%s6 + $0x68] sm:$0xff] %v11900
    %11915 = vst [vmem:[%s6 + $0x2a0] sm:$0xc0] %v11904
    %11916 = vst [vmem:[%s6 + $0x2a8] sm:$0xc0] %v11908
    %11917 = vst [vmem:[%s6 + $0x2b0] sm:$0xff] %v11904
    %11918 = vst [vmem:[%s6 + $0x2b8] sm:$0xff] %v11908
    %11919 = vst [vmem:[%s6 + $0x2c0] sm:$0xff] %v11904
    %11920 = vst [vmem:[%s6 + $0x2c8] sm:$0xff] %v11908
    %v11921 = vlaneseq
    %v11922 = vshrl.u32 %v11921, 7
    %v11923 = vsub.s32 3, %v11922
    %v11924 = vrot.slane %v11829, %v11923
    %v11925 = vlaneseq
    %v11926 = vshrl.u32 %v11925, 7
    %v11927 = vsub.s32 3, %v11926
    %v11928 = vrot.slane %v11830, %v11927
    %v11929 = vlaneseq
    %v11930 = vshrl.u32 %v11929, 7
    %v11931 = vsub.s32 3, %v11930
    %v11932 = vrot.slane %v11833, %v11931
    %v11933 = vlaneseq
    %v11934 = vshrl.u32 %v11933, 7
    %v11935 = vsub.s32 3, %v11934
    %v11936 = vrot.slane %v11834, %v11935
    %11937 = vst [vmem:[%s6 + $0x70] sm:$0xff] %v11924
    %11938 = vst [vmem:[%s6 + $0x78] sm:$0xff] %v11928
    %11939 = vst [vmem:[%s6 + $0x80] sm:$0xff] %v11924
    %11940 = vst [vmem:[%s6 + $0x88] sm:$0xff] %v11928
    %11941 = vst [vmem:[%s6 + $0x90] sm:$0x7] %v11924
    %11942 = vst [vmem:[%s6 + $0x98] sm:$0x7] %v11928
    %11943 = vst [vmem:[%s6 + $0x2d0] sm:$0xff] %v11932
    %11944 = vst [vmem:[%s6 + $0x2d8] sm:$0xff] %v11936
    %11945 = vst [vmem:[%s6 + $0x2e0] sm:$0xff] %v11932
    %11946 = vst [vmem:[%s6 + $0x2e8] sm:$0xff] %v11936
    %11947 = vst [vmem:[%s6 + $0x2f0] sm:$0x7] %v11932
    %11948 = vst [vmem:[%s6 + $0x2f8] sm:$0x7] %v11936
    %v11949 = vlaneseq
    %v11950 = vshrl.u32 %v11949, 7
    %v11951 = vsub.s32 4, %v11950
    %v11952 = vrot.slane %v11829, %v11951
    %v11953 = vlaneseq
    %v11954 = vshrl.u32 %v11953, 7
    %v11955 = vsub.s32 4, %v11954
    %v11956 = vrot.slane %v11830, %v11955
    %v11957 = vlaneseq
    %v11958 = vshrl.u32 %v11957, 7
    %v11959 = vsub.s32 4, %v11958
    %v11960 = vrot.slane %v11833, %v11959
    %v11961 = vlaneseq
    %v11962 = vshrl.u32 %v11961, 7
    %v11963 = vsub.s32 4, %v11962
    %v11964 = vrot.slane %v11834, %v11963
    %11965 = vst [vmem:[%s6 + $0x90] sm:$0xf8] %v11952
    %11966 = vst [vmem:[%s6 + $0x98] sm:$0xf8] %v11956
    %11967 = vst [vmem:[%s6 + $0xa0] sm:$0xff] %v11952
    %11968 = vst [vmem:[%s6 + $0xa8] sm:$0xff] %v11956
    %11969 = vst [vmem:[%s6 + $0xb0] sm:$0x3f] %v11952
    %11970 = vst [vmem:[%s6 + $0xb8] sm:$0x3f] %v11956
    %11971 = vst [vmem:[%s6 + $0x2f0] sm:$0xf8] %v11960
    %11972 = vst [vmem:[%s6 + $0x2f8] sm:$0xf8] %v11964
    %11973 = vst [vmem:[%s6 + $0x300] sm:$0xff] %v11960
    %11974 = vst [vmem:[%s6 + $0x308] sm:$0xff] %v11964
    %11975 = vst [vmem:[%s6 + $0x310] sm:$0x3f] %v11960
    %11976 = vst [vmem:[%s6 + $0x318] sm:$0x3f] %v11964
    %v11977 = vlaneseq
    %v11978 = vshrl.u32 %v11977, 7
    %v11979 = vsub.s32 5, %v11978
    %v11980 = vrot.slane %v11829, %v11979
    %v11981 = vlaneseq
    %v11982 = vshrl.u32 %v11981, 7
    %v11983 = vsub.s32 5, %v11982
    %v11984 = vrot.slane %v11830, %v11983
    %v11985 = vlaneseq
    %v11986 = vshrl.u32 %v11985, 7
    %v11987 = vsub.s32 5, %v11986
    %v11988 = vrot.slane %v11833, %v11987
    %v11989 = vlaneseq
    %v11990 = vshrl.u32 %v11989, 7
    %v11991 = vsub.s32 5, %v11990
    %v11992 = vrot.slane %v11834, %v11991
    %11993 = vst [vmem:[%s6 + $0xb0] sm:$0xc0] %v11980
    %11994 = vst [vmem:[%s6 + $0xb8] sm:$0xc0] %v11984
    %11995 = vst [vmem:[%s6 + $0xc0] sm:$0xff] %v11980
    %11996 = vst [vmem:[%s6 + $0xc8] sm:$0xff] %v11984
    %11997 = vst [vmem:[%s6 + $0xd0] sm:$0xff] %v11980
    %11998 = vst [vmem:[%s6 + $0xd8] sm:$0xff] %v11984
    %11999 = vst [vmem:[%s6 + $0x310] sm:$0xc0] %v11988
    %12000 = vst [vmem:[%s6 + $0x318] sm:$0xc0] %v11992
    %12001 = vst [vmem:[%s6 + $0x320] sm:$0xff] %v11988
    %12002 = vst [vmem:[%s6 + $0x328] sm:$0xff] %v11992
    %12003 = vst [vmem:[%s6 + $0x330] sm:$0xff] %v11988
    %12004 = vst [vmem:[%s6 + $0x338] sm:$0xff] %v11992
    %v12005 = vlaneseq
    %v12006 = vshrl.u32 %v12005, 7
    %v12007 = vsub.s32 6, %v12006
    %v12008 = vrot.slane %v11829, %v12007
    %v12009 = vlaneseq
    %v12010 = vshrl.u32 %v12009, 7
    %v12011 = vsub.s32 6, %v12010
    %v12012 = vrot.slane %v11830, %v12011
    %v12013 = vlaneseq
    %v12014 = vshrl.u32 %v12013, 7
    %v12015 = vsub.s32 6, %v12014
    %v12016 = vrot.slane %v11833, %v12015
    %v12017 = vlaneseq
    %v12018 = vshrl.u32 %v12017, 7
    %v12019 = vsub.s32 6, %v12018
    %v12020 = vrot.slane %v11834, %v12019
    %12021 = vst [vmem:[%s6 + $0xe0] sm:$0xff] %v12008
    %12022 = vst [vmem:[%s6 + $0xe8] sm:$0xff] %v12012
    %12023 = vst [vmem:[%s6 + $0xf0] sm:$0xff] %v12008
    %12024 = vst [vmem:[%s6 + $0xf8] sm:$0xff] %v12012
    %12025 = vst [vmem:[%s6 + $0x100] sm:$0x7] %v12008
    %12026 = vst [vmem:[%s6 + $0x108] sm:$0x7] %v12012
    %12027 = vst [vmem:[%s6 + $0x340] sm:$0xff] %v12016
    %12028 = vst [vmem:[%s6 + $0x348] sm:$0xff] %v12020
    %12029 = vst [vmem:[%s6 + $0x350] sm:$0xff] %v12016
    %12030 = vst [vmem:[%s6 + $0x358] sm:$0xff] %v12020
    %12031 = vst [vmem:[%s6 + $0x360] sm:$0x7] %v12016
    %12032 = vst [vmem:[%s6 + $0x368] sm:$0x7] %v12020
    %v12033 = vlaneseq
    %v12034 = vshrl.u32 %v12033, 7
    %v12035 = vsub.s32 7, %v12034
    %v12036 = vrot.slane %v11829, %v12035
    %v12037 = vlaneseq
    %v12038 = vshrl.u32 %v12037, 7
    %v12039 = vsub.s32 7, %v12038
    %v12040 = vrot.slane %v11830, %v12039
    %v12041 = vlaneseq
    %v12042 = vshrl.u32 %v12041, 7
    %v12043 = vsub.s32 7, %v12042
    %v12044 = vrot.slane %v11833, %v12043
    %v12045 = vlaneseq
    %v12046 = vshrl.u32 %v12045, 7
    %v12047 = vsub.s32 7, %v12046
    %v12048 = vrot.slane %v11834, %v12047
    %12049 = vst [vmem:[%s6 + $0x100] sm:$0xf8] %v12036
    %12050 = vst [vmem:[%s6 + $0x108] sm:$0xf8] %v12040
    %12051 = vst [vmem:[%s6 + $0x110] sm:$0xff] %v12036
    %12052 = vst [vmem:[%s6 + $0x118] sm:$0xff] %v12040
    %12053 = vst [vmem:[%s6 + $0x120] sm:$0x1f] %v12036
    %12054 = vst [vmem:[%s6 + $0x128] sm:$0x1f] %v12040
    %12055 = vst [vmem:[%s6 + $0x360] sm:$0xf8] %v12044
    %12056 = vst [vmem:[%s6 + $0x368] sm:$0xf8] %v12048
    %12057 = vst [vmem:[%s6 + $0x370] sm:$0xff] %v12044
    %12058 = vst [vmem:[%s6 + $0x378] sm:$0xff] %v12048
    %12059 = vst [vmem:[%s6 + $0x380] sm:$0x1f] %v12044
    %12060 = vst [vmem:[%s6 + $0x388] sm:$0x1f] %v12048
    %v12061 = vlaneseq
    %v12062 = vshrl.u32 %v12061, 7
    %v12063 = vsub.s32 0, %v12062
    %v12064 = vrot.slane %v11831, %v12063
    %v12065 = vlaneseq
    %v12066 = vshrl.u32 %v12065, 7
    %v12067 = vsub.s32 0, %v12066
    %v12068 = vrot.slane %v11832, %v12067
    %v12069 = vlaneseq
    %v12070 = vshrl.u32 %v12069, 7
    %v12071 = vsub.s32 0, %v12070
    %v12072 = vrot.slane %v11835, %v12071
    %v12073 = vlaneseq
    %v12074 = vshrl.u32 %v12073, 7
    %v12075 = vsub.s32 0, %v12074
    %v12076 = vrot.slane %v11836, %v12075
    %12077 = vst [vmem:[%s6 + $0x120] sm:$0xe0] %v12064
    %12078 = vst [vmem:[%s6 + $0x128] sm:$0xe0] %v12068
    %12079 = vst [vmem:[%s6 + $0x130] sm:$0xff] %v12064
    %12080 = vst [vmem:[%s6 + $0x138] sm:$0xff] %v12068
    %12081 = vst [vmem:[%s6 + $0x140] sm:$0xff] %v12064
    %12082 = vst [vmem:[%s6 + $0x148] sm:$0xff] %v12068
    %12083 = vst [vmem:[%s6 + $0x380] sm:$0xe0] %v12072
    %12084 = vst [vmem:[%s6 + $0x388] sm:$0xe0] %v12076
    %12085 = vst [vmem:[%s6 + $0x390] sm:$0xff] %v12072
    %12086 = vst [vmem:[%s6 + $0x398] sm:$0xff] %v12076
    %12087 = vst [vmem:[%s6 + $0x3a0] sm:$0xff] %v12072
    %12088 = vst [vmem:[%s6 + $0x3a8] sm:$0xff] %v12076
    %v12089 = vlaneseq
    %v12090 = vshrl.u32 %v12089, 7
    %v12091 = vsub.s32 1, %v12090
    %v12092 = vrot.slane %v11831, %v12091
    %v12093 = vlaneseq
    %v12094 = vshrl.u32 %v12093, 7
    %v12095 = vsub.s32 1, %v12094
    %v12096 = vrot.slane %v11832, %v12095
    %v12097 = vlaneseq
    %v12098 = vshrl.u32 %v12097, 7
    %v12099 = vsub.s32 1, %v12098
    %v12100 = vrot.slane %v11835, %v12099
    %v12101 = vlaneseq
    %v12102 = vshrl.u32 %v12101, 7
    %v12103 = vsub.s32 1, %v12102
    %v12104 = vrot.slane %v11836, %v12103
    %12105 = vst [vmem:[%s6 + $0x150] sm:$0xff] %v12092
    %12106 = vst [vmem:[%s6 + $0x158] sm:$0xff] %v12096
    %12107 = vst [vmem:[%s6 + $0x160] sm:$0xff] %v12092
    %12108 = vst [vmem:[%s6 + $0x168] sm:$0xff] %v12096
    %12109 = vst [vmem:[%s6 + $0x170] sm:$0x7] %v12092
    %12110 = vst [vmem:[%s6 + $0x178] sm:$0x7] %v12096
    %12111 = vst [vmem:[%s6 + $0x3b0] sm:$0xff] %v12100
    %12112 = vst [vmem:[%s6 + $0x3b8] sm:$0xff] %v12104
    %12113 = vst [vmem:[%s6 + $0x3c0] sm:$0xff] %v12100
    %12114 = vst [vmem:[%s6 + $0x3c8] sm:$0xff] %v12104
    %12115 = vst [vmem:[%s6 + $0x3d0] sm:$0x7] %v12100
    %12116 = vst [vmem:[%s6 + $0x3d8] sm:$0x7] %v12104
    %v12117 = vlaneseq
    %v12118 = vshrl.u32 %v12117, 7
    %v12119 = vsub.s32 2, %v12118
    %v12120 = vrot.slane %v11831, %v12119
    %v12121 = vlaneseq
    %v12122 = vshrl.u32 %v12121, 7
    %v12123 = vsub.s32 2, %v12122
    %v12124 = vrot.slane %v11832, %v12123
    %v12125 = vlaneseq
    %v12126 = vshrl.u32 %v12125, 7
    %v12127 = vsub.s32 2, %v12126
    %v12128 = vrot.slane %v11835, %v12127
    %v12129 = vlaneseq
    %v12130 = vshrl.u32 %v12129, 7
    %v12131 = vsub.s32 2, %v12130
    %v12132 = vrot.slane %v11836, %v12131
    %12133 = vst [vmem:[%s6 + $0x170] sm:$0xf8] %v12120
    %12134 = vst [vmem:[%s6 + $0x178] sm:$0xf8] %v12124
    %12135 = vst [vmem:[%s6 + $0x180] sm:$0xff] %v12120
    %12136 = vst [vmem:[%s6 + $0x188] sm:$0xff] %v12124
    %12137 = vst [vmem:[%s6 + $0x190] sm:$0x1f] %v12120
    %12138 = vst [vmem:[%s6 + $0x198] sm:$0x1f] %v12124
    %12139 = vst [vmem:[%s6 + $0x3d0] sm:$0xf8] %v12128
    %12140 = vst [vmem:[%s6 + $0x3d8] sm:$0xf8] %v12132
    %12141 = vst [vmem:[%s6 + $0x3e0] sm:$0xff] %v12128
    %12142 = vst [vmem:[%s6 + $0x3e8] sm:$0xff] %v12132
    %12143 = vst [vmem:[%s6 + $0x3f0] sm:$0x1f] %v12128
    %12144 = vst [vmem:[%s6 + $0x3f8] sm:$0x1f] %v12132
    %v12145 = vlaneseq
    %v12146 = vshrl.u32 %v12145, 7
    %v12147 = vsub.s32 3, %v12146
    %v12148 = vrot.slane %v11831, %v12147
    %v12149 = vlaneseq
    %v12150 = vshrl.u32 %v12149, 7
    %v12151 = vsub.s32 3, %v12150
    %v12152 = vrot.slane %v11832, %v12151
    %v12153 = vlaneseq
    %v12154 = vshrl.u32 %v12153, 7
    %v12155 = vsub.s32 3, %v12154
    %v12156 = vrot.slane %v11835, %v12155
    %v12157 = vlaneseq
    %v12158 = vshrl.u32 %v12157, 7
    %v12159 = vsub.s32 3, %v12158
    %v12160 = vrot.slane %v11836, %v12159
    %12161 = vst [vmem:[%s6 + $0x190] sm:$0xe0] %v12148
    %12162 = vst [vmem:[%s6 + $0x198] sm:$0xe0] %v12152
    %12163 = vst [vmem:[%s6 + $0x1a0] sm:$0xff] %v12148
    %12164 = vst [vmem:[%s6 + $0x1a8] sm:$0xff] %v12152
    %12165 = vst [vmem:[%s6 + $0x1b0] sm:$0xff] %v12148
    %12166 = vst [vmem:[%s6 + $0x1b8] sm:$0xff] %v12152
    %12167 = vst [vmem:[%s6 + $0x3f0] sm:$0xe0] %v12156
    %12168 = vst [vmem:[%s6 + $0x3f8] sm:$0xe0] %v12160
    %12169 = vst [vmem:[%s6 + $0x400] sm:$0xff] %v12156
    %12170 = vst [vmem:[%s6 + $0x408] sm:$0xff] %v12160
    %12171 = vst [vmem:[%s6 + $0x410] sm:$0xff] %v12156
    %12172 = vst [vmem:[%s6 + $0x418] sm:$0xff] %v12160
    %v12173 = vlaneseq
    %v12174 = vshrl.u32 %v12173, 7
    %v12175 = vsub.s32 4, %v12174
    %v12176 = vrot.slane %v11831, %v12175
    %v12177 = vlaneseq
    %v12178 = vshrl.u32 %v12177, 7
    %v12179 = vsub.s32 4, %v12178
    %v12180 = vrot.slane %v11832, %v12179
    %v12181 = vlaneseq
    %v12182 = vshrl.u32 %v12181, 7
    %v12183 = vsub.s32 4, %v12182
    %v12184 = vrot.slane %v11835, %v12183
    %v12185 = vlaneseq
    %v12186 = vshrl.u32 %v12185, 7
    %v12187 = vsub.s32 4, %v12186
    %v12188 = vrot.slane %v11836, %v12187
    %12189 = vst [vmem:[%s6 + $0x1c0] sm:$0xff] %v12176
    %12190 = vst [vmem:[%s6 + $0x1c8] sm:$0xff] %v12180
    %12191 = vst [vmem:[%s6 + $0x1d0] sm:$0xff] %v12176
    %12192 = vst [vmem:[%s6 + $0x1d8] sm:$0xff] %v12180
    %12193 = vst [vmem:[%s6 + $0x1e0] sm:$0x7] %v12176
    %12194 = vst [vmem:[%s6 + $0x1e8] sm:$0x7] %v12180
    %12195 = vst [vmem:[%s6 + $0x420] sm:$0xff] %v12184
    %12196 = vst [vmem:[%s6 + $0x428] sm:$0xff] %v12188
    %12197 = vst [vmem:[%s6 + $0x430] sm:$0xff] %v12184
    %12198 = vst [vmem:[%s6 + $0x438] sm:$0xff] %v12188
    %12199 = vst [vmem:[%s6 + $0x440] sm:$0x7] %v12184
    %12200 = vst [vmem:[%s6 + $0x448] sm:$0x7] %v12188
    %v12201 = vlaneseq
    %v12202 = vshrl.u32 %v12201, 7
    %v12203 = vsub.s32 5, %v12202
    %v12204 = vrot.slane %v11831, %v12203
    %v12205 = vlaneseq
    %v12206 = vshrl.u32 %v12205, 7
    %v12207 = vsub.s32 5, %v12206
    %v12208 = vrot.slane %v11832, %v12207
    %v12209 = vlaneseq
    %v12210 = vshrl.u32 %v12209, 7
    %v12211 = vsub.s32 5, %v12210
    %v12212 = vrot.slane %v11835, %v12211
    %v12213 = vlaneseq
    %v12214 = vshrl.u32 %v12213, 7
    %v12215 = vsub.s32 5, %v12214
    %v12216 = vrot.slane %v11836, %v12215
    %12217 = vst [vmem:[%s6 + $0x1e0] sm:$0xf8] %v12204
    %12218 = vst [vmem:[%s6 + $0x1e8] sm:$0xf8] %v12208
    %12219 = vst [vmem:[%s6 + $0x1f0] sm:$0xff] %v12204
    %12220 = vst [vmem:[%s6 + $0x1f8] sm:$0xff] %v12208
    %12221 = vst [vmem:[%s6 + $0x200] sm:$0x1f] %v12204
    %12222 = vst [vmem:[%s6 + $0x208] sm:$0x1f] %v12208
    %12223 = vst [vmem:[%s6 + $0x440] sm:$0xf8] %v12212
    %12224 = vst [vmem:[%s6 + $0x448] sm:$0xf8] %v12216
    %12225 = vst [vmem:[%s6 + $0x450] sm:$0xff] %v12212
    %12226 = vst [vmem:[%s6 + $0x458] sm:$0xff] %v12216
    %12227 = vst [vmem:[%s6 + $0x460] sm:$0x1f] %v12212
    %12228 = vst [vmem:[%s6 + $0x468] sm:$0x1f] %v12216
    %v12229 = vlaneseq
    %v12230 = vshrl.u32 %v12229, 7
    %v12231 = vsub.s32 6, %v12230
    %v12232 = vrot.slane %v11831, %v12231
    %v12233 = vlaneseq
    %v12234 = vshrl.u32 %v12233, 7
    %v12235 = vsub.s32 6, %v12234
    %v12236 = vrot.slane %v11832, %v12235
    %v12237 = vlaneseq
    %v12238 = vshrl.u32 %v12237, 7
    %v12239 = vsub.s32 6, %v12238
    %v12240 = vrot.slane %v11835, %v12239
    %v12241 = vlaneseq
    %v12242 = vshrl.u32 %v12241, 7
    %v12243 = vsub.s32 6, %v12242
    %v12244 = vrot.slane %v11836, %v12243
    %12245 = vst [vmem:[%s6 + $0x200] sm:$0xe0] %v12232
    %12246 = vst [vmem:[%s6 + $0x208] sm:$0xe0] %v12236
    %12247 = vst [vmem:[%s6 + $0x210] sm:$0xff] %v12232
    %12248 = vst [vmem:[%s6 + $0x218] sm:$0xff] %v12236
    %12249 = vst [vmem:[%s6 + $0x220] sm:$0xff] %v12232
    %12250 = vst [vmem:[%s6 + $0x228] sm:$0xff] %v12236
    %12251 = vst [vmem:[%s6 + $0x460] sm:$0xe0] %v12240
    %12252 = vst [vmem:[%s6 + $0x468] sm:$0xe0] %v12244
    %12253 = vst [vmem:[%s6 + $0x470] sm:$0xff] %v12240
    %12254 = vst [vmem:[%s6 + $0x478] sm:$0xff] %v12244
    %12255 = vst [vmem:[%s6 + $0x480] sm:$0xff] %v12240
    %12256 = vst [vmem:[%s6 + $0x488] sm:$0xff] %v12244
    %v12257 = vlaneseq
    %v12258 = vshrl.u32 %v12257, 7
    %v12259 = vsub.s32 7, %v12258
    %v12260 = vrot.slane %v11831, %v12259
    %v12261 = vlaneseq
    %v12262 = vshrl.u32 %v12261, 7
    %v12263 = vsub.s32 7, %v12262
    %v12264 = vrot.slane %v11832, %v12263
    %v12265 = vlaneseq
    %v12266 = vshrl.u32 %v12265, 7
    %v12267 = vsub.s32 7, %v12266
    %v12268 = vrot.slane %v11835, %v12267
    %v12269 = vlaneseq
    %v12270 = vshrl.u32 %v12269, 7
    %v12271 = vsub.s32 7, %v12270
    %v12272 = vrot.slane %v11836, %v12271
    %12273 = vst [vmem:[%s6 + $0x230] sm:$0xff] %v12260
    %12274 = vst [vmem:[%s6 + $0x238] sm:$0xff] %v12264
    %12275 = vst [vmem:[%s6 + $0x240] sm:$0xff] %v12260
    %12276 = vst [vmem:[%s6 + $0x248] sm:$0xff] %v12264
    %12277 = vst [vmem:[%s6 + $0x250] sm:$0x3] %v12260
    %12278 = vst [vmem:[%s6 + $0x258] sm:$0x3] %v12264
    %12279 = vst [vmem:[%s6 + $0x490] sm:$0xff] %v12268
    %12280 = vst [vmem:[%s6 + $0x498] sm:$0xff] %v12272
    %12281 = vst [vmem:[%s6 + $0x4a0] sm:$0xff] %v12268
    %12282 = vst [vmem:[%s6 + $0x4a8] sm:$0xff] %v12272
    %12283 = vst [vmem:[%s6 + $0x4b0] sm:$0x3] %v12268
    %12284 = vst [vmem:[%s6 + $0x4b8] sm:$0x3] %v12272
    // Predicated region
    $region50: #{tpu_custom_call.1} parent=1 // pred_check
      _
    $region51: #{tpu_custom_call.1} parent=1 // pred_check_branch
      %12286 = sbr.rel (0) target = $region53
    $region52: #{tpu_custom_call.1} parent=1 // pred_region
      _
    $region53: #{tpu_custom_call.1} parent=1 // pred_fallthru
      _
    // Predicated region
    $region54: #{tpu_custom_call.1} parent=1 // pred_check
      _
    $region55: #{tpu_custom_call.1} parent=1 // pred_check_branch
      %12288 = sbr.rel (0) target = $region57
    $region56: #{tpu_custom_call.1} parent=1 // pred_region
      _
    $region57: #{tpu_custom_call.1} parent=1 // pred_fallthru
      _
    %12289 = vsyncpa [#allocation5], 1
    %12290 = vsyncpa [#allocation7], 1
    %12291 = vsyncpa [#allocation10], 1
    %12292 = vsyncpa [#allocation13], 1

</llo_original>
